<compile_context>
chip_gen: v5e
topology: v5e:2x2
jax: 0.10.0
libtpu: 0.0.40
codegen_flags: <defaults>
</compile_context>

<pallas_src>
import functools
import math

import jax
import jax.numpy as jnp
from jax import lax
from jax.experimental import pallas as pl
from jax.experimental.pallas import tpu as pltpu

EPS = 1e-5  # PyTorch LayerNorm default


def _layernorm_1pass(x, gamma, beta):
    # Single-pass statistics: var = E[x^2] - E[x]^2 (halves XLU reductions).
    mean = jnp.mean(x, axis=-1, keepdims=True)
    msq = jnp.mean(x * x, axis=-1, keepdims=True)
    var = jnp.maximum(msq - mean * mean, 0.0)
    return (x - mean) * lax.rsqrt(var + EPS) * gamma + beta


def _encoder_kernel(nhead, num_layers, has_final_norm,
                    src_ref, cq_ref, ck_ref,
                    wqkv_ref, bv_ref, wo_ref, bo_ref,
                    w1_ref, b1_ref, w2_ref, b2_ref,
                    g1_ref, be1_ref, g2_ref, be2_ref,
                    gf_ref, bf_ref,
                    out_ref):
    bb, S, D = src_ref.shape          # bb batch elements handled per grid step
    M = bb * S
    hd = D // nhead
    F = w1_ref.shape[1]

    # Resident weights (constant block index => DMA'd into VMEM once), bf16.
    wqkv = wqkv_ref[...]              # (D, 3D) = [Wq^T*softmax_scale | Wk^T | Wv^T]
    wo = wo_ref[...]                  # (D, D)
    w1 = w1_ref[...]                  # (D, F)
    w2 = w2_ref[...]                  # (F, D)

    # Layer-invariant additive constants / broadcasts, hoisted ONCE out of the
    # unrolled layer loop (JAX does not CSE broadcast_in_dim).
    cq = cq_ref[...]                                   # (M, D) f32: (pos@Wq^T + bq)*scale
    ck = ck_ref[...]                                   # (M, D) f32:  pos@Wk^T + bk
    bv = jnp.broadcast_to(bv_ref[0, :], (M, D))
    bo = jnp.broadcast_to(bo_ref[0, :], (M, D))
    b1 = jnp.broadcast_to(b1_ref[0, :], (M, F))
    b2 = jnp.broadcast_to(b2_ref[0, :], (M, D))
    g1 = jnp.broadcast_to(g1_ref[0, :], (M, D))
    be1 = jnp.broadcast_to(be1_ref[0, :], (M, D))
    g2 = jnp.broadcast_to(g2_ref[0, :], (M, D))
    be2 = jnp.broadcast_to(be2_ref[0, :], (M, D))

    def layer(x):
        # --- merged Q/K/V projection: one bf16 MXU pass, f32 accumulation ---
        # pos / bias / softmax-scale contributions are pre-folded into cq/ck/bv.
        qkv = jnp.dot(x.astype(jnp.bfloat16), wqkv,
                      preferred_element_type=jnp.float32)       # (M, 3D)
        q = qkv[:, 0:D] + cq
        k = qkv[:, D:2 * D] + ck
        v = qkv[:, 2 * D:3 * D] + bv

        # --- attention, per batch element (no cross-batch token mixing) ---
        # bb is a static Python int, so this loop is unrolled at trace time.
        attn_rows = []
        for b in range(bb):
            rs = slice(b * S, (b + 1) * S)                       # static, 8-row aligned
            qh = q[rs].reshape(S, nhead, hd).astype(jnp.bfloat16)
            kh = k[rs].reshape(S, nhead, hd).astype(jnp.bfloat16)
            vh = v[rs].reshape(S, nhead, hd).astype(jnp.bfloat16)
            # TODO(synk): at real model sizes, verify with pl.lower_as_mlir that
            # these head-batched einsums do not insert per-einsum XLU relayouts;
            # if they do, switch to one explicit head-major relayout per layer.
            s = jnp.einsum('qhd,khd->hqk', qh, kh,
                           preferred_element_type=jnp.float32)   # scale folded into Wq
            m = jnp.max(s, axis=-1, keepdims=True)
            p = jnp.exp(s - m)
            p = p * pl.reciprocal(jnp.sum(p, axis=-1, keepdims=True), approx=True)
            a = jnp.einsum('hqk,khd->qhd', p.astype(jnp.bfloat16), vh,
                           preferred_element_type=jnp.float32)
            attn_rows.append(a.reshape(S, D))
        attn = attn_rows[0] if bb == 1 else jnp.concatenate(attn_rows, axis=0)

        attn_out = jnp.dot(attn.astype(jnp.bfloat16), wo,
                           preferred_element_type=jnp.float32) + bo

        # Residual + LayerNorm1 (dropout = identity in eval)
        x1 = _layernorm_1pass(x + attn_out, g1, be1)

        # Feed-forward: Linear1 -> ReLU -> Linear2 (bf16 operands, f32 acc)
        h = jnp.maximum(
            jnp.dot(x1.astype(jnp.bfloat16), w1, preferred_element_type=jnp.float32) + b1,
            0.0)
        f = jnp.dot(h.astype(jnp.bfloat16), w2,
                    preferred_element_type=jnp.float32) + b2

        # Residual + LayerNorm2
        return _layernorm_1pass(x1 + f, g2, be2)

    x0 = src_ref[...].astype(jnp.float32).reshape(M, D)
    # Layers are serially dependent: unrolling buys no cross-iteration ILP, so
    # only unroll shallow stacks (deep stacks would bloat vreg live ranges).
    x = lax.fori_loop(0, num_layers, lambda _i, acc: layer(acc), x0,
                      unroll=(num_layers <= 3))

    if has_final_norm:   # static Python branch
        x = _layernorm_1pass(x,
                             jnp.broadcast_to(gf_ref[0, :], (M, D)),
                             jnp.broadcast_to(bf_ref[0, :], (M, D)))

    out_ref[...] = x.reshape(bb, S, D).astype(out_ref.dtype)


def transformer_encoder(src, pos, layer_params, num_layers, nhead,
                        norm_params=None, batch_block=None):
    """TransformerEncoder.forward: fused stack of identical layers + optional norm.

    src: (B, S, D), pos: (S, D) broadcast over batch.
    """
    B, S, D = src.shape
    F = layer_params['w1'].shape[0]
    hd = D // nhead
    scale = 1.0 / math.sqrt(hd)

    # ---- generation-aware batch blocking ---------------------------------
    # Single-TC chips (v5e/v6e): fold the whole batch into one grid step.
    # Multi-TC chips (v4/v5p/v7x): keep the batch on a parallel grid axis.
    if batch_block is None:
        try:
            kind = jax.devices()[0].device_kind.lower()
        except Exception:
            kind = ""
        multi_tc = any(t in kind for t in ("v7", "7x", "v4", "v5p"))
        batch_block = 1 if multi_tc else B
    assert B % batch_block == 0
    bb = batch_block

    # ---- host-side one-time weight re-layout (no in-kernel transposes) ----
    wqkv = layer_params['wqkv']                       # (3D, D): [Wq; Wk; Wv]
    wq_t = jnp.transpose(wqkv[0:D, :])                # (D, D) = Wq^T
    wk_t = jnp.transpose(wqkv[D:2 * D, :])            # (D, D) = Wk^T
    wv_t = jnp.transpose(wqkv[2 * D:3 * D, :])        # (D, D) = Wv^T
    # softmax 1/sqrt(hd) folded into the Q half; Q|K|V merged into one matmul.
    wqkv_t = jnp.concatenate([wq_t * scale, wk_t, wv_t], axis=1).astype(jnp.bfloat16)

    bqkv3 = layer_params['bqkv'].reshape(3, D)        # rows = bq, bk, bv
    # pos is layer-invariant => its projection (plus bias and softmax scale)
    # is computed ONCE here and becomes an additive constant inside the kernel.
    const_q = (pos @ wq_t + bqkv3[0]) * scale         # (S, D) f32
    const_k = pos @ wk_t + bqkv3[1]                   # (S, D) f32
    cq = jnp.tile(const_q, (bb, 1))                   # (bb*S, D)
    ck = jnp.tile(const_k, (bb, 1))
    bv_row = bqkv3[2:3]                               # (1, D)

    wo_t = jnp.transpose(layer_params['wo']).astype(jnp.bfloat16)   # (D, D)
    w1_t = jnp.transpose(layer_params['w1']).astype(jnp.bfloat16)   # (D, F)
    w2_t = jnp.transpose(layer_params['w2']).astype(jnp.bfloat16)   # (F, D)

    has_norm = norm_params is not None
    gf = norm_params['g'] if has_norm else jnp.ones((1, D), jnp.float32)
    bfin = norm_params['b'] if has_norm else jnp.zeros((1, D), jnp.float32)

    kernel = functools.partial(_encoder_kernel, nhead, num_layers, has_norm)

    seq_spec = pl.BlockSpec((bb, S, D), lambda i: (i, 0, 0))

    def const_spec(shape):
        rank = len(shape)
        return pl.BlockSpec(shape, lambda i, _r=rank: (0,) * _r)

    in_specs = [
        seq_spec,                      # src
        const_spec((bb * S, D)),       # const_q (pos@Wq + bq)*scale, tiled over bb
        const_spec((bb * S, D)),       # const_k  pos@Wk + bk,        tiled over bb
        const_spec((D, 3 * D)),        # merged [Wq^T*scale | Wk^T | Wv^T]  (bf16)
        const_spec((1, D)),            # bv
        const_spec((D, D)),            # wo^T (bf16)
        const_spec((1, D)),            # bo
        const_spec((D, F)),            # w1^T (bf16)
        const_spec((1, F)),            # b1
        const_spec((F, D)),            # w2^T (bf16)
        const_spec((1, D)),            # b2
        const_spec((1, D)),            # norm1 gamma
        const_spec((1, D)),            # norm1 beta
        const_spec((1, D)),            # norm2 gamma
        const_spec((1, D)),            # norm2 beta
        const_spec((1, D)),            # final norm gamma (unused if no norm)
        const_spec((1, D)),            # final norm beta  (unused if no norm)
    ]

    return pl.pallas_call(
        kernel,
        out_shape=jax.ShapeDtypeStruct((B, S, D), src.dtype),
        grid_spec=pltpu.PrefetchScalarGridSpec(
            num_scalar_prefetch=0,
            grid=(B // bb,),
            in_specs=in_specs,
            out_specs=seq_spec,
        ),
        compiler_params=pltpu.CompilerParams(
            dimension_semantics=("parallel",),
            # Explicit VMEM budget (generous at these toy sizes).  Re-derive the
            # budget (and single-buffer the constant weight blocks) before
            # scaling D/F/S to DETR sizes on v7x's 64 MiB physical VMEM.
            vmem_limit_bytes=32 * 1024 * 1024),
    )(src, cq, ck, wqkv_t, bv_row, wo_t, layer_params['bo'],
      w1_t, layer_params['b1'], w2_t, layer_params['b2'],
      layer_params['g1'], layer_params['be1'],
      layer_params['g2'], layer_params['be2'],
      gf, bfin)


# ----------------------------- pure-JAX reference -----------------------------
def _layernorm_ref(x, gamma, beta):
    mean = jnp.mean(x, axis=-1, keepdims=True)
    var = jnp.mean((x - mean) ** 2, axis=-1, keepdims=True)
    return (x - mean) * lax.rsqrt(var + EPS) * gamma + beta


def _ref_layer(src, pos, p, nhead):
    B, S, D = src.shape
    hd = D // nhead
    qk_in = src + pos[None]
    q = qk_in @ p['wqkv'][0:D].T + p['bqkv'][0, 0:D]
    k = qk_in @ p['wqkv'][D:2 * D].T + p['bqkv'][0, D:2 * D]
    v = src @ p['wqkv'][2 * D:].T + p['bqkv'][0, 2 * D:]
    qh = q.reshape(B, S, nhead, hd).transpose(0, 2, 1, 3)
    kh = k.reshape(B, S, nhead, hd).transpose(0, 2, 1, 3)
    vh = v.reshape(B, S, nhead, hd).transpose(0, 2, 1, 3)
    sc = jnp.einsum('bhqd,bhkd->bhqk', qh, kh) / math.sqrt(hd)
    pr = jax.nn.softmax(sc, axis=-1)
    at = jnp.einsum('bhqk,bhkd->bhqd', pr, vh).transpose(0, 2, 1, 3).reshape(B, S, D)
    at = at @ p['wo'].T + p['bo'][0]
    x = _layernorm_ref(src + at, p['g1'][0], p['be1'][0])
    h = jnp.maximum(x @ p['w1'].T + p['b1'][0], 0.0)
    f = h @ p['w2'].T + p['b2'][0]
    return _layernorm_ref(x + f, p['g2'][0], p['be2'][0])


def _ref_encoder(src, pos, p, num_layers, nhead, norm_params):
    out = src
    for _ in range(num_layers):
        out = _ref_layer(out, pos, p, nhead)
    if norm_params is not None:
        out = _layernorm_ref(out, norm_params['g'][0], norm_params['b'][0])
    return out


# ------------------------------------ main ------------------------------------
if __name__ == "__main__":
    B, S, D = 2, 8, 32          # batch, sequence, d_model
    NHEAD = 4
    FF = 64                     # dim_feedforward
    NUM_LAYERS = 2

    key = jax.random.PRNGKey(0)
    ks = jax.random.split(key, 12)

    scale = 0.05
    # TODO(synk): nn.TransformerEncoder deep-copies the layer, so weights are only
    # guaranteed identical at init; trained per-layer weights would need a list of
    # param dicts (API limitation of this shared-weight wrapper, not a kernel bug).
    layer_params = {
        'wqkv': scale * jax.random.normal(ks[0], (3 * D, D), jnp.float32),
        'bqkv': scale * jax.random.normal(ks[1], (1, 3 * D), jnp.float32),
        'wo':   scale * jax.random.normal(ks[2], (D, D), jnp.float32),
        'bo':   scale * jax.random.normal(ks[3], (1, D), jnp.float32),
        'w1':   scale * jax.random.normal(ks[4], (FF, D), jnp.float32),
        'b1':   scale * jax.random.normal(ks[5], (1, FF), jnp.float32),
        'w2':   scale * jax.random.normal(ks[6], (D, FF), jnp.float32),
        'b2':   scale * jax.random.normal(ks[7], (1, D), jnp.float32),
        'g1':   jnp.ones((1, D), jnp.float32),
        'be1':  jnp.zeros((1, D), jnp.float32),
        'g2':   jnp.ones((1, D), jnp.float32),
        'be2':  jnp.zeros((1, D), jnp.float32),
    }
    norm_params = {
        'g': jnp.ones((1, D), jnp.float32),
        'b': jnp.zeros((1, D), jnp.float32),
    }

    src = jax.random.normal(ks[8], (B, S, D), jnp.float32)   # (B, S, D)
    pos = jax.random.normal(ks[9], (S, D), jnp.float32)      # (S, D), broadcast over batch

    out = transformer_encoder(src, pos, layer_params, NUM_LAYERS, NHEAD,
                              norm_params=norm_params)
    out = jax.block_until_ready(out)

    ref = _ref_encoder(src, pos, layer_params, NUM_LAYERS, NHEAD, norm_params)
    assert out.shape == (B, S, D)
    # Kernel runs the MXU path in bf16 (f32 accumulation, f32 LayerNorm/softmax),
    # so compare against the pure-f32 reference at a bf16-appropriate tolerance.
    assert jnp.allclose(out, ref, atol=2e-2, rtol=2e-2), "mismatch vs JAX reference"

    print("KERNEL_OK")
</pallas_src>

<mosaic_0001>
module attributes {stable_mosaic.version = 11 : i64} {
  func.func @_encoder_kernel(%arg0: i32, %arg1: memref<2x8x32xf32, #tpu.memory_space<vmem>>, %arg2: memref<16x32xf32, #tpu.memory_space<vmem>>, %arg3: memref<16x32xf32, #tpu.memory_space<vmem>>, %arg4: memref<32x96xbf16, #tpu.memory_space<vmem>>, %arg5: memref<1x32xf32, #tpu.memory_space<vmem>>, %arg6: memref<32x32xbf16, #tpu.memory_space<vmem>>, %arg7: memref<1x32xf32, #tpu.memory_space<vmem>>, %arg8: memref<32x64xbf16, #tpu.memory_space<vmem>>, %arg9: memref<1x64xf32, #tpu.memory_space<vmem>>, %arg10: memref<64x32xbf16, #tpu.memory_space<vmem>>, %arg11: memref<1x32xf32, #tpu.memory_space<vmem>>, %arg12: memref<1x32xf32, #tpu.memory_space<vmem>>, %arg13: memref<1x32xf32, #tpu.memory_space<vmem>>, %arg14: memref<1x32xf32, #tpu.memory_space<vmem>>, %arg15: memref<1x32xf32, #tpu.memory_space<vmem>>, %arg16: memref<1x32xf32, #tpu.memory_space<vmem>>, %arg17: memref<1x32xf32, #tpu.memory_space<vmem>>, %arg18: memref<2x8x32xf32, #tpu.memory_space<vmem>>) attributes {dimension_semantics = [#tpu.dimension_semantics<parallel>], iteration_bounds = array<i64: 1>, scalar_prefetch = 0 : i64, scratch_operands = 0 : i64, tpu.core_type = #tpu.core_type<tc>, window_params = [{transform_indices = @transform_0, window_bounds = array<i64: 2, 8, 32>}, {pipeline_mode = #tpu.pipeline_mode<synchronous>, transform_indices = @transform_1, window_bounds = array<i64: 16, 32>}, {pipeline_mode = #tpu.pipeline_mode<synchronous>, transform_indices = @transform_2, window_bounds = array<i64: 16, 32>}, {pipeline_mode = #tpu.pipeline_mode<synchronous>, transform_indices = @transform_3, window_bounds = array<i64: 32, 96>}, {pipeline_mode = #tpu.pipeline_mode<synchronous>, transform_indices = @transform_4, window_bounds = array<i64: 1, 32>}, {pipeline_mode = #tpu.pipeline_mode<synchronous>, transform_indices = @transform_5, window_bounds = array<i64: 32, 32>}, {pipeline_mode = #tpu.pipeline_mode<synchronous>, transform_indices = @transform_6, window_bounds = array<i64: 1, 32>}, {pipeline_mode = #tpu.pipeline_mode<synchronous>, transform_indices = @transform_7, window_bounds = array<i64: 32, 64>}, {pipeline_mode = #tpu.pipeline_mode<synchronous>, transform_indices = @transform_8, window_bounds = array<i64: 1, 64>}, {pipeline_mode = #tpu.pipeline_mode<synchronous>, transform_indices = @transform_9, window_bounds = array<i64: 64, 32>}, {pipeline_mode = #tpu.pipeline_mode<synchronous>, transform_indices = @transform_10, window_bounds = array<i64: 1, 32>}, {pipeline_mode = #tpu.pipeline_mode<synchronous>, transform_indices = @transform_11, window_bounds = array<i64: 1, 32>}, {pipeline_mode = #tpu.pipeline_mode<synchronous>, transform_indices = @transform_12, window_bounds = array<i64: 1, 32>}, {pipeline_mode = #tpu.pipeline_mode<synchronous>, transform_indices = @transform_13, window_bounds = array<i64: 1, 32>}, {pipeline_mode = #tpu.pipeline_mode<synchronous>, transform_indices = @transform_14, window_bounds = array<i64: 1, 32>}, {pipeline_mode = #tpu.pipeline_mode<synchronous>, transform_indices = @transform_15, window_bounds = array<i64: 1, 32>}, {pipeline_mode = #tpu.pipeline_mode<synchronous>, transform_indices = @transform_16, window_bounds = array<i64: 1, 32>}, {transform_indices = @transform_17, window_bounds = array<i64: 2, 8, 32>}]} {
    %c0 = arith.constant 0 : index
    %c0_0 = arith.constant 0 : index
    %0 = vector.load %arg4[%c0, %c0_0] : memref<32x96xbf16, #tpu.memory_space<vmem>>, vector<32x96xbf16>
    %c0_1 = arith.constant 0 : index
    %c0_2 = arith.constant 0 : index
    %1 = vector.load %arg6[%c0_1, %c0_2] : memref<32x32xbf16, #tpu.memory_space<vmem>>, vector<32x32xbf16>
    %c0_3 = arith.constant 0 : index
    %c0_4 = arith.constant 0 : index
    %2 = vector.load %arg8[%c0_3, %c0_4] : memref<32x64xbf16, #tpu.memory_space<vmem>>, vector<32x64xbf16>
    %c0_5 = arith.constant 0 : index
    %c0_6 = arith.constant 0 : index
    %3 = vector.load %arg10[%c0_5, %c0_6] : memref<64x32xbf16, #tpu.memory_space<vmem>>, vector<64x32xbf16>
    %c0_7 = arith.constant 0 : index
    %c0_8 = arith.constant 0 : index
    %4 = vector.load %arg2[%c0_7, %c0_8] : memref<16x32xf32, #tpu.memory_space<vmem>>, vector<16x32xf32>
    %c0_9 = arith.constant 0 : index
    %c0_10 = arith.constant 0 : index
    %5 = vector.load %arg3[%c0_9, %c0_10] : memref<16x32xf32, #tpu.memory_space<vmem>>, vector<16x32xf32>
    %c0_11 = arith.constant 0 : index
    %c0_12 = arith.constant 0 : index
    %6 = vector.load %arg5[%c0_11, %c0_12] : memref<1x32xf32, #tpu.memory_space<vmem>>, vector<1x32xf32>
    %7 = vector.shape_cast %6 : vector<1x32xf32> to vector<32xf32>
    %8 = vector.shape_cast %7 : vector<32xf32> to vector<1x32xf32>
    %9 = vector.broadcast %8 : vector<1x32xf32> to vector<16x32xf32>
    %c0_13 = arith.constant 0 : index
    %c0_14 = arith.constant 0 : index
    %10 = vector.load %arg7[%c0_13, %c0_14] : memref<1x32xf32, #tpu.memory_space<vmem>>, vector<1x32xf32>
    %11 = vector.shape_cast %10 : vector<1x32xf32> to vector<32xf32>
    %12 = vector.shape_cast %11 : vector<32xf32> to vector<1x32xf32>
    %13 = vector.broadcast %12 : vector<1x32xf32> to vector<16x32xf32>
    %c0_15 = arith.constant 0 : index
    %c0_16 = arith.constant 0 : index
    %14 = vector.load %arg9[%c0_15, %c0_16] : memref<1x64xf32, #tpu.memory_space<vmem>>, vector<1x64xf32>
    %15 = vector.shape_cast %14 : vector<1x64xf32> to vector<64xf32>
    %16 = vector.shape_cast %15 : vector<64xf32> to vector<1x64xf32>
    %17 = vector.broadcast %16 : vector<1x64xf32> to vector<16x64xf32>
    %c0_17 = arith.constant 0 : index
    %c0_18 = arith.constant 0 : index
    %18 = vector.load %arg11[%c0_17, %c0_18] : memref<1x32xf32, #tpu.memory_space<vmem>>, vector<1x32xf32>
    %19 = vector.shape_cast %18 : vector<1x32xf32> to vector<32xf32>
    %20 = vector.shape_cast %19 : vector<32xf32> to vector<1x32xf32>
    %21 = vector.broadcast %20 : vector<1x32xf32> to vector<16x32xf32>
    %c0_19 = arith.constant 0 : index
    %c0_20 = arith.constant 0 : index
    %22 = vector.load %arg12[%c0_19, %c0_20] : memref<1x32xf32, #tpu.memory_space<vmem>>, vector<1x32xf32>
    %23 = vector.shape_cast %22 : vector<1x32xf32> to vector<32xf32>
    %24 = vector.shape_cast %23 : vector<32xf32> to vector<1x32xf32>
    %25 = vector.broadcast %24 : vector<1x32xf32> to vector<16x32xf32>
    %c0_21 = arith.constant 0 : index
    %c0_22 = arith.constant 0 : index
    %26 = vector.load %arg13[%c0_21, %c0_22] : memref<1x32xf32, #tpu.memory_space<vmem>>, vector<1x32xf32>
    %27 = vector.shape_cast %26 : vector<1x32xf32> to vector<32xf32>
    %28 = vector.shape_cast %27 : vector<32xf32> to vector<1x32xf32>
    %29 = vector.broadcast %28 : vector<1x32xf32> to vector<16x32xf32>
    %c0_23 = arith.constant 0 : index
    %c0_24 = arith.constant 0 : index
    %30 = vector.load %arg14[%c0_23, %c0_24] : memref<1x32xf32, #tpu.memory_space<vmem>>, vector<1x32xf32>
    %31 = vector.shape_cast %30 : vector<1x32xf32> to vector<32xf32>
    %32 = vector.shape_cast %31 : vector<32xf32> to vector<1x32xf32>
    %33 = vector.broadcast %32 : vector<1x32xf32> to vector<16x32xf32>
    %c0_25 = arith.constant 0 : index
    %c0_26 = arith.constant 0 : index
    %34 = vector.load %arg15[%c0_25, %c0_26] : memref<1x32xf32, #tpu.memory_space<vmem>>, vector<1x32xf32>
    %35 = vector.shape_cast %34 : vector<1x32xf32> to vector<32xf32>
    %36 = vector.shape_cast %35 : vector<32xf32> to vector<1x32xf32>
    %37 = vector.broadcast %36 : vector<1x32xf32> to vector<16x32xf32>
    %c0_27 = arith.constant 0 : index
    %c0_28 = arith.constant 0 : index
    %c0_29 = arith.constant 0 : index
    %38 = vector.load %arg1[%c0_27, %c0_28, %c0_29] : memref<2x8x32xf32, #tpu.memory_space<vmem>>, vector<2x8x32xf32>
    %39 = vector.shape_cast %38 : vector<2x8x32xf32> to vector<16x32xf32>
    %c0_i32 = arith.constant 0 : i32
    %40 = arith.truncf %39 : vector<16x32xf32> to vector<16x32xbf16>
    %cst = arith.constant dense<0.000000e+00> : vector<16x96xf32>
    %41 = tpu.matmul %40, %0, %cst {dimension_numbers = #tpu.dot_dimension_numbers<[1], [0], [0], [1], [0, 0, 1, 1], [], []>} : vector<16x32xbf16>, vector<32x96xbf16>, vector<16x96xf32> -> vector<16x96xf32>
    %42 = vector.extract_strided_slice %41 {offsets = [0, 0], sizes = [16, 32], strides = [1, 1]} : vector<16x96xf32> to vector<16x32xf32>
    %43 = arith.addf %42, %4 : vector<16x32xf32>
    %44 = vector.extract_strided_slice %41 {offsets = [0, 32], sizes = [16, 32], strides = [1, 1]} : vector<16x96xf32> to vector<16x32xf32>
    %45 = arith.addf %44, %5 : vector<16x32xf32>
    %46 = vector.extract_strided_slice %41 {offsets = [0, 64], sizes = [16, 32], strides = [1, 1]} : vector<16x96xf32> to vector<16x32xf32>
    %47 = arith.addf %46, %9 : vector<16x32xf32>
    %48 = vector.extract_strided_slice %43 {offsets = [0, 0], sizes = [8, 32], strides = [1, 1]} : vector<16x32xf32> to vector<8x32xf32>
    %49 = vector.shape_cast %48 : vector<8x32xf32> to vector<8x4x8xf32>
    %50 = arith.truncf %49 : vector<8x4x8xf32> to vector<8x4x8xbf16>
    %51 = vector.extract_strided_slice %45 {offsets = [0, 0], sizes = [8, 32], strides = [1, 1]} : vector<16x32xf32> to vector<8x32xf32>
    %52 = vector.shape_cast %51 : vector<8x32xf32> to vector<8x4x8xf32>
    %53 = arith.truncf %52 : vector<8x4x8xf32> to vector<8x4x8xbf16>
    %54 = vector.extract_strided_slice %47 {offsets = [0, 0], sizes = [8, 32], strides = [1, 1]} : vector<16x32xf32> to vector<8x32xf32>
    %55 = vector.shape_cast %54 : vector<8x32xf32> to vector<8x4x8xf32>
    %56 = arith.truncf %55 : vector<8x4x8xf32> to vector<8x4x8xbf16>
    "tpu.trace_start"() <{level = 10 : i32, message = "qhd,khd->hqk"}> : () -> ()
    %cst_30 = arith.constant dense<0.000000e+00> : vector<4x8x8xf32>
    %57 = tpu.matmul %50, %53, %cst_30 {dimension_numbers = #tpu.dot_dimension_numbers<[2], [2], [0], [0], [0, 1, 0, 0, 1, 0], [1], [1]>} : vector<8x4x8xbf16>, vector<8x4x8xbf16>, vector<4x8x8xf32> -> vector<4x8x8xf32>
    "tpu.trace_stop"() : () -> ()
    %cst_31 = arith.constant dense<0xFF800000> : vector<4x8xf32>
    %58 = vector.multi_reduction <maximumf>, %57, %cst_31 [2] : vector<4x8x8xf32> to vector<4x8xf32>
    %59 = vector.shape_cast %58 : vector<4x8xf32> to vector<4x8x1xf32>
    %60 = vector.broadcast %59 : vector<4x8x1xf32> to vector<4x8x8xf32>
    %61 = arith.subf %57, %60 : vector<4x8x8xf32>
    %62 = math.exp %61 : vector<4x8x8xf32>
    %cst_32 = arith.constant dense<0.000000e+00> : vector<4x8xf32>
    %63 = vector.multi_reduction <add>, %62, %cst_32 [2] : vector<4x8x8xf32> to vector<4x8xf32>
    %64 = vector.shape_cast %63 : vector<4x8xf32> to vector<4x8x1xf32>
    %65 = tpu.reciprocal %64 {approx = true} : vector<4x8x1xf32> -> vector<4x8x1xf32>
    %66 = vector.broadcast %65 : vector<4x8x1xf32> to vector<4x8x8xf32>
    %67 = arith.mulf %62, %66 : vector<4x8x8xf32>
    %68 = arith.truncf %67 : vector<4x8x8xf32> to vector<4x8x8xbf16>
    "tpu.trace_start"() <{level = 10 : i32, message = "hqk,khd->qhd"}> : () -> ()
    %cst_33 = arith.constant dense<0.000000e+00> : vector<4x8x8xf32>
    %69 = tpu.matmul %56, %68, %cst_33 {dimension_numbers = #tpu.dot_dimension_numbers<[0], [2], [2], [1], [0, 1, 0, 2, 1, 1], [1], [0]>} : vector<8x4x8xbf16>, vector<4x8x8xbf16>, vector<4x8x8xf32> -> vector<4x8x8xf32>
    %70 = tpu.transpose %69, [2, 0, 1] : vector<4x8x8xf32> -> vector<8x4x8xf32>
    "tpu.trace_stop"() : () -> ()
    %71 = vector.shape_cast %70 : vector<8x4x8xf32> to vector<8x32xf32>
    %72 = vector.extract_strided_slice %43 {offsets = [8, 0], sizes = [8, 32], strides = [1, 1]} : vector<16x32xf32> to vector<8x32xf32>
    %73 = vector.shape_cast %72 : vector<8x32xf32> to vector<8x4x8xf32>
    %74 = arith.truncf %73 : vector<8x4x8xf32> to vector<8x4x8xbf16>
    %75 = vector.extract_strided_slice %45 {offsets = [8, 0], sizes = [8, 32], strides = [1, 1]} : vector<16x32xf32> to vector<8x32xf32>
    %76 = vector.shape_cast %75 : vector<8x32xf32> to vector<8x4x8xf32>
    %77 = arith.truncf %76 : vector<8x4x8xf32> to vector<8x4x8xbf16>
    %78 = vector.extract_strided_slice %47 {offsets = [8, 0], sizes = [8, 32], strides = [1, 1]} : vector<16x32xf32> to vector<8x32xf32>
    %79 = vector.shape_cast %78 : vector<8x32xf32> to vector<8x4x8xf32>
    %80 = arith.truncf %79 : vector<8x4x8xf32> to vector<8x4x8xbf16>
    "tpu.trace_start"() <{level = 10 : i32, message = "qhd,khd->hqk"}> : () -> ()
    %cst_34 = arith.constant dense<0.000000e+00> : vector<4x8x8xf32>
    %81 = tpu.matmul %74, %77, %cst_34 {dimension_numbers = #tpu.dot_dimension_numbers<[2], [2], [0], [0], [0, 1, 0, 0, 1, 0], [1], [1]>} : vector<8x4x8xbf16>, vector<8x4x8xbf16>, vector<4x8x8xf32> -> vector<4x8x8xf32>
    "tpu.trace_stop"() : () -> ()
    %cst_35 = arith.constant dense<0xFF800000> : vector<4x8xf32>
    %82 = vector.multi_reduction <maximumf>, %81, %cst_35 [2] : vector<4x8x8xf32> to vector<4x8xf32>
    %83 = vector.shape_cast %82 : vector<4x8xf32> to vector<4x8x1xf32>
    %84 = vector.broadcast %83 : vector<4x8x1xf32> to vector<4x8x8xf32>
    %85 = arith.subf %81, %84 : vector<4x8x8xf32>
    %86 = math.exp %85 : vector<4x8x8xf32>
    %cst_36 = arith.constant dense<0.000000e+00> : vector<4x8xf32>
    %87 = vector.multi_reduction <add>, %86, %cst_36 [2] : vector<4x8x8xf32> to vector<4x8xf32>
    %88 = vector.shape_cast %87 : vector<4x8xf32> to vector<4x8x1xf32>
    %89 = tpu.reciprocal %88 {approx = true} : vector<4x8x1xf32> -> vector<4x8x1xf32>
    %90 = vector.broadcast %89 : vector<4x8x1xf32> to vector<4x8x8xf32>
    %91 = arith.mulf %86, %90 : vector<4x8x8xf32>
    %92 = arith.truncf %91 : vector<4x8x8xf32> to vector<4x8x8xbf16>
    "tpu.trace_start"() <{level = 10 : i32, message = "hqk,khd->qhd"}> : () -> ()
    %cst_37 = arith.constant dense<0.000000e+00> : vector<4x8x8xf32>
    %93 = tpu.matmul %80, %92, %cst_37 {dimension_numbers = #tpu.dot_dimension_numbers<[0], [2], [2], [1], [0, 1, 0, 2, 1, 1], [1], [0]>} : vector<8x4x8xbf16>, vector<4x8x8xbf16>, vector<4x8x8xf32> -> vector<4x8x8xf32>
    %94 = tpu.transpose %93, [2, 0, 1] : vector<4x8x8xf32> -> vector<8x4x8xf32>
    "tpu.trace_stop"() : () -> ()
    %95 = vector.shape_cast %94 : vector<8x4x8xf32> to vector<8x32xf32>
    %96 = tpu.concatenate %71, %95 in 0 : vector<8x32xf32>, vector<8x32xf32> -> vector<16x32xf32>
    %97 = arith.truncf %96 : vector<16x32xf32> to vector<16x32xbf16>
    %cst_38 = arith.constant dense<0.000000e+00> : vector<16x32xf32>
    %98 = tpu.matmul %97, %1, %cst_38 {dimension_numbers = #tpu.dot_dimension_numbers<[1], [0], [0], [1], [0, 0, 1, 1], [], []>} : vector<16x32xbf16>, vector<32x32xbf16>, vector<16x32xf32> -> vector<16x32xf32>
    %99 = arith.addf %98, %13 : vector<16x32xf32>
    %100 = arith.addf %39, %99 : vector<16x32xf32>
    %cst_39 = arith.constant dense<0.000000e+00> : vector<16xf32>
    %101 = vector.multi_reduction <add>, %100, %cst_39 [1] : vector<16x32xf32> to vector<16xf32>
    %102 = vector.shape_cast %101 : vector<16xf32> to vector<16x1xf32>
    %cst_40 = arith.constant 3.200000e+01 : f32
    %103 = vector.broadcast %cst_40 : f32 to vector<16x1xf32>
    %104 = arith.divf %102, %103 : vector<16x1xf32>
    %105 = arith.mulf %100, %100 : vector<16x32xf32>
    %cst_41 = arith.constant dense<0.000000e+00> : vector<16xf32>
    %106 = vector.multi_reduction <add>, %105, %cst_41 [1] : vector<16x32xf32> to vector<16xf32>
    %107 = vector.shape_cast %106 : vector<16xf32> to vector<16x1xf32>
    %cst_42 = arith.constant 3.200000e+01 : f32
    %108 = vector.broadcast %cst_42 : f32 to vector<16x1xf32>
    %109 = arith.divf %107, %108 : vector<16x1xf32>
    %110 = arith.mulf %104, %104 : vector<16x1xf32>
    %111 = arith.subf %109, %110 : vector<16x1xf32>
    %cst_43 = arith.constant 0.000000e+00 : f32
    %112 = vector.broadcast %cst_43 : f32 to vector<16x1xf32>
    %113 = arith.maximumf %111, %112 : vector<16x1xf32>
    %114 = vector.broadcast %104 : vector<16x1xf32> to vector<16x32xf32>
    %115 = arith.subf %100, %114 : vector<16x32xf32>
    %cst_44 = arith.constant 9.99999974E-6 : f32
    %116 = vector.broadcast %cst_44 : f32 to vector<16x1xf32>
    %117 = arith.addf %113, %116 : vector<16x1xf32>
    %118 = math.rsqrt %117 : vector<16x1xf32>
    %119 = vector.broadcast %118 : vector<16x1xf32> to vector<16x32xf32>
    %120 = arith.mulf %115, %119 : vector<16x32xf32>
    %121 = arith.mulf %120, %25 : vector<16x32xf32>
    %122 = arith.addf %121, %29 : vector<16x32xf32>
    %123 = arith.truncf %122 : vector<16x32xf32> to vector<16x32xbf16>
    %cst_45 = arith.constant dense<0.000000e+00> : vector<16x64xf32>
    %124 = tpu.matmul %123, %2, %cst_45 {dimension_numbers = #tpu.dot_dimension_numbers<[1], [0], [0], [1], [0, 0, 1, 1], [], []>} : vector<16x32xbf16>, vector<32x64xbf16>, vector<16x64xf32> -> vector<16x64xf32>
    %125 = arith.addf %124, %17 : vector<16x64xf32>
    %cst_46 = arith.constant 0.000000e+00 : f32
    %126 = vector.broadcast %cst_46 : f32 to vector<16x64xf32>
    %127 = arith.maximumf %125, %126 : vector<16x64xf32>
    %128 = arith.truncf %127 : vector<16x64xf32> to vector<16x64xbf16>
    %cst_47 = arith.constant dense<0.000000e+00> : vector<16x32xf32>
    %129 = tpu.matmul %128, %3, %cst_47 {dimension_numbers = #tpu.dot_dimension_numbers<[1], [0], [0], [1], [0, 0, 1, 1], [], []>} : vector<16x64xbf16>, vector<64x32xbf16>, vector<16x32xf32> -> vector<16x32xf32>
    %130 = arith.addf %129, %21 : vector<16x32xf32>
    %131 = arith.addf %122, %130 : vector<16x32xf32>
    %cst_48 = arith.constant dense<0.000000e+00> : vector<16xf32>
    %132 = vector.multi_reduction <add>, %131, %cst_48 [1] : vector<16x32xf32> to vector<16xf32>
    %133 = vector.shape_cast %132 : vector<16xf32> to vector<16x1xf32>
    %cst_49 = arith.constant 3.200000e+01 : f32
    %134 = vector.broadcast %cst_49 : f32 to vector<16x1xf32>
    %135 = arith.divf %133, %134 : vector<16x1xf32>
    %136 = arith.mulf %131, %131 : vector<16x32xf32>
    %cst_50 = arith.constant dense<0.000000e+00> : vector<16xf32>
    %137 = vector.multi_reduction <add>, %136, %cst_50 [1] : vector<16x32xf32> to vector<16xf32>
    %138 = vector.shape_cast %137 : vector<16xf32> to vector<16x1xf32>
    %cst_51 = arith.constant 3.200000e+01 : f32
    %139 = vector.broadcast %cst_51 : f32 to vector<16x1xf32>
    %140 = arith.divf %138, %139 : vector<16x1xf32>
    %141 = arith.mulf %135, %135 : vector<16x1xf32>
    %142 = arith.subf %140, %141 : vector<16x1xf32>
    %cst_52 = arith.constant 0.000000e+00 : f32
    %143 = vector.broadcast %cst_52 : f32 to vector<16x1xf32>
    %144 = arith.maximumf %142, %143 : vector<16x1xf32>
    %145 = vector.broadcast %135 : vector<16x1xf32> to vector<16x32xf32>
    %146 = arith.subf %131, %145 : vector<16x32xf32>
    %cst_53 = arith.constant 9.99999974E-6 : f32
    %147 = vector.broadcast %cst_53 : f32 to vector<16x1xf32>
    %148 = arith.addf %144, %147 : vector<16x1xf32>
    %149 = math.rsqrt %148 : vector<16x1xf32>
    %150 = vector.broadcast %149 : vector<16x1xf32> to vector<16x32xf32>
    %151 = arith.mulf %146, %150 : vector<16x32xf32>
    %152 = arith.mulf %151, %33 : vector<16x32xf32>
    %153 = arith.addf %152, %37 : vector<16x32xf32>
    %c1_i32 = arith.constant 1 : i32
    %154 = arith.truncf %153 : vector<16x32xf32> to vector<16x32xbf16>
    %cst_54 = arith.constant dense<0.000000e+00> : vector<16x96xf32>
    %155 = tpu.matmul %154, %0, %cst_54 {dimension_numbers = #tpu.dot_dimension_numbers<[1], [0], [0], [1], [0, 0, 1, 1], [], []>} : vector<16x32xbf16>, vector<32x96xbf16>, vector<16x96xf32> -> vector<16x96xf32>
    %156 = vector.extract_strided_slice %155 {offsets = [0, 0], sizes = [16, 32], strides = [1, 1]} : vector<16x96xf32> to vector<16x32xf32>
    %157 = arith.addf %156, %4 : vector<16x32xf32>
    %158 = vector.extract_strided_slice %155 {offsets = [0, 32], sizes = [16, 32], strides = [1, 1]} : vector<16x96xf32> to vector<16x32xf32>
    %159 = arith.addf %158, %5 : vector<16x32xf32>
    %160 = vector.extract_strided_slice %155 {offsets = [0, 64], sizes = [16, 32], strides = [1, 1]} : vector<16x96xf32> to vector<16x32xf32>
    %161 = arith.addf %160, %9 : vector<16x32xf32>
    %162 = vector.extract_strided_slice %157 {offsets = [0, 0], sizes = [8, 32], strides = [1, 1]} : vector<16x32xf32> to vector<8x32xf32>
    %163 = vector.shape_cast %162 : vector<8x32xf32> to vector<8x4x8xf32>
    %164 = arith.truncf %163 : vector<8x4x8xf32> to vector<8x4x8xbf16>
    %165 = vector.extract_strided_slice %159 {offsets = [0, 0], sizes = [8, 32], strides = [1, 1]} : vector<16x32xf32> to vector<8x32xf32>
    %166 = vector.shape_cast %165 : vector<8x32xf32> to vector<8x4x8xf32>
    %167 = arith.truncf %166 : vector<8x4x8xf32> to vector<8x4x8xbf16>
    %168 = vector.extract_strided_slice %161 {offsets = [0, 0], sizes = [8, 32], strides = [1, 1]} : vector<16x32xf32> to vector<8x32xf32>
    %169 = vector.shape_cast %168 : vector<8x32xf32> to vector<8x4x8xf32>
    %170 = arith.truncf %169 : vector<8x4x8xf32> to vector<8x4x8xbf16>
    "tpu.trace_start"() <{level = 10 : i32, message = "qhd,khd->hqk"}> : () -> ()
    %cst_55 = arith.constant dense<0.000000e+00> : vector<4x8x8xf32>
    %171 = tpu.matmul %164, %167, %cst_55 {dimension_numbers = #tpu.dot_dimension_numbers<[2], [2], [0], [0], [0, 1, 0, 0, 1, 0], [1], [1]>} : vector<8x4x8xbf16>, vector<8x4x8xbf16>, vector<4x8x8xf32> -> vector<4x8x8xf32>
    "tpu.trace_stop"() : () -> ()
    %cst_56 = arith.constant dense<0xFF800000> : vector<4x8xf32>
    %172 = vector.multi_reduction <maximumf>, %171, %cst_56 [2] : vector<4x8x8xf32> to vector<4x8xf32>
    %173 = vector.shape_cast %172 : vector<4x8xf32> to vector<4x8x1xf32>
    %174 = vector.broadcast %173 : vector<4x8x1xf32> to vector<4x8x8xf32>
    %175 = arith.subf %171, %174 : vector<4x8x8xf32>
    %176 = math.exp %175 : vector<4x8x8xf32>
    %cst_57 = arith.constant dense<0.000000e+00> : vector<4x8xf32>
    %177 = vector.multi_reduction <add>, %176, %cst_57 [2] : vector<4x8x8xf32> to vector<4x8xf32>
    %178 = vector.shape_cast %177 : vector<4x8xf32> to vector<4x8x1xf32>
    %179 = tpu.reciprocal %178 {approx = true} : vector<4x8x1xf32> -> vector<4x8x1xf32>
    %180 = vector.broadcast %179 : vector<4x8x1xf32> to vector<4x8x8xf32>
    %181 = arith.mulf %176, %180 : vector<4x8x8xf32>
    %182 = arith.truncf %181 : vector<4x8x8xf32> to vector<4x8x8xbf16>
    "tpu.trace_start"() <{level = 10 : i32, message = "hqk,khd->qhd"}> : () -> ()
    %cst_58 = arith.constant dense<0.000000e+00> : vector<4x8x8xf32>
    %183 = tpu.matmul %170, %182, %cst_58 {dimension_numbers = #tpu.dot_dimension_numbers<[0], [2], [2], [1], [0, 1, 0, 2, 1, 1], [1], [0]>} : vector<8x4x8xbf16>, vector<4x8x8xbf16>, vector<4x8x8xf32> -> vector<4x8x8xf32>
    %184 = tpu.transpose %183, [2, 0, 1] : vector<4x8x8xf32> -> vector<8x4x8xf32>
    "tpu.trace_stop"() : () -> ()
    %185 = vector.shape_cast %184 : vector<8x4x8xf32> to vector<8x32xf32>
    %186 = vector.extract_strided_slice %157 {offsets = [8, 0], sizes = [8, 32], strides = [1, 1]} : vector<16x32xf32> to vector<8x32xf32>
    %187 = vector.shape_cast %186 : vector<8x32xf32> to vector<8x4x8xf32>
    %188 = arith.truncf %187 : vector<8x4x8xf32> to vector<8x4x8xbf16>
    %189 = vector.extract_strided_slice %159 {offsets = [8, 0], sizes = [8, 32], strides = [1, 1]} : vector<16x32xf32> to vector<8x32xf32>
    %190 = vector.shape_cast %189 : vector<8x32xf32> to vector<8x4x8xf32>
    %191 = arith.truncf %190 : vector<8x4x8xf32> to vector<8x4x8xbf16>
    %192 = vector.extract_strided_slice %161 {offsets = [8, 0], sizes = [8, 32], strides = [1, 1]} : vector<16x32xf32> to vector<8x32xf32>
    %193 = vector.shape_cast %192 : vector<8x32xf32> to vector<8x4x8xf32>
    %194 = arith.truncf %193 : vector<8x4x8xf32> to vector<8x4x8xbf16>
    "tpu.trace_start"() <{level = 10 : i32, message = "qhd,khd->hqk"}> : () -> ()
    %cst_59 = arith.constant dense<0.000000e+00> : vector<4x8x8xf32>
    %195 = tpu.matmul %188, %191, %cst_59 {dimension_numbers = #tpu.dot_dimension_numbers<[2], [2], [0], [0], [0, 1, 0, 0, 1, 0], [1], [1]>} : vector<8x4x8xbf16>, vector<8x4x8xbf16>, vector<4x8x8xf32> -> vector<4x8x8xf32>
    "tpu.trace_stop"() : () -> ()
    %cst_60 = arith.constant dense<0xFF800000> : vector<4x8xf32>
    %196 = vector.multi_reduction <maximumf>, %195, %cst_60 [2] : vector<4x8x8xf32> to vector<4x8xf32>
    %197 = vector.shape_cast %196 : vector<4x8xf32> to vector<4x8x1xf32>
    %198 = vector.broadcast %197 : vector<4x8x1xf32> to vector<4x8x8xf32>
    %199 = arith.subf %195, %198 : vector<4x8x8xf32>
    %200 = math.exp %199 : vector<4x8x8xf32>
    %cst_61 = arith.constant dense<0.000000e+00> : vector<4x8xf32>
    %201 = vector.multi_reduction <add>, %200, %cst_61 [2] : vector<4x8x8xf32> to vector<4x8xf32>
    %202 = vector.shape_cast %201 : vector<4x8xf32> to vector<4x8x1xf32>
    %203 = tpu.reciprocal %202 {approx = true} : vector<4x8x1xf32> -> vector<4x8x1xf32>
    %204 = vector.broadcast %203 : vector<4x8x1xf32> to vector<4x8x8xf32>
    %205 = arith.mulf %200, %204 : vector<4x8x8xf32>
    %206 = arith.truncf %205 : vector<4x8x8xf32> to vector<4x8x8xbf16>
    "tpu.trace_start"() <{level = 10 : i32, message = "hqk,khd->qhd"}> : () -> ()
    %cst_62 = arith.constant dense<0.000000e+00> : vector<4x8x8xf32>
    %207 = tpu.matmul %194, %206, %cst_62 {dimension_numbers = #tpu.dot_dimension_numbers<[0], [2], [2], [1], [0, 1, 0, 2, 1, 1], [1], [0]>} : vector<8x4x8xbf16>, vector<4x8x8xbf16>, vector<4x8x8xf32> -> vector<4x8x8xf32>
    %208 = tpu.transpose %207, [2, 0, 1] : vector<4x8x8xf32> -> vector<8x4x8xf32>
    "tpu.trace_stop"() : () -> ()
    %209 = vector.shape_cast %208 : vector<8x4x8xf32> to vector<8x32xf32>
    %210 = tpu.concatenate %185, %209 in 0 : vector<8x32xf32>, vector<8x32xf32> -> vector<16x32xf32>
    %211 = arith.truncf %210 : vector<16x32xf32> to vector<16x32xbf16>
    %cst_63 = arith.constant dense<0.000000e+00> : vector<16x32xf32>
    %212 = tpu.matmul %211, %1, %cst_63 {dimension_numbers = #tpu.dot_dimension_numbers<[1], [0], [0], [1], [0, 0, 1, 1], [], []>} : vector<16x32xbf16>, vector<32x32xbf16>, vector<16x32xf32> -> vector<16x32xf32>
    %213 = arith.addf %212, %13 : vector<16x32xf32>
    %214 = arith.addf %153, %213 : vector<16x32xf32>
    %cst_64 = arith.constant dense<0.000000e+00> : vector<16xf32>
    %215 = vector.multi_reduction <add>, %214, %cst_64 [1] : vector<16x32xf32> to vector<16xf32>
    %216 = vector.shape_cast %215 : vector<16xf32> to vector<16x1xf32>
    %cst_65 = arith.constant 3.200000e+01 : f32
    %217 = vector.broadcast %cst_65 : f32 to vector<16x1xf32>
    %218 = arith.divf %216, %217 : vector<16x1xf32>
    %219 = arith.mulf %214, %214 : vector<16x32xf32>
    %cst_66 = arith.constant dense<0.000000e+00> : vector<16xf32>
    %220 = vector.multi_reduction <add>, %219, %cst_66 [1] : vector<16x32xf32> to vector<16xf32>
    %221 = vector.shape_cast %220 : vector<16xf32> to vector<16x1xf32>
    %cst_67 = arith.constant 3.200000e+01 : f32
    %222 = vector.broadcast %cst_67 : f32 to vector<16x1xf32>
    %223 = arith.divf %221, %222 : vector<16x1xf32>
    %224 = arith.mulf %218, %218 : vector<16x1xf32>
    %225 = arith.subf %223, %224 : vector<16x1xf32>
    %cst_68 = arith.constant 0.000000e+00 : f32
    %226 = vector.broadcast %cst_68 : f32 to vector<16x1xf32>
    %227 = arith.maximumf %225, %226 : vector<16x1xf32>
    %228 = vector.broadcast %218 : vector<16x1xf32> to vector<16x32xf32>
    %229 = arith.subf %214, %228 : vector<16x32xf32>
    %cst_69 = arith.constant 9.99999974E-6 : f32
    %230 = vector.broadcast %cst_69 : f32 to vector<16x1xf32>
    %231 = arith.addf %227, %230 : vector<16x1xf32>
    %232 = math.rsqrt %231 : vector<16x1xf32>
    %233 = vector.broadcast %232 : vector<16x1xf32> to vector<16x32xf32>
    %234 = arith.mulf %229, %233 : vector<16x32xf32>
    %235 = arith.mulf %234, %25 : vector<16x32xf32>
    %236 = arith.addf %235, %29 : vector<16x32xf32>
    %237 = arith.truncf %236 : vector<16x32xf32> to vector<16x32xbf16>
    %cst_70 = arith.constant dense<0.000000e+00> : vector<16x64xf32>
    %238 = tpu.matmul %237, %2, %cst_70 {dimension_numbers = #tpu.dot_dimension_numbers<[1], [0], [0], [1], [0, 0, 1, 1], [], []>} : vector<16x32xbf16>, vector<32x64xbf16>, vector<16x64xf32> -> vector<16x64xf32>
    %239 = arith.addf %238, %17 : vector<16x64xf32>
    %cst_71 = arith.constant 0.000000e+00 : f32
    %240 = vector.broadcast %cst_71 : f32 to vector<16x64xf32>
    %241 = arith.maximumf %239, %240 : vector<16x64xf32>
    %242 = arith.truncf %241 : vector<16x64xf32> to vector<16x64xbf16>
    %cst_72 = arith.constant dense<0.000000e+00> : vector<16x32xf32>
    %243 = tpu.matmul %242, %3, %cst_72 {dimension_numbers = #tpu.dot_dimension_numbers<[1], [0], [0], [1], [0, 0, 1, 1], [], []>} : vector<16x64xbf16>, vector<64x32xbf16>, vector<16x32xf32> -> vector<16x32xf32>
    %244 = arith.addf %243, %21 : vector<16x32xf32>
    %245 = arith.addf %236, %244 : vector<16x32xf32>
    %cst_73 = arith.constant dense<0.000000e+00> : vector<16xf32>
    %246 = vector.multi_reduction <add>, %245, %cst_73 [1] : vector<16x32xf32> to vector<16xf32>
    %247 = vector.shape_cast %246 : vector<16xf32> to vector<16x1xf32>
    %cst_74 = arith.constant 3.200000e+01 : f32
    %248 = vector.broadcast %cst_74 : f32 to vector<16x1xf32>
    %249 = arith.divf %247, %248 : vector<16x1xf32>
    %250 = arith.mulf %245, %245 : vector<16x32xf32>
    %cst_75 = arith.constant dense<0.000000e+00> : vector<16xf32>
    %251 = vector.multi_reduction <add>, %250, %cst_75 [1] : vector<16x32xf32> to vector<16xf32>
    %252 = vector.shape_cast %251 : vector<16xf32> to vector<16x1xf32>
    %cst_76 = arith.constant 3.200000e+01 : f32
    %253 = vector.broadcast %cst_76 : f32 to vector<16x1xf32>
    %254 = arith.divf %252, %253 : vector<16x1xf32>
    %255 = arith.mulf %249, %249 : vector<16x1xf32>
    %256 = arith.subf %254, %255 : vector<16x1xf32>
    %cst_77 = arith.constant 0.000000e+00 : f32
    %257 = vector.broadcast %cst_77 : f32 to vector<16x1xf32>
    %258 = arith.maximumf %256, %257 : vector<16x1xf32>
    %259 = vector.broadcast %249 : vector<16x1xf32> to vector<16x32xf32>
    %260 = arith.subf %245, %259 : vector<16x32xf32>
    %cst_78 = arith.constant 9.99999974E-6 : f32
    %261 = vector.broadcast %cst_78 : f32 to vector<16x1xf32>
    %262 = arith.addf %258, %261 : vector<16x1xf32>
    %263 = math.rsqrt %262 : vector<16x1xf32>
    %264 = vector.broadcast %263 : vector<16x1xf32> to vector<16x32xf32>
    %265 = arith.mulf %260, %264 : vector<16x32xf32>
    %266 = arith.mulf %265, %33 : vector<16x32xf32>
    %267 = arith.addf %266, %37 : vector<16x32xf32>
    %c0_79 = arith.constant 0 : index
    %c0_80 = arith.constant 0 : index
    %268 = vector.load %arg16[%c0_79, %c0_80] : memref<1x32xf32, #tpu.memory_space<vmem>>, vector<1x32xf32>
    %269 = vector.shape_cast %268 : vector<1x32xf32> to vector<32xf32>
    %270 = vector.shape_cast %269 : vector<32xf32> to vector<1x32xf32>
    %271 = vector.broadcast %270 : vector<1x32xf32> to vector<16x32xf32>
    %c0_81 = arith.constant 0 : index
    %c0_82 = arith.constant 0 : index
    %272 = vector.load %arg17[%c0_81, %c0_82] : memref<1x32xf32, #tpu.memory_space<vmem>>, vector<1x32xf32>
    %273 = vector.shape_cast %272 : vector<1x32xf32> to vector<32xf32>
    %274 = vector.shape_cast %273 : vector<32xf32> to vector<1x32xf32>
    %275 = vector.broadcast %274 : vector<1x32xf32> to vector<16x32xf32>
    %cst_83 = arith.constant dense<0.000000e+00> : vector<16xf32>
    %276 = vector.multi_reduction <add>, %267, %cst_83 [1] : vector<16x32xf32> to vector<16xf32>
    %277 = vector.shape_cast %276 : vector<16xf32> to vector<16x1xf32>
    %cst_84 = arith.constant 3.200000e+01 : f32
    %278 = vector.broadcast %cst_84 : f32 to vector<16x1xf32>
    %279 = arith.divf %277, %278 : vector<16x1xf32>
    %280 = arith.mulf %267, %267 : vector<16x32xf32>
    %cst_85 = arith.constant dense<0.000000e+00> : vector<16xf32>
    %281 = vector.multi_reduction <add>, %280, %cst_85 [1] : vector<16x32xf32> to vector<16xf32>
    %282 = vector.shape_cast %281 : vector<16xf32> to vector<16x1xf32>
    %cst_86 = arith.constant 3.200000e+01 : f32
    %283 = vector.broadcast %cst_86 : f32 to vector<16x1xf32>
    %284 = arith.divf %282, %283 : vector<16x1xf32>
    %285 = arith.mulf %279, %279 : vector<16x1xf32>
    %286 = arith.subf %284, %285 : vector<16x1xf32>
    %cst_87 = arith.constant 0.000000e+00 : f32
    %287 = vector.broadcast %cst_87 : f32 to vector<16x1xf32>
    %288 = arith.maximumf %286, %287 : vector<16x1xf32>
    %289 = vector.broadcast %279 : vector<16x1xf32> to vector<16x32xf32>
    %290 = arith.subf %267, %289 : vector<16x32xf32>
    %cst_88 = arith.constant 9.99999974E-6 : f32
    %291 = vector.broadcast %cst_88 : f32 to vector<16x1xf32>
    %292 = arith.addf %288, %291 : vector<16x1xf32>
    %293 = math.rsqrt %292 : vector<16x1xf32>
    %294 = vector.broadcast %293 : vector<16x1xf32> to vector<16x32xf32>
    %295 = arith.mulf %290, %294 : vector<16x32xf32>
    %296 = arith.mulf %295, %271 : vector<16x32xf32>
    %297 = arith.addf %296, %275 : vector<16x32xf32>
    %298 = vector.shape_cast %297 : vector<16x32xf32> to vector<2x8x32xf32>
    %c0_89 = arith.constant 0 : index
    %c0_90 = arith.constant 0 : index
    %c0_91 = arith.constant 0 : index
    %299 = vector.load %arg18[%c0_89, %c0_90, %c0_91] : memref<2x8x32xf32, #tpu.memory_space<vmem>>, vector<2x8x32xf32>
    tpu.vector_store %arg18[%c0_89, %c0_90, %c0_91], %298 {strides = array<i32>} : memref<2x8x32xf32, #tpu.memory_space<vmem>>, vector<2x8x32xf32>,
    return
  }
  func.func @transform_0(%arg0: i32) -> (i32, i32, i32) {
    %c0_i32 = arith.constant 0 : i32
    %c0_i32_0 = arith.constant 0 : i32
    %c0_i32_1 = arith.constant 0 : i32
    return %arg0, %c0_i32, %c0_i32_0 : i32, i32, i32
  }
  func.func @transform_1(%arg0: i32) -> (i32, i32) {
    %c0_i32 = arith.constant 0 : i32
    %c0_i32_0 = arith.constant 0 : i32
    %c0_i32_1 = arith.constant 0 : i32
    return %c0_i32, %c0_i32_0 : i32, i32
  }
  func.func @transform_2(%arg0: i32) -> (i32, i32) {
    %c0_i32 = arith.constant 0 : i32
    %c0_i32_0 = arith.constant 0 : i32
    %c0_i32_1 = arith.constant 0 : i32
    return %c0_i32, %c0_i32_0 : i32, i32
  }
  func.func @transform_3(%arg0: i32) -> (i32, i32) {
    %c0_i32 = arith.constant 0 : i32
    %c0_i32_0 = arith.constant 0 : i32
    %c0_i32_1 = arith.constant 0 : i32
    return %c0_i32, %c0_i32_0 : i32, i32
  }
  func.func @transform_4(%arg0: i32) -> (i32, i32) {
    %c0_i32 = arith.constant 0 : i32
    %c0_i32_0 = arith.constant 0 : i32
    %c0_i32_1 = arith.constant 0 : i32
    return %c0_i32, %c0_i32_0 : i32, i32
  }
  func.func @transform_5(%arg0: i32) -> (i32, i32) {
    %c0_i32 = arith.constant 0 : i32
    %c0_i32_0 = arith.constant 0 : i32
    %c0_i32_1 = arith.constant 0 : i32
    return %c0_i32, %c0_i32_0 : i32, i32
  }
  func.func @transform_6(%arg0: i32) -> (i32, i32) {
    %c0_i32 = arith.constant 0 : i32
    %c0_i32_0 = arith.constant 0 : i32
    %c0_i32_1 = arith.constant 0 : i32
    return %c0_i32, %c0_i32_0 : i32, i32
  }
  func.func @transform_7(%arg0: i32) -> (i32, i32) {
    %c0_i32 = arith.constant 0 : i32
    %c0_i32_0 = arith.constant 0 : i32
    %c0_i32_1 = arith.constant 0 : i32
    return %c0_i32, %c0_i32_0 : i32, i32
  }
  func.func @transform_8(%arg0: i32) -> (i32, i32) {
    %c0_i32 = arith.constant 0 : i32
    %c0_i32_0 = arith.constant 0 : i32
    %c0_i32_1 = arith.constant 0 : i32
    return %c0_i32, %c0_i32_0 : i32, i32
  }
  func.func @transform_9(%arg0: i32) -> (i32, i32) {
    %c0_i32 = arith.constant 0 : i32
    %c0_i32_0 = arith.constant 0 : i32
    %c0_i32_1 = arith.constant 0 : i32
    return %c0_i32, %c0_i32_0 : i32, i32
  }
  func.func @transform_10(%arg0: i32) -> (i32, i32) {
    %c0_i32 = arith.constant 0 : i32
    %c0_i32_0 = arith.constant 0 : i32
    %c0_i32_1 = arith.constant 0 : i32
    return %c0_i32, %c0_i32_0 : i32, i32
  }
  func.func @transform_11(%arg0: i32) -> (i32, i32) {
    %c0_i32 = arith.constant 0 : i32
    %c0_i32_0 = arith.constant 0 : i32
    %c0_i32_1 = arith.constant 0 : i32
    return %c0_i32, %c0_i32_0 : i32, i32
  }
  func.func @transform_12(%arg0: i32) -> (i32, i32) {
    %c0_i32 = arith.constant 0 : i32
    %c0_i32_0 = arith.constant 0 : i32
    %c0_i32_1 = arith.constant 0 : i32
    return %c0_i32, %c0_i32_0 : i32, i32
  }
  func.func @transform_13(%arg0: i32) -> (i32, i32) {
    %c0_i32 = arith.constant 0 : i32
    %c0_i32_0 = arith.constant 0 : i32
    %c0_i32_1 = arith.constant 0 : i32
    return %c0_i32, %c0_i32_0 : i32, i32
  }
  func.func @transform_14(%arg0: i32) -> (i32, i32) {
    %c0_i32 = arith.constant 0 : i32
    %c0_i32_0 = arith.constant 0 : i32
    %c0_i32_1 = arith.constant 0 : i32
    return %c0_i32, %c0_i32_0 : i32, i32
  }
  func.func @transform_15(%arg0: i32) -> (i32, i32) {
    %c0_i32 = arith.constant 0 : i32
    %c0_i32_0 = arith.constant 0 : i32
    %c0_i32_1 = arith.constant 0 : i32
    return %c0_i32, %c0_i32_0 : i32, i32
  }
  func.func @transform_16(%arg0: i32) -> (i32, i32) {
    %c0_i32 = arith.constant 0 : i32
    %c0_i32_0 = arith.constant 0 : i32
    %c0_i32_1 = arith.constant 0 : i32
    return %c0_i32, %c0_i32_0 : i32, i32
  }
  func.func @transform_17(%arg0: i32) -> (i32, i32, i32) {
    %c0_i32 = arith.constant 0 : i32
    %c0_i32_0 = arith.constant 0 : i32
    %c0_i32_1 = arith.constant 0 : i32
    return %arg0, %c0_i32, %c0_i32_0 : i32, i32, i32
  }
}

</mosaic_0001>

<llo_original>
// kernel: tpu_custom_call.1
$region0: #{tpu_custom_call.1}
  #allocation0 [shape = 'u32[]', space=smem, size = 0x4, offset = 0x4, fixed_abs, tag = 'smem constant byte address 0x4 - core index']
  #allocation1 [shape = 'u32[72,128]{1,0:T(1,128)}', space=vmem, size = 0x9000, scoped, tag = 'internal scratch']
  %s0 = inlined_call_operand.vmem [shape: f32[2,8,32], index: 0, kind: input, shape index: {}]
  %s1 = inlined_call_operand.vmem [shape: f32[16,32], index: 1, kind: input, shape index: {}]
  %s2 = inlined_call_operand.vmem [shape: f32[16,32], index: 2, kind: input, shape index: {}]
  %s3 = inlined_call_operand.hbm [shape: bf16[32,96], index: 3, kind: input, shape index: {}]
  %s4 = inlined_call_operand.vmem [shape: f32[1,32], index: 4, kind: input, shape index: {}]
  %s5 = inlined_call_operand.hbm [shape: bf16[32,32], index: 5, kind: input, shape index: {}]
  %s6 = inlined_call_operand.vmem [shape: f32[1,32], index: 6, kind: input, shape index: {}]
  %s7 = inlined_call_operand.hbm [shape: bf16[32,64], index: 7, kind: input, shape index: {}]
  %s8 = inlined_call_operand.vmem [shape: f32[1,64], index: 8, kind: input, shape index: {}]
  %s9 = inlined_call_operand.vmem [shape: bf16[64,32], index: 9, kind: input, shape index: {}]
  %s10 = inlined_call_operand.vmem [shape: f32[1,32], index: 10, kind: input, shape index: {}]
  %s11 = inlined_call_operand.vmem [shape: f32[1,32], index: 11, kind: input, shape index: {}]
  %s12 = inlined_call_operand.vmem [shape: f32[1,32], index: 12, kind: input, shape index: {}]
  %s13 = inlined_call_operand.vmem [shape: f32[1,32], index: 13, kind: input, shape index: {}]
  %s14 = inlined_call_operand.vmem [shape: f32[1,32], index: 14, kind: input, shape index: {}]
  %s15 = inlined_call_operand.vmem [shape: f32[1,32], index: 15, kind: input, shape index: {}]
  %s16 = inlined_call_operand.vmem [shape: f32[1,32], index: 16, kind: input, shape index: {}]
  %s17 = inlined_call_operand.hbm [shape: f32[2,8,32], index: 17, kind: output, shape index: {}]
  %s18 = sld [smem:[#allocation0]]
  $region90: #{tpu_custom_call.1} parent=0
    _
  %s20 = ssub.s32 1, %s18
  %s21 = scalar_select 0, %s20, %s18
  $region1: #{tpu_custom_call.1} parent=0
    #allocation2 [shape = 'u8[8192]{0}', space=vmem, size = 0x2000, scoped, tag = 'input window, operand 3, single buffered']
    #allocation3 [shape = 's32[1]{0}', space=sflag, size = 0x4, scoped, tag = 'scoped memory for tpu_custom_call.1']
    #allocation4 [shape = 's32[1]{0}', space=sflag, size = 0x4, scoped, tag = 'scoped memory for tpu_custom_call.1']
    #allocation5 [shape = 'u8[8192]{0}', space=vmem, size = 0x2000, scoped, tag = 'input window, operand 5, single buffered']
    #allocation6 [shape = 's32[1]{0}', space=sflag, size = 0x4, scoped, tag = 'scoped memory for tpu_custom_call.1']
    #allocation7 [shape = 'u8[8192]{0}', space=vmem, size = 0x2000, scoped, tag = 'input window, operand 7, single buffered']
    #allocation8 [shape = 'u8[8192]{0}', space=vmem, size = 0x2000, scoped, tag = 'output window, operand 0, single buffered']
    %22 = vsyncpa [#allocation3], 0
    %23 = vsyncpa [#allocation6], 0
    %24 = vsyncpa [#allocation4], 0
    // Predicated region
    $region2: #{tpu_custom_call.1} parent=1 // pred_check
      _
    $region3: #{tpu_custom_call.1} parent=1 // pred_check_branch
      %26 = sbr.rel (0) target = $region5
    $region4: #{tpu_custom_call.1} parent=1 // pred_region
      _
    $region5: #{tpu_custom_call.1} parent=1 // pred_fallthru
      _
    // Predicated region
    $region6: #{tpu_custom_call.1} parent=1 // pred_check
      _
    $region7: #{tpu_custom_call.1} parent=1 // pred_check_branch
      %28 = sbr.rel (0) target = $region9
    $region8: #{tpu_custom_call.1} parent=1 // pred_region
      _
    $region9: #{tpu_custom_call.1} parent=1 // pred_fallthru
      _
    // Predicated region
    $region10: #{tpu_custom_call.1} parent=1 // pred_check
      _
    $region11: #{tpu_custom_call.1} parent=1 // pred_check_branch
      %30 = sbr.rel (0) target = $region13
    $region12: #{tpu_custom_call.1} parent=1 // pred_region
      _
    $region13: #{tpu_custom_call.1} parent=1 // pred_fallthru
      _
    // Predicated region
    $region14: #{tpu_custom_call.1} parent=1 // pred_check
      _
    $region15: #{tpu_custom_call.1} parent=1 // pred_check_branch
      %32 = sbr.rel (0) target = $region17
    $region16: #{tpu_custom_call.1} parent=1 // pred_region
      %34 = vsyncadd [#allocation3], 0
      %s35 = sshll.u32 %s3, 4
      %s36 = int_to_ptr.hbm [resolvable:$true] %s35
      %s37 = sshll.u32 [#allocation2], 4
      %s38 = int_to_ptr.vmem [resolvable:$true] %s37
      %43 = dma.hbm_to_vmem [thread:$0]  %s36, 256, %s38, [#allocation3], 64, 64, 4
    $region17: #{tpu_custom_call.1} parent=1 // pred_fallthru
      _
    // Predicated region
    $region18: #{tpu_custom_call.1} parent=1 // pred_check
      _
    $region19: #{tpu_custom_call.1} parent=1 // pred_check_branch
      %45 = sbr.rel (0) target = $region21
    $region20: #{tpu_custom_call.1} parent=1 // pred_region
      _
    $region21: #{tpu_custom_call.1} parent=1 // pred_fallthru
      _
    // Predicated region
    $region22: #{tpu_custom_call.1} parent=1 // pred_check
      _
    $region23: #{tpu_custom_call.1} parent=1 // pred_check_branch
      %47 = sbr.rel (0) target = $region25
    $region24: #{tpu_custom_call.1} parent=1 // pred_region
      %49 = vsyncadd [#allocation6], 0
      %s50 = sshll.u32 %s5, 4
      %s51 = int_to_ptr.hbm [resolvable:$true] %s50
      %s52 = sshll.u32 [#allocation5], 4
      %s53 = int_to_ptr.vmem [resolvable:$true] %s52
      %58 = dma.hbm_to_vmem [thread:$0]  %s51, 256, %s53, [#allocation6], 64, 64, 4
    $region25: #{tpu_custom_call.1} parent=1 // pred_fallthru
      _
    // Predicated region
    $region26: #{tpu_custom_call.1} parent=1 // pred_check
      _
    $region27: #{tpu_custom_call.1} parent=1 // pred_check_branch
      %60 = sbr.rel (0) target = $region29
    $region28: #{tpu_custom_call.1} parent=1 // pred_region
      _
    $region29: #{tpu_custom_call.1} parent=1 // pred_fallthru
      _
    // Predicated region
    $region30: #{tpu_custom_call.1} parent=1 // pred_check
      _
    $region31: #{tpu_custom_call.1} parent=1 // pred_check_branch
      %62 = sbr.rel (0) target = $region33
    $region32: #{tpu_custom_call.1} parent=1 // pred_region
      %64 = vsyncadd [#allocation6], 0
      %s65 = sshll.u32 %s7, 4
      %s66 = int_to_ptr.hbm [resolvable:$true] %s65
      %s67 = sshll.u32 [#allocation7], 4
      %s68 = int_to_ptr.vmem [resolvable:$true] %s67
      %73 = dma.hbm_to_vmem [thread:$0]  %s66, 256, %s68, [#allocation6], 64, 64, 4
    $region33: #{tpu_custom_call.1} parent=1 // pred_fallthru
      _
    // Predicated region
    $region34: #{tpu_custom_call.1} parent=1 // pred_check
      _
    $region35: #{tpu_custom_call.1} parent=1 // pred_check_branch
      %75 = sbr.rel (0) target = $region37
    $region36: #{tpu_custom_call.1} parent=1 // pred_region
      _
    $region37: #{tpu_custom_call.1} parent=1 // pred_fallthru
      _
    // Predicated region
    $region38: #{tpu_custom_call.1} parent=1 // pred_check
      _
    $region39: #{tpu_custom_call.1} parent=1 // pred_check_branch
      %77 = sbr.rel (0) target = $region41
    $region40: #{tpu_custom_call.1} parent=1 // pred_region
      _
    $region41: #{tpu_custom_call.1} parent=1 // pred_fallthru
      _
    // Predicated region
    $region42: #{tpu_custom_call.1} parent=1 // pred_check
      _
    $region43: #{tpu_custom_call.1} parent=1 // pred_check_branch
      %79 = sbr.rel (0) target = $region45
    $region44: #{tpu_custom_call.1} parent=1 // pred_region
      _
    $region45: #{tpu_custom_call.1} parent=1 // pred_fallthru
      _
    // Predicated region
    $region46: #{tpu_custom_call.1} parent=1 // pred_check
      _
    $region47: #{tpu_custom_call.1} parent=1 // pred_check_branch
      %81 = sbr.rel (0) target = $region49
    $region48: #{tpu_custom_call.1} parent=1 // pred_region
      _
    $region49: #{tpu_custom_call.1} parent=1 // pred_fallthru
      _
    // Predicated region
    $region50: #{tpu_custom_call.1} parent=1 // pred_check
      _
    $region51: #{tpu_custom_call.1} parent=1 // pred_check_branch
      %83 = sbr.rel (0) target = $region53
    $region52: #{tpu_custom_call.1} parent=1 // pred_region
      _
    $region53: #{tpu_custom_call.1} parent=1 // pred_fallthru
      _
    // Predicated region
    $region54: #{tpu_custom_call.1} parent=1 // pred_check
      _
    $region55: #{tpu_custom_call.1} parent=1 // pred_check_branch
      %85 = sbr.rel (0) target = $region57
    $region56: #{tpu_custom_call.1} parent=1 // pred_region
      _
    $region57: #{tpu_custom_call.1} parent=1 // pred_fallthru
      _
    // Predicated region
    $region58: #{tpu_custom_call.1} parent=1 // pred_check
      _
    $region59: #{tpu_custom_call.1} parent=1 // pred_check_branch
      %87 = sbr.rel (0) target = $region61
    $region60: #{tpu_custom_call.1} parent=1 // pred_region
      _
    $region61: #{tpu_custom_call.1} parent=1 // pred_fallthru
      _
    // Predicated region
    $region62: #{tpu_custom_call.1} parent=1 // pred_check
      _
    $region63: #{tpu_custom_call.1} parent=1 // pred_check_branch
      %89 = sbr.rel (0) target = $region65
    $region64: #{tpu_custom_call.1} parent=1 // pred_region
      _
    $region65: #{tpu_custom_call.1} parent=1 // pred_fallthru
      _
    // Predicated region
    $region66: #{tpu_custom_call.1} parent=1 // pred_check
      _
    $region67: #{tpu_custom_call.1} parent=1 // pred_check_branch
      %91 = sbr.rel (0) target = $region69
    $region68: #{tpu_custom_call.1} parent=1 // pred_region
      _
    $region69: #{tpu_custom_call.1} parent=1 // pred_fallthru
      _
    // Predicated region
    $region70: #{tpu_custom_call.1} parent=1 // pred_check
      _
    $region71: #{tpu_custom_call.1} parent=1 // pred_check_branch
      %93 = sbr.rel (0) target = $region73
    $region72: #{tpu_custom_call.1} parent=1 // pred_region
      %95 = dma.done [#allocation3], 256
    $region73: #{tpu_custom_call.1} parent=1 // pred_fallthru
      _
    // Predicated region
    $region74: #{tpu_custom_call.1} parent=1 // pred_check
      _
    $region75: #{tpu_custom_call.1} parent=1 // pred_check_branch
      %97 = sbr.rel (0) target = $region77
    $region76: #{tpu_custom_call.1} parent=1 // pred_region
      %99 = dma.done [#allocation6], 256
    $region77: #{tpu_custom_call.1} parent=1 // pred_fallthru
      _
    // Predicated region
    $region78: #{tpu_custom_call.1} parent=1 // pred_check
      _
    $region79: #{tpu_custom_call.1} parent=1 // pred_check_branch
      %101 = sbr.rel (0) target = $region81
    $region80: #{tpu_custom_call.1} parent=1 // pred_region
      %103 = dma.done [#allocation6], 256
    $region81: #{tpu_custom_call.1} parent=1 // pred_fallthru
      _
    %v105 = vld [vmem:[#allocation2] sm:$0xf]
    %v106 = vld [vmem:[#allocation2 + $0x4] sm:$0xf]
    %v107 = vld [vmem:[#allocation2 + $0x8] sm:$0xf]
    %v108 = vld [vmem:[#allocation2 + $0xc] sm:$0xf]
    %v109 = vld [vmem:[#allocation5] sm:$0xf]
    %v110 = vld [vmem:[#allocation5 + $0x4] sm:$0xf]
    %v111 = vld [vmem:[#allocation5 + $0x8] sm:$0xf]
    %v112 = vld [vmem:[#allocation5 + $0xc] sm:$0xf]
    %v113 = vld [vmem:[#allocation7] sm:$0xf]
    %v114 = vld [vmem:[#allocation7 + $0x4] sm:$0xf]
    %v115 = vld [vmem:[#allocation7 + $0x8] sm:$0xf]
    %v116 = vld [vmem:[#allocation7 + $0xc] sm:$0xf]
    %v117 = vld [vmem:[%s9] sm:$0xf]
    %v118 = vld [vmem:[%s9 + $0x4] sm:$0xf]
    %v119 = vld [vmem:[%s9 + $0x8] sm:$0xf]
    %v120 = vld [vmem:[%s9 + $0xc] sm:$0xf]
    %v121 = vld [vmem:[%s9 + $0x10] sm:$0xf]
    %v122 = vld [vmem:[%s9 + $0x14] sm:$0xf]
    %v123 = vld [vmem:[%s9 + $0x18] sm:$0xf]
    %v124 = vld [vmem:[%s9 + $0x1c] sm:$0xf]
    %v125 = vld [vmem:[%s1] sm:$0xff]
    %v126 = vld [vmem:[%s1 + $0x8] sm:$0xff]
    %v127 = vld [vmem:[%s2] sm:$0xff]
    %v128 = vld [vmem:[%s2 + $0x8] sm:$0xff]
    %v129 = vld [vmem:[%s4] sm:$0x1]
    %v131 = vperm.slane %v129, 0
    %v132 = vld [vmem:[%s6] sm:$0x1]
    %v134 = vperm.slane %v132, 0
    %v136 = vld [vmem:[%s8] sm:$0x1]
    %v138 = vperm.slane %v136, 0
    %v140 = vld [vmem:[%s10] sm:$0x1]
    %v142 = vperm.slane %v140, 0
    %v144 = vld [vmem:[%s11] sm:$0x1]
    %v146 = vperm.slane %v144, 0
    %v148 = vld [vmem:[%s12] sm:$0x1]
    %v150 = vperm.slane %v148, 0
    %v152 = vld [vmem:[%s13] sm:$0x1]
    %v154 = vperm.slane %v152, 0
    %v156 = vld [vmem:[%s14] sm:$0x1]
    %v158 = vperm.slane %v156, 0
    %v160 = vld [vmem:[%s0] sm:$0xff]
    %v161 = vld [vmem:[%s0 + $0x8] sm:$0xff]
    %v162 = vpack.c.bf16 %v161, %v160
    %v167 = vunpack.c.l.b16 %v105
    %v168 = vunpack.c.l.b16 %v106
    %v169 = vunpack.c.l.b16 %v107
    %v170 = vunpack.c.l.b16 %v108
    %v171 = vpack.c.b16 %v168, %v167
    %v172 = vpack.c.b16 %v170, %v169
    %vm175 = vcmask 261120
    %v177 = vsel %vm175, %v162, 0
    %179 = vmatpush.bf16.msra.mxu0 0
    %180 = vmatpush.bf16.msra.mxu0 0
    %181 = vmatpush.bf16.msra.mxu0 0
    %182 = vmatpush.bf16.msra.mxu0 0
    %183 = vmatpush.bf16.msra.mxu0 0
    %184 = vmatpush.bf16.msra.mxu0 0
    %185 = vmatpush.bf16.msra.mxu0 %v172
    %186 = vmatpush.bf16.msra.mxu0 %v171
    %187 = vmatmul.bf16.gmra.mxu0 %v177
    %v188 = vpop.f32.mrf.mxu0
    %v189 = vadd.f32 0.0, %v188
    %v190 = vpop.f32.mrf.mxu0
    %v191 = vadd.f32 0.0, %v190
    %192 = vdwg.mxu0
    %v193 = vadd.f32 %v189, %v125
    %v194 = vadd.f32 %v191, %v126
    %197 = vrot.lane.b32.xlu0 %v127, 32
    %v198 = vpop.permute.xlu0 %197
    %199 = vrot.lane.b32.xlu0 %v128, 32
    %v200 = vpop.permute.xlu0 %199
    %v203 = vadd.f32 %v189, %v198
    %v204 = vadd.f32 %v191, %v200
    %205 = vrot.lane.b32.xlu0 %v131, 64
    %v206 = vpop.permute.xlu0 %205
    %v208 = vadd.f32 %v189, %v206
    %v209 = vadd.f32 %v191, %v206
    %211 = vrot.lane.b32.xlu0 %v193, 120
    %v212 = vpop.permute.xlu0 %211
    %214 = vrot.lane.b32.xlu0 %v193, 112
    %v215 = vpop.permute.xlu0 %214
    %217 = vrot.lane.b32.xlu0 %v193, 104
    %v218 = vpop.permute.xlu0 %217
    %v220 = vrot.slane %v215, 4
    %vm221 = vcmask 1047556
    %v222 = vsel %vm221, %v220, %v193
    %v223 = vrot.slane %v193, 4
    %v224 = vsel %vm221, %v215, %v223
    %v226 = vunpack.c.l.s4 1983009808
    %v227 = vunpack.c.0.s8 %v226
    %v228 = vperm.slane %v222, %v227
    %v230 = vunpack.c.l.s4 1983009808
    %v231 = vunpack.c.0.s8 %v230
    %v232 = vperm.slane %v224, %v231
    %v233 = vrot.slane %v218, 4
    %v234 = vsel %vm221, %v233, %v212
    %v235 = vrot.slane %v212, 4
    %v236 = vsel %vm221, %v218, %v235
    %v238 = vunpack.c.l.s4 1983009808
    %v239 = vunpack.c.0.s8 %v238
    %v240 = vperm.slane %v234, %v239
    %v242 = vunpack.c.l.s4 1983009808
    %v243 = vunpack.c.0.s8 %v242
    %v244 = vperm.slane %v236, %v243
    %v245 = vrot.slane %v240, 4
    %v246 = vsel %vm221, %v245, %v228
    %v247 = vrot.slane %v228, 4
    %v248 = vsel %vm221, %v240, %v247
    %v250 = vunpack.c.l.s4 1934713408
    %v251 = vunpack.c.0.s8 %v250
    %v252 = vperm.slane %v246, %v251
    %v254 = vunpack.c.l.s4 1934713408
    %v255 = vunpack.c.0.s8 %v254
    %v256 = vperm.slane %v248, %v255
    %v257 = vrot.slane %v244, 4
    %v258 = vsel %vm221, %v257, %v232
    %v259 = vrot.slane %v232, 4
    %v260 = vsel %vm221, %v244, %v259
    %v262 = vunpack.c.l.s4 1934713408
    %v263 = vunpack.c.0.s8 %v262
    %v264 = vperm.slane %v258, %v263
    %v266 = vunpack.c.l.s4 1934713408
    %v267 = vunpack.c.0.s8 %v266
    %v268 = vperm.slane %v260, %v267
    %v269 = vrot.slane %v252, 4
    %v270 = vsel %vm221, 0.0, %v269
    %v271 = vrot.slane %v256, 4
    %v272 = vsel %vm221, 0.0, %v271
    %v273 = vrot.slane %v264, 4
    %v274 = vsel %vm221, 0.0, %v273
    %v275 = vrot.slane %v268, 4
    %v276 = vsel %vm221, 0.0, %v275
    %v277 = vpack.c.bf16 %v252, %v252
    %v278 = vpack.c.bf16 %v270, %v270
    %v279 = vpack.c.bf16 %v256, %v256
    %v280 = vpack.c.bf16 %v272, %v272
    %v281 = vpack.c.bf16 %v264, %v264
    %v282 = vpack.c.bf16 %v274, %v274
    %v283 = vpack.c.bf16 %v268, %v268
    %v284 = vpack.c.bf16 %v276, %v276
    %286 = vrot.lane.b32.xlu0 %v203, 120
    %v287 = vpop.permute.xlu0 %286
    %288 = vrot.lane.b32.xlu0 %v203, 112
    %v289 = vpop.permute.xlu0 %288
    %290 = vrot.lane.b32.xlu0 %v203, 104
    %v291 = vpop.permute.xlu0 %290
    %292 = vrot.lane.b32.xlu0 %v203, 96
    %v293 = vpop.permute.xlu0 %292
    %294 = vrot.lane.b32.xlu0 %v287, 96
    %v295 = vpop.permute.xlu0 %294
    %296 = vrot.lane.b32.xlu0 %v289, 96
    %v297 = vpop.permute.xlu0 %296
    %298 = vrot.lane.b32.xlu0 %v291, 96
    %v299 = vpop.permute.xlu0 %298
    %v304 = vrot.slane %v297, 4
    %v305 = vsel %vm221, %v304, %v293
    %v306 = vrot.slane %v293, 4
    %v307 = vsel %vm221, %v297, %v306
    %v309 = vunpack.c.l.s4 1983009808
    %v310 = vunpack.c.0.s8 %v309
    %v311 = vperm.slane %v305, %v310
    %v313 = vunpack.c.l.s4 1983009808
    %v314 = vunpack.c.0.s8 %v313
    %v315 = vperm.slane %v307, %v314
    %v316 = vrot.slane %v299, 4
    %v317 = vsel %vm221, %v316, %v295
    %v318 = vrot.slane %v295, 4
    %v319 = vsel %vm221, %v299, %v318
    %v321 = vunpack.c.l.s4 1983009808
    %v322 = vunpack.c.0.s8 %v321
    %v323 = vperm.slane %v317, %v322
    %v325 = vunpack.c.l.s4 1983009808
    %v326 = vunpack.c.0.s8 %v325
    %v327 = vperm.slane %v319, %v326
    %v328 = vrot.slane %v323, 4
    %v329 = vsel %vm221, %v328, %v311
    %v330 = vrot.slane %v311, 4
    %v331 = vsel %vm221, %v323, %v330
    %v333 = vunpack.c.l.s4 1934713408
    %v334 = vunpack.c.0.s8 %v333
    %v335 = vperm.slane %v329, %v334
    %v337 = vunpack.c.l.s4 1934713408
    %v338 = vunpack.c.0.s8 %v337
    %v339 = vperm.slane %v331, %v338
    %v340 = vrot.slane %v327, 4
    %v341 = vsel %vm221, %v340, %v315
    %v342 = vrot.slane %v315, 4
    %v343 = vsel %vm221, %v327, %v342
    %v345 = vunpack.c.l.s4 1934713408
    %v346 = vunpack.c.0.s8 %v345
    %v347 = vperm.slane %v341, %v346
    %v349 = vunpack.c.l.s4 1934713408
    %v350 = vunpack.c.0.s8 %v349
    %v351 = vperm.slane %v343, %v350
    %v352 = vrot.slane %v335, 4
    %v353 = vsel %vm221, 0.0, %v352
    %v354 = vrot.slane %v339, 4
    %v355 = vsel %vm221, 0.0, %v354
    %v356 = vrot.slane %v347, 4
    %v357 = vsel %vm221, 0.0, %v356
    %v358 = vrot.slane %v351, 4
    %v359 = vsel %vm221, 0.0, %v358
    %v360 = vpack.c.bf16 %v335, %v335
    %v361 = vpack.c.bf16 %v353, %v353
    %v362 = vpack.c.bf16 %v339, %v339
    %v363 = vpack.c.bf16 %v355, %v355
    %v364 = vpack.c.bf16 %v347, %v347
    %v365 = vpack.c.bf16 %v357, %v357
    %v366 = vpack.c.bf16 %v351, %v351
    %v367 = vpack.c.bf16 %v359, %v359
    %369 = vrot.lane.b32.xlu0 %v208, 120
    %v370 = vpop.permute.xlu0 %369
    %371 = vrot.lane.b32.xlu0 %v208, 112
    %v372 = vpop.permute.xlu0 %371
    %373 = vrot.lane.b32.xlu0 %v208, 104
    %v374 = vpop.permute.xlu0 %373
    %375 = vrot.lane.b32.xlu0 %v208, 64
    %v376 = vpop.permute.xlu0 %375
    %377 = vrot.lane.b32.xlu0 %v370, 64
    %v378 = vpop.permute.xlu0 %377
    %379 = vrot.lane.b32.xlu0 %v372, 64
    %v380 = vpop.permute.xlu0 %379
    %381 = vrot.lane.b32.xlu0 %v374, 64
    %v382 = vpop.permute.xlu0 %381
    %v387 = vrot.slane %v380, 4
    %v388 = vsel %vm221, %v387, %v376
    %v389 = vrot.slane %v376, 4
    %v390 = vsel %vm221, %v380, %v389
    %v392 = vunpack.c.l.s4 1983009808
    %v393 = vunpack.c.0.s8 %v392
    %v394 = vperm.slane %v388, %v393
    %v396 = vunpack.c.l.s4 1983009808
    %v397 = vunpack.c.0.s8 %v396
    %v398 = vperm.slane %v390, %v397
    %v399 = vrot.slane %v382, 4
    %v400 = vsel %vm221, %v399, %v378
    %v401 = vrot.slane %v378, 4
    %v402 = vsel %vm221, %v382, %v401
    %v404 = vunpack.c.l.s4 1983009808
    %v405 = vunpack.c.0.s8 %v404
    %v406 = vperm.slane %v400, %v405
    %v408 = vunpack.c.l.s4 1983009808
    %v409 = vunpack.c.0.s8 %v408
    %v410 = vperm.slane %v402, %v409
    %v411 = vrot.slane %v406, 4
    %v412 = vsel %vm221, %v411, %v394
    %v413 = vrot.slane %v394, 4
    %v414 = vsel %vm221, %v406, %v413
    %v416 = vunpack.c.l.s4 1934713408
    %v417 = vunpack.c.0.s8 %v416
    %v418 = vperm.slane %v412, %v417
    %v420 = vunpack.c.l.s4 1934713408
    %v421 = vunpack.c.0.s8 %v420
    %v422 = vperm.slane %v414, %v421
    %v423 = vrot.slane %v410, 4
    %v424 = vsel %vm221, %v423, %v398
    %v425 = vrot.slane %v398, 4
    %v426 = vsel %vm221, %v410, %v425
    %v428 = vunpack.c.l.s4 1934713408
    %v429 = vunpack.c.0.s8 %v428
    %v430 = vperm.slane %v424, %v429
    %v432 = vunpack.c.l.s4 1934713408
    %v433 = vunpack.c.0.s8 %v432
    %v434 = vperm.slane %v426, %v433
    %v435 = vrot.slane %v418, 4
    %v436 = vsel %vm221, 0.0, %v435
    %v437 = vrot.slane %v422, 4
    %v438 = vsel %vm221, 0.0, %v437
    %v439 = vrot.slane %v430, 4
    %v440 = vsel %vm221, 0.0, %v439
    %v441 = vrot.slane %v434, 4
    %v442 = vsel %vm221, 0.0, %v441
    %v443 = vpack.c.bf16 %v418, %v418
    %v444 = vpack.c.bf16 %v436, %v436
    %v445 = vpack.c.bf16 %v422, %v422
    %v446 = vpack.c.bf16 %v438, %v438
    %v447 = vpack.c.bf16 %v430, %v430
    %v448 = vpack.c.bf16 %v440, %v440
    %v449 = vpack.c.bf16 %v434, %v434
    %v450 = vpack.c.bf16 %v442, %v442
    %v451 = vrot.slane %v281, 4
    %vm452 = vcmask 1047556
    %v453 = vsel %vm452, %v451, %v277
    %v455 = vunpack.c.l.s4 1983009808
    %v456 = vunpack.c.0.s8 %v455
    %v457 = vperm.slane %v453, %v456
    %v458 = vrot.slane %v283, 4
    %v459 = vsel %vm452, %v458, %v279
    %v461 = vunpack.c.l.s4 1983009808
    %v462 = vunpack.c.0.s8 %v461
    %v463 = vperm.slane %v459, %v462
    %v464 = vrot.slane %v463, 4
    %v465 = vsel %vm452, %v464, %v457
    %v467 = vunpack.c.l.s4 1934713408
    %v468 = vunpack.c.0.s8 %v467
    %v469 = vperm.slane %v465, %v468
    %v470 = vrot.slane %v469, 4
    %v471 = vsel %vm452, 0, %v470
    %v472 = vrot.slane %v282, 4
    %v473 = vsel %vm452, %v472, %v278
    %v475 = vunpack.c.l.s4 1983009808
    %v476 = vunpack.c.0.s8 %v475
    %v477 = vperm.slane %v473, %v476
    %v478 = vrot.slane %v284, 4
    %v479 = vsel %vm452, %v478, %v280
    %v481 = vunpack.c.l.s4 1983009808
    %v482 = vunpack.c.0.s8 %v481
    %v483 = vperm.slane %v479, %v482
    %v484 = vrot.slane %v483, 4
    %v485 = vsel %vm452, %v484, %v477
    %v487 = vunpack.c.l.s4 1934713408
    %v488 = vunpack.c.0.s8 %v487
    %v489 = vperm.slane %v485, %v488
    %v490 = vrot.slane %v489, 4
    %v491 = vsel %vm452, 0, %v490
    %v494 = vpack.i.b16 %v489, %v469
    %v495 = vshrl.u32 %v469, 16
    %v496 = vshrl.u32 %v489, 16
    %v497 = vpack.i.b16 %v496, %v495
    %v500 = vpack.i.b16 %v491, %v471
    %v501 = vshrl.u32 %v471, 16
    %v502 = vshrl.u32 %v491, 16
    %v503 = vpack.i.b16 %v502, %v501
    %504 = vxpose.xlu0.c.b16.start [1/8] %v360, 128
    %505 = vxpose.xlu0.c.b16.cont [2/8] 0, 128
    %506 = vxpose.xlu0.c.b16.cont [3/8] 0, 128
    %507 = vxpose.xlu0.c.b16.cont [4/8] 0, 128
    %508 = vxpose.xlu0.c.b16.cont [5/8] 0, 128
    %509 = vxpose.xlu0.c.b16.cont [6/8] 0, 128
    %510 = vxpose.xlu0.c.b16.cont [7/8] 0, 128
    %511 = vxpose.xlu0.c.b16.end [8/8] 0, 128
    %v512 = vpop.trf.xlu0
    %v513 = vpop.trf.xlu0
    %v514 = vpop.trf.xlu0
    %v515 = vpop.trf.xlu0
    %v516 = vpop.trf.xlu0
    %v517 = vpop.trf.xlu0
    %v518 = vpop.trf.xlu0
    %v519 = vpop.trf.xlu0
    %520 = vxpose.xlu0.c.b16.start [1/8] %v361, 128
    %521 = vxpose.xlu0.c.b16.cont [2/8] 0, 128
    %522 = vxpose.xlu0.c.b16.cont [3/8] 0, 128
    %523 = vxpose.xlu0.c.b16.cont [4/8] 0, 128
    %524 = vxpose.xlu0.c.b16.cont [5/8] 0, 128
    %525 = vxpose.xlu0.c.b16.cont [6/8] 0, 128
    %526 = vxpose.xlu0.c.b16.cont [7/8] 0, 128
    %527 = vxpose.xlu0.c.b16.end [8/8] 0, 128
    %v528 = vpop.trf.xlu0
    %v529 = vpop.trf.xlu0
    %v530 = vpop.trf.xlu0
    %v531 = vpop.trf.xlu0
    %v532 = vpop.trf.xlu0
    %v533 = vpop.trf.xlu0
    %v534 = vpop.trf.xlu0
    %v535 = vpop.trf.xlu0
    %536 = vxpose.xlu0.c.b16.start [1/8] %v362, 128
    %537 = vxpose.xlu0.c.b16.cont [2/8] 0, 128
    %538 = vxpose.xlu0.c.b16.cont [3/8] 0, 128
    %539 = vxpose.xlu0.c.b16.cont [4/8] 0, 128
    %540 = vxpose.xlu0.c.b16.cont [5/8] 0, 128
    %541 = vxpose.xlu0.c.b16.cont [6/8] 0, 128
    %542 = vxpose.xlu0.c.b16.cont [7/8] 0, 128
    %543 = vxpose.xlu0.c.b16.end [8/8] 0, 128
    %v544 = vpop.trf.xlu0
    %v545 = vpop.trf.xlu0
    %v546 = vpop.trf.xlu0
    %v547 = vpop.trf.xlu0
    %v548 = vpop.trf.xlu0
    %v549 = vpop.trf.xlu0
    %v550 = vpop.trf.xlu0
    %v551 = vpop.trf.xlu0
    %552 = vxpose.xlu0.c.b16.start [1/8] %v363, 128
    %553 = vxpose.xlu0.c.b16.cont [2/8] 0, 128
    %554 = vxpose.xlu0.c.b16.cont [3/8] 0, 128
    %555 = vxpose.xlu0.c.b16.cont [4/8] 0, 128
    %556 = vxpose.xlu0.c.b16.cont [5/8] 0, 128
    %557 = vxpose.xlu0.c.b16.cont [6/8] 0, 128
    %558 = vxpose.xlu0.c.b16.cont [7/8] 0, 128
    %559 = vxpose.xlu0.c.b16.end [8/8] 0, 128
    %v560 = vpop.trf.xlu0
    %v561 = vpop.trf.xlu0
    %v562 = vpop.trf.xlu0
    %v563 = vpop.trf.xlu0
    %v564 = vpop.trf.xlu0
    %v565 = vpop.trf.xlu0
    %v566 = vpop.trf.xlu0
    %v567 = vpop.trf.xlu0
    %568 = vxpose.xlu0.c.b16.start [1/8] %v364, 128
    %569 = vxpose.xlu0.c.b16.cont [2/8] 0, 128
    %570 = vxpose.xlu0.c.b16.cont [3/8] 0, 128
    %571 = vxpose.xlu0.c.b16.cont [4/8] 0, 128
    %572 = vxpose.xlu0.c.b16.cont [5/8] 0, 128
    %573 = vxpose.xlu0.c.b16.cont [6/8] 0, 128
    %574 = vxpose.xlu0.c.b16.cont [7/8] 0, 128
    %575 = vxpose.xlu0.c.b16.end [8/8] 0, 128
    %v576 = vpop.trf.xlu0
    %v577 = vpop.trf.xlu0
    %v578 = vpop.trf.xlu0
    %v579 = vpop.trf.xlu0
    %v580 = vpop.trf.xlu0
    %v581 = vpop.trf.xlu0
    %v582 = vpop.trf.xlu0
    %v583 = vpop.trf.xlu0
    %584 = vxpose.xlu0.c.b16.start [1/8] %v365, 128
    %585 = vxpose.xlu0.c.b16.cont [2/8] 0, 128
    %586 = vxpose.xlu0.c.b16.cont [3/8] 0, 128
    %587 = vxpose.xlu0.c.b16.cont [4/8] 0, 128
    %588 = vxpose.xlu0.c.b16.cont [5/8] 0, 128
    %589 = vxpose.xlu0.c.b16.cont [6/8] 0, 128
    %590 = vxpose.xlu0.c.b16.cont [7/8] 0, 128
    %591 = vxpose.xlu0.c.b16.end [8/8] 0, 128
    %v592 = vpop.trf.xlu0
    %v593 = vpop.trf.xlu0
    %v594 = vpop.trf.xlu0
    %v595 = vpop.trf.xlu0
    %v596 = vpop.trf.xlu0
    %v597 = vpop.trf.xlu0
    %v598 = vpop.trf.xlu0
    %v599 = vpop.trf.xlu0
    %600 = vxpose.xlu0.c.b16.start [1/8] %v366, 128
    %601 = vxpose.xlu0.c.b16.cont [2/8] 0, 128
    %602 = vxpose.xlu0.c.b16.cont [3/8] 0, 128
    %603 = vxpose.xlu0.c.b16.cont [4/8] 0, 128
    %604 = vxpose.xlu0.c.b16.cont [5/8] 0, 128
    %605 = vxpose.xlu0.c.b16.cont [6/8] 0, 128
    %606 = vxpose.xlu0.c.b16.cont [7/8] 0, 128
    %607 = vxpose.xlu0.c.b16.end [8/8] 0, 128
    %v608 = vpop.trf.xlu0
    %v609 = vpop.trf.xlu0
    %v610 = vpop.trf.xlu0
    %v611 = vpop.trf.xlu0
    %v612 = vpop.trf.xlu0
    %v613 = vpop.trf.xlu0
    %v614 = vpop.trf.xlu0
    %v615 = vpop.trf.xlu0
    %616 = vxpose.xlu0.c.b16.start [1/8] %v367, 128
    %617 = vxpose.xlu0.c.b16.cont [2/8] 0, 128
    %618 = vxpose.xlu0.c.b16.cont [3/8] 0, 128
    %619 = vxpose.xlu0.c.b16.cont [4/8] 0, 128
    %620 = vxpose.xlu0.c.b16.cont [5/8] 0, 128
    %621 = vxpose.xlu0.c.b16.cont [6/8] 0, 128
    %622 = vxpose.xlu0.c.b16.cont [7/8] 0, 128
    %623 = vxpose.xlu0.c.b16.end [8/8] 0, 128
    %v624 = vpop.trf.xlu0
    %v625 = vpop.trf.xlu0
    %v626 = vpop.trf.xlu0
    %v627 = vpop.trf.xlu0
    %v628 = vpop.trf.xlu0
    %v629 = vpop.trf.xlu0
    %v630 = vpop.trf.xlu0
    %v631 = vpop.trf.xlu0
    %v632 = vrot.slane %v576, 4
    %v633 = vsel %vm452, %v632, %v512
    %v635 = vunpack.c.l.s4 1983009808
    %v636 = vunpack.c.0.s8 %v635
    %v637 = vperm.slane %v633, %v636
    %v638 = vrot.slane %v608, 4
    %v639 = vsel %vm452, %v638, %v544
    %v641 = vunpack.c.l.s4 1983009808
    %v642 = vunpack.c.0.s8 %v641
    %v643 = vperm.slane %v639, %v642
    %v644 = vrot.slane %v643, 4
    %v645 = vsel %vm452, %v644, %v637
    %v646 = vrot.slane %v637, 4
    %v647 = vsel %vm452, %v643, %v646
    %v649 = vunpack.c.l.s4 1934713408
    %v650 = vunpack.c.0.s8 %v649
    %v651 = vperm.slane %v645, %v650
    %v653 = vunpack.c.l.s4 1934713408
    %v654 = vunpack.c.0.s8 %v653
    %v655 = vperm.slane %v647, %v654
    %v656 = vrot.slane %v651, 4
    %v657 = vsel %vm452, 0, %v656
    %v658 = vrot.slane %v655, 4
    %v659 = vsel %vm452, 0, %v658
    %v660 = vrot.slane %v592, 4
    %v661 = vsel %vm452, %v660, %v528
    %v663 = vunpack.c.l.s4 1983009808
    %v664 = vunpack.c.0.s8 %v663
    %v665 = vperm.slane %v661, %v664
    %v666 = vrot.slane %v624, 4
    %v667 = vsel %vm452, %v666, %v560
    %v669 = vunpack.c.l.s4 1983009808
    %v670 = vunpack.c.0.s8 %v669
    %v671 = vperm.slane %v667, %v670
    %v672 = vrot.slane %v671, 4
    %v673 = vsel %vm452, %v672, %v665
    %v674 = vrot.slane %v665, 4
    %v675 = vsel %vm452, %v671, %v674
    %v677 = vunpack.c.l.s4 1934713408
    %v678 = vunpack.c.0.s8 %v677
    %v679 = vperm.slane %v673, %v678
    %v681 = vunpack.c.l.s4 1934713408
    %v682 = vunpack.c.0.s8 %v681
    %v683 = vperm.slane %v675, %v682
    %v684 = vrot.slane %v679, 4
    %v685 = vsel %vm452, 0, %v684
    %v686 = vrot.slane %v683, 4
    %v687 = vsel %vm452, 0, %v686
    %v690 = vpack.i.b16 %v679, %v651
    %v692 = vshrl.u32 %v651, 16
    %v693 = vshrl.u32 %v679, 16
    %v694 = vpack.i.b16 %v693, %v692
    %v698 = vpack.i.b16 %v685, %v657
    %v700 = vshrl.u32 %v657, 16
    %v701 = vshrl.u32 %v685, 16
    %v702 = vpack.i.b16 %v701, %v700
    %v706 = vpack.i.b16 %v683, %v655
    %v708 = vshrl.u32 %v655, 16
    %v709 = vshrl.u32 %v683, 16
    %v710 = vpack.i.b16 %v709, %v708
    %v714 = vpack.i.b16 %v687, %v659
    %v716 = vshrl.u32 %v659, 16
    %v717 = vshrl.u32 %v687, 16
    %v718 = vpack.i.b16 %v717, %v716
    %720 = vxpose.xlu0.c.b16.start [1/8] %v690, 128
    %721 = vxpose.xlu0.c.b16.cont [2/8] 0, 128
    %722 = vxpose.xlu0.c.b16.cont [3/8] 0, 128
    %723 = vxpose.xlu0.c.b16.cont [4/8] 0, 128
    %724 = vxpose.xlu0.c.b16.cont [5/8] 0, 128
    %725 = vxpose.xlu0.c.b16.cont [6/8] 0, 128
    %726 = vxpose.xlu0.c.b16.cont [7/8] 0, 128
    %727 = vxpose.xlu0.c.b16.end [8/8] 0, 128
    %v728 = vpop.trf.xlu0
    %v729 = vpop.trf.xlu0
    %v730 = vpop.trf.xlu0
    %v731 = vpop.trf.xlu0
    %v732 = vpop.trf.xlu0
    %v733 = vpop.trf.xlu0
    %v734 = vpop.trf.xlu0
    %v735 = vpop.trf.xlu0
    %736 = vxpose.xlu0.c.b16.start [1/8] %v694, 128
    %737 = vxpose.xlu0.c.b16.cont [2/8] 0, 128
    %738 = vxpose.xlu0.c.b16.cont [3/8] 0, 128
    %739 = vxpose.xlu0.c.b16.cont [4/8] 0, 128
    %740 = vxpose.xlu0.c.b16.cont [5/8] 0, 128
    %741 = vxpose.xlu0.c.b16.cont [6/8] 0, 128
    %742 = vxpose.xlu0.c.b16.cont [7/8] 0, 128
    %743 = vxpose.xlu0.c.b16.end [8/8] 0, 128
    %v744 = vpop.trf.xlu0
    %v745 = vpop.trf.xlu0
    %v746 = vpop.trf.xlu0
    %v747 = vpop.trf.xlu0
    %v748 = vpop.trf.xlu0
    %v749 = vpop.trf.xlu0
    %v750 = vpop.trf.xlu0
    %v751 = vpop.trf.xlu0
    %752 = vxpose.xlu0.c.b16.start [1/8] %v698, 128
    %753 = vxpose.xlu0.c.b16.cont [2/8] 0, 128
    %754 = vxpose.xlu0.c.b16.cont [3/8] 0, 128
    %755 = vxpose.xlu0.c.b16.cont [4/8] 0, 128
    %756 = vxpose.xlu0.c.b16.cont [5/8] 0, 128
    %757 = vxpose.xlu0.c.b16.cont [6/8] 0, 128
    %758 = vxpose.xlu0.c.b16.cont [7/8] 0, 128
    %759 = vxpose.xlu0.c.b16.end [8/8] 0, 128
    %v760 = vpop.trf.xlu0
    %v761 = vpop.trf.xlu0
    %v762 = vpop.trf.xlu0
    %v763 = vpop.trf.xlu0
    %v764 = vpop.trf.xlu0
    %v765 = vpop.trf.xlu0
    %v766 = vpop.trf.xlu0
    %v767 = vpop.trf.xlu0
    %768 = vxpose.xlu0.c.b16.start [1/8] %v702, 128
    %769 = vxpose.xlu0.c.b16.cont [2/8] 0, 128
    %770 = vxpose.xlu0.c.b16.cont [3/8] 0, 128
    %771 = vxpose.xlu0.c.b16.cont [4/8] 0, 128
    %772 = vxpose.xlu0.c.b16.cont [5/8] 0, 128
    %773 = vxpose.xlu0.c.b16.cont [6/8] 0, 128
    %774 = vxpose.xlu0.c.b16.cont [7/8] 0, 128
    %775 = vxpose.xlu0.c.b16.end [8/8] 0, 128
    %v776 = vpop.trf.xlu0
    %v777 = vpop.trf.xlu0
    %v778 = vpop.trf.xlu0
    %v779 = vpop.trf.xlu0
    %v780 = vpop.trf.xlu0
    %v781 = vpop.trf.xlu0
    %v782 = vpop.trf.xlu0
    %v783 = vpop.trf.xlu0
    %784 = vxpose.xlu0.c.b16.start [1/8] %v706, 128
    %785 = vxpose.xlu0.c.b16.cont [2/8] 0, 128
    %786 = vxpose.xlu0.c.b16.cont [3/8] 0, 128
    %787 = vxpose.xlu0.c.b16.cont [4/8] 0, 128
    %788 = vxpose.xlu0.c.b16.cont [5/8] 0, 128
    %789 = vxpose.xlu0.c.b16.cont [6/8] 0, 128
    %790 = vxpose.xlu0.c.b16.cont [7/8] 0, 128
    %791 = vxpose.xlu0.c.b16.end [8/8] 0, 128
    %v792 = vpop.trf.xlu0
    %v793 = vpop.trf.xlu0
    %v794 = vpop.trf.xlu0
    %v795 = vpop.trf.xlu0
    %v796 = vpop.trf.xlu0
    %v797 = vpop.trf.xlu0
    %v798 = vpop.trf.xlu0
    %v799 = vpop.trf.xlu0
    %800 = vxpose.xlu0.c.b16.start [1/8] %v710, 128
    %801 = vxpose.xlu0.c.b16.cont [2/8] 0, 128
    %802 = vxpose.xlu0.c.b16.cont [3/8] 0, 128
    %803 = vxpose.xlu0.c.b16.cont [4/8] 0, 128
    %804 = vxpose.xlu0.c.b16.cont [5/8] 0, 128
    %805 = vxpose.xlu0.c.b16.cont [6/8] 0, 128
    %806 = vxpose.xlu0.c.b16.cont [7/8] 0, 128
    %807 = vxpose.xlu0.c.b16.end [8/8] 0, 128
    %v808 = vpop.trf.xlu0
    %v809 = vpop.trf.xlu0
    %v810 = vpop.trf.xlu0
    %v811 = vpop.trf.xlu0
    %v812 = vpop.trf.xlu0
    %v813 = vpop.trf.xlu0
    %v814 = vpop.trf.xlu0
    %v815 = vpop.trf.xlu0
    %816 = vxpose.xlu0.c.b16.start [1/8] %v714, 128
    %817 = vxpose.xlu0.c.b16.cont [2/8] 0, 128
    %818 = vxpose.xlu0.c.b16.cont [3/8] 0, 128
    %819 = vxpose.xlu0.c.b16.cont [4/8] 0, 128
    %820 = vxpose.xlu0.c.b16.cont [5/8] 0, 128
    %821 = vxpose.xlu0.c.b16.cont [6/8] 0, 128
    %822 = vxpose.xlu0.c.b16.cont [7/8] 0, 128
    %823 = vxpose.xlu0.c.b16.end [8/8] 0, 128
    %v824 = vpop.trf.xlu0
    %v825 = vpop.trf.xlu0
    %v826 = vpop.trf.xlu0
    %v827 = vpop.trf.xlu0
    %v828 = vpop.trf.xlu0
    %v829 = vpop.trf.xlu0
    %v830 = vpop.trf.xlu0
    %v831 = vpop.trf.xlu0
    %832 = vxpose.xlu0.c.b16.start [1/8] %v718, 128
    %833 = vxpose.xlu0.c.b16.cont [2/8] 0, 128
    %834 = vxpose.xlu0.c.b16.cont [3/8] 0, 128
    %835 = vxpose.xlu0.c.b16.cont [4/8] 0, 128
    %836 = vxpose.xlu0.c.b16.cont [5/8] 0, 128
    %837 = vxpose.xlu0.c.b16.cont [6/8] 0, 128
    %838 = vxpose.xlu0.c.b16.cont [7/8] 0, 128
    %839 = vxpose.xlu0.c.b16.end [8/8] 0, 128
    %v840 = vpop.trf.xlu0
    %v841 = vpop.trf.xlu0
    %v842 = vpop.trf.xlu0
    %v843 = vpop.trf.xlu0
    %v844 = vpop.trf.xlu0
    %v845 = vpop.trf.xlu0
    %v846 = vpop.trf.xlu0
    %v847 = vpop.trf.xlu0
    %v848 = vrot.slane %v792, 4
    %v849 = vsel %vm452, %v848, %v728
    %v851 = vunpack.c.l.s4 1983009808
    %v852 = vunpack.c.0.s8 %v851
    %v853 = vperm.slane %v849, %v852
    %v854 = vrot.slane %v824, 4
    %v855 = vsel %vm452, %v854, %v760
    %v857 = vunpack.c.l.s4 1983009808
    %v858 = vunpack.c.0.s8 %v857
    %v859 = vperm.slane %v855, %v858
    %v860 = vrot.slane %v859, 4
    %v861 = vsel %vm452, %v860, %v853
    %v863 = vunpack.c.l.s4 1934713408
    %v864 = vunpack.c.0.s8 %v863
    %v865 = vperm.slane %v861, %v864
    %v866 = vrot.slane %v865, 4
    %v867 = vsel %vm452, 0, %v866
    %v868 = vrot.slane %v808, 4
    %v869 = vsel %vm452, %v868, %v744
    %v871 = vunpack.c.l.s4 1983009808
    %v872 = vunpack.c.0.s8 %v871
    %v873 = vperm.slane %v869, %v872
    %v874 = vrot.slane %v840, 4
    %v875 = vsel %vm452, %v874, %v776
    %v877 = vunpack.c.l.s4 1983009808
    %v878 = vunpack.c.0.s8 %v877
    %v879 = vperm.slane %v875, %v878
    %v880 = vrot.slane %v879, 4
    %v881 = vsel %vm452, %v880, %v873
    %v883 = vunpack.c.l.s4 1934713408
    %v884 = vunpack.c.0.s8 %v883
    %v885 = vperm.slane %v881, %v884
    %v886 = vrot.slane %v885, 4
    %v887 = vsel %vm452, 0, %v886
    %v890 = vpack.i.b16 %v885, %v865
    %v891 = vshrl.u32 %v865, 16
    %v892 = vshrl.u32 %v885, 16
    %v893 = vpack.i.b16 %v892, %v891
    %v896 = vpack.i.b16 %v887, %v867
    %v897 = vshrl.u32 %v867, 16
    %v898 = vshrl.u32 %v887, 16
    %v899 = vpack.i.b16 %v898, %v897
    %vm900 = vcmask 64512
    %v902 = vsel %vm900, %v494, 0
    %vm904 = vcmask 1043456
    %v906 = vsel %vm904, %v890, 0
    %908 = vmatpush.bf16.msra.mxu0 0
    %909 = vmatpush.bf16.msra.mxu0 0
    %910 = vmatpush.bf16.msra.mxu0 0
    %911 = vmatpush.bf16.msra.mxu0 0
    %912 = vmatpush.bf16.msra.mxu0 0
    %913 = vmatpush.bf16.msra.mxu0 0
    %914 = vmatpush.bf16.msra.mxu0 0
    %915 = vmatpush.bf16.msra.mxu0 %v906
    %916 = vmatmul.bf16.gmra.mxu0 %v902
    %v917 = vpop.f32.mrf.mxu0
    %v918 = vadd.f32 0.0, %v917
    %v919 = vpop.f32.mrf.mxu0
    %920 = vdwg.mxu0
    %v922 = vsel %vm900, %v497, 0
    %v925 = vsel %vm904, %v893, 0
    %927 = vmatpush.bf16.msra.mxu0 0
    %928 = vmatpush.bf16.msra.mxu0 0
    %929 = vmatpush.bf16.msra.mxu0 0
    %930 = vmatpush.bf16.msra.mxu0 0
    %931 = vmatpush.bf16.msra.mxu0 0
    %932 = vmatpush.bf16.msra.mxu0 0
    %933 = vmatpush.bf16.msra.mxu0 0
    %934 = vmatpush.bf16.msra.mxu0 %v925
    %935 = vmatmul.bf16.gmra.mxu0 %v922
    %v936 = vpop.f32.mrf.mxu0
    %v937 = vadd.f32 0.0, %v936
    %v938 = vpop.f32.mrf.mxu0
    %939 = vdwg.mxu0
    %v941 = vsel %vm900, %v500, 0
    %v944 = vsel %vm904, %v896, 0
    %946 = vmatpush.bf16.msra.mxu0 0
    %947 = vmatpush.bf16.msra.mxu0 0
    %948 = vmatpush.bf16.msra.mxu0 0
    %949 = vmatpush.bf16.msra.mxu0 0
    %950 = vmatpush.bf16.msra.mxu0 0
    %951 = vmatpush.bf16.msra.mxu0 0
    %952 = vmatpush.bf16.msra.mxu0 0
    %953 = vmatpush.bf16.msra.mxu0 %v944
    %954 = vmatmul.bf16.gmra.mxu0 %v941
    %v955 = vpop.f32.mrf.mxu0
    %v956 = vadd.f32 0.0, %v955
    %v957 = vpop.f32.mrf.mxu0
    %958 = vdwg.mxu0
    %v960 = vsel %vm900, %v503, 0
    %v963 = vsel %vm904, %v899, 0
    %965 = vmatpush.bf16.msra.mxu0 0
    %966 = vmatpush.bf16.msra.mxu0 0
    %967 = vmatpush.bf16.msra.mxu0 0
    %968 = vmatpush.bf16.msra.mxu0 0
    %969 = vmatpush.bf16.msra.mxu0 0
    %970 = vmatpush.bf16.msra.mxu0 0
    %971 = vmatpush.bf16.msra.mxu0 0
    %972 = vmatpush.bf16.msra.mxu0 %v963
    %973 = vmatmul.bf16.gmra.mxu0 %v960
    %v974 = vpop.f32.mrf.mxu0
    %v975 = vadd.f32 0.0, %v974
    %v976 = vpop.f32.mrf.mxu0
    %977 = vdwg.mxu0
    %v978 = vsel %vm900, %v918, -inf
    %979 = vmax.xlane.f32.xlu0 %v978
    %v980 = vpop.xlane.xlu0 %979
    %v981 = vsel %vm900, %v937, -inf
    %982 = vmax.xlane.f32.xlu0 %v981
    %v983 = vpop.xlane.xlu0 %982
    %v984 = vsel %vm900, %v956, -inf
    %985 = vmax.xlane.f32.xlu0 %v984
    %v986 = vpop.xlane.xlu0 %985
    %v987 = vsel %vm900, %v975, -inf
    %988 = vmax.xlane.f32.xlu0 %v987
    %v989 = vpop.xlane.xlu0 %988
    %v990 = vsub.f32 %v918, %v980
    %v991 = vsub.f32 %v937, %v983
    %v992 = vsub.f32 %v956, %v986
    %v993 = vsub.f32 %v975, %v989
    %v994 = vmul.f32 %v990, 1.442695
    %v995 = vpow.pop %v994
    %v996 = vmul.f32 %v991, 1.442695
    %v997 = vpow.pop %v996
    %v998 = vmul.f32 %v992, 1.442695
    %v999 = vpow.pop %v998
    %v1000 = vmul.f32 %v993, 1.442695
    %v1001 = vpow.pop %v1000
    %v1002 = vsel %vm900, %v995, 0.0
    %1003 = vadd.xlane.f32.xlu0 %v1002
    %v1004 = vpop.xlane.xlu0 %1003
    %v1005 = vsel %vm900, %v997, 0.0
    %1006 = vadd.xlane.f32.xlu0 %v1005
    %v1007 = vpop.xlane.xlu0 %1006
    %v1008 = vsel %vm900, %v999, 0.0
    %1009 = vadd.xlane.f32.xlu0 %v1008
    %v1010 = vpop.xlane.xlu0 %1009
    %v1011 = vsel %vm900, %v1001, 0.0
    %1012 = vadd.xlane.f32.xlu0 %v1011
    %v1013 = vpop.xlane.xlu0 %1012
    %v1014 = vrcp.pop %v1004
    %v1015 = vrcp.pop %v1007
    %v1016 = vrcp.pop %v1010
    %v1017 = vrcp.pop %v1013
    %v1018 = vmul.f32 %v995, %v1014
    %v1019 = vmul.f32 %v997, %v1015
    %v1020 = vmul.f32 %v999, %v1016
    %v1021 = vmul.f32 %v1001, %v1017
    %v1022 = vpack.c.bf16 %v1018, %v1018
    %v1023 = vpack.c.bf16 %v1019, %v1019
    %v1024 = vpack.c.bf16 %v1020, %v1020
    %v1025 = vpack.c.bf16 %v1021, %v1021
    %1026 = vxpose.xlu0.c.b16.start [1/8] %v443, 128
    %1027 = vxpose.xlu0.c.b16.cont [2/8] 0, 128
    %1028 = vxpose.xlu0.c.b16.cont [3/8] 0, 128
    %1029 = vxpose.xlu0.c.b16.cont [4/8] 0, 128
    %1030 = vxpose.xlu0.c.b16.cont [5/8] 0, 128
    %1031 = vxpose.xlu0.c.b16.cont [6/8] 0, 128
    %1032 = vxpose.xlu0.c.b16.cont [7/8] 0, 128
    %1033 = vxpose.xlu0.c.b16.end [8/8] 0, 128
    %v1034 = vpop.trf.xlu0
    %v1035 = vpop.trf.xlu0
    %v1036 = vpop.trf.xlu0
    %v1037 = vpop.trf.xlu0
    %v1038 = vpop.trf.xlu0
    %v1039 = vpop.trf.xlu0
    %v1040 = vpop.trf.xlu0
    %v1041 = vpop.trf.xlu0
    %1042 = vxpose.xlu0.c.b16.start [1/8] %v444, 128
    %1043 = vxpose.xlu0.c.b16.cont [2/8] 0, 128
    %1044 = vxpose.xlu0.c.b16.cont [3/8] 0, 128
    %1045 = vxpose.xlu0.c.b16.cont [4/8] 0, 128
    %1046 = vxpose.xlu0.c.b16.cont [5/8] 0, 128
    %1047 = vxpose.xlu0.c.b16.cont [6/8] 0, 128
    %1048 = vxpose.xlu0.c.b16.cont [7/8] 0, 128
    %1049 = vxpose.xlu0.c.b16.end [8/8] 0, 128
    %v1050 = vpop.trf.xlu0
    %v1051 = vpop.trf.xlu0
    %v1052 = vpop.trf.xlu0
    %v1053 = vpop.trf.xlu0
    %v1054 = vpop.trf.xlu0
    %v1055 = vpop.trf.xlu0
    %v1056 = vpop.trf.xlu0
    %v1057 = vpop.trf.xlu0
    %1058 = vxpose.xlu0.c.b16.start [1/8] %v445, 128
    %1059 = vxpose.xlu0.c.b16.cont [2/8] 0, 128
    %1060 = vxpose.xlu0.c.b16.cont [3/8] 0, 128
    %1061 = vxpose.xlu0.c.b16.cont [4/8] 0, 128
    %1062 = vxpose.xlu0.c.b16.cont [5/8] 0, 128
    %1063 = vxpose.xlu0.c.b16.cont [6/8] 0, 128
    %1064 = vxpose.xlu0.c.b16.cont [7/8] 0, 128
    %1065 = vxpose.xlu0.c.b16.end [8/8] 0, 128
    %v1066 = vpop.trf.xlu0
    %v1067 = vpop.trf.xlu0
    %v1068 = vpop.trf.xlu0
    %v1069 = vpop.trf.xlu0
    %v1070 = vpop.trf.xlu0
    %v1071 = vpop.trf.xlu0
    %v1072 = vpop.trf.xlu0
    %v1073 = vpop.trf.xlu0
    %1074 = vxpose.xlu0.c.b16.start [1/8] %v446, 128
    %1075 = vxpose.xlu0.c.b16.cont [2/8] 0, 128
    %1076 = vxpose.xlu0.c.b16.cont [3/8] 0, 128
    %1077 = vxpose.xlu0.c.b16.cont [4/8] 0, 128
    %1078 = vxpose.xlu0.c.b16.cont [5/8] 0, 128
    %1079 = vxpose.xlu0.c.b16.cont [6/8] 0, 128
    %1080 = vxpose.xlu0.c.b16.cont [7/8] 0, 128
    %1081 = vxpose.xlu0.c.b16.end [8/8] 0, 128
    %v1082 = vpop.trf.xlu0
    %v1083 = vpop.trf.xlu0
    %v1084 = vpop.trf.xlu0
    %v1085 = vpop.trf.xlu0
    %v1086 = vpop.trf.xlu0
    %v1087 = vpop.trf.xlu0
    %v1088 = vpop.trf.xlu0
    %v1089 = vpop.trf.xlu0
    %1090 = vxpose.xlu0.c.b16.start [1/8] %v447, 128
    %1091 = vxpose.xlu0.c.b16.cont [2/8] 0, 128
    %1092 = vxpose.xlu0.c.b16.cont [3/8] 0, 128
    %1093 = vxpose.xlu0.c.b16.cont [4/8] 0, 128
    %1094 = vxpose.xlu0.c.b16.cont [5/8] 0, 128
    %1095 = vxpose.xlu0.c.b16.cont [6/8] 0, 128
    %1096 = vxpose.xlu0.c.b16.cont [7/8] 0, 128
    %1097 = vxpose.xlu0.c.b16.end [8/8] 0, 128
    %v1098 = vpop.trf.xlu0
    %v1099 = vpop.trf.xlu0
    %v1100 = vpop.trf.xlu0
    %v1101 = vpop.trf.xlu0
    %v1102 = vpop.trf.xlu0
    %v1103 = vpop.trf.xlu0
    %v1104 = vpop.trf.xlu0
    %v1105 = vpop.trf.xlu0
    %1106 = vxpose.xlu0.c.b16.start [1/8] %v448, 128
    %1107 = vxpose.xlu0.c.b16.cont [2/8] 0, 128
    %1108 = vxpose.xlu0.c.b16.cont [3/8] 0, 128
    %1109 = vxpose.xlu0.c.b16.cont [4/8] 0, 128
    %1110 = vxpose.xlu0.c.b16.cont [5/8] 0, 128
    %1111 = vxpose.xlu0.c.b16.cont [6/8] 0, 128
    %1112 = vxpose.xlu0.c.b16.cont [7/8] 0, 128
    %1113 = vxpose.xlu0.c.b16.end [8/8] 0, 128
    %v1114 = vpop.trf.xlu0
    %v1115 = vpop.trf.xlu0
    %v1116 = vpop.trf.xlu0
    %v1117 = vpop.trf.xlu0
    %v1118 = vpop.trf.xlu0
    %v1119 = vpop.trf.xlu0
    %v1120 = vpop.trf.xlu0
    %v1121 = vpop.trf.xlu0
    %1122 = vxpose.xlu0.c.b16.start [1/8] %v449, 128
    %1123 = vxpose.xlu0.c.b16.cont [2/8] 0, 128
    %1124 = vxpose.xlu0.c.b16.cont [3/8] 0, 128
    %1125 = vxpose.xlu0.c.b16.cont [4/8] 0, 128
    %1126 = vxpose.xlu0.c.b16.cont [5/8] 0, 128
    %1127 = vxpose.xlu0.c.b16.cont [6/8] 0, 128
    %1128 = vxpose.xlu0.c.b16.cont [7/8] 0, 128
    %1129 = vxpose.xlu0.c.b16.end [8/8] 0, 128
    %v1130 = vpop.trf.xlu0
    %v1131 = vpop.trf.xlu0
    %v1132 = vpop.trf.xlu0
    %v1133 = vpop.trf.xlu0
    %v1134 = vpop.trf.xlu0
    %v1135 = vpop.trf.xlu0
    %v1136 = vpop.trf.xlu0
    %v1137 = vpop.trf.xlu0
    %1138 = vxpose.xlu0.c.b16.start [1/8] %v450, 128
    %1139 = vxpose.xlu0.c.b16.cont [2/8] 0, 128
    %1140 = vxpose.xlu0.c.b16.cont [3/8] 0, 128
    %1141 = vxpose.xlu0.c.b16.cont [4/8] 0, 128
    %1142 = vxpose.xlu0.c.b16.cont [5/8] 0, 128
    %1143 = vxpose.xlu0.c.b16.cont [6/8] 0, 128
    %1144 = vxpose.xlu0.c.b16.cont [7/8] 0, 128
    %1145 = vxpose.xlu0.c.b16.end [8/8] 0, 128
    %v1146 = vpop.trf.xlu0
    %v1147 = vpop.trf.xlu0
    %v1148 = vpop.trf.xlu0
    %v1149 = vpop.trf.xlu0
    %v1150 = vpop.trf.xlu0
    %v1151 = vpop.trf.xlu0
    %v1152 = vpop.trf.xlu0
    %v1153 = vpop.trf.xlu0
    %v1154 = vrot.slane %v1098, 4
    %v1155 = vsel %vm452, %v1154, %v1034
    %v1157 = vunpack.c.l.s4 1983009808
    %v1158 = vunpack.c.0.s8 %v1157
    %v1159 = vperm.slane %v1155, %v1158
    %v1160 = vrot.slane %v1130, 4
    %v1161 = vsel %vm452, %v1160, %v1066
    %v1163 = vunpack.c.l.s4 1983009808
    %v1164 = vunpack.c.0.s8 %v1163
    %v1165 = vperm.slane %v1161, %v1164
    %v1166 = vrot.slane %v1165, 4
    %v1167 = vsel %vm452, %v1166, %v1159
    %v1168 = vrot.slane %v1159, 4
    %v1169 = vsel %vm452, %v1165, %v1168
    %v1171 = vunpack.c.l.s4 1934713408
    %v1172 = vunpack.c.0.s8 %v1171
    %v1173 = vperm.slane %v1167, %v1172
    %v1175 = vunpack.c.l.s4 1934713408
    %v1176 = vunpack.c.0.s8 %v1175
    %v1177 = vperm.slane %v1169, %v1176
    %v1178 = vrot.slane %v1173, 4
    %v1179 = vsel %vm452, 0, %v1178
    %v1180 = vrot.slane %v1177, 4
    %v1181 = vsel %vm452, 0, %v1180
    %v1182 = vrot.slane %v1114, 4
    %v1183 = vsel %vm452, %v1182, %v1050
    %v1185 = vunpack.c.l.s4 1983009808
    %v1186 = vunpack.c.0.s8 %v1185
    %v1187 = vperm.slane %v1183, %v1186
    %v1188 = vrot.slane %v1146, 4
    %v1189 = vsel %vm452, %v1188, %v1082
    %v1191 = vunpack.c.l.s4 1983009808
    %v1192 = vunpack.c.0.s8 %v1191
    %v1193 = vperm.slane %v1189, %v1192
    %v1194 = vrot.slane %v1193, 4
    %v1195 = vsel %vm452, %v1194, %v1187
    %v1196 = vrot.slane %v1187, 4
    %v1197 = vsel %vm452, %v1193, %v1196
    %v1199 = vunpack.c.l.s4 1934713408
    %v1200 = vunpack.c.0.s8 %v1199
    %v1201 = vperm.slane %v1195, %v1200
    %v1203 = vunpack.c.l.s4 1934713408
    %v1204 = vunpack.c.0.s8 %v1203
    %v1205 = vperm.slane %v1197, %v1204
    %v1206 = vrot.slane %v1201, 4
    %v1207 = vsel %vm452, 0, %v1206
    %v1208 = vrot.slane %v1205, 4
    %v1209 = vsel %vm452, 0, %v1208
    %v1212 = vpack.i.b16 %v1201, %v1173
    %v1214 = vshrl.u32 %v1173, 16
    %v1215 = vshrl.u32 %v1201, 16
    %v1216 = vpack.i.b16 %v1215, %v1214
    %v1220 = vpack.i.b16 %v1207, %v1179
    %v1222 = vshrl.u32 %v1179, 16
    %v1223 = vshrl.u32 %v1207, 16
    %v1224 = vpack.i.b16 %v1223, %v1222
    %v1228 = vpack.i.b16 %v1205, %v1177
    %v1230 = vshrl.u32 %v1177, 16
    %v1231 = vshrl.u32 %v1205, 16
    %v1232 = vpack.i.b16 %v1231, %v1230
    %v1236 = vpack.i.b16 %v1209, %v1181
    %v1238 = vshrl.u32 %v1181, 16
    %v1239 = vshrl.u32 %v1209, 16
    %v1240 = vpack.i.b16 %v1239, %v1238
    %1242 = vxpose.xlu0.c.b16.start [1/8] %v1212, 128
    %1243 = vxpose.xlu0.c.b16.cont [2/8] 0, 128
    %1244 = vxpose.xlu0.c.b16.cont [3/8] 0, 128
    %1245 = vxpose.xlu0.c.b16.cont [4/8] 0, 128
    %1246 = vxpose.xlu0.c.b16.cont [5/8] 0, 128
    %1247 = vxpose.xlu0.c.b16.cont [6/8] 0, 128
    %1248 = vxpose.xlu0.c.b16.cont [7/8] 0, 128
    %1249 = vxpose.xlu0.c.b16.end [8/8] 0, 128
    %v1250 = vpop.trf.xlu0
    %v1251 = vpop.trf.xlu0
    %v1252 = vpop.trf.xlu0
    %v1253 = vpop.trf.xlu0
    %v1254 = vpop.trf.xlu0
    %v1255 = vpop.trf.xlu0
    %v1256 = vpop.trf.xlu0
    %v1257 = vpop.trf.xlu0
    %1258 = vxpose.xlu0.c.b16.start [1/8] %v1216, 128
    %1259 = vxpose.xlu0.c.b16.cont [2/8] 0, 128
    %1260 = vxpose.xlu0.c.b16.cont [3/8] 0, 128
    %1261 = vxpose.xlu0.c.b16.cont [4/8] 0, 128
    %1262 = vxpose.xlu0.c.b16.cont [5/8] 0, 128
    %1263 = vxpose.xlu0.c.b16.cont [6/8] 0, 128
    %1264 = vxpose.xlu0.c.b16.cont [7/8] 0, 128
    %1265 = vxpose.xlu0.c.b16.end [8/8] 0, 128
    %v1266 = vpop.trf.xlu0
    %v1267 = vpop.trf.xlu0
    %v1268 = vpop.trf.xlu0
    %v1269 = vpop.trf.xlu0
    %v1270 = vpop.trf.xlu0
    %v1271 = vpop.trf.xlu0
    %v1272 = vpop.trf.xlu0
    %v1273 = vpop.trf.xlu0
    %1274 = vxpose.xlu0.c.b16.start [1/8] %v1220, 128
    %1275 = vxpose.xlu0.c.b16.cont [2/8] 0, 128
    %1276 = vxpose.xlu0.c.b16.cont [3/8] 0, 128
    %1277 = vxpose.xlu0.c.b16.cont [4/8] 0, 128
    %1278 = vxpose.xlu0.c.b16.cont [5/8] 0, 128
    %1279 = vxpose.xlu0.c.b16.cont [6/8] 0, 128
    %1280 = vxpose.xlu0.c.b16.cont [7/8] 0, 128
    %1281 = vxpose.xlu0.c.b16.end [8/8] 0, 128
    %v1282 = vpop.trf.xlu0
    %v1283 = vpop.trf.xlu0
    %v1284 = vpop.trf.xlu0
    %v1285 = vpop.trf.xlu0
    %v1286 = vpop.trf.xlu0
    %v1287 = vpop.trf.xlu0
    %v1288 = vpop.trf.xlu0
    %v1289 = vpop.trf.xlu0
    %1290 = vxpose.xlu0.c.b16.start [1/8] %v1224, 128
    %1291 = vxpose.xlu0.c.b16.cont [2/8] 0, 128
    %1292 = vxpose.xlu0.c.b16.cont [3/8] 0, 128
    %1293 = vxpose.xlu0.c.b16.cont [4/8] 0, 128
    %1294 = vxpose.xlu0.c.b16.cont [5/8] 0, 128
    %1295 = vxpose.xlu0.c.b16.cont [6/8] 0, 128
    %1296 = vxpose.xlu0.c.b16.cont [7/8] 0, 128
    %1297 = vxpose.xlu0.c.b16.end [8/8] 0, 128
    %v1298 = vpop.trf.xlu0
    %v1299 = vpop.trf.xlu0
    %v1300 = vpop.trf.xlu0
    %v1301 = vpop.trf.xlu0
    %v1302 = vpop.trf.xlu0
    %v1303 = vpop.trf.xlu0
    %v1304 = vpop.trf.xlu0
    %v1305 = vpop.trf.xlu0
    %1306 = vxpose.xlu0.c.b16.start [1/8] %v1228, 128
    %1307 = vxpose.xlu0.c.b16.cont [2/8] 0, 128
    %1308 = vxpose.xlu0.c.b16.cont [3/8] 0, 128
    %1309 = vxpose.xlu0.c.b16.cont [4/8] 0, 128
    %1310 = vxpose.xlu0.c.b16.cont [5/8] 0, 128
    %1311 = vxpose.xlu0.c.b16.cont [6/8] 0, 128
    %1312 = vxpose.xlu0.c.b16.cont [7/8] 0, 128
    %1313 = vxpose.xlu0.c.b16.end [8/8] 0, 128
    %v1314 = vpop.trf.xlu0
    %v1315 = vpop.trf.xlu0
    %v1316 = vpop.trf.xlu0
    %v1317 = vpop.trf.xlu0
    %v1318 = vpop.trf.xlu0
    %v1319 = vpop.trf.xlu0
    %v1320 = vpop.trf.xlu0
    %v1321 = vpop.trf.xlu0
    %1322 = vxpose.xlu0.c.b16.start [1/8] %v1232, 128
    %1323 = vxpose.xlu0.c.b16.cont [2/8] 0, 128
    %1324 = vxpose.xlu0.c.b16.cont [3/8] 0, 128
    %1325 = vxpose.xlu0.c.b16.cont [4/8] 0, 128
    %1326 = vxpose.xlu0.c.b16.cont [5/8] 0, 128
    %1327 = vxpose.xlu0.c.b16.cont [6/8] 0, 128
    %1328 = vxpose.xlu0.c.b16.cont [7/8] 0, 128
    %1329 = vxpose.xlu0.c.b16.end [8/8] 0, 128
    %v1330 = vpop.trf.xlu0
    %v1331 = vpop.trf.xlu0
    %v1332 = vpop.trf.xlu0
    %v1333 = vpop.trf.xlu0
    %v1334 = vpop.trf.xlu0
    %v1335 = vpop.trf.xlu0
    %v1336 = vpop.trf.xlu0
    %v1337 = vpop.trf.xlu0
    %1338 = vxpose.xlu0.c.b16.start [1/8] %v1236, 128
    %1339 = vxpose.xlu0.c.b16.cont [2/8] 0, 128
    %1340 = vxpose.xlu0.c.b16.cont [3/8] 0, 128
    %1341 = vxpose.xlu0.c.b16.cont [4/8] 0, 128
    %1342 = vxpose.xlu0.c.b16.cont [5/8] 0, 128
    %1343 = vxpose.xlu0.c.b16.cont [6/8] 0, 128
    %1344 = vxpose.xlu0.c.b16.cont [7/8] 0, 128
    %1345 = vxpose.xlu0.c.b16.end [8/8] 0, 128
    %v1346 = vpop.trf.xlu0
    %v1347 = vpop.trf.xlu0
    %v1348 = vpop.trf.xlu0
    %v1349 = vpop.trf.xlu0
    %v1350 = vpop.trf.xlu0
    %v1351 = vpop.trf.xlu0
    %v1352 = vpop.trf.xlu0
    %v1353 = vpop.trf.xlu0
    %1354 = vxpose.xlu0.c.b16.start [1/8] %v1240, 128
    %1355 = vxpose.xlu0.c.b16.cont [2/8] 0, 128
    %1356 = vxpose.xlu0.c.b16.cont [3/8] 0, 128
    %1357 = vxpose.xlu0.c.b16.cont [4/8] 0, 128
    %1358 = vxpose.xlu0.c.b16.cont [5/8] 0, 128
    %1359 = vxpose.xlu0.c.b16.cont [6/8] 0, 128
    %1360 = vxpose.xlu0.c.b16.cont [7/8] 0, 128
    %1361 = vxpose.xlu0.c.b16.end [8/8] 0, 128
    %v1362 = vpop.trf.xlu0
    %v1363 = vpop.trf.xlu0
    %v1364 = vpop.trf.xlu0
    %v1365 = vpop.trf.xlu0
    %v1366 = vpop.trf.xlu0
    %v1367 = vpop.trf.xlu0
    %v1368 = vpop.trf.xlu0
    %v1369 = vpop.trf.xlu0
    %v1370 = vrot.slane %v1314, 4
    %v1371 = vsel %vm452, %v1370, %v1250
    %v1373 = vunpack.c.l.s4 1983009808
    %v1374 = vunpack.c.0.s8 %v1373
    %v1375 = vperm.slane %v1371, %v1374
    %v1376 = vrot.slane %v1346, 4
    %v1377 = vsel %vm452, %v1376, %v1282
    %v1379 = vunpack.c.l.s4 1983009808
    %v1380 = vunpack.c.0.s8 %v1379
    %v1381 = vperm.slane %v1377, %v1380
    %v1382 = vrot.slane %v1381, 4
    %v1383 = vsel %vm452, %v1382, %v1375
    %v1385 = vunpack.c.l.s4 1934713408
    %v1386 = vunpack.c.0.s8 %v1385
    %v1387 = vperm.slane %v1383, %v1386
    %v1388 = vrot.slane %v1387, 4
    %v1389 = vsel %vm452, 0, %v1388
    %v1390 = vrot.slane %v1330, 4
    %v1391 = vsel %vm452, %v1390, %v1266
    %v1393 = vunpack.c.l.s4 1983009808
    %v1394 = vunpack.c.0.s8 %v1393
    %v1395 = vperm.slane %v1391, %v1394
    %v1396 = vrot.slane %v1362, 4
    %v1397 = vsel %vm452, %v1396, %v1298
    %v1399 = vunpack.c.l.s4 1983009808
    %v1400 = vunpack.c.0.s8 %v1399
    %v1401 = vperm.slane %v1397, %v1400
    %v1402 = vrot.slane %v1401, 4
    %v1403 = vsel %vm452, %v1402, %v1395
    %v1405 = vunpack.c.l.s4 1934713408
    %v1406 = vunpack.c.0.s8 %v1405
    %v1407 = vperm.slane %v1403, %v1406
    %v1408 = vrot.slane %v1407, 4
    %v1409 = vsel %vm452, 0, %v1408
    %v1412 = vpack.i.b16 %v1407, %v1387
    %v1413 = vshrl.u32 %v1387, 16
    %v1414 = vshrl.u32 %v1407, 16
    %v1415 = vpack.i.b16 %v1414, %v1413
    %v1418 = vpack.i.b16 %v1409, %v1389
    %v1419 = vshrl.u32 %v1389, 16
    %v1420 = vshrl.u32 %v1409, 16
    %v1421 = vpack.i.b16 %v1420, %v1419
    %v1423 = vsel %vm900, %v1412, 0
    %v1426 = vsel %vm900, %v1022, 0
    %1428 = vmatpush.bf16.xpose.msra.mxu0 0
    %1429 = vmatpush.bf16.xpose.msra.mxu0 0
    %1430 = vmatpush.bf16.xpose.msra.mxu0 0
    %1431 = vmatpush.bf16.xpose.msra.mxu0 0
    %1432 = vmatpush.bf16.xpose.msra.mxu0 0
    %1433 = vmatpush.bf16.xpose.msra.mxu0 0
    %1434 = vmatpush.bf16.xpose.msra.mxu0 0
    %1435 = vmatpush.bf16.xpose.msra.mxu0 %v1426
    %1436 = vmatmul.bf16.gmra.mxu0 %v1423
    %v1437 = vpop.f32.mrf.mxu0
    %v1438 = vadd.f32 0.0, %v1437
    %v1439 = vpop.f32.mrf.mxu0
    %1440 = vdwg.mxu0
    %v1442 = vsel %vm900, %v1415, 0
    %v1445 = vsel %vm900, %v1023, 0
    %1447 = vmatpush.bf16.xpose.msra.mxu0 0
    %1448 = vmatpush.bf16.xpose.msra.mxu0 0
    %1449 = vmatpush.bf16.xpose.msra.mxu0 0
    %1450 = vmatpush.bf16.xpose.msra.mxu0 0
    %1451 = vmatpush.bf16.xpose.msra.mxu0 0
    %1452 = vmatpush.bf16.xpose.msra.mxu0 0
    %1453 = vmatpush.bf16.xpose.msra.mxu0 0
    %1454 = vmatpush.bf16.xpose.msra.mxu0 %v1445
    %1455 = vmatmul.bf16.gmra.mxu0 %v1442
    %v1456 = vpop.f32.mrf.mxu0
    %v1457 = vadd.f32 0.0, %v1456
    %v1458 = vpop.f32.mrf.mxu0
    %1459 = vdwg.mxu0
    %v1461 = vsel %vm900, %v1418, 0
    %v1464 = vsel %vm900, %v1024, 0
    %1466 = vmatpush.bf16.xpose.msra.mxu0 0
    %1467 = vmatpush.bf16.xpose.msra.mxu0 0
    %1468 = vmatpush.bf16.xpose.msra.mxu0 0
    %1469 = vmatpush.bf16.xpose.msra.mxu0 0
    %1470 = vmatpush.bf16.xpose.msra.mxu0 0
    %1471 = vmatpush.bf16.xpose.msra.mxu0 0
    %1472 = vmatpush.bf16.xpose.msra.mxu0 0
    %1473 = vmatpush.bf16.xpose.msra.mxu0 %v1464
    %1474 = vmatmul.bf16.gmra.mxu0 %v1461
    %v1475 = vpop.f32.mrf.mxu0
    %v1476 = vadd.f32 0.0, %v1475
    %v1477 = vpop.f32.mrf.mxu0
    %1478 = vdwg.mxu0
    %v1480 = vsel %vm900, %v1421, 0
    %v1483 = vsel %vm900, %v1025, 0
    %1485 = vmatpush.bf16.xpose.msra.mxu0 0
    %1486 = vmatpush.bf16.xpose.msra.mxu0 0
    %1487 = vmatpush.bf16.xpose.msra.mxu0 0
    %1488 = vmatpush.bf16.xpose.msra.mxu0 0
    %1489 = vmatpush.bf16.xpose.msra.mxu0 0
    %1490 = vmatpush.bf16.xpose.msra.mxu0 0
    %1491 = vmatpush.bf16.xpose.msra.mxu0 0
    %1492 = vmatpush.bf16.xpose.msra.mxu0 %v1483
    %1493 = vmatmul.bf16.gmra.mxu0 %v1480
    %v1494 = vpop.f32.mrf.mxu0
    %v1495 = vadd.f32 0.0, %v1494
    %v1496 = vpop.f32.mrf.mxu0
    %1497 = vdwg.mxu0
    %1498 = vxpose.xlu0.b32.start [1/16] %v1438, 128
    %1499 = vxpose.xlu0.b32.cont [2/16] 0.0, 128
    %1500 = vxpose.xlu0.b32.cont [3/16] 0.0, 128
    %1501 = vxpose.xlu0.b32.cont [4/16] 0.0, 128
    %1502 = vxpose.xlu0.b32.cont [5/16] 0.0, 128
    %1503 = vxpose.xlu0.b32.cont [6/16] 0.0, 128
    %1504 = vxpose.xlu0.b32.cont [7/16] 0.0, 128
    %1505 = vxpose.xlu0.b32.cont [8/16] 0.0, 128
    %1506 = vxpose.xlu0.b32.cont [9/16] 0.0, 128
    %1507 = vxpose.xlu0.b32.cont [10/16] 0.0, 128
    %1508 = vxpose.xlu0.b32.cont [11/16] 0.0, 128
    %1509 = vxpose.xlu0.b32.cont [12/16] 0.0, 128
    %1510 = vxpose.xlu0.b32.cont [13/16] 0.0, 128
    %1511 = vxpose.xlu0.b32.cont [14/16] 0.0, 128
    %1512 = vxpose.xlu0.b32.cont [15/16] 0.0, 128
    %1513 = vxpose.xlu0.b32.end [16/16] 0.0, 128
    %v1514 = vpop.trf.xlu0
    %v1515 = vpop.trf.xlu0
    %v1516 = vpop.trf.xlu0
    %v1517 = vpop.trf.xlu0
    %v1518 = vpop.trf.xlu0
    %v1519 = vpop.trf.xlu0
    %v1520 = vpop.trf.xlu0
    %v1521 = vpop.trf.xlu0
    %v1522 = vpop.trf.xlu0
    %v1523 = vpop.trf.xlu0
    %v1524 = vpop.trf.xlu0
    %v1525 = vpop.trf.xlu0
    %v1526 = vpop.trf.xlu0
    %v1527 = vpop.trf.xlu0
    %v1528 = vpop.trf.xlu0
    %v1529 = vpop.trf.xlu0
    %1530 = vxpose.xlu0.b32.start [1/16] %v1457, 128
    %1531 = vxpose.xlu0.b32.cont [2/16] 0.0, 128
    %1532 = vxpose.xlu0.b32.cont [3/16] 0.0, 128
    %1533 = vxpose.xlu0.b32.cont [4/16] 0.0, 128
    %1534 = vxpose.xlu0.b32.cont [5/16] 0.0, 128
    %1535 = vxpose.xlu0.b32.cont [6/16] 0.0, 128
    %1536 = vxpose.xlu0.b32.cont [7/16] 0.0, 128
    %1537 = vxpose.xlu0.b32.cont [8/16] 0.0, 128
    %1538 = vxpose.xlu0.b32.cont [9/16] 0.0, 128
    %1539 = vxpose.xlu0.b32.cont [10/16] 0.0, 128
    %1540 = vxpose.xlu0.b32.cont [11/16] 0.0, 128
    %1541 = vxpose.xlu0.b32.cont [12/16] 0.0, 128
    %1542 = vxpose.xlu0.b32.cont [13/16] 0.0, 128
    %1543 = vxpose.xlu0.b32.cont [14/16] 0.0, 128
    %1544 = vxpose.xlu0.b32.cont [15/16] 0.0, 128
    %1545 = vxpose.xlu0.b32.end [16/16] 0.0, 128
    %v1546 = vpop.trf.xlu0
    %v1547 = vpop.trf.xlu0
    %v1548 = vpop.trf.xlu0
    %v1549 = vpop.trf.xlu0
    %v1550 = vpop.trf.xlu0
    %v1551 = vpop.trf.xlu0
    %v1552 = vpop.trf.xlu0
    %v1553 = vpop.trf.xlu0
    %v1554 = vpop.trf.xlu0
    %v1555 = vpop.trf.xlu0
    %v1556 = vpop.trf.xlu0
    %v1557 = vpop.trf.xlu0
    %v1558 = vpop.trf.xlu0
    %v1559 = vpop.trf.xlu0
    %v1560 = vpop.trf.xlu0
    %v1561 = vpop.trf.xlu0
    %1562 = vxpose.xlu0.b32.start [1/16] %v1476, 128
    %1563 = vxpose.xlu0.b32.cont [2/16] 0.0, 128
    %1564 = vxpose.xlu0.b32.cont [3/16] 0.0, 128
    %1565 = vxpose.xlu0.b32.cont [4/16] 0.0, 128
    %1566 = vxpose.xlu0.b32.cont [5/16] 0.0, 128
    %1567 = vxpose.xlu0.b32.cont [6/16] 0.0, 128
    %1568 = vxpose.xlu0.b32.cont [7/16] 0.0, 128
    %1569 = vxpose.xlu0.b32.cont [8/16] 0.0, 128
    %1570 = vxpose.xlu0.b32.cont [9/16] 0.0, 128
    %1571 = vxpose.xlu0.b32.cont [10/16] 0.0, 128
    %1572 = vxpose.xlu0.b32.cont [11/16] 0.0, 128
    %1573 = vxpose.xlu0.b32.cont [12/16] 0.0, 128
    %1574 = vxpose.xlu0.b32.cont [13/16] 0.0, 128
    %1575 = vxpose.xlu0.b32.cont [14/16] 0.0, 128
    %1576 = vxpose.xlu0.b32.cont [15/16] 0.0, 128
    %1577 = vxpose.xlu0.b32.end [16/16] 0.0, 128
    %v1578 = vpop.trf.xlu0
    %v1579 = vpop.trf.xlu0
    %v1580 = vpop.trf.xlu0
    %v1581 = vpop.trf.xlu0
    %v1582 = vpop.trf.xlu0
    %v1583 = vpop.trf.xlu0
    %v1584 = vpop.trf.xlu0
    %v1585 = vpop.trf.xlu0
    %v1586 = vpop.trf.xlu0
    %v1587 = vpop.trf.xlu0
    %v1588 = vpop.trf.xlu0
    %v1589 = vpop.trf.xlu0
    %v1590 = vpop.trf.xlu0
    %v1591 = vpop.trf.xlu0
    %v1592 = vpop.trf.xlu0
    %v1593 = vpop.trf.xlu0
    %1594 = vxpose.xlu0.b32.start [1/16] %v1495, 128
    %1595 = vxpose.xlu0.b32.cont [2/16] 0.0, 128
    %1596 = vxpose.xlu0.b32.cont [3/16] 0.0, 128
    %1597 = vxpose.xlu0.b32.cont [4/16] 0.0, 128
    %1598 = vxpose.xlu0.b32.cont [5/16] 0.0, 128
    %1599 = vxpose.xlu0.b32.cont [6/16] 0.0, 128
    %1600 = vxpose.xlu0.b32.cont [7/16] 0.0, 128
    %1601 = vxpose.xlu0.b32.cont [8/16] 0.0, 128
    %1602 = vxpose.xlu0.b32.cont [9/16] 0.0, 128
    %1603 = vxpose.xlu0.b32.cont [10/16] 0.0, 128
    %1604 = vxpose.xlu0.b32.cont [11/16] 0.0, 128
    %1605 = vxpose.xlu0.b32.cont [12/16] 0.0, 128
    %1606 = vxpose.xlu0.b32.cont [13/16] 0.0, 128
    %1607 = vxpose.xlu0.b32.cont [14/16] 0.0, 128
    %1608 = vxpose.xlu0.b32.cont [15/16] 0.0, 128
    %1609 = vxpose.xlu0.b32.end [16/16] 0.0, 128
    %v1610 = vpop.trf.xlu0
    %v1611 = vpop.trf.xlu0
    %v1612 = vpop.trf.xlu0
    %v1613 = vpop.trf.xlu0
    %v1614 = vpop.trf.xlu0
    %v1615 = vpop.trf.xlu0
    %v1616 = vpop.trf.xlu0
    %v1617 = vpop.trf.xlu0
    %v1618 = vpop.trf.xlu0
    %v1619 = vpop.trf.xlu0
    %v1620 = vpop.trf.xlu0
    %v1621 = vpop.trf.xlu0
    %v1622 = vpop.trf.xlu0
    %v1623 = vpop.trf.xlu0
    %v1624 = vpop.trf.xlu0
    %v1625 = vpop.trf.xlu0
    %v1626 = vrot.slane %v1578, 4
    %v1627 = vsel %vm221, %v1626, %v1514
    %v1628 = vrot.slane %v1514, 4
    %v1629 = vsel %vm221, %v1578, %v1628
    %v1631 = vunpack.c.l.s4 1983009808
    %v1632 = vunpack.c.0.s8 %v1631
    %v1633 = vperm.slane %v1627, %v1632
    %v1635 = vunpack.c.l.s4 1983009808
    %v1636 = vunpack.c.0.s8 %v1635
    %v1637 = vperm.slane %v1629, %v1636
    %v1638 = vrot.slane %v1610, 4
    %v1639 = vsel %vm221, %v1638, %v1546
    %v1640 = vrot.slane %v1546, 4
    %v1641 = vsel %vm221, %v1610, %v1640
    %v1643 = vunpack.c.l.s4 1983009808
    %v1644 = vunpack.c.0.s8 %v1643
    %v1645 = vperm.slane %v1639, %v1644
    %v1647 = vunpack.c.l.s4 1983009808
    %v1648 = vunpack.c.0.s8 %v1647
    %v1649 = vperm.slane %v1641, %v1648
    %v1650 = vrot.slane %v1645, 4
    %v1651 = vsel %vm221, %v1650, %v1633
    %v1652 = vrot.slane %v1633, 4
    %v1653 = vsel %vm221, %v1645, %v1652
    %v1655 = vunpack.c.l.s4 1934713408
    %v1656 = vunpack.c.0.s8 %v1655
    %v1657 = vperm.slane %v1651, %v1656
    %v1659 = vunpack.c.l.s4 1934713408
    %v1660 = vunpack.c.0.s8 %v1659
    %v1661 = vperm.slane %v1653, %v1660
    %v1662 = vrot.slane %v1649, 4
    %v1663 = vsel %vm221, %v1662, %v1637
    %v1664 = vrot.slane %v1637, 4
    %v1665 = vsel %vm221, %v1649, %v1664
    %v1667 = vunpack.c.l.s4 1934713408
    %v1668 = vunpack.c.0.s8 %v1667
    %v1669 = vperm.slane %v1663, %v1668
    %v1671 = vunpack.c.l.s4 1934713408
    %v1672 = vunpack.c.0.s8 %v1671
    %v1673 = vperm.slane %v1665, %v1672
    %v1674 = vrot.slane %v1657, 4
    %v1675 = vsel %vm221, 0.0, %v1674
    %v1676 = vrot.slane %v1661, 4
    %v1677 = vsel %vm221, 0.0, %v1676
    %v1678 = vrot.slane %v1669, 4
    %v1679 = vsel %vm221, 0.0, %v1678
    %v1680 = vrot.slane %v1673, 4
    %v1681 = vsel %vm221, 0.0, %v1680
    %v1682 = vsel %vm221, %v1676, %v1657
    %v1684 = vunpack.c.l.s4 1983009808
    %v1685 = vunpack.c.0.s8 %v1684
    %v1686 = vperm.slane %v1682, %v1685
    %v1687 = vrot.slane %v1677, 4
    %v1688 = vsel %vm221, %v1687, %v1675
    %v1690 = vunpack.c.l.s4 1983009808
    %v1691 = vunpack.c.0.s8 %v1690
    %v1692 = vperm.slane %v1688, %v1691
    %v1693 = vsel %vm221, %v1680, %v1669
    %v1695 = vunpack.c.l.s4 1983009808
    %v1696 = vunpack.c.0.s8 %v1695
    %v1697 = vperm.slane %v1693, %v1696
    %v1698 = vrot.slane %v1681, 4
    %v1699 = vsel %vm221, %v1698, %v1679
    %v1701 = vunpack.c.l.s4 1983009808
    %v1702 = vunpack.c.0.s8 %v1701
    %v1703 = vperm.slane %v1699, %v1702
    %v1704 = vrot.slane %v1692, 4
    %v1705 = vsel %vm221, %v1704, %v1686
    %v1706 = vrot.slane %v1686, 4
    %v1707 = vsel %vm221, %v1692, %v1706
    %v1709 = vunpack.c.l.s4 1934713408
    %v1710 = vunpack.c.0.s8 %v1709
    %v1711 = vperm.slane %v1705, %v1710
    %v1713 = vunpack.c.l.s4 1934713408
    %v1714 = vunpack.c.0.s8 %v1713
    %v1715 = vperm.slane %v1707, %v1714
    %v1716 = vrot.slane %v1703, 4
    %v1717 = vsel %vm221, %v1716, %v1697
    %v1718 = vrot.slane %v1697, 4
    %v1719 = vsel %vm221, %v1703, %v1718
    %v1721 = vunpack.c.l.s4 1934713408
    %v1722 = vunpack.c.0.s8 %v1721
    %v1723 = vperm.slane %v1717, %v1722
    %v1725 = vunpack.c.l.s4 1934713408
    %v1726 = vunpack.c.0.s8 %v1725
    %v1727 = vperm.slane %v1719, %v1726
    %v1728 = vrot.slane %v1723, 4
    %v1729 = vsel %vm221, %v1728, %v1711
    %v1730 = vrot.slane %v1711, 4
    %v1731 = vsel %vm221, %v1723, %v1730
    %v1732 = vrot.slane %v1727, 4
    %v1733 = vsel %vm221, %v1732, %v1715
    %v1734 = vrot.slane %v1715, 4
    %v1735 = vsel %vm221, %v1727, %v1734
    %1737 = vrot.lane.b32.xlu0 %v1731, 8
    %v1738 = vpop.permute.xlu0 %1737
    %1741 = vrot.lane.b32.xlu0 %v1733, 16
    %v1742 = vpop.permute.xlu0 %1741
    %1745 = vrot.lane.b32.xlu0 %v1735, 24
    %v1746 = vpop.permute.xlu0 %1745
    %v1748 = vsel %vm900, %v1729, %v1738
    %vm1749 = vcmask 130048
    %v1750 = vsel %vm1749, %v1748, %v1742
    %vm1751 = vcmask 195584
    %v1752 = vsel %vm1751, %v1750, %v1746
    %1754 = vrot.lane.b32.xlu0 %v194, 120
    %v1755 = vpop.permute.xlu0 %1754
    %1757 = vrot.lane.b32.xlu0 %v194, 112
    %v1758 = vpop.permute.xlu0 %1757
    %1760 = vrot.lane.b32.xlu0 %v194, 104
    %v1761 = vpop.permute.xlu0 %1760
    %v1763 = vrot.slane %v1758, 4
    %v1764 = vsel %vm221, %v1763, %v194
    %v1765 = vrot.slane %v194, 4
    %v1766 = vsel %vm221, %v1758, %v1765
    %v1768 = vunpack.c.l.s4 1983009808
    %v1769 = vunpack.c.0.s8 %v1768
    %v1770 = vperm.slane %v1764, %v1769
    %v1772 = vunpack.c.l.s4 1983009808
    %v1773 = vunpack.c.0.s8 %v1772
    %v1774 = vperm.slane %v1766, %v1773
    %v1775 = vrot.slane %v1761, 4
    %v1776 = vsel %vm221, %v1775, %v1755
    %v1777 = vrot.slane %v1755, 4
    %v1778 = vsel %vm221, %v1761, %v1777
    %v1780 = vunpack.c.l.s4 1983009808
    %v1781 = vunpack.c.0.s8 %v1780
    %v1782 = vperm.slane %v1776, %v1781
    %v1784 = vunpack.c.l.s4 1983009808
    %v1785 = vunpack.c.0.s8 %v1784
    %v1786 = vperm.slane %v1778, %v1785
    %v1787 = vrot.slane %v1782, 4
    %v1788 = vsel %vm221, %v1787, %v1770
    %v1789 = vrot.slane %v1770, 4
    %v1790 = vsel %vm221, %v1782, %v1789
    %v1792 = vunpack.c.l.s4 1934713408
    %v1793 = vunpack.c.0.s8 %v1792
    %v1794 = vperm.slane %v1788, %v1793
    %v1796 = vunpack.c.l.s4 1934713408
    %v1797 = vunpack.c.0.s8 %v1796
    %v1798 = vperm.slane %v1790, %v1797
    %v1799 = vrot.slane %v1786, 4
    %v1800 = vsel %vm221, %v1799, %v1774
    %v1801 = vrot.slane %v1774, 4
    %v1802 = vsel %vm221, %v1786, %v1801
    %v1804 = vunpack.c.l.s4 1934713408
    %v1805 = vunpack.c.0.s8 %v1804
    %v1806 = vperm.slane %v1800, %v1805
    %v1808 = vunpack.c.l.s4 1934713408
    %v1809 = vunpack.c.0.s8 %v1808
    %v1810 = vperm.slane %v1802, %v1809
    %v1811 = vrot.slane %v1794, 4
    %v1812 = vsel %vm221, 0.0, %v1811
    %v1813 = vrot.slane %v1798, 4
    %v1814 = vsel %vm221, 0.0, %v1813
    %v1815 = vrot.slane %v1806, 4
    %v1816 = vsel %vm221, 0.0, %v1815
    %v1817 = vrot.slane %v1810, 4
    %v1818 = vsel %vm221, 0.0, %v1817
    %v1819 = vpack.c.bf16 %v1794, %v1794
    %v1820 = vpack.c.bf16 %v1812, %v1812
    %v1821 = vpack.c.bf16 %v1798, %v1798
    %v1822 = vpack.c.bf16 %v1814, %v1814
    %v1823 = vpack.c.bf16 %v1806, %v1806
    %v1824 = vpack.c.bf16 %v1816, %v1816
    %v1825 = vpack.c.bf16 %v1810, %v1810
    %v1826 = vpack.c.bf16 %v1818, %v1818
    %1828 = vrot.lane.b32.xlu0 %v204, 120
    %v1829 = vpop.permute.xlu0 %1828
    %1830 = vrot.lane.b32.xlu0 %v204, 112
    %v1831 = vpop.permute.xlu0 %1830
    %1832 = vrot.lane.b32.xlu0 %v204, 104
    %v1833 = vpop.permute.xlu0 %1832
    %1834 = vrot.lane.b32.xlu0 %v204, 96
    %v1835 = vpop.permute.xlu0 %1834
    %1836 = vrot.lane.b32.xlu0 %v1829, 96
    %v1837 = vpop.permute.xlu0 %1836
    %1838 = vrot.lane.b32.xlu0 %v1831, 96
    %v1839 = vpop.permute.xlu0 %1838
    %1840 = vrot.lane.b32.xlu0 %v1833, 96
    %v1841 = vpop.permute.xlu0 %1840
    %v1846 = vrot.slane %v1839, 4
    %v1847 = vsel %vm221, %v1846, %v1835
    %v1848 = vrot.slane %v1835, 4
    %v1849 = vsel %vm221, %v1839, %v1848
    %v1851 = vunpack.c.l.s4 1983009808
    %v1852 = vunpack.c.0.s8 %v1851
    %v1853 = vperm.slane %v1847, %v1852
    %v1855 = vunpack.c.l.s4 1983009808
    %v1856 = vunpack.c.0.s8 %v1855
    %v1857 = vperm.slane %v1849, %v1856
    %v1858 = vrot.slane %v1841, 4
    %v1859 = vsel %vm221, %v1858, %v1837
    %v1860 = vrot.slane %v1837, 4
    %v1861 = vsel %vm221, %v1841, %v1860
    %v1863 = vunpack.c.l.s4 1983009808
    %v1864 = vunpack.c.0.s8 %v1863
    %v1865 = vperm.slane %v1859, %v1864
    %v1867 = vunpack.c.l.s4 1983009808
    %v1868 = vunpack.c.0.s8 %v1867
    %v1869 = vperm.slane %v1861, %v1868
    %v1870 = vrot.slane %v1865, 4
    %v1871 = vsel %vm221, %v1870, %v1853
    %v1872 = vrot.slane %v1853, 4
    %v1873 = vsel %vm221, %v1865, %v1872
    %v1875 = vunpack.c.l.s4 1934713408
    %v1876 = vunpack.c.0.s8 %v1875
    %v1877 = vperm.slane %v1871, %v1876
    %v1879 = vunpack.c.l.s4 1934713408
    %v1880 = vunpack.c.0.s8 %v1879
    %v1881 = vperm.slane %v1873, %v1880
    %v1882 = vrot.slane %v1869, 4
    %v1883 = vsel %vm221, %v1882, %v1857
    %v1884 = vrot.slane %v1857, 4
    %v1885 = vsel %vm221, %v1869, %v1884
    %v1887 = vunpack.c.l.s4 1934713408
    %v1888 = vunpack.c.0.s8 %v1887
    %v1889 = vperm.slane %v1883, %v1888
    %v1891 = vunpack.c.l.s4 1934713408
    %v1892 = vunpack.c.0.s8 %v1891
    %v1893 = vperm.slane %v1885, %v1892
    %v1894 = vrot.slane %v1877, 4
    %v1895 = vsel %vm221, 0.0, %v1894
    %v1896 = vrot.slane %v1881, 4
    %v1897 = vsel %vm221, 0.0, %v1896
    %v1898 = vrot.slane %v1889, 4
    %v1899 = vsel %vm221, 0.0, %v1898
    %v1900 = vrot.slane %v1893, 4
    %v1901 = vsel %vm221, 0.0, %v1900
    %v1902 = vpack.c.bf16 %v1877, %v1877
    %v1903 = vpack.c.bf16 %v1895, %v1895
    %v1904 = vpack.c.bf16 %v1881, %v1881
    %v1905 = vpack.c.bf16 %v1897, %v1897
    %v1906 = vpack.c.bf16 %v1889, %v1889
    %v1907 = vpack.c.bf16 %v1899, %v1899
    %v1908 = vpack.c.bf16 %v1893, %v1893
    %v1909 = vpack.c.bf16 %v1901, %v1901
    %1911 = vrot.lane.b32.xlu0 %v209, 120
    %v1912 = vpop.permute.xlu0 %1911
    %1913 = vrot.lane.b32.xlu0 %v209, 112
    %v1914 = vpop.permute.xlu0 %1913
    %1915 = vrot.lane.b32.xlu0 %v209, 104
    %v1916 = vpop.permute.xlu0 %1915
    %1917 = vrot.lane.b32.xlu0 %v209, 64
    %v1918 = vpop.permute.xlu0 %1917
    %1919 = vrot.lane.b32.xlu0 %v1912, 64
    %v1920 = vpop.permute.xlu0 %1919
    %1921 = vrot.lane.b32.xlu0 %v1914, 64
    %v1922 = vpop.permute.xlu0 %1921
    %1923 = vrot.lane.b32.xlu0 %v1916, 64
    %v1924 = vpop.permute.xlu0 %1923
    %v1929 = vrot.slane %v1922, 4
    %v1930 = vsel %vm221, %v1929, %v1918
    %v1931 = vrot.slane %v1918, 4
    %v1932 = vsel %vm221, %v1922, %v1931
    %v1934 = vunpack.c.l.s4 1983009808
    %v1935 = vunpack.c.0.s8 %v1934
    %v1936 = vperm.slane %v1930, %v1935
    %v1938 = vunpack.c.l.s4 1983009808
    %v1939 = vunpack.c.0.s8 %v1938
    %v1940 = vperm.slane %v1932, %v1939
    %v1941 = vrot.slane %v1924, 4
    %v1942 = vsel %vm221, %v1941, %v1920
    %v1943 = vrot.slane %v1920, 4
    %v1944 = vsel %vm221, %v1924, %v1943
    %v1946 = vunpack.c.l.s4 1983009808
    %v1947 = vunpack.c.0.s8 %v1946
    %v1948 = vperm.slane %v1942, %v1947
    %v1950 = vunpack.c.l.s4 1983009808
    %v1951 = vunpack.c.0.s8 %v1950
    %v1952 = vperm.slane %v1944, %v1951
    %v1953 = vrot.slane %v1948, 4
    %v1954 = vsel %vm221, %v1953, %v1936
    %v1955 = vrot.slane %v1936, 4
    %v1956 = vsel %vm221, %v1948, %v1955
    %v1958 = vunpack.c.l.s4 1934713408
    %v1959 = vunpack.c.0.s8 %v1958
    %v1960 = vperm.slane %v1954, %v1959
    %v1962 = vunpack.c.l.s4 1934713408
    %v1963 = vunpack.c.0.s8 %v1962
    %v1964 = vperm.slane %v1956, %v1963
    %v1965 = vrot.slane %v1952, 4
    %v1966 = vsel %vm221, %v1965, %v1940
    %v1967 = vrot.slane %v1940, 4
    %v1968 = vsel %vm221, %v1952, %v1967
    %v1970 = vunpack.c.l.s4 1934713408
    %v1971 = vunpack.c.0.s8 %v1970
    %v1972 = vperm.slane %v1966, %v1971
    %v1974 = vunpack.c.l.s4 1934713408
    %v1975 = vunpack.c.0.s8 %v1974
    %v1976 = vperm.slane %v1968, %v1975
    %v1977 = vrot.slane %v1960, 4
    %v1978 = vsel %vm221, 0.0, %v1977
    %v1979 = vrot.slane %v1964, 4
    %v1980 = vsel %vm221, 0.0, %v1979
    %v1981 = vrot.slane %v1972, 4
    %v1982 = vsel %vm221, 0.0, %v1981
    %v1983 = vrot.slane %v1976, 4
    %v1984 = vsel %vm221, 0.0, %v1983
    %v1985 = vpack.c.bf16 %v1960, %v1960
    %v1986 = vpack.c.bf16 %v1978, %v1978
    %v1987 = vpack.c.bf16 %v1964, %v1964
    %v1988 = vpack.c.bf16 %v1980, %v1980
    %v1989 = vpack.c.bf16 %v1972, %v1972
    %v1990 = vpack.c.bf16 %v1982, %v1982
    %v1991 = vpack.c.bf16 %v1976, %v1976
    %v1992 = vpack.c.bf16 %v1984, %v1984
    %v1993 = vrot.slane %v1823, 4
    %v1994 = vsel %vm452, %v1993, %v1819
    %v1996 = vunpack.c.l.s4 1983009808
    %v1997 = vunpack.c.0.s8 %v1996
    %v1998 = vperm.slane %v1994, %v1997
    %v1999 = vrot.slane %v1825, 4
    %v2000 = vsel %vm452, %v1999, %v1821
    %v2002 = vunpack.c.l.s4 1983009808
    %v2003 = vunpack.c.0.s8 %v2002
    %v2004 = vperm.slane %v2000, %v2003
    %v2005 = vrot.slane %v2004, 4
    %v2006 = vsel %vm452, %v2005, %v1998
    %v2008 = vunpack.c.l.s4 1934713408
    %v2009 = vunpack.c.0.s8 %v2008
    %v2010 = vperm.slane %v2006, %v2009
    %v2011 = vrot.slane %v2010, 4
    %v2012 = vsel %vm452, 0, %v2011
    %v2013 = vrot.slane %v1824, 4
    %v2014 = vsel %vm452, %v2013, %v1820
    %v2016 = vunpack.c.l.s4 1983009808
    %v2017 = vunpack.c.0.s8 %v2016
    %v2018 = vperm.slane %v2014, %v2017
    %v2019 = vrot.slane %v1826, 4
    %v2020 = vsel %vm452, %v2019, %v1822
    %v2022 = vunpack.c.l.s4 1983009808
    %v2023 = vunpack.c.0.s8 %v2022
    %v2024 = vperm.slane %v2020, %v2023
    %v2025 = vrot.slane %v2024, 4
    %v2026 = vsel %vm452, %v2025, %v2018
    %v2028 = vunpack.c.l.s4 1934713408
    %v2029 = vunpack.c.0.s8 %v2028
    %v2030 = vperm.slane %v2026, %v2029
    %v2031 = vrot.slane %v2030, 4
    %v2032 = vsel %vm452, 0, %v2031
    %v2035 = vpack.i.b16 %v2030, %v2010
    %v2036 = vshrl.u32 %v2010, 16
    %v2037 = vshrl.u32 %v2030, 16
    %v2038 = vpack.i.b16 %v2037, %v2036
    %v2041 = vpack.i.b16 %v2032, %v2012
    %v2042 = vshrl.u32 %v2012, 16
    %v2043 = vshrl.u32 %v2032, 16
    %v2044 = vpack.i.b16 %v2043, %v2042
    %2045 = vxpose.xlu0.c.b16.start [1/8] %v1902, 128
    %2046 = vxpose.xlu0.c.b16.cont [2/8] 0, 128
    %2047 = vxpose.xlu0.c.b16.cont [3/8] 0, 128
    %2048 = vxpose.xlu0.c.b16.cont [4/8] 0, 128
    %2049 = vxpose.xlu0.c.b16.cont [5/8] 0, 128
    %2050 = vxpose.xlu0.c.b16.cont [6/8] 0, 128
    %2051 = vxpose.xlu0.c.b16.cont [7/8] 0, 128
    %2052 = vxpose.xlu0.c.b16.end [8/8] 0, 128
    %v2053 = vpop.trf.xlu0
    %v2054 = vpop.trf.xlu0
    %v2055 = vpop.trf.xlu0
    %v2056 = vpop.trf.xlu0
    %v2057 = vpop.trf.xlu0
    %v2058 = vpop.trf.xlu0
    %v2059 = vpop.trf.xlu0
    %v2060 = vpop.trf.xlu0
    %2061 = vxpose.xlu0.c.b16.start [1/8] %v1903, 128
    %2062 = vxpose.xlu0.c.b16.cont [2/8] 0, 128
    %2063 = vxpose.xlu0.c.b16.cont [3/8] 0, 128
    %2064 = vxpose.xlu0.c.b16.cont [4/8] 0, 128
    %2065 = vxpose.xlu0.c.b16.cont [5/8] 0, 128
    %2066 = vxpose.xlu0.c.b16.cont [6/8] 0, 128
    %2067 = vxpose.xlu0.c.b16.cont [7/8] 0, 128
    %2068 = vxpose.xlu0.c.b16.end [8/8] 0, 128
    %v2069 = vpop.trf.xlu0
    %v2070 = vpop.trf.xlu0
    %v2071 = vpop.trf.xlu0
    %v2072 = vpop.trf.xlu0
    %v2073 = vpop.trf.xlu0
    %v2074 = vpop.trf.xlu0
    %v2075 = vpop.trf.xlu0
    %v2076 = vpop.trf.xlu0
    %2077 = vxpose.xlu0.c.b16.start [1/8] %v1904, 128
    %2078 = vxpose.xlu0.c.b16.cont [2/8] 0, 128
    %2079 = vxpose.xlu0.c.b16.cont [3/8] 0, 128
    %2080 = vxpose.xlu0.c.b16.cont [4/8] 0, 128
    %2081 = vxpose.xlu0.c.b16.cont [5/8] 0, 128
    %2082 = vxpose.xlu0.c.b16.cont [6/8] 0, 128
    %2083 = vxpose.xlu0.c.b16.cont [7/8] 0, 128
    %2084 = vxpose.xlu0.c.b16.end [8/8] 0, 128
    %v2085 = vpop.trf.xlu0
    %v2086 = vpop.trf.xlu0
    %v2087 = vpop.trf.xlu0
    %v2088 = vpop.trf.xlu0
    %v2089 = vpop.trf.xlu0
    %v2090 = vpop.trf.xlu0
    %v2091 = vpop.trf.xlu0
    %v2092 = vpop.trf.xlu0
    %2093 = vxpose.xlu0.c.b16.start [1/8] %v1905, 128
    %2094 = vxpose.xlu0.c.b16.cont [2/8] 0, 128
    %2095 = vxpose.xlu0.c.b16.cont [3/8] 0, 128
    %2096 = vxpose.xlu0.c.b16.cont [4/8] 0, 128
    %2097 = vxpose.xlu0.c.b16.cont [5/8] 0, 128
    %2098 = vxpose.xlu0.c.b16.cont [6/8] 0, 128
    %2099 = vxpose.xlu0.c.b16.cont [7/8] 0, 128
    %2100 = vxpose.xlu0.c.b16.end [8/8] 0, 128
    %v2101 = vpop.trf.xlu0
    %v2102 = vpop.trf.xlu0
    %v2103 = vpop.trf.xlu0
    %v2104 = vpop.trf.xlu0
    %v2105 = vpop.trf.xlu0
    %v2106 = vpop.trf.xlu0
    %v2107 = vpop.trf.xlu0
    %v2108 = vpop.trf.xlu0
    %2109 = vxpose.xlu0.c.b16.start [1/8] %v1906, 128
    %2110 = vxpose.xlu0.c.b16.cont [2/8] 0, 128
    %2111 = vxpose.xlu0.c.b16.cont [3/8] 0, 128
    %2112 = vxpose.xlu0.c.b16.cont [4/8] 0, 128
    %2113 = vxpose.xlu0.c.b16.cont [5/8] 0, 128
    %2114 = vxpose.xlu0.c.b16.cont [6/8] 0, 128
    %2115 = vxpose.xlu0.c.b16.cont [7/8] 0, 128
    %2116 = vxpose.xlu0.c.b16.end [8/8] 0, 128
    %v2117 = vpop.trf.xlu0
    %v2118 = vpop.trf.xlu0
    %v2119 = vpop.trf.xlu0
    %v2120 = vpop.trf.xlu0
    %v2121 = vpop.trf.xlu0
    %v2122 = vpop.trf.xlu0
    %v2123 = vpop.trf.xlu0
    %v2124 = vpop.trf.xlu0
    %2125 = vxpose.xlu0.c.b16.start [1/8] %v1907, 128
    %2126 = vxpose.xlu0.c.b16.cont [2/8] 0, 128
    %2127 = vxpose.xlu0.c.b16.cont [3/8] 0, 128
    %2128 = vxpose.xlu0.c.b16.cont [4/8] 0, 128
    %2129 = vxpose.xlu0.c.b16.cont [5/8] 0, 128
    %2130 = vxpose.xlu0.c.b16.cont [6/8] 0, 128
    %2131 = vxpose.xlu0.c.b16.cont [7/8] 0, 128
    %2132 = vxpose.xlu0.c.b16.end [8/8] 0, 128
    %v2133 = vpop.trf.xlu0
    %v2134 = vpop.trf.xlu0
    %v2135 = vpop.trf.xlu0
    %v2136 = vpop.trf.xlu0
    %v2137 = vpop.trf.xlu0
    %v2138 = vpop.trf.xlu0
    %v2139 = vpop.trf.xlu0
    %v2140 = vpop.trf.xlu0
    %2141 = vxpose.xlu0.c.b16.start [1/8] %v1908, 128
    %2142 = vxpose.xlu0.c.b16.cont [2/8] 0, 128
    %2143 = vxpose.xlu0.c.b16.cont [3/8] 0, 128
    %2144 = vxpose.xlu0.c.b16.cont [4/8] 0, 128
    %2145 = vxpose.xlu0.c.b16.cont [5/8] 0, 128
    %2146 = vxpose.xlu0.c.b16.cont [6/8] 0, 128
    %2147 = vxpose.xlu0.c.b16.cont [7/8] 0, 128
    %2148 = vxpose.xlu0.c.b16.end [8/8] 0, 128
    %v2149 = vpop.trf.xlu0
    %v2150 = vpop.trf.xlu0
    %v2151 = vpop.trf.xlu0
    %v2152 = vpop.trf.xlu0
    %v2153 = vpop.trf.xlu0
    %v2154 = vpop.trf.xlu0
    %v2155 = vpop.trf.xlu0
    %v2156 = vpop.trf.xlu0
    %2157 = vxpose.xlu0.c.b16.start [1/8] %v1909, 128
    %2158 = vxpose.xlu0.c.b16.cont [2/8] 0, 128
    %2159 = vxpose.xlu0.c.b16.cont [3/8] 0, 128
    %2160 = vxpose.xlu0.c.b16.cont [4/8] 0, 128
    %2161 = vxpose.xlu0.c.b16.cont [5/8] 0, 128
    %2162 = vxpose.xlu0.c.b16.cont [6/8] 0, 128
    %2163 = vxpose.xlu0.c.b16.cont [7/8] 0, 128
    %2164 = vxpose.xlu0.c.b16.end [8/8] 0, 128
    %v2165 = vpop.trf.xlu0
    %v2166 = vpop.trf.xlu0
    %v2167 = vpop.trf.xlu0
    %v2168 = vpop.trf.xlu0
    %v2169 = vpop.trf.xlu0
    %v2170 = vpop.trf.xlu0
    %v2171 = vpop.trf.xlu0
    %v2172 = vpop.trf.xlu0
    %v2173 = vrot.slane %v2117, 4
    %v2174 = vsel %vm452, %v2173, %v2053
    %v2176 = vunpack.c.l.s4 1983009808
    %v2177 = vunpack.c.0.s8 %v2176
    %v2178 = vperm.slane %v2174, %v2177
    %v2179 = vrot.slane %v2149, 4
    %v2180 = vsel %vm452, %v2179, %v2085
    %v2182 = vunpack.c.l.s4 1983009808
    %v2183 = vunpack.c.0.s8 %v2182
    %v2184 = vperm.slane %v2180, %v2183
    %v2185 = vrot.slane %v2184, 4
    %v2186 = vsel %vm452, %v2185, %v2178
    %v2187 = vrot.slane %v2178, 4
    %v2188 = vsel %vm452, %v2184, %v2187
    %v2190 = vunpack.c.l.s4 1934713408
    %v2191 = vunpack.c.0.s8 %v2190
    %v2192 = vperm.slane %v2186, %v2191
    %v2194 = vunpack.c.l.s4 1934713408
    %v2195 = vunpack.c.0.s8 %v2194
    %v2196 = vperm.slane %v2188, %v2195
    %v2197 = vrot.slane %v2192, 4
    %v2198 = vsel %vm452, 0, %v2197
    %v2199 = vrot.slane %v2196, 4
    %v2200 = vsel %vm452, 0, %v2199
    %v2201 = vrot.slane %v2133, 4
    %v2202 = vsel %vm452, %v2201, %v2069
    %v2204 = vunpack.c.l.s4 1983009808
    %v2205 = vunpack.c.0.s8 %v2204
    %v2206 = vperm.slane %v2202, %v2205
    %v2207 = vrot.slane %v2165, 4
    %v2208 = vsel %vm452, %v2207, %v2101
    %v2210 = vunpack.c.l.s4 1983009808
    %v2211 = vunpack.c.0.s8 %v2210
    %v2212 = vperm.slane %v2208, %v2211
    %v2213 = vrot.slane %v2212, 4
    %v2214 = vsel %vm452, %v2213, %v2206
    %v2215 = vrot.slane %v2206, 4
    %v2216 = vsel %vm452, %v2212, %v2215
    %v2218 = vunpack.c.l.s4 1934713408
    %v2219 = vunpack.c.0.s8 %v2218
    %v2220 = vperm.slane %v2214, %v2219
    %v2222 = vunpack.c.l.s4 1934713408
    %v2223 = vunpack.c.0.s8 %v2222
    %v2224 = vperm.slane %v2216, %v2223
    %v2225 = vrot.slane %v2220, 4
    %v2226 = vsel %vm452, 0, %v2225
    %v2227 = vrot.slane %v2224, 4
    %v2228 = vsel %vm452, 0, %v2227
    %v2231 = vpack.i.b16 %v2220, %v2192
    %v2233 = vshrl.u32 %v2192, 16
    %v2234 = vshrl.u32 %v2220, 16
    %v2235 = vpack.i.b16 %v2234, %v2233
    %v2239 = vpack.i.b16 %v2226, %v2198
    %v2241 = vshrl.u32 %v2198, 16
    %v2242 = vshrl.u32 %v2226, 16
    %v2243 = vpack.i.b16 %v2242, %v2241
    %v2247 = vpack.i.b16 %v2224, %v2196
    %v2249 = vshrl.u32 %v2196, 16
    %v2250 = vshrl.u32 %v2224, 16
    %v2251 = vpack.i.b16 %v2250, %v2249
    %v2255 = vpack.i.b16 %v2228, %v2200
    %v2257 = vshrl.u32 %v2200, 16
    %v2258 = vshrl.u32 %v2228, 16
    %v2259 = vpack.i.b16 %v2258, %v2257
    %2261 = vxpose.xlu0.c.b16.start [1/8] %v2231, 128
    %2262 = vxpose.xlu0.c.b16.cont [2/8] 0, 128
    %2263 = vxpose.xlu0.c.b16.cont [3/8] 0, 128
    %2264 = vxpose.xlu0.c.b16.cont [4/8] 0, 128
    %2265 = vxpose.xlu0.c.b16.cont [5/8] 0, 128
    %2266 = vxpose.xlu0.c.b16.cont [6/8] 0, 128
    %2267 = vxpose.xlu0.c.b16.cont [7/8] 0, 128
    %2268 = vxpose.xlu0.c.b16.end [8/8] 0, 128
    %v2269 = vpop.trf.xlu0
    %v2270 = vpop.trf.xlu0
    %v2271 = vpop.trf.xlu0
    %v2272 = vpop.trf.xlu0
    %v2273 = vpop.trf.xlu0
    %v2274 = vpop.trf.xlu0
    %v2275 = vpop.trf.xlu0
    %v2276 = vpop.trf.xlu0
    %2277 = vxpose.xlu0.c.b16.start [1/8] %v2235, 128
    %2278 = vxpose.xlu0.c.b16.cont [2/8] 0, 128
    %2279 = vxpose.xlu0.c.b16.cont [3/8] 0, 128
    %2280 = vxpose.xlu0.c.b16.cont [4/8] 0, 128
    %2281 = vxpose.xlu0.c.b16.cont [5/8] 0, 128
    %2282 = vxpose.xlu0.c.b16.cont [6/8] 0, 128
    %2283 = vxpose.xlu0.c.b16.cont [7/8] 0, 128
    %2284 = vxpose.xlu0.c.b16.end [8/8] 0, 128
    %v2285 = vpop.trf.xlu0
    %v2286 = vpop.trf.xlu0
    %v2287 = vpop.trf.xlu0
    %v2288 = vpop.trf.xlu0
    %v2289 = vpop.trf.xlu0
    %v2290 = vpop.trf.xlu0
    %v2291 = vpop.trf.xlu0
    %v2292 = vpop.trf.xlu0
    %2293 = vxpose.xlu0.c.b16.start [1/8] %v2239, 128
    %2294 = vxpose.xlu0.c.b16.cont [2/8] 0, 128
    %2295 = vxpose.xlu0.c.b16.cont [3/8] 0, 128
    %2296 = vxpose.xlu0.c.b16.cont [4/8] 0, 128
    %2297 = vxpose.xlu0.c.b16.cont [5/8] 0, 128
    %2298 = vxpose.xlu0.c.b16.cont [6/8] 0, 128
    %2299 = vxpose.xlu0.c.b16.cont [7/8] 0, 128
    %2300 = vxpose.xlu0.c.b16.end [8/8] 0, 128
    %v2301 = vpop.trf.xlu0
    %v2302 = vpop.trf.xlu0
    %v2303 = vpop.trf.xlu0
    %v2304 = vpop.trf.xlu0
    %v2305 = vpop.trf.xlu0
    %v2306 = vpop.trf.xlu0
    %v2307 = vpop.trf.xlu0
    %v2308 = vpop.trf.xlu0
    %2309 = vxpose.xlu0.c.b16.start [1/8] %v2243, 128
    %2310 = vxpose.xlu0.c.b16.cont [2/8] 0, 128
    %2311 = vxpose.xlu0.c.b16.cont [3/8] 0, 128
    %2312 = vxpose.xlu0.c.b16.cont [4/8] 0, 128
    %2313 = vxpose.xlu0.c.b16.cont [5/8] 0, 128
    %2314 = vxpose.xlu0.c.b16.cont [6/8] 0, 128
    %2315 = vxpose.xlu0.c.b16.cont [7/8] 0, 128
    %2316 = vxpose.xlu0.c.b16.end [8/8] 0, 128
    %v2317 = vpop.trf.xlu0
    %v2318 = vpop.trf.xlu0
    %v2319 = vpop.trf.xlu0
    %v2320 = vpop.trf.xlu0
    %v2321 = vpop.trf.xlu0
    %v2322 = vpop.trf.xlu0
    %v2323 = vpop.trf.xlu0
    %v2324 = vpop.trf.xlu0
    %2325 = vxpose.xlu0.c.b16.start [1/8] %v2247, 128
    %2326 = vxpose.xlu0.c.b16.cont [2/8] 0, 128
    %2327 = vxpose.xlu0.c.b16.cont [3/8] 0, 128
    %2328 = vxpose.xlu0.c.b16.cont [4/8] 0, 128
    %2329 = vxpose.xlu0.c.b16.cont [5/8] 0, 128
    %2330 = vxpose.xlu0.c.b16.cont [6/8] 0, 128
    %2331 = vxpose.xlu0.c.b16.cont [7/8] 0, 128
    %2332 = vxpose.xlu0.c.b16.end [8/8] 0, 128
    %v2333 = vpop.trf.xlu0
    %v2334 = vpop.trf.xlu0
    %v2335 = vpop.trf.xlu0
    %v2336 = vpop.trf.xlu0
    %v2337 = vpop.trf.xlu0
    %v2338 = vpop.trf.xlu0
    %v2339 = vpop.trf.xlu0
    %v2340 = vpop.trf.xlu0
    %2341 = vxpose.xlu0.c.b16.start [1/8] %v2251, 128
    %2342 = vxpose.xlu0.c.b16.cont [2/8] 0, 128
    %2343 = vxpose.xlu0.c.b16.cont [3/8] 0, 128
    %2344 = vxpose.xlu0.c.b16.cont [4/8] 0, 128
    %2345 = vxpose.xlu0.c.b16.cont [5/8] 0, 128
    %2346 = vxpose.xlu0.c.b16.cont [6/8] 0, 128
    %2347 = vxpose.xlu0.c.b16.cont [7/8] 0, 128
    %2348 = vxpose.xlu0.c.b16.end [8/8] 0, 128
    %v2349 = vpop.trf.xlu0
    %v2350 = vpop.trf.xlu0
    %v2351 = vpop.trf.xlu0
    %v2352 = vpop.trf.xlu0
    %v2353 = vpop.trf.xlu0
    %v2354 = vpop.trf.xlu0
    %v2355 = vpop.trf.xlu0
    %v2356 = vpop.trf.xlu0
    %2357 = vxpose.xlu0.c.b16.start [1/8] %v2255, 128
    %2358 = vxpose.xlu0.c.b16.cont [2/8] 0, 128
    %2359 = vxpose.xlu0.c.b16.cont [3/8] 0, 128
    %2360 = vxpose.xlu0.c.b16.cont [4/8] 0, 128
    %2361 = vxpose.xlu0.c.b16.cont [5/8] 0, 128
    %2362 = vxpose.xlu0.c.b16.cont [6/8] 0, 128
    %2363 = vxpose.xlu0.c.b16.cont [7/8] 0, 128
    %2364 = vxpose.xlu0.c.b16.end [8/8] 0, 128
    %v2365 = vpop.trf.xlu0
    %v2366 = vpop.trf.xlu0
    %v2367 = vpop.trf.xlu0
    %v2368 = vpop.trf.xlu0
    %v2369 = vpop.trf.xlu0
    %v2370 = vpop.trf.xlu0
    %v2371 = vpop.trf.xlu0
    %v2372 = vpop.trf.xlu0
    %2373 = vxpose.xlu0.c.b16.start [1/8] %v2259, 128
    %2374 = vxpose.xlu0.c.b16.cont [2/8] 0, 128
    %2375 = vxpose.xlu0.c.b16.cont [3/8] 0, 128
    %2376 = vxpose.xlu0.c.b16.cont [4/8] 0, 128
    %2377 = vxpose.xlu0.c.b16.cont [5/8] 0, 128
    %2378 = vxpose.xlu0.c.b16.cont [6/8] 0, 128
    %2379 = vxpose.xlu0.c.b16.cont [7/8] 0, 128
    %2380 = vxpose.xlu0.c.b16.end [8/8] 0, 128
    %v2381 = vpop.trf.xlu0
    %v2382 = vpop.trf.xlu0
    %v2383 = vpop.trf.xlu0
    %v2384 = vpop.trf.xlu0
    %v2385 = vpop.trf.xlu0
    %v2386 = vpop.trf.xlu0
    %v2387 = vpop.trf.xlu0
    %v2388 = vpop.trf.xlu0
    %v2389 = vrot.slane %v2333, 4
    %v2390 = vsel %vm452, %v2389, %v2269
    %v2392 = vunpack.c.l.s4 1983009808
    %v2393 = vunpack.c.0.s8 %v2392
    %v2394 = vperm.slane %v2390, %v2393
    %v2395 = vrot.slane %v2365, 4
    %v2396 = vsel %vm452, %v2395, %v2301
    %v2398 = vunpack.c.l.s4 1983009808
    %v2399 = vunpack.c.0.s8 %v2398
    %v2400 = vperm.slane %v2396, %v2399
    %v2401 = vrot.slane %v2400, 4
    %v2402 = vsel %vm452, %v2401, %v2394
    %v2404 = vunpack.c.l.s4 1934713408
    %v2405 = vunpack.c.0.s8 %v2404
    %v2406 = vperm.slane %v2402, %v2405
    %v2407 = vrot.slane %v2406, 4
    %v2408 = vsel %vm452, 0, %v2407
    %v2409 = vrot.slane %v2349, 4
    %v2410 = vsel %vm452, %v2409, %v2285
    %v2412 = vunpack.c.l.s4 1983009808
    %v2413 = vunpack.c.0.s8 %v2412
    %v2414 = vperm.slane %v2410, %v2413
    %v2415 = vrot.slane %v2381, 4
    %v2416 = vsel %vm452, %v2415, %v2317
    %v2418 = vunpack.c.l.s4 1983009808
    %v2419 = vunpack.c.0.s8 %v2418
    %v2420 = vperm.slane %v2416, %v2419
    %v2421 = vrot.slane %v2420, 4
    %v2422 = vsel %vm452, %v2421, %v2414
    %v2424 = vunpack.c.l.s4 1934713408
    %v2425 = vunpack.c.0.s8 %v2424
    %v2426 = vperm.slane %v2422, %v2425
    %v2427 = vrot.slane %v2426, 4
    %v2428 = vsel %vm452, 0, %v2427
    %v2431 = vpack.i.b16 %v2426, %v2406
    %v2432 = vshrl.u32 %v2406, 16
    %v2433 = vshrl.u32 %v2426, 16
    %v2434 = vpack.i.b16 %v2433, %v2432
    %v2437 = vpack.i.b16 %v2428, %v2408
    %v2438 = vshrl.u32 %v2408, 16
    %v2439 = vshrl.u32 %v2428, 16
    %v2440 = vpack.i.b16 %v2439, %v2438
    %v2442 = vsel %vm900, %v2035, 0
    %v2445 = vsel %vm904, %v2431, 0
    %2447 = vmatpush.bf16.msra.mxu0 0
    %2448 = vmatpush.bf16.msra.mxu0 0
    %2449 = vmatpush.bf16.msra.mxu0 0
    %2450 = vmatpush.bf16.msra.mxu0 0
    %2451 = vmatpush.bf16.msra.mxu0 0
    %2452 = vmatpush.bf16.msra.mxu0 0
    %2453 = vmatpush.bf16.msra.mxu0 0
    %2454 = vmatpush.bf16.msra.mxu0 %v2445
    %2455 = vmatmul.bf16.gmra.mxu0 %v2442
    %v2456 = vpop.f32.mrf.mxu0
    %v2457 = vadd.f32 0.0, %v2456
    %v2458 = vpop.f32.mrf.mxu0
    %2459 = vdwg.mxu0
    %v2461 = vsel %vm900, %v2038, 0
    %v2464 = vsel %vm904, %v2434, 0
    %2466 = vmatpush.bf16.msra.mxu0 0
    %2467 = vmatpush.bf16.msra.mxu0 0
    %2468 = vmatpush.bf16.msra.mxu0 0
    %2469 = vmatpush.bf16.msra.mxu0 0
    %2470 = vmatpush.bf16.msra.mxu0 0
    %2471 = vmatpush.bf16.msra.mxu0 0
    %2472 = vmatpush.bf16.msra.mxu0 0
    %2473 = vmatpush.bf16.msra.mxu0 %v2464
    %2474 = vmatmul.bf16.gmra.mxu0 %v2461
    %v2475 = vpop.f32.mrf.mxu0
    %v2476 = vadd.f32 0.0, %v2475
    %v2477 = vpop.f32.mrf.mxu0
    %2478 = vdwg.mxu0
    %v2480 = vsel %vm900, %v2041, 0
    %v2483 = vsel %vm904, %v2437, 0
    %2485 = vmatpush.bf16.msra.mxu0 0
    %2486 = vmatpush.bf16.msra.mxu0 0
    %2487 = vmatpush.bf16.msra.mxu0 0
    %2488 = vmatpush.bf16.msra.mxu0 0
    %2489 = vmatpush.bf16.msra.mxu0 0
    %2490 = vmatpush.bf16.msra.mxu0 0
    %2491 = vmatpush.bf16.msra.mxu0 0
    %2492 = vmatpush.bf16.msra.mxu0 %v2483
    %2493 = vmatmul.bf16.gmra.mxu0 %v2480
    %v2494 = vpop.f32.mrf.mxu0
    %v2495 = vadd.f32 0.0, %v2494
    %v2496 = vpop.f32.mrf.mxu0
    %2497 = vdwg.mxu0
    %v2499 = vsel %vm900, %v2044, 0
    %v2502 = vsel %vm904, %v2440, 0
    %2504 = vmatpush.bf16.msra.mxu0 0
    %2505 = vmatpush.bf16.msra.mxu0 0
    %2506 = vmatpush.bf16.msra.mxu0 0
    %2507 = vmatpush.bf16.msra.mxu0 0
    %2508 = vmatpush.bf16.msra.mxu0 0
    %2509 = vmatpush.bf16.msra.mxu0 0
    %2510 = vmatpush.bf16.msra.mxu0 0
    %2511 = vmatpush.bf16.msra.mxu0 %v2502
    %2512 = vmatmul.bf16.gmra.mxu0 %v2499
    %v2513 = vpop.f32.mrf.mxu0
    %v2514 = vadd.f32 0.0, %v2513
    %v2515 = vpop.f32.mrf.mxu0
    %2516 = vdwg.mxu0
    %v2517 = vsel %vm900, %v2457, -inf
    %2518 = vmax.xlane.f32.xlu0 %v2517
    %v2519 = vpop.xlane.xlu0 %2518
    %v2520 = vsel %vm900, %v2476, -inf
    %2521 = vmax.xlane.f32.xlu0 %v2520
    %v2522 = vpop.xlane.xlu0 %2521
    %v2523 = vsel %vm900, %v2495, -inf
    %2524 = vmax.xlane.f32.xlu0 %v2523
    %v2525 = vpop.xlane.xlu0 %2524
    %v2526 = vsel %vm900, %v2514, -inf
    %2527 = vmax.xlane.f32.xlu0 %v2526
    %v2528 = vpop.xlane.xlu0 %2527
    %v2529 = vsub.f32 %v2457, %v2519
    %v2530 = vsub.f32 %v2476, %v2522
    %v2531 = vsub.f32 %v2495, %v2525
    %v2532 = vsub.f32 %v2514, %v2528
    %v2533 = vmul.f32 %v2529, 1.442695
    %v2534 = vpow.pop %v2533
    %v2535 = vmul.f32 %v2530, 1.442695
    %v2536 = vpow.pop %v2535
    %v2537 = vmul.f32 %v2531, 1.442695
    %v2538 = vpow.pop %v2537
    %v2539 = vmul.f32 %v2532, 1.442695
    %v2540 = vpow.pop %v2539
    %v2541 = vsel %vm900, %v2534, 0.0
    %2542 = vadd.xlane.f32.xlu0 %v2541
    %v2543 = vpop.xlane.xlu0 %2542
    %v2544 = vsel %vm900, %v2536, 0.0
    %2545 = vadd.xlane.f32.xlu0 %v2544
    %v2546 = vpop.xlane.xlu0 %2545
    %v2547 = vsel %vm900, %v2538, 0.0
    %2548 = vadd.xlane.f32.xlu0 %v2547
    %v2549 = vpop.xlane.xlu0 %2548
    %v2550 = vsel %vm900, %v2540, 0.0
    %2551 = vadd.xlane.f32.xlu0 %v2550
    %v2552 = vpop.xlane.xlu0 %2551
    %v2553 = vrcp.pop %v2543
    %v2554 = vrcp.pop %v2546
    %v2555 = vrcp.pop %v2549
    %v2556 = vrcp.pop %v2552
    %v2557 = vmul.f32 %v2534, %v2553
    %v2558 = vmul.f32 %v2536, %v2554
    %v2559 = vmul.f32 %v2538, %v2555
    %v2560 = vmul.f32 %v2540, %v2556
    %v2561 = vpack.c.bf16 %v2557, %v2557
    %v2562 = vpack.c.bf16 %v2558, %v2558
    %v2563 = vpack.c.bf16 %v2559, %v2559
    %v2564 = vpack.c.bf16 %v2560, %v2560
    %2565 = vxpose.xlu0.c.b16.start [1/8] %v1985, 128
    %2566 = vxpose.xlu0.c.b16.cont [2/8] 0, 128
    %2567 = vxpose.xlu0.c.b16.cont [3/8] 0, 128
    %2568 = vxpose.xlu0.c.b16.cont [4/8] 0, 128
    %2569 = vxpose.xlu0.c.b16.cont [5/8] 0, 128
    %2570 = vxpose.xlu0.c.b16.cont [6/8] 0, 128
    %2571 = vxpose.xlu0.c.b16.cont [7/8] 0, 128
    %2572 = vxpose.xlu0.c.b16.end [8/8] 0, 128
    %v2573 = vpop.trf.xlu0
    %v2574 = vpop.trf.xlu0
    %v2575 = vpop.trf.xlu0
    %v2576 = vpop.trf.xlu0
    %v2577 = vpop.trf.xlu0
    %v2578 = vpop.trf.xlu0
    %v2579 = vpop.trf.xlu0
    %v2580 = vpop.trf.xlu0
    %2581 = vxpose.xlu0.c.b16.start [1/8] %v1986, 128
    %2582 = vxpose.xlu0.c.b16.cont [2/8] 0, 128
    %2583 = vxpose.xlu0.c.b16.cont [3/8] 0, 128
    %2584 = vxpose.xlu0.c.b16.cont [4/8] 0, 128
    %2585 = vxpose.xlu0.c.b16.cont [5/8] 0, 128
    %2586 = vxpose.xlu0.c.b16.cont [6/8] 0, 128
    %2587 = vxpose.xlu0.c.b16.cont [7/8] 0, 128
    %2588 = vxpose.xlu0.c.b16.end [8/8] 0, 128
    %v2589 = vpop.trf.xlu0
    %v2590 = vpop.trf.xlu0
    %v2591 = vpop.trf.xlu0
    %v2592 = vpop.trf.xlu0
    %v2593 = vpop.trf.xlu0
    %v2594 = vpop.trf.xlu0
    %v2595 = vpop.trf.xlu0
    %v2596 = vpop.trf.xlu0
    %2597 = vxpose.xlu0.c.b16.start [1/8] %v1987, 128
    %2598 = vxpose.xlu0.c.b16.cont [2/8] 0, 128
    %2599 = vxpose.xlu0.c.b16.cont [3/8] 0, 128
    %2600 = vxpose.xlu0.c.b16.cont [4/8] 0, 128
    %2601 = vxpose.xlu0.c.b16.cont [5/8] 0, 128
    %2602 = vxpose.xlu0.c.b16.cont [6/8] 0, 128
    %2603 = vxpose.xlu0.c.b16.cont [7/8] 0, 128
    %2604 = vxpose.xlu0.c.b16.end [8/8] 0, 128
    %v2605 = vpop.trf.xlu0
    %v2606 = vpop.trf.xlu0
    %v2607 = vpop.trf.xlu0
    %v2608 = vpop.trf.xlu0
    %v2609 = vpop.trf.xlu0
    %v2610 = vpop.trf.xlu0
    %v2611 = vpop.trf.xlu0
    %v2612 = vpop.trf.xlu0
    %2613 = vxpose.xlu0.c.b16.start [1/8] %v1988, 128
    %2614 = vxpose.xlu0.c.b16.cont [2/8] 0, 128
    %2615 = vxpose.xlu0.c.b16.cont [3/8] 0, 128
    %2616 = vxpose.xlu0.c.b16.cont [4/8] 0, 128
    %2617 = vxpose.xlu0.c.b16.cont [5/8] 0, 128
    %2618 = vxpose.xlu0.c.b16.cont [6/8] 0, 128
    %2619 = vxpose.xlu0.c.b16.cont [7/8] 0, 128
    %2620 = vxpose.xlu0.c.b16.end [8/8] 0, 128
    %v2621 = vpop.trf.xlu0
    %v2622 = vpop.trf.xlu0
    %v2623 = vpop.trf.xlu0
    %v2624 = vpop.trf.xlu0
    %v2625 = vpop.trf.xlu0
    %v2626 = vpop.trf.xlu0
    %v2627 = vpop.trf.xlu0
    %v2628 = vpop.trf.xlu0
    %2629 = vxpose.xlu0.c.b16.start [1/8] %v1989, 128
    %2630 = vxpose.xlu0.c.b16.cont [2/8] 0, 128
    %2631 = vxpose.xlu0.c.b16.cont [3/8] 0, 128
    %2632 = vxpose.xlu0.c.b16.cont [4/8] 0, 128
    %2633 = vxpose.xlu0.c.b16.cont [5/8] 0, 128
    %2634 = vxpose.xlu0.c.b16.cont [6/8] 0, 128
    %2635 = vxpose.xlu0.c.b16.cont [7/8] 0, 128
    %2636 = vxpose.xlu0.c.b16.end [8/8] 0, 128
    %v2637 = vpop.trf.xlu0
    %v2638 = vpop.trf.xlu0
    %v2639 = vpop.trf.xlu0
    %v2640 = vpop.trf.xlu0
    %v2641 = vpop.trf.xlu0
    %v2642 = vpop.trf.xlu0
    %v2643 = vpop.trf.xlu0
    %v2644 = vpop.trf.xlu0
    %2645 = vxpose.xlu0.c.b16.start [1/8] %v1990, 128
    %2646 = vxpose.xlu0.c.b16.cont [2/8] 0, 128
    %2647 = vxpose.xlu0.c.b16.cont [3/8] 0, 128
    %2648 = vxpose.xlu0.c.b16.cont [4/8] 0, 128
    %2649 = vxpose.xlu0.c.b16.cont [5/8] 0, 128
    %2650 = vxpose.xlu0.c.b16.cont [6/8] 0, 128
    %2651 = vxpose.xlu0.c.b16.cont [7/8] 0, 128
    %2652 = vxpose.xlu0.c.b16.end [8/8] 0, 128
    %v2653 = vpop.trf.xlu0
    %v2654 = vpop.trf.xlu0
    %v2655 = vpop.trf.xlu0
    %v2656 = vpop.trf.xlu0
    %v2657 = vpop.trf.xlu0
    %v2658 = vpop.trf.xlu0
    %v2659 = vpop.trf.xlu0
    %v2660 = vpop.trf.xlu0
    %2661 = vxpose.xlu0.c.b16.start [1/8] %v1991, 128
    %2662 = vxpose.xlu0.c.b16.cont [2/8] 0, 128
    %2663 = vxpose.xlu0.c.b16.cont [3/8] 0, 128
    %2664 = vxpose.xlu0.c.b16.cont [4/8] 0, 128
    %2665 = vxpose.xlu0.c.b16.cont [5/8] 0, 128
    %2666 = vxpose.xlu0.c.b16.cont [6/8] 0, 128
    %2667 = vxpose.xlu0.c.b16.cont [7/8] 0, 128
    %2668 = vxpose.xlu0.c.b16.end [8/8] 0, 128
    %v2669 = vpop.trf.xlu0
    %v2670 = vpop.trf.xlu0
    %v2671 = vpop.trf.xlu0
    %v2672 = vpop.trf.xlu0
    %v2673 = vpop.trf.xlu0
    %v2674 = vpop.trf.xlu0
    %v2675 = vpop.trf.xlu0
    %v2676 = vpop.trf.xlu0
    %2677 = vxpose.xlu0.c.b16.start [1/8] %v1992, 128
    %2678 = vxpose.xlu0.c.b16.cont [2/8] 0, 128
    %2679 = vxpose.xlu0.c.b16.cont [3/8] 0, 128
    %2680 = vxpose.xlu0.c.b16.cont [4/8] 0, 128
    %2681 = vxpose.xlu0.c.b16.cont [5/8] 0, 128
    %2682 = vxpose.xlu0.c.b16.cont [6/8] 0, 128
    %2683 = vxpose.xlu0.c.b16.cont [7/8] 0, 128
    %2684 = vxpose.xlu0.c.b16.end [8/8] 0, 128
    %v2685 = vpop.trf.xlu0
    %v2686 = vpop.trf.xlu0
    %v2687 = vpop.trf.xlu0
    %v2688 = vpop.trf.xlu0
    %v2689 = vpop.trf.xlu0
    %v2690 = vpop.trf.xlu0
    %v2691 = vpop.trf.xlu0
    %v2692 = vpop.trf.xlu0
    %v2693 = vrot.slane %v2637, 4
    %v2694 = vsel %vm452, %v2693, %v2573
    %v2696 = vunpack.c.l.s4 1983009808
    %v2697 = vunpack.c.0.s8 %v2696
    %v2698 = vperm.slane %v2694, %v2697
    %v2699 = vrot.slane %v2669, 4
    %v2700 = vsel %vm452, %v2699, %v2605
    %v2702 = vunpack.c.l.s4 1983009808
    %v2703 = vunpack.c.0.s8 %v2702
    %v2704 = vperm.slane %v2700, %v2703
    %v2705 = vrot.slane %v2704, 4
    %v2706 = vsel %vm452, %v2705, %v2698
    %v2707 = vrot.slane %v2698, 4
    %v2708 = vsel %vm452, %v2704, %v2707
    %v2710 = vunpack.c.l.s4 1934713408
    %v2711 = vunpack.c.0.s8 %v2710
    %v2712 = vperm.slane %v2706, %v2711
    %v2714 = vunpack.c.l.s4 1934713408
    %v2715 = vunpack.c.0.s8 %v2714
    %v2716 = vperm.slane %v2708, %v2715
    %v2717 = vrot.slane %v2712, 4
    %v2718 = vsel %vm452, 0, %v2717
    %v2719 = vrot.slane %v2716, 4
    %v2720 = vsel %vm452, 0, %v2719
    %v2721 = vrot.slane %v2653, 4
    %v2722 = vsel %vm452, %v2721, %v2589
    %v2724 = vunpack.c.l.s4 1983009808
    %v2725 = vunpack.c.0.s8 %v2724
    %v2726 = vperm.slane %v2722, %v2725
    %v2727 = vrot.slane %v2685, 4
    %v2728 = vsel %vm452, %v2727, %v2621
    %v2730 = vunpack.c.l.s4 1983009808
    %v2731 = vunpack.c.0.s8 %v2730
    %v2732 = vperm.slane %v2728, %v2731
    %v2733 = vrot.slane %v2732, 4
    %v2734 = vsel %vm452, %v2733, %v2726
    %v2735 = vrot.slane %v2726, 4
    %v2736 = vsel %vm452, %v2732, %v2735
    %v2738 = vunpack.c.l.s4 1934713408
    %v2739 = vunpack.c.0.s8 %v2738
    %v2740 = vperm.slane %v2734, %v2739
    %v2742 = vunpack.c.l.s4 1934713408
    %v2743 = vunpack.c.0.s8 %v2742
    %v2744 = vperm.slane %v2736, %v2743
    %v2745 = vrot.slane %v2740, 4
    %v2746 = vsel %vm452, 0, %v2745
    %v2747 = vrot.slane %v2744, 4
    %v2748 = vsel %vm452, 0, %v2747
    %v2751 = vpack.i.b16 %v2740, %v2712
    %v2753 = vshrl.u32 %v2712, 16
    %v2754 = vshrl.u32 %v2740, 16
    %v2755 = vpack.i.b16 %v2754, %v2753
    %v2759 = vpack.i.b16 %v2746, %v2718
    %v2761 = vshrl.u32 %v2718, 16
    %v2762 = vshrl.u32 %v2746, 16
    %v2763 = vpack.i.b16 %v2762, %v2761
    %v2767 = vpack.i.b16 %v2744, %v2716
    %v2769 = vshrl.u32 %v2716, 16
    %v2770 = vshrl.u32 %v2744, 16
    %v2771 = vpack.i.b16 %v2770, %v2769
    %v2775 = vpack.i.b16 %v2748, %v2720
    %v2777 = vshrl.u32 %v2720, 16
    %v2778 = vshrl.u32 %v2748, 16
    %v2779 = vpack.i.b16 %v2778, %v2777
    %2781 = vxpose.xlu0.c.b16.start [1/8] %v2751, 128
    %2782 = vxpose.xlu0.c.b16.cont [2/8] 0, 128
    %2783 = vxpose.xlu0.c.b16.cont [3/8] 0, 128
    %2784 = vxpose.xlu0.c.b16.cont [4/8] 0, 128
    %2785 = vxpose.xlu0.c.b16.cont [5/8] 0, 128
    %2786 = vxpose.xlu0.c.b16.cont [6/8] 0, 128
    %2787 = vxpose.xlu0.c.b16.cont [7/8] 0, 128
    %2788 = vxpose.xlu0.c.b16.end [8/8] 0, 128
    %v2789 = vpop.trf.xlu0
    %v2790 = vpop.trf.xlu0
    %v2791 = vpop.trf.xlu0
    %v2792 = vpop.trf.xlu0
    %v2793 = vpop.trf.xlu0
    %v2794 = vpop.trf.xlu0
    %v2795 = vpop.trf.xlu0
    %v2796 = vpop.trf.xlu0
    %2797 = vxpose.xlu0.c.b16.start [1/8] %v2755, 128
    %2798 = vxpose.xlu0.c.b16.cont [2/8] 0, 128
    %2799 = vxpose.xlu0.c.b16.cont [3/8] 0, 128
    %2800 = vxpose.xlu0.c.b16.cont [4/8] 0, 128
    %2801 = vxpose.xlu0.c.b16.cont [5/8] 0, 128
    %2802 = vxpose.xlu0.c.b16.cont [6/8] 0, 128
    %2803 = vxpose.xlu0.c.b16.cont [7/8] 0, 128
    %2804 = vxpose.xlu0.c.b16.end [8/8] 0, 128
    %v2805 = vpop.trf.xlu0
    %v2806 = vpop.trf.xlu0
    %v2807 = vpop.trf.xlu0
    %v2808 = vpop.trf.xlu0
    %v2809 = vpop.trf.xlu0
    %v2810 = vpop.trf.xlu0
    %v2811 = vpop.trf.xlu0
    %v2812 = vpop.trf.xlu0
    %2813 = vxpose.xlu0.c.b16.start [1/8] %v2759, 128
    %2814 = vxpose.xlu0.c.b16.cont [2/8] 0, 128
    %2815 = vxpose.xlu0.c.b16.cont [3/8] 0, 128
    %2816 = vxpose.xlu0.c.b16.cont [4/8] 0, 128
    %2817 = vxpose.xlu0.c.b16.cont [5/8] 0, 128
    %2818 = vxpose.xlu0.c.b16.cont [6/8] 0, 128
    %2819 = vxpose.xlu0.c.b16.cont [7/8] 0, 128
    %2820 = vxpose.xlu0.c.b16.end [8/8] 0, 128
    %v2821 = vpop.trf.xlu0
    %v2822 = vpop.trf.xlu0
    %v2823 = vpop.trf.xlu0
    %v2824 = vpop.trf.xlu0
    %v2825 = vpop.trf.xlu0
    %v2826 = vpop.trf.xlu0
    %v2827 = vpop.trf.xlu0
    %v2828 = vpop.trf.xlu0
    %2829 = vxpose.xlu0.c.b16.start [1/8] %v2763, 128
    %2830 = vxpose.xlu0.c.b16.cont [2/8] 0, 128
    %2831 = vxpose.xlu0.c.b16.cont [3/8] 0, 128
    %2832 = vxpose.xlu0.c.b16.cont [4/8] 0, 128
    %2833 = vxpose.xlu0.c.b16.cont [5/8] 0, 128
    %2834 = vxpose.xlu0.c.b16.cont [6/8] 0, 128
    %2835 = vxpose.xlu0.c.b16.cont [7/8] 0, 128
    %2836 = vxpose.xlu0.c.b16.end [8/8] 0, 128
    %v2837 = vpop.trf.xlu0
    %v2838 = vpop.trf.xlu0
    %v2839 = vpop.trf.xlu0
    %v2840 = vpop.trf.xlu0
    %v2841 = vpop.trf.xlu0
    %v2842 = vpop.trf.xlu0
    %v2843 = vpop.trf.xlu0
    %v2844 = vpop.trf.xlu0
    %2845 = vxpose.xlu0.c.b16.start [1/8] %v2767, 128
    %2846 = vxpose.xlu0.c.b16.cont [2/8] 0, 128
    %2847 = vxpose.xlu0.c.b16.cont [3/8] 0, 128
    %2848 = vxpose.xlu0.c.b16.cont [4/8] 0, 128
    %2849 = vxpose.xlu0.c.b16.cont [5/8] 0, 128
    %2850 = vxpose.xlu0.c.b16.cont [6/8] 0, 128
    %2851 = vxpose.xlu0.c.b16.cont [7/8] 0, 128
    %2852 = vxpose.xlu0.c.b16.end [8/8] 0, 128
    %v2853 = vpop.trf.xlu0
    %v2854 = vpop.trf.xlu0
    %v2855 = vpop.trf.xlu0
    %v2856 = vpop.trf.xlu0
    %v2857 = vpop.trf.xlu0
    %v2858 = vpop.trf.xlu0
    %v2859 = vpop.trf.xlu0
    %v2860 = vpop.trf.xlu0
    %2861 = vxpose.xlu0.c.b16.start [1/8] %v2771, 128
    %2862 = vxpose.xlu0.c.b16.cont [2/8] 0, 128
    %2863 = vxpose.xlu0.c.b16.cont [3/8] 0, 128
    %2864 = vxpose.xlu0.c.b16.cont [4/8] 0, 128
    %2865 = vxpose.xlu0.c.b16.cont [5/8] 0, 128
    %2866 = vxpose.xlu0.c.b16.cont [6/8] 0, 128
    %2867 = vxpose.xlu0.c.b16.cont [7/8] 0, 128
    %2868 = vxpose.xlu0.c.b16.end [8/8] 0, 128
    %v2869 = vpop.trf.xlu0
    %v2870 = vpop.trf.xlu0
    %v2871 = vpop.trf.xlu0
    %v2872 = vpop.trf.xlu0
    %v2873 = vpop.trf.xlu0
    %v2874 = vpop.trf.xlu0
    %v2875 = vpop.trf.xlu0
    %v2876 = vpop.trf.xlu0
    %2877 = vxpose.xlu0.c.b16.start [1/8] %v2775, 128
    %2878 = vxpose.xlu0.c.b16.cont [2/8] 0, 128
    %2879 = vxpose.xlu0.c.b16.cont [3/8] 0, 128
    %2880 = vxpose.xlu0.c.b16.cont [4/8] 0, 128
    %2881 = vxpose.xlu0.c.b16.cont [5/8] 0, 128
    %2882 = vxpose.xlu0.c.b16.cont [6/8] 0, 128
    %2883 = vxpose.xlu0.c.b16.cont [7/8] 0, 128
    %2884 = vxpose.xlu0.c.b16.end [8/8] 0, 128
    %v2885 = vpop.trf.xlu0
    %v2886 = vpop.trf.xlu0
    %v2887 = vpop.trf.xlu0
    %v2888 = vpop.trf.xlu0
    %v2889 = vpop.trf.xlu0
    %v2890 = vpop.trf.xlu0
    %v2891 = vpop.trf.xlu0
    %v2892 = vpop.trf.xlu0
    %2893 = vxpose.xlu0.c.b16.start [1/8] %v2779, 128
    %2894 = vxpose.xlu0.c.b16.cont [2/8] 0, 128
    %2895 = vxpose.xlu0.c.b16.cont [3/8] 0, 128
    %2896 = vxpose.xlu0.c.b16.cont [4/8] 0, 128
    %2897 = vxpose.xlu0.c.b16.cont [5/8] 0, 128
    %2898 = vxpose.xlu0.c.b16.cont [6/8] 0, 128
    %2899 = vxpose.xlu0.c.b16.cont [7/8] 0, 128
    %2900 = vxpose.xlu0.c.b16.end [8/8] 0, 128
    %v2901 = vpop.trf.xlu0
    %v2902 = vpop.trf.xlu0
    %v2903 = vpop.trf.xlu0
    %v2904 = vpop.trf.xlu0
    %v2905 = vpop.trf.xlu0
    %v2906 = vpop.trf.xlu0
    %v2907 = vpop.trf.xlu0
    %v2908 = vpop.trf.xlu0
    %v2909 = vrot.slane %v2853, 4
    %v2910 = vsel %vm452, %v2909, %v2789
    %v2912 = vunpack.c.l.s4 1983009808
    %v2913 = vunpack.c.0.s8 %v2912
    %v2914 = vperm.slane %v2910, %v2913
    %v2915 = vrot.slane %v2885, 4
    %v2916 = vsel %vm452, %v2915, %v2821
    %v2918 = vunpack.c.l.s4 1983009808
    %v2919 = vunpack.c.0.s8 %v2918
    %v2920 = vperm.slane %v2916, %v2919
    %v2921 = vrot.slane %v2920, 4
    %v2922 = vsel %vm452, %v2921, %v2914
    %v2924 = vunpack.c.l.s4 1934713408
    %v2925 = vunpack.c.0.s8 %v2924
    %v2926 = vperm.slane %v2922, %v2925
    %v2927 = vrot.slane %v2926, 4
    %v2928 = vsel %vm452, 0, %v2927
    %v2929 = vrot.slane %v2869, 4
    %v2930 = vsel %vm452, %v2929, %v2805
    %v2932 = vunpack.c.l.s4 1983009808
    %v2933 = vunpack.c.0.s8 %v2932
    %v2934 = vperm.slane %v2930, %v2933
    %v2935 = vrot.slane %v2901, 4
    %v2936 = vsel %vm452, %v2935, %v2837
    %v2938 = vunpack.c.l.s4 1983009808
    %v2939 = vunpack.c.0.s8 %v2938
    %v2940 = vperm.slane %v2936, %v2939
    %v2941 = vrot.slane %v2940, 4
    %v2942 = vsel %vm452, %v2941, %v2934
    %v2944 = vunpack.c.l.s4 1934713408
    %v2945 = vunpack.c.0.s8 %v2944
    %v2946 = vperm.slane %v2942, %v2945
    %v2947 = vrot.slane %v2946, 4
    %v2948 = vsel %vm452, 0, %v2947
    %v2951 = vpack.i.b16 %v2946, %v2926
    %v2952 = vshrl.u32 %v2926, 16
    %v2953 = vshrl.u32 %v2946, 16
    %v2954 = vpack.i.b16 %v2953, %v2952
    %v2957 = vpack.i.b16 %v2948, %v2928
    %v2958 = vshrl.u32 %v2928, 16
    %v2959 = vshrl.u32 %v2948, 16
    %v2960 = vpack.i.b16 %v2959, %v2958
    %v2962 = vsel %vm900, %v2951, 0
    %v2965 = vsel %vm900, %v2561, 0
    %2967 = vmatpush.bf16.xpose.msra.mxu0 0
    %2968 = vmatpush.bf16.xpose.msra.mxu0 0
    %2969 = vmatpush.bf16.xpose.msra.mxu0 0
    %2970 = vmatpush.bf16.xpose.msra.mxu0 0
    %2971 = vmatpush.bf16.xpose.msra.mxu0 0
    %2972 = vmatpush.bf16.xpose.msra.mxu0 0
    %2973 = vmatpush.bf16.xpose.msra.mxu0 0
    %2974 = vmatpush.bf16.xpose.msra.mxu0 %v2965
    %2975 = vmatmul.bf16.gmra.mxu0 %v2962
    %v2976 = vpop.f32.mrf.mxu0
    %v2977 = vadd.f32 0.0, %v2976
    %v2978 = vpop.f32.mrf.mxu0
    %2979 = vdwg.mxu0
    %v2981 = vsel %vm900, %v2954, 0
    %v2984 = vsel %vm900, %v2562, 0
    %2986 = vmatpush.bf16.xpose.msra.mxu0 0
    %2987 = vmatpush.bf16.xpose.msra.mxu0 0
    %2988 = vmatpush.bf16.xpose.msra.mxu0 0
    %2989 = vmatpush.bf16.xpose.msra.mxu0 0
    %2990 = vmatpush.bf16.xpose.msra.mxu0 0
    %2991 = vmatpush.bf16.xpose.msra.mxu0 0
    %2992 = vmatpush.bf16.xpose.msra.mxu0 0
    %2993 = vmatpush.bf16.xpose.msra.mxu0 %v2984
    %2994 = vmatmul.bf16.gmra.mxu0 %v2981
    %v2995 = vpop.f32.mrf.mxu0
    %v2996 = vadd.f32 0.0, %v2995
    %v2997 = vpop.f32.mrf.mxu0
    %2998 = vdwg.mxu0
    %v3000 = vsel %vm900, %v2957, 0
    %v3003 = vsel %vm900, %v2563, 0
    %3005 = vmatpush.bf16.xpose.msra.mxu0 0
    %3006 = vmatpush.bf16.xpose.msra.mxu0 0
    %3007 = vmatpush.bf16.xpose.msra.mxu0 0
    %3008 = vmatpush.bf16.xpose.msra.mxu0 0
    %3009 = vmatpush.bf16.xpose.msra.mxu0 0
    %3010 = vmatpush.bf16.xpose.msra.mxu0 0
    %3011 = vmatpush.bf16.xpose.msra.mxu0 0
    %3012 = vmatpush.bf16.xpose.msra.mxu0 %v3003
    %3013 = vmatmul.bf16.gmra.mxu0 %v3000
    %v3014 = vpop.f32.mrf.mxu0
    %v3015 = vadd.f32 0.0, %v3014
    %v3016 = vpop.f32.mrf.mxu0
    %3017 = vdwg.mxu0
    %v3019 = vsel %vm900, %v2960, 0
    %v3022 = vsel %vm900, %v2564, 0
    %3024 = vmatpush.bf16.xpose.msra.mxu0 0
    %3025 = vmatpush.bf16.xpose.msra.mxu0 0
    %3026 = vmatpush.bf16.xpose.msra.mxu0 0
    %3027 = vmatpush.bf16.xpose.msra.mxu0 0
    %3028 = vmatpush.bf16.xpose.msra.mxu0 0
    %3029 = vmatpush.bf16.xpose.msra.mxu0 0
    %3030 = vmatpush.bf16.xpose.msra.mxu0 0
    %3031 = vmatpush.bf16.xpose.msra.mxu0 %v3022
    %3032 = vmatmul.bf16.gmra.mxu0 %v3019
    %v3033 = vpop.f32.mrf.mxu0
    %v3034 = vadd.f32 0.0, %v3033
    %v3035 = vpop.f32.mrf.mxu0
    %3036 = vdwg.mxu0
    %3037 = vxpose.xlu0.b32.start [1/16] %v2977, 128
    %3038 = vxpose.xlu0.b32.cont [2/16] 0.0, 128
    %3039 = vxpose.xlu0.b32.cont [3/16] 0.0, 128
    %3040 = vxpose.xlu0.b32.cont [4/16] 0.0, 128
    %3041 = vxpose.xlu0.b32.cont [5/16] 0.0, 128
    %3042 = vxpose.xlu0.b32.cont [6/16] 0.0, 128
    %3043 = vxpose.xlu0.b32.cont [7/16] 0.0, 128
    %3044 = vxpose.xlu0.b32.cont [8/16] 0.0, 128
    %3045 = vxpose.xlu0.b32.cont [9/16] 0.0, 128
    %3046 = vxpose.xlu0.b32.cont [10/16] 0.0, 128
    %3047 = vxpose.xlu0.b32.cont [11/16] 0.0, 128
    %3048 = vxpose.xlu0.b32.cont [12/16] 0.0, 128
    %3049 = vxpose.xlu0.b32.cont [13/16] 0.0, 128
    %3050 = vxpose.xlu0.b32.cont [14/16] 0.0, 128
    %3051 = vxpose.xlu0.b32.cont [15/16] 0.0, 128
    %3052 = vxpose.xlu0.b32.end [16/16] 0.0, 128
    %v3053 = vpop.trf.xlu0
    %v3054 = vpop.trf.xlu0
    %v3055 = vpop.trf.xlu0
    %v3056 = vpop.trf.xlu0
    %v3057 = vpop.trf.xlu0
    %v3058 = vpop.trf.xlu0
    %v3059 = vpop.trf.xlu0
    %v3060 = vpop.trf.xlu0
    %v3061 = vpop.trf.xlu0
    %v3062 = vpop.trf.xlu0
    %v3063 = vpop.trf.xlu0
    %v3064 = vpop.trf.xlu0
    %v3065 = vpop.trf.xlu0
    %v3066 = vpop.trf.xlu0
    %v3067 = vpop.trf.xlu0
    %v3068 = vpop.trf.xlu0
    %3069 = vxpose.xlu0.b32.start [1/16] %v2996, 128
    %3070 = vxpose.xlu0.b32.cont [2/16] 0.0, 128
    %3071 = vxpose.xlu0.b32.cont [3/16] 0.0, 128
    %3072 = vxpose.xlu0.b32.cont [4/16] 0.0, 128
    %3073 = vxpose.xlu0.b32.cont [5/16] 0.0, 128
    %3074 = vxpose.xlu0.b32.cont [6/16] 0.0, 128
    %3075 = vxpose.xlu0.b32.cont [7/16] 0.0, 128
    %3076 = vxpose.xlu0.b32.cont [8/16] 0.0, 128
    %3077 = vxpose.xlu0.b32.cont [9/16] 0.0, 128
    %3078 = vxpose.xlu0.b32.cont [10/16] 0.0, 128
    %3079 = vxpose.xlu0.b32.cont [11/16] 0.0, 128
    %3080 = vxpose.xlu0.b32.cont [12/16] 0.0, 128
    %3081 = vxpose.xlu0.b32.cont [13/16] 0.0, 128
    %3082 = vxpose.xlu0.b32.cont [14/16] 0.0, 128
    %3083 = vxpose.xlu0.b32.cont [15/16] 0.0, 128
    %3084 = vxpose.xlu0.b32.end [16/16] 0.0, 128
    %v3085 = vpop.trf.xlu0
    %v3086 = vpop.trf.xlu0
    %v3087 = vpop.trf.xlu0
    %v3088 = vpop.trf.xlu0
    %v3089 = vpop.trf.xlu0
    %v3090 = vpop.trf.xlu0
    %v3091 = vpop.trf.xlu0
    %v3092 = vpop.trf.xlu0
    %v3093 = vpop.trf.xlu0
    %v3094 = vpop.trf.xlu0
    %v3095 = vpop.trf.xlu0
    %v3096 = vpop.trf.xlu0
    %v3097 = vpop.trf.xlu0
    %v3098 = vpop.trf.xlu0
    %v3099 = vpop.trf.xlu0
    %v3100 = vpop.trf.xlu0
    %3101 = vxpose.xlu0.b32.start [1/16] %v3015, 128
    %3102 = vxpose.xlu0.b32.cont [2/16] 0.0, 128
    %3103 = vxpose.xlu0.b32.cont [3/16] 0.0, 128
    %3104 = vxpose.xlu0.b32.cont [4/16] 0.0, 128
    %3105 = vxpose.xlu0.b32.cont [5/16] 0.0, 128
    %3106 = vxpose.xlu0.b32.cont [6/16] 0.0, 128
    %3107 = vxpose.xlu0.b32.cont [7/16] 0.0, 128
    %3108 = vxpose.xlu0.b32.cont [8/16] 0.0, 128
    %3109 = vxpose.xlu0.b32.cont [9/16] 0.0, 128
    %3110 = vxpose.xlu0.b32.cont [10/16] 0.0, 128
    %3111 = vxpose.xlu0.b32.cont [11/16] 0.0, 128
    %3112 = vxpose.xlu0.b32.cont [12/16] 0.0, 128
    %3113 = vxpose.xlu0.b32.cont [13/16] 0.0, 128
    %3114 = vxpose.xlu0.b32.cont [14/16] 0.0, 128
    %3115 = vxpose.xlu0.b32.cont [15/16] 0.0, 128
    %3116 = vxpose.xlu0.b32.end [16/16] 0.0, 128
    %v3117 = vpop.trf.xlu0
    %v3118 = vpop.trf.xlu0
    %v3119 = vpop.trf.xlu0
    %v3120 = vpop.trf.xlu0
    %v3121 = vpop.trf.xlu0
    %v3122 = vpop.trf.xlu0
    %v3123 = vpop.trf.xlu0
    %v3124 = vpop.trf.xlu0
    %v3125 = vpop.trf.xlu0
    %v3126 = vpop.trf.xlu0
    %v3127 = vpop.trf.xlu0
    %v3128 = vpop.trf.xlu0
    %v3129 = vpop.trf.xlu0
    %v3130 = vpop.trf.xlu0
    %v3131 = vpop.trf.xlu0
    %v3132 = vpop.trf.xlu0
    %3133 = vxpose.xlu0.b32.start [1/16] %v3034, 128
    %3134 = vxpose.xlu0.b32.cont [2/16] 0.0, 128
    %3135 = vxpose.xlu0.b32.cont [3/16] 0.0, 128
    %3136 = vxpose.xlu0.b32.cont [4/16] 0.0, 128
    %3137 = vxpose.xlu0.b32.cont [5/16] 0.0, 128
    %3138 = vxpose.xlu0.b32.cont [6/16] 0.0, 128
    %3139 = vxpose.xlu0.b32.cont [7/16] 0.0, 128
    %3140 = vxpose.xlu0.b32.cont [8/16] 0.0, 128
    %3141 = vxpose.xlu0.b32.cont [9/16] 0.0, 128
    %3142 = vxpose.xlu0.b32.cont [10/16] 0.0, 128
    %3143 = vxpose.xlu0.b32.cont [11/16] 0.0, 128
    %3144 = vxpose.xlu0.b32.cont [12/16] 0.0, 128
    %3145 = vxpose.xlu0.b32.cont [13/16] 0.0, 128
    %3146 = vxpose.xlu0.b32.cont [14/16] 0.0, 128
    %3147 = vxpose.xlu0.b32.cont [15/16] 0.0, 128
    %3148 = vxpose.xlu0.b32.end [16/16] 0.0, 128
    %v3149 = vpop.trf.xlu0
    %v3150 = vpop.trf.xlu0
    %v3151 = vpop.trf.xlu0
    %v3152 = vpop.trf.xlu0
    %v3153 = vpop.trf.xlu0
    %v3154 = vpop.trf.xlu0
    %v3155 = vpop.trf.xlu0
    %v3156 = vpop.trf.xlu0
    %v3157 = vpop.trf.xlu0
    %v3158 = vpop.trf.xlu0
    %v3159 = vpop.trf.xlu0
    %v3160 = vpop.trf.xlu0
    %v3161 = vpop.trf.xlu0
    %v3162 = vpop.trf.xlu0
    %v3163 = vpop.trf.xlu0
    %v3164 = vpop.trf.xlu0
    %v3165 = vrot.slane %v3117, 4
    %v3166 = vsel %vm221, %v3165, %v3053
    %v3167 = vrot.slane %v3053, 4
    %v3168 = vsel %vm221, %v3117, %v3167
    %v3170 = vunpack.c.l.s4 1983009808
    %v3171 = vunpack.c.0.s8 %v3170
    %v3172 = vperm.slane %v3166, %v3171
    %v3174 = vunpack.c.l.s4 1983009808
    %v3175 = vunpack.c.0.s8 %v3174
    %v3176 = vperm.slane %v3168, %v3175
    %v3177 = vrot.slane %v3149, 4
    %v3178 = vsel %vm221, %v3177, %v3085
    %v3179 = vrot.slane %v3085, 4
    %v3180 = vsel %vm221, %v3149, %v3179
    %v3182 = vunpack.c.l.s4 1983009808
    %v3183 = vunpack.c.0.s8 %v3182
    %v3184 = vperm.slane %v3178, %v3183
    %v3186 = vunpack.c.l.s4 1983009808
    %v3187 = vunpack.c.0.s8 %v3186
    %v3188 = vperm.slane %v3180, %v3187
    %v3189 = vrot.slane %v3184, 4
    %v3190 = vsel %vm221, %v3189, %v3172
    %v3191 = vrot.slane %v3172, 4
    %v3192 = vsel %vm221, %v3184, %v3191
    %v3194 = vunpack.c.l.s4 1934713408
    %v3195 = vunpack.c.0.s8 %v3194
    %v3196 = vperm.slane %v3190, %v3195
    %v3198 = vunpack.c.l.s4 1934713408
    %v3199 = vunpack.c.0.s8 %v3198
    %v3200 = vperm.slane %v3192, %v3199
    %v3201 = vrot.slane %v3188, 4
    %v3202 = vsel %vm221, %v3201, %v3176
    %v3203 = vrot.slane %v3176, 4
    %v3204 = vsel %vm221, %v3188, %v3203
    %v3206 = vunpack.c.l.s4 1934713408
    %v3207 = vunpack.c.0.s8 %v3206
    %v3208 = vperm.slane %v3202, %v3207
    %v3210 = vunpack.c.l.s4 1934713408
    %v3211 = vunpack.c.0.s8 %v3210
    %v3212 = vperm.slane %v3204, %v3211
    %v3213 = vrot.slane %v3196, 4
    %v3214 = vsel %vm221, 0.0, %v3213
    %v3215 = vrot.slane %v3200, 4
    %v3216 = vsel %vm221, 0.0, %v3215
    %v3217 = vrot.slane %v3208, 4
    %v3218 = vsel %vm221, 0.0, %v3217
    %v3219 = vrot.slane %v3212, 4
    %v3220 = vsel %vm221, 0.0, %v3219
    %v3221 = vsel %vm221, %v3215, %v3196
    %v3223 = vunpack.c.l.s4 1983009808
    %v3224 = vunpack.c.0.s8 %v3223
    %v3225 = vperm.slane %v3221, %v3224
    %v3226 = vrot.slane %v3216, 4
    %v3227 = vsel %vm221, %v3226, %v3214
    %v3229 = vunpack.c.l.s4 1983009808
    %v3230 = vunpack.c.0.s8 %v3229
    %v3231 = vperm.slane %v3227, %v3230
    %v3232 = vsel %vm221, %v3219, %v3208
    %v3234 = vunpack.c.l.s4 1983009808
    %v3235 = vunpack.c.0.s8 %v3234
    %v3236 = vperm.slane %v3232, %v3235
    %v3237 = vrot.slane %v3220, 4
    %v3238 = vsel %vm221, %v3237, %v3218
    %v3240 = vunpack.c.l.s4 1983009808
    %v3241 = vunpack.c.0.s8 %v3240
    %v3242 = vperm.slane %v3238, %v3241
    %v3243 = vrot.slane %v3231, 4
    %v3244 = vsel %vm221, %v3243, %v3225
    %v3245 = vrot.slane %v3225, 4
    %v3246 = vsel %vm221, %v3231, %v3245
    %v3248 = vunpack.c.l.s4 1934713408
    %v3249 = vunpack.c.0.s8 %v3248
    %v3250 = vperm.slane %v3244, %v3249
    %v3252 = vunpack.c.l.s4 1934713408
    %v3253 = vunpack.c.0.s8 %v3252
    %v3254 = vperm.slane %v3246, %v3253
    %v3255 = vrot.slane %v3242, 4
    %v3256 = vsel %vm221, %v3255, %v3236
    %v3257 = vrot.slane %v3236, 4
    %v3258 = vsel %vm221, %v3242, %v3257
    %v3260 = vunpack.c.l.s4 1934713408
    %v3261 = vunpack.c.0.s8 %v3260
    %v3262 = vperm.slane %v3256, %v3261
    %v3264 = vunpack.c.l.s4 1934713408
    %v3265 = vunpack.c.0.s8 %v3264
    %v3266 = vperm.slane %v3258, %v3265
    %v3267 = vrot.slane %v3262, 4
    %v3268 = vsel %vm221, %v3267, %v3250
    %v3269 = vrot.slane %v3250, 4
    %v3270 = vsel %vm221, %v3262, %v3269
    %v3271 = vrot.slane %v3266, 4
    %v3272 = vsel %vm221, %v3271, %v3254
    %v3273 = vrot.slane %v3254, 4
    %v3274 = vsel %vm221, %v3266, %v3273
    %3276 = vrot.lane.b32.xlu0 %v3270, 8
    %v3277 = vpop.permute.xlu0 %3276
    %3280 = vrot.lane.b32.xlu0 %v3272, 16
    %v3281 = vpop.permute.xlu0 %3280
    %3284 = vrot.lane.b32.xlu0 %v3274, 24
    %v3285 = vpop.permute.xlu0 %3284
    %v3287 = vsel %vm900, %v3268, %v3277
    %v3288 = vsel %vm1749, %v3287, %v3281
    %v3289 = vsel %vm1751, %v3288, %v3285
    %v3290 = vpack.c.bf16 %v3289, %v1752
    %v3295 = vunpack.c.l.b16 %v109
    %v3296 = vunpack.c.l.b16 %v110
    %v3297 = vunpack.c.l.b16 %v111
    %v3298 = vunpack.c.l.b16 %v112
    %v3299 = vpack.c.b16 %v3296, %v3295
    %v3300 = vpack.c.b16 %v3298, %v3297
    %v3304 = vsel %vm175, %v3290, 0
    %3306 = vmatpush.bf16.msra.mxu0 0
    %3307 = vmatpush.bf16.msra.mxu0 0
    %3308 = vmatpush.bf16.msra.mxu0 0
    %3309 = vmatpush.bf16.msra.mxu0 0
    %3310 = vmatpush.bf16.msra.mxu0 0
    %3311 = vmatpush.bf16.msra.mxu0 0
    %3312 = vmatpush.bf16.msra.mxu0 %v3300
    %3313 = vmatpush.bf16.msra.mxu0 %v3299
    %3314 = vmatmul.bf16.gmra.mxu0 %v3304
    %v3315 = vpop.f32.mrf.mxu0
    %v3316 = vadd.f32 %v134, %v3315
    %v3317 = vpop.f32.mrf.mxu0
    %v3318 = vadd.f32 %v134, %v3317
    %3319 = vdwg.mxu0
    %v3320 = vadd.f32 %v160, %v3316
    %v3321 = vadd.f32 %v161, %v3318
    %v3322 = vsel %vm175, %v3320, 0.0
    %3323 = vadd.xlane.f32.xlu0 %v3322
    %v3324 = vpop.xlane.xlu0 %3323
    %v3325 = vsel %vm175, %v3321, 0.0
    %3326 = vadd.xlane.f32.xlu0 %v3325
    %v3327 = vpop.xlane.xlu0 %3326
    %v3328 = vrcp.pop 32.0
    %v3329 = vmul.f32 32.0, %v3328
    %v3330 = vsub.f32 1.0, %v3329
    %v3331 = vmul.f32 %v3328, %v3330
    %v3332 = vadd.f32 %v3328, %v3331
    %vm3333 = vweird.f32 %v3328
    %v3334 = vsel %vm3333, %v3328, %v3332
    %v3335 = vmul.f32 %v3324, %v3334
    %v3336 = vmul.f32 %v3327, %v3334
    %v3337 = vmul.f32 %v3320, %v3320
    %v3338 = vmul.f32 %v3321, %v3321
    %v3339 = vsel %vm175, %v3337, 0.0
    %3340 = vadd.xlane.f32.xlu0 %v3339
    %v3341 = vpop.xlane.xlu0 %3340
    %v3342 = vsel %vm175, %v3338, 0.0
    %3343 = vadd.xlane.f32.xlu0 %v3342
    %v3344 = vpop.xlane.xlu0 %3343
    %v3345 = vmul.f32 %v3341, %v3334
    %v3346 = vmul.f32 %v3344, %v3334
    %v3347 = vmul.f32 %v3335, %v3335
    %v3348 = vmul.f32 %v3336, %v3336
    %v3349 = vsub.f32 %v3345, %v3347
    %v3350 = vsub.f32 %v3346, %v3348
    %v3351 = vmax.f32 %v3349, 0.0
    %v3352 = vmax.f32 %v3350, 0.0
    %v3353 = vsub.f32 %v3320, %v3335
    %v3354 = vsub.f32 %v3321, %v3336
    %v3355 = vadd.f32 %v3351, 1e-05
    %v3356 = vadd.f32 %v3352, 1e-05
    %v3357 = vrsqrt.pop %v3355
    %v3358 = vmul.f32 %v3357, %v3355
    %v3359 = vmul.f32 %v3358, %v3357
    %v3360 = vmul.f32 0.5, %v3359
    %v3361 = vsub.f32 1.5, %v3360
    %v3362 = vmul.f32 %v3357, %v3361
    %vm3363 = vweird.f32 %v3355
    %vm3364 = vweird.f32 %v3357
    %vm3365 = vmor %vm3363, %vm3364
    %v3366 = vsel %vm3365, %v3357, %v3362
    %v3367 = vrsqrt.pop %v3356
    %v3368 = vmul.f32 %v3367, %v3356
    %v3369 = vmul.f32 %v3368, %v3367
    %v3370 = vmul.f32 0.5, %v3369
    %v3371 = vsub.f32 1.5, %v3370
    %v3372 = vmul.f32 %v3367, %v3371
    %vm3373 = vweird.f32 %v3356
    %vm3374 = vweird.f32 %v3367
    %vm3375 = vmor %vm3373, %vm3374
    %v3376 = vsel %vm3375, %v3367, %v3372
    %v3377 = vmul.f32 %v3353, %v3366
    %v3378 = vmul.f32 %v3354, %v3376
    %v3379 = vmul.f32 %v3377, %v146
    %v3380 = vmul.f32 %v3378, %v146
    %v3381 = vadd.f32 %v3379, %v150
    %v3382 = vadd.f32 %v3380, %v150
    %v3383 = vpack.c.bf16 %v3382, %v3381
    %v3388 = vunpack.c.l.b16 %v113
    %v3389 = vunpack.c.l.b16 %v114
    %v3390 = vunpack.c.l.b16 %v115
    %v3391 = vunpack.c.l.b16 %v116
    %v3392 = vpack.c.b16 %v3389, %v3388
    %v3393 = vpack.c.b16 %v3391, %v3390
    %v3397 = vsel %vm175, %v3383, 0
    %3399 = vmatpush.bf16.msra.mxu0 0
    %3400 = vmatpush.bf16.msra.mxu0 0
    %3401 = vmatpush.bf16.msra.mxu0 0
    %3402 = vmatpush.bf16.msra.mxu0 0
    %3403 = vmatpush.bf16.msra.mxu0 0
    %3404 = vmatpush.bf16.msra.mxu0 0
    %3405 = vmatpush.bf16.msra.mxu0 %v3393
    %3406 = vmatpush.bf16.msra.mxu0 %v3392
    %3407 = vmatmul.bf16.gmra.mxu0 %v3397
    %v3408 = vpop.f32.mrf.mxu0
    %v3409 = vadd.f32 %v138, %v3408
    %v3410 = vpop.f32.mrf.mxu0
    %v3411 = vadd.f32 %v138, %v3410
    %3412 = vdwg.mxu0
    %v3413 = vmax.f32 %v3409, 0.0
    %v3414 = vmax.f32 %v3411, 0.0
    %v3415 = vpack.c.bf16 %v3414, %v3413
    %v3424 = vunpack.c.l.b16 %v117
    %v3425 = vunpack.c.l.b16 %v118
    %v3426 = vunpack.c.l.b16 %v119
    %v3427 = vunpack.c.l.b16 %v120
    %v3428 = vunpack.c.l.b16 %v121
    %v3429 = vunpack.c.l.b16 %v122
    %v3430 = vunpack.c.l.b16 %v123
    %v3431 = vunpack.c.l.b16 %v124
    %v3432 = vpack.c.b16 %v3425, %v3424
    %v3433 = vpack.c.b16 %v3427, %v3426
    %v3434 = vpack.c.b16 %v3429, %v3428
    %v3435 = vpack.c.b16 %v3431, %v3430
    %vm3440 = vcmask 523264
    %v3442 = vsel %vm3440, %v3415, 0
    %3444 = vmatpush.bf16.msra.mxu0 0
    %3445 = vmatpush.bf16.msra.mxu0 0
    %3446 = vmatpush.bf16.msra.mxu0 0
    %3447 = vmatpush.bf16.msra.mxu0 0
    %3448 = vmatpush.bf16.msra.mxu0 %v3435
    %3449 = vmatpush.bf16.msra.mxu0 %v3434
    %3450 = vmatpush.bf16.msra.mxu0 %v3433
    %3451 = vmatpush.bf16.msra.mxu0 %v3432
    %3452 = vmatmul.bf16.gmra.mxu0 %v3442
    %v3453 = vpop.f32.mrf.mxu0
    %v3454 = vadd.f32 %v142, %v3453
    %v3455 = vpop.f32.mrf.mxu0
    %v3456 = vadd.f32 %v142, %v3455
    %3457 = vdwg.mxu0
    %v3458 = vadd.f32 %v3381, %v3454
    %v3459 = vadd.f32 %v3382, %v3456
    %v3460 = vsel %vm175, %v3458, 0.0
    %3461 = vadd.xlane.f32.xlu0 %v3460
    %v3462 = vpop.xlane.xlu0 %3461
    %v3463 = vsel %vm175, %v3459, 0.0
    %3464 = vadd.xlane.f32.xlu0 %v3463
    %v3465 = vpop.xlane.xlu0 %3464
    %v3466 = vmul.f32 %v3462, %v3334
    %v3467 = vmul.f32 %v3465, %v3334
    %v3468 = vmul.f32 %v3458, %v3458
    %v3469 = vmul.f32 %v3459, %v3459
    %v3470 = vsel %vm175, %v3468, 0.0
    %3471 = vadd.xlane.f32.xlu0 %v3470
    %v3472 = vpop.xlane.xlu0 %3471
    %v3473 = vsel %vm175, %v3469, 0.0
    %3474 = vadd.xlane.f32.xlu0 %v3473
    %v3475 = vpop.xlane.xlu0 %3474
    %v3476 = vmul.f32 %v3472, %v3334
    %v3477 = vmul.f32 %v3475, %v3334
    %v3478 = vmul.f32 %v3466, %v3466
    %v3479 = vmul.f32 %v3467, %v3467
    %v3480 = vsub.f32 %v3476, %v3478
    %v3481 = vsub.f32 %v3477, %v3479
    %v3482 = vmax.f32 %v3480, 0.0
    %v3483 = vmax.f32 %v3481, 0.0
    %v3484 = vsub.f32 %v3458, %v3466
    %v3485 = vsub.f32 %v3459, %v3467
    %v3486 = vadd.f32 %v3482, 1e-05
    %v3487 = vadd.f32 %v3483, 1e-05
    %v3488 = vrsqrt.pop %v3486
    %v3489 = vmul.f32 %v3488, %v3486
    %v3490 = vmul.f32 %v3489, %v3488
    %v3491 = vmul.f32 0.5, %v3490
    %v3492 = vsub.f32 1.5, %v3491
    %v3493 = vmul.f32 %v3488, %v3492
    %vm3494 = vweird.f32 %v3486
    %vm3495 = vweird.f32 %v3488
    %vm3496 = vmor %vm3494, %vm3495
    %v3497 = vsel %vm3496, %v3488, %v3493
    %v3498 = vrsqrt.pop %v3487
    %v3499 = vmul.f32 %v3498, %v3487
    %v3500 = vmul.f32 %v3499, %v3498
    %v3501 = vmul.f32 0.5, %v3500
    %v3502 = vsub.f32 1.5, %v3501
    %v3503 = vmul.f32 %v3498, %v3502
    %vm3504 = vweird.f32 %v3487
    %vm3505 = vweird.f32 %v3498
    %vm3506 = vmor %vm3504, %vm3505
    %v3507 = vsel %vm3506, %v3498, %v3503
    %v3508 = vmul.f32 %v3484, %v3497
    %v3509 = vmul.f32 %v3485, %v3507
    %v3510 = vmul.f32 %v3508, %v154
    %v3511 = vmul.f32 %v3509, %v154
    %v3512 = vadd.f32 %v3510, %v158
    %v3513 = vadd.f32 %v3511, %v158
    %v3514 = vpack.c.bf16 %v3513, %v3512
    %v3516 = vsel %vm175, %v3514, 0
    %3518 = vmatpush.bf16.msra.mxu0 0
    %3519 = vmatpush.bf16.msra.mxu0 0
    %3520 = vmatpush.bf16.msra.mxu0 0
    %3521 = vmatpush.bf16.msra.mxu0 0
    %3522 = vmatpush.bf16.msra.mxu0 0
    %3523 = vmatpush.bf16.msra.mxu0 0
    %3524 = vmatpush.bf16.msra.mxu0 %v172
    %3525 = vmatpush.bf16.msra.mxu0 %v171
    %3526 = vmatmul.bf16.gmra.mxu0 %v3516
    %v3527 = vpop.f32.mrf.mxu0
    %v3528 = vadd.f32 0.0, %v3527
    %v3529 = vpop.f32.mrf.mxu0
    %v3530 = vadd.f32 0.0, %v3529
    %3531 = vdwg.mxu0
    %v3532 = vadd.f32 %v3528, %v125
    %v3533 = vadd.f32 %v3530, %v126
    %v3534 = vadd.f32 %v3528, %v198
    %v3535 = vadd.f32 %v3530, %v200
    %v3536 = vadd.f32 %v3528, %v206
    %v3537 = vadd.f32 %v3530, %v206
    %3539 = vrot.lane.b32.xlu0 %v3532, 120
    %v3540 = vpop.permute.xlu0 %3539
    %3542 = vrot.lane.b32.xlu0 %v3532, 112
    %v3543 = vpop.permute.xlu0 %3542
    %3545 = vrot.lane.b32.xlu0 %v3532, 104
    %v3546 = vpop.permute.xlu0 %3545
    %v3548 = vrot.slane %v3543, 4
    %v3549 = vsel %vm221, %v3548, %v3532
    %v3550 = vrot.slane %v3532, 4
    %v3551 = vsel %vm221, %v3543, %v3550
    %v3553 = vunpack.c.l.s4 1983009808
    %v3554 = vunpack.c.0.s8 %v3553
    %v3555 = vperm.slane %v3549, %v3554
    %v3557 = vunpack.c.l.s4 1983009808
    %v3558 = vunpack.c.0.s8 %v3557
    %v3559 = vperm.slane %v3551, %v3558
    %v3560 = vrot.slane %v3546, 4
    %v3561 = vsel %vm221, %v3560, %v3540
    %v3562 = vrot.slane %v3540, 4
    %v3563 = vsel %vm221, %v3546, %v3562
    %v3565 = vunpack.c.l.s4 1983009808
    %v3566 = vunpack.c.0.s8 %v3565
    %v3567 = vperm.slane %v3561, %v3566
    %v3569 = vunpack.c.l.s4 1983009808
    %v3570 = vunpack.c.0.s8 %v3569
    %v3571 = vperm.slane %v3563, %v3570
    %v3572 = vrot.slane %v3567, 4
    %v3573 = vsel %vm221, %v3572, %v3555
    %v3574 = vrot.slane %v3555, 4
    %v3575 = vsel %vm221, %v3567, %v3574
    %v3577 = vunpack.c.l.s4 1934713408
    %v3578 = vunpack.c.0.s8 %v3577
    %v3579 = vperm.slane %v3573, %v3578
    %v3581 = vunpack.c.l.s4 1934713408
    %v3582 = vunpack.c.0.s8 %v3581
    %v3583 = vperm.slane %v3575, %v3582
    %v3584 = vrot.slane %v3571, 4
    %v3585 = vsel %vm221, %v3584, %v3559
    %v3586 = vrot.slane %v3559, 4
    %v3587 = vsel %vm221, %v3571, %v3586
    %v3589 = vunpack.c.l.s4 1934713408
    %v3590 = vunpack.c.0.s8 %v3589
    %v3591 = vperm.slane %v3585, %v3590
    %v3593 = vunpack.c.l.s4 1934713408
    %v3594 = vunpack.c.0.s8 %v3593
    %v3595 = vperm.slane %v3587, %v3594
    %v3596 = vrot.slane %v3579, 4
    %v3597 = vsel %vm221, 0.0, %v3596
    %v3598 = vrot.slane %v3583, 4
    %v3599 = vsel %vm221, 0.0, %v3598
    %v3600 = vrot.slane %v3591, 4
    %v3601 = vsel %vm221, 0.0, %v3600
    %v3602 = vrot.slane %v3595, 4
    %v3603 = vsel %vm221, 0.0, %v3602
    %v3604 = vpack.c.bf16 %v3579, %v3579
    %v3605 = vpack.c.bf16 %v3597, %v3597
    %v3606 = vpack.c.bf16 %v3583, %v3583
    %v3607 = vpack.c.bf16 %v3599, %v3599
    %v3608 = vpack.c.bf16 %v3591, %v3591
    %v3609 = vpack.c.bf16 %v3601, %v3601
    %v3610 = vpack.c.bf16 %v3595, %v3595
    %v3611 = vpack.c.bf16 %v3603, %v3603
    %3613 = vrot.lane.b32.xlu0 %v3534, 120
    %v3614 = vpop.permute.xlu0 %3613
    %3615 = vrot.lane.b32.xlu0 %v3534, 112
    %v3616 = vpop.permute.xlu0 %3615
    %3617 = vrot.lane.b32.xlu0 %v3534, 104
    %v3618 = vpop.permute.xlu0 %3617
    %3619 = vrot.lane.b32.xlu0 %v3534, 96
    %v3620 = vpop.permute.xlu0 %3619
    %3621 = vrot.lane.b32.xlu0 %v3614, 96
    %v3622 = vpop.permute.xlu0 %3621
    %3623 = vrot.lane.b32.xlu0 %v3616, 96
    %v3624 = vpop.permute.xlu0 %3623
    %3625 = vrot.lane.b32.xlu0 %v3618, 96
    %v3626 = vpop.permute.xlu0 %3625
    %v3631 = vrot.slane %v3624, 4
    %v3632 = vsel %vm221, %v3631, %v3620
    %v3633 = vrot.slane %v3620, 4
    %v3634 = vsel %vm221, %v3624, %v3633
    %v3636 = vunpack.c.l.s4 1983009808
    %v3637 = vunpack.c.0.s8 %v3636
    %v3638 = vperm.slane %v3632, %v3637
    %v3640 = vunpack.c.l.s4 1983009808
    %v3641 = vunpack.c.0.s8 %v3640
    %v3642 = vperm.slane %v3634, %v3641
    %v3643 = vrot.slane %v3626, 4
    %v3644 = vsel %vm221, %v3643, %v3622
    %v3645 = vrot.slane %v3622, 4
    %v3646 = vsel %vm221, %v3626, %v3645
    %v3648 = vunpack.c.l.s4 1983009808
    %v3649 = vunpack.c.0.s8 %v3648
    %v3650 = vperm.slane %v3644, %v3649
    %v3652 = vunpack.c.l.s4 1983009808
    %v3653 = vunpack.c.0.s8 %v3652
    %v3654 = vperm.slane %v3646, %v3653
    %v3655 = vrot.slane %v3650, 4
    %v3656 = vsel %vm221, %v3655, %v3638
    %v3657 = vrot.slane %v3638, 4
    %v3658 = vsel %vm221, %v3650, %v3657
    %v3660 = vunpack.c.l.s4 1934713408
    %v3661 = vunpack.c.0.s8 %v3660
    %v3662 = vperm.slane %v3656, %v3661
    %v3664 = vunpack.c.l.s4 1934713408
    %v3665 = vunpack.c.0.s8 %v3664
    %v3666 = vperm.slane %v3658, %v3665
    %v3667 = vrot.slane %v3654, 4
    %v3668 = vsel %vm221, %v3667, %v3642
    %v3669 = vrot.slane %v3642, 4
    %v3670 = vsel %vm221, %v3654, %v3669
    %v3672 = vunpack.c.l.s4 1934713408
    %v3673 = vunpack.c.0.s8 %v3672
    %v3674 = vperm.slane %v3668, %v3673
    %v3676 = vunpack.c.l.s4 1934713408
    %v3677 = vunpack.c.0.s8 %v3676
    %v3678 = vperm.slane %v3670, %v3677
    %v3679 = vrot.slane %v3662, 4
    %v3680 = vsel %vm221, 0.0, %v3679
    %v3681 = vrot.slane %v3666, 4
    %v3682 = vsel %vm221, 0.0, %v3681
    %v3683 = vrot.slane %v3674, 4
    %v3684 = vsel %vm221, 0.0, %v3683
    %v3685 = vrot.slane %v3678, 4
    %v3686 = vsel %vm221, 0.0, %v3685
    %v3687 = vpack.c.bf16 %v3662, %v3662
    %v3688 = vpack.c.bf16 %v3680, %v3680
    %v3689 = vpack.c.bf16 %v3666, %v3666
    %v3690 = vpack.c.bf16 %v3682, %v3682
    %v3691 = vpack.c.bf16 %v3674, %v3674
    %v3692 = vpack.c.bf16 %v3684, %v3684
    %v3693 = vpack.c.bf16 %v3678, %v3678
    %v3694 = vpack.c.bf16 %v3686, %v3686
    %3696 = vrot.lane.b32.xlu0 %v3536, 120
    %v3697 = vpop.permute.xlu0 %3696
    %3698 = vrot.lane.b32.xlu0 %v3536, 112
    %v3699 = vpop.permute.xlu0 %3698
    %3700 = vrot.lane.b32.xlu0 %v3536, 104
    %v3701 = vpop.permute.xlu0 %3700
    %3702 = vrot.lane.b32.xlu0 %v3536, 64
    %v3703 = vpop.permute.xlu0 %3702
    %3704 = vrot.lane.b32.xlu0 %v3697, 64
    %v3705 = vpop.permute.xlu0 %3704
    %3706 = vrot.lane.b32.xlu0 %v3699, 64
    %v3707 = vpop.permute.xlu0 %3706
    %3708 = vrot.lane.b32.xlu0 %v3701, 64
    %v3709 = vpop.permute.xlu0 %3708
    %v3714 = vrot.slane %v3707, 4
    %v3715 = vsel %vm221, %v3714, %v3703
    %v3716 = vrot.slane %v3703, 4
    %v3717 = vsel %vm221, %v3707, %v3716
    %v3719 = vunpack.c.l.s4 1983009808
    %v3720 = vunpack.c.0.s8 %v3719
    %v3721 = vperm.slane %v3715, %v3720
    %v3723 = vunpack.c.l.s4 1983009808
    %v3724 = vunpack.c.0.s8 %v3723
    %v3725 = vperm.slane %v3717, %v3724
    %v3726 = vrot.slane %v3709, 4
    %v3727 = vsel %vm221, %v3726, %v3705
    %v3728 = vrot.slane %v3705, 4
    %v3729 = vsel %vm221, %v3709, %v3728
    %v3731 = vunpack.c.l.s4 1983009808
    %v3732 = vunpack.c.0.s8 %v3731
    %v3733 = vperm.slane %v3727, %v3732
    %v3735 = vunpack.c.l.s4 1983009808
    %v3736 = vunpack.c.0.s8 %v3735
    %v3737 = vperm.slane %v3729, %v3736
    %v3738 = vrot.slane %v3733, 4
    %v3739 = vsel %vm221, %v3738, %v3721
    %v3740 = vrot.slane %v3721, 4
    %v3741 = vsel %vm221, %v3733, %v3740
    %v3743 = vunpack.c.l.s4 1934713408
    %v3744 = vunpack.c.0.s8 %v3743
    %v3745 = vperm.slane %v3739, %v3744
    %v3747 = vunpack.c.l.s4 1934713408
    %v3748 = vunpack.c.0.s8 %v3747
    %v3749 = vperm.slane %v3741, %v3748
    %v3750 = vrot.slane %v3737, 4
    %v3751 = vsel %vm221, %v3750, %v3725
    %v3752 = vrot.slane %v3725, 4
    %v3753 = vsel %vm221, %v3737, %v3752
    %v3755 = vunpack.c.l.s4 1934713408
    %v3756 = vunpack.c.0.s8 %v3755
    %v3757 = vperm.slane %v3751, %v3756
    %v3759 = vunpack.c.l.s4 1934713408
    %v3760 = vunpack.c.0.s8 %v3759
    %v3761 = vperm.slane %v3753, %v3760
    %v3762 = vrot.slane %v3745, 4
    %v3763 = vsel %vm221, 0.0, %v3762
    %v3764 = vrot.slane %v3749, 4
    %v3765 = vsel %vm221, 0.0, %v3764
    %v3766 = vrot.slane %v3757, 4
    %v3767 = vsel %vm221, 0.0, %v3766
    %v3768 = vrot.slane %v3761, 4
    %v3769 = vsel %vm221, 0.0, %v3768
    %v3770 = vpack.c.bf16 %v3745, %v3745
    %v3771 = vpack.c.bf16 %v3763, %v3763
    %v3772 = vpack.c.bf16 %v3749, %v3749
    %v3773 = vpack.c.bf16 %v3765, %v3765
    %v3774 = vpack.c.bf16 %v3757, %v3757
    %v3775 = vpack.c.bf16 %v3767, %v3767
    %v3776 = vpack.c.bf16 %v3761, %v3761
    %v3777 = vpack.c.bf16 %v3769, %v3769
    %v3778 = vrot.slane %v3608, 4
    %v3779 = vsel %vm452, %v3778, %v3604
    %v3781 = vunpack.c.l.s4 1983009808
    %v3782 = vunpack.c.0.s8 %v3781
    %v3783 = vperm.slane %v3779, %v3782
    %v3784 = vrot.slane %v3610, 4
    %v3785 = vsel %vm452, %v3784, %v3606
    %v3787 = vunpack.c.l.s4 1983009808
    %v3788 = vunpack.c.0.s8 %v3787
    %v3789 = vperm.slane %v3785, %v3788
    %v3790 = vrot.slane %v3789, 4
    %v3791 = vsel %vm452, %v3790, %v3783
    %v3793 = vunpack.c.l.s4 1934713408
    %v3794 = vunpack.c.0.s8 %v3793
    %v3795 = vperm.slane %v3791, %v3794
    %v3796 = vrot.slane %v3795, 4
    %v3797 = vsel %vm452, 0, %v3796
    %v3798 = vrot.slane %v3609, 4
    %v3799 = vsel %vm452, %v3798, %v3605
    %v3801 = vunpack.c.l.s4 1983009808
    %v3802 = vunpack.c.0.s8 %v3801
    %v3803 = vperm.slane %v3799, %v3802
    %v3804 = vrot.slane %v3611, 4
    %v3805 = vsel %vm452, %v3804, %v3607
    %v3807 = vunpack.c.l.s4 1983009808
    %v3808 = vunpack.c.0.s8 %v3807
    %v3809 = vperm.slane %v3805, %v3808
    %v3810 = vrot.slane %v3809, 4
    %v3811 = vsel %vm452, %v3810, %v3803
    %v3813 = vunpack.c.l.s4 1934713408
    %v3814 = vunpack.c.0.s8 %v3813
    %v3815 = vperm.slane %v3811, %v3814
    %v3816 = vrot.slane %v3815, 4
    %v3817 = vsel %vm452, 0, %v3816
    %v3820 = vpack.i.b16 %v3815, %v3795
    %v3821 = vshrl.u32 %v3795, 16
    %v3822 = vshrl.u32 %v3815, 16
    %v3823 = vpack.i.b16 %v3822, %v3821
    %v3826 = vpack.i.b16 %v3817, %v3797
    %v3827 = vshrl.u32 %v3797, 16
    %v3828 = vshrl.u32 %v3817, 16
    %v3829 = vpack.i.b16 %v3828, %v3827
    %3830 = vxpose.xlu0.c.b16.start [1/8] %v3687, 128
    %3831 = vxpose.xlu0.c.b16.cont [2/8] 0, 128
    %3832 = vxpose.xlu0.c.b16.cont [3/8] 0, 128
    %3833 = vxpose.xlu0.c.b16.cont [4/8] 0, 128
    %3834 = vxpose.xlu0.c.b16.cont [5/8] 0, 128
    %3835 = vxpose.xlu0.c.b16.cont [6/8] 0, 128
    %3836 = vxpose.xlu0.c.b16.cont [7/8] 0, 128
    %3837 = vxpose.xlu0.c.b16.end [8/8] 0, 128
    %v3838 = vpop.trf.xlu0
    %v3839 = vpop.trf.xlu0
    %v3840 = vpop.trf.xlu0
    %v3841 = vpop.trf.xlu0
    %v3842 = vpop.trf.xlu0
    %v3843 = vpop.trf.xlu0
    %v3844 = vpop.trf.xlu0
    %v3845 = vpop.trf.xlu0
    %3846 = vxpose.xlu0.c.b16.start [1/8] %v3688, 128
    %3847 = vxpose.xlu0.c.b16.cont [2/8] 0, 128
    %3848 = vxpose.xlu0.c.b16.cont [3/8] 0, 128
    %3849 = vxpose.xlu0.c.b16.cont [4/8] 0, 128
    %3850 = vxpose.xlu0.c.b16.cont [5/8] 0, 128
    %3851 = vxpose.xlu0.c.b16.cont [6/8] 0, 128
    %3852 = vxpose.xlu0.c.b16.cont [7/8] 0, 128
    %3853 = vxpose.xlu0.c.b16.end [8/8] 0, 128
    %v3854 = vpop.trf.xlu0
    %v3855 = vpop.trf.xlu0
    %v3856 = vpop.trf.xlu0
    %v3857 = vpop.trf.xlu0
    %v3858 = vpop.trf.xlu0
    %v3859 = vpop.trf.xlu0
    %v3860 = vpop.trf.xlu0
    %v3861 = vpop.trf.xlu0
    %3862 = vxpose.xlu0.c.b16.start [1/8] %v3689, 128
    %3863 = vxpose.xlu0.c.b16.cont [2/8] 0, 128
    %3864 = vxpose.xlu0.c.b16.cont [3/8] 0, 128
    %3865 = vxpose.xlu0.c.b16.cont [4/8] 0, 128
    %3866 = vxpose.xlu0.c.b16.cont [5/8] 0, 128
    %3867 = vxpose.xlu0.c.b16.cont [6/8] 0, 128
    %3868 = vxpose.xlu0.c.b16.cont [7/8] 0, 128
    %3869 = vxpose.xlu0.c.b16.end [8/8] 0, 128
    %v3870 = vpop.trf.xlu0
    %v3871 = vpop.trf.xlu0
    %v3872 = vpop.trf.xlu0
    %v3873 = vpop.trf.xlu0
    %v3874 = vpop.trf.xlu0
    %v3875 = vpop.trf.xlu0
    %v3876 = vpop.trf.xlu0
    %v3877 = vpop.trf.xlu0
    %3878 = vxpose.xlu0.c.b16.start [1/8] %v3690, 128
    %3879 = vxpose.xlu0.c.b16.cont [2/8] 0, 128
    %3880 = vxpose.xlu0.c.b16.cont [3/8] 0, 128
    %3881 = vxpose.xlu0.c.b16.cont [4/8] 0, 128
    %3882 = vxpose.xlu0.c.b16.cont [5/8] 0, 128
    %3883 = vxpose.xlu0.c.b16.cont [6/8] 0, 128
    %3884 = vxpose.xlu0.c.b16.cont [7/8] 0, 128
    %3885 = vxpose.xlu0.c.b16.end [8/8] 0, 128
    %v3886 = vpop.trf.xlu0
    %v3887 = vpop.trf.xlu0
    %v3888 = vpop.trf.xlu0
    %v3889 = vpop.trf.xlu0
    %v3890 = vpop.trf.xlu0
    %v3891 = vpop.trf.xlu0
    %v3892 = vpop.trf.xlu0
    %v3893 = vpop.trf.xlu0
    %3894 = vxpose.xlu0.c.b16.start [1/8] %v3691, 128
    %3895 = vxpose.xlu0.c.b16.cont [2/8] 0, 128
    %3896 = vxpose.xlu0.c.b16.cont [3/8] 0, 128
    %3897 = vxpose.xlu0.c.b16.cont [4/8] 0, 128
    %3898 = vxpose.xlu0.c.b16.cont [5/8] 0, 128
    %3899 = vxpose.xlu0.c.b16.cont [6/8] 0, 128
    %3900 = vxpose.xlu0.c.b16.cont [7/8] 0, 128
    %3901 = vxpose.xlu0.c.b16.end [8/8] 0, 128
    %v3902 = vpop.trf.xlu0
    %v3903 = vpop.trf.xlu0
    %v3904 = vpop.trf.xlu0
    %v3905 = vpop.trf.xlu0
    %v3906 = vpop.trf.xlu0
    %v3907 = vpop.trf.xlu0
    %v3908 = vpop.trf.xlu0
    %v3909 = vpop.trf.xlu0
    %3910 = vxpose.xlu0.c.b16.start [1/8] %v3692, 128
    %3911 = vxpose.xlu0.c.b16.cont [2/8] 0, 128
    %3912 = vxpose.xlu0.c.b16.cont [3/8] 0, 128
    %3913 = vxpose.xlu0.c.b16.cont [4/8] 0, 128
    %3914 = vxpose.xlu0.c.b16.cont [5/8] 0, 128
    %3915 = vxpose.xlu0.c.b16.cont [6/8] 0, 128
    %3916 = vxpose.xlu0.c.b16.cont [7/8] 0, 128
    %3917 = vxpose.xlu0.c.b16.end [8/8] 0, 128
    %v3918 = vpop.trf.xlu0
    %v3919 = vpop.trf.xlu0
    %v3920 = vpop.trf.xlu0
    %v3921 = vpop.trf.xlu0
    %v3922 = vpop.trf.xlu0
    %v3923 = vpop.trf.xlu0
    %v3924 = vpop.trf.xlu0
    %v3925 = vpop.trf.xlu0
    %3926 = vxpose.xlu0.c.b16.start [1/8] %v3693, 128
    %3927 = vxpose.xlu0.c.b16.cont [2/8] 0, 128
    %3928 = vxpose.xlu0.c.b16.cont [3/8] 0, 128
    %3929 = vxpose.xlu0.c.b16.cont [4/8] 0, 128
    %3930 = vxpose.xlu0.c.b16.cont [5/8] 0, 128
    %3931 = vxpose.xlu0.c.b16.cont [6/8] 0, 128
    %3932 = vxpose.xlu0.c.b16.cont [7/8] 0, 128
    %3933 = vxpose.xlu0.c.b16.end [8/8] 0, 128
    %v3934 = vpop.trf.xlu0
    %v3935 = vpop.trf.xlu0
    %v3936 = vpop.trf.xlu0
    %v3937 = vpop.trf.xlu0
    %v3938 = vpop.trf.xlu0
    %v3939 = vpop.trf.xlu0
    %v3940 = vpop.trf.xlu0
    %v3941 = vpop.trf.xlu0
    %3942 = vxpose.xlu0.c.b16.start [1/8] %v3694, 128
    %3943 = vxpose.xlu0.c.b16.cont [2/8] 0, 128
    %3944 = vxpose.xlu0.c.b16.cont [3/8] 0, 128
    %3945 = vxpose.xlu0.c.b16.cont [4/8] 0, 128
    %3946 = vxpose.xlu0.c.b16.cont [5/8] 0, 128
    %3947 = vxpose.xlu0.c.b16.cont [6/8] 0, 128
    %3948 = vxpose.xlu0.c.b16.cont [7/8] 0, 128
    %3949 = vxpose.xlu0.c.b16.end [8/8] 0, 128
    %v3950 = vpop.trf.xlu0
    %v3951 = vpop.trf.xlu0
    %v3952 = vpop.trf.xlu0
    %v3953 = vpop.trf.xlu0
    %v3954 = vpop.trf.xlu0
    %v3955 = vpop.trf.xlu0
    %v3956 = vpop.trf.xlu0
    %v3957 = vpop.trf.xlu0
    %v3958 = vrot.slane %v3902, 4
    %v3959 = vsel %vm452, %v3958, %v3838
    %v3961 = vunpack.c.l.s4 1983009808
    %v3962 = vunpack.c.0.s8 %v3961
    %v3963 = vperm.slane %v3959, %v3962
    %v3964 = vrot.slane %v3934, 4
    %v3965 = vsel %vm452, %v3964, %v3870
    %v3967 = vunpack.c.l.s4 1983009808
    %v3968 = vunpack.c.0.s8 %v3967
    %v3969 = vperm.slane %v3965, %v3968
    %v3970 = vrot.slane %v3969, 4
    %v3971 = vsel %vm452, %v3970, %v3963
    %v3972 = vrot.slane %v3963, 4
    %v3973 = vsel %vm452, %v3969, %v3972
    %v3975 = vunpack.c.l.s4 1934713408
    %v3976 = vunpack.c.0.s8 %v3975
    %v3977 = vperm.slane %v3971, %v3976
    %v3979 = vunpack.c.l.s4 1934713408
    %v3980 = vunpack.c.0.s8 %v3979
    %v3981 = vperm.slane %v3973, %v3980
    %v3982 = vrot.slane %v3977, 4
    %v3983 = vsel %vm452, 0, %v3982
    %v3984 = vrot.slane %v3981, 4
    %v3985 = vsel %vm452, 0, %v3984
    %v3986 = vrot.slane %v3918, 4
    %v3987 = vsel %vm452, %v3986, %v3854
    %v3989 = vunpack.c.l.s4 1983009808
    %v3990 = vunpack.c.0.s8 %v3989
    %v3991 = vperm.slane %v3987, %v3990
    %v3992 = vrot.slane %v3950, 4
    %v3993 = vsel %vm452, %v3992, %v3886
    %v3995 = vunpack.c.l.s4 1983009808
    %v3996 = vunpack.c.0.s8 %v3995
    %v3997 = vperm.slane %v3993, %v3996
    %v3998 = vrot.slane %v3997, 4
    %v3999 = vsel %vm452, %v3998, %v3991
    %v4000 = vrot.slane %v3991, 4
    %v4001 = vsel %vm452, %v3997, %v4000
    %v4003 = vunpack.c.l.s4 1934713408
    %v4004 = vunpack.c.0.s8 %v4003
    %v4005 = vperm.slane %v3999, %v4004
    %v4007 = vunpack.c.l.s4 1934713408
    %v4008 = vunpack.c.0.s8 %v4007
    %v4009 = vperm.slane %v4001, %v4008
    %v4010 = vrot.slane %v4005, 4
    %v4011 = vsel %vm452, 0, %v4010
    %v4012 = vrot.slane %v4009, 4
    %v4013 = vsel %vm452, 0, %v4012
    %v4016 = vpack.i.b16 %v4005, %v3977
    %v4018 = vshrl.u32 %v3977, 16
    %v4019 = vshrl.u32 %v4005, 16
    %v4020 = vpack.i.b16 %v4019, %v4018
    %v4024 = vpack.i.b16 %v4011, %v3983
    %v4026 = vshrl.u32 %v3983, 16
    %v4027 = vshrl.u32 %v4011, 16
    %v4028 = vpack.i.b16 %v4027, %v4026
    %v4032 = vpack.i.b16 %v4009, %v3981
    %v4034 = vshrl.u32 %v3981, 16
    %v4035 = vshrl.u32 %v4009, 16
    %v4036 = vpack.i.b16 %v4035, %v4034
    %v4040 = vpack.i.b16 %v4013, %v3985
    %v4042 = vshrl.u32 %v3985, 16
    %v4043 = vshrl.u32 %v4013, 16
    %v4044 = vpack.i.b16 %v4043, %v4042
    %4046 = vxpose.xlu0.c.b16.start [1/8] %v4016, 128
    %4047 = vxpose.xlu0.c.b16.cont [2/8] 0, 128
    %4048 = vxpose.xlu0.c.b16.cont [3/8] 0, 128
    %4049 = vxpose.xlu0.c.b16.cont [4/8] 0, 128
    %4050 = vxpose.xlu0.c.b16.cont [5/8] 0, 128
    %4051 = vxpose.xlu0.c.b16.cont [6/8] 0, 128
    %4052 = vxpose.xlu0.c.b16.cont [7/8] 0, 128
    %4053 = vxpose.xlu0.c.b16.end [8/8] 0, 128
    %v4054 = vpop.trf.xlu0
    %v4055 = vpop.trf.xlu0
    %v4056 = vpop.trf.xlu0
    %v4057 = vpop.trf.xlu0
    %v4058 = vpop.trf.xlu0
    %v4059 = vpop.trf.xlu0
    %v4060 = vpop.trf.xlu0
    %v4061 = vpop.trf.xlu0
    %4062 = vxpose.xlu0.c.b16.start [1/8] %v4020, 128
    %4063 = vxpose.xlu0.c.b16.cont [2/8] 0, 128
    %4064 = vxpose.xlu0.c.b16.cont [3/8] 0, 128
    %4065 = vxpose.xlu0.c.b16.cont [4/8] 0, 128
    %4066 = vxpose.xlu0.c.b16.cont [5/8] 0, 128
    %4067 = vxpose.xlu0.c.b16.cont [6/8] 0, 128
    %4068 = vxpose.xlu0.c.b16.cont [7/8] 0, 128
    %4069 = vxpose.xlu0.c.b16.end [8/8] 0, 128
    %v4070 = vpop.trf.xlu0
    %v4071 = vpop.trf.xlu0
    %v4072 = vpop.trf.xlu0
    %v4073 = vpop.trf.xlu0
    %v4074 = vpop.trf.xlu0
    %v4075 = vpop.trf.xlu0
    %v4076 = vpop.trf.xlu0
    %v4077 = vpop.trf.xlu0
    %4078 = vxpose.xlu0.c.b16.start [1/8] %v4024, 128
    %4079 = vxpose.xlu0.c.b16.cont [2/8] 0, 128
    %4080 = vxpose.xlu0.c.b16.cont [3/8] 0, 128
    %4081 = vxpose.xlu0.c.b16.cont [4/8] 0, 128
    %4082 = vxpose.xlu0.c.b16.cont [5/8] 0, 128
    %4083 = vxpose.xlu0.c.b16.cont [6/8] 0, 128
    %4084 = vxpose.xlu0.c.b16.cont [7/8] 0, 128
    %4085 = vxpose.xlu0.c.b16.end [8/8] 0, 128
    %v4086 = vpop.trf.xlu0
    %v4087 = vpop.trf.xlu0
    %v4088 = vpop.trf.xlu0
    %v4089 = vpop.trf.xlu0
    %v4090 = vpop.trf.xlu0
    %v4091 = vpop.trf.xlu0
    %v4092 = vpop.trf.xlu0
    %v4093 = vpop.trf.xlu0
    %4094 = vxpose.xlu0.c.b16.start [1/8] %v4028, 128
    %4095 = vxpose.xlu0.c.b16.cont [2/8] 0, 128
    %4096 = vxpose.xlu0.c.b16.cont [3/8] 0, 128
    %4097 = vxpose.xlu0.c.b16.cont [4/8] 0, 128
    %4098 = vxpose.xlu0.c.b16.cont [5/8] 0, 128
    %4099 = vxpose.xlu0.c.b16.cont [6/8] 0, 128
    %4100 = vxpose.xlu0.c.b16.cont [7/8] 0, 128
    %4101 = vxpose.xlu0.c.b16.end [8/8] 0, 128
    %v4102 = vpop.trf.xlu0
    %v4103 = vpop.trf.xlu0
    %v4104 = vpop.trf.xlu0
    %v4105 = vpop.trf.xlu0
    %v4106 = vpop.trf.xlu0
    %v4107 = vpop.trf.xlu0
    %v4108 = vpop.trf.xlu0
    %v4109 = vpop.trf.xlu0
    %4110 = vxpose.xlu0.c.b16.start [1/8] %v4032, 128
    %4111 = vxpose.xlu0.c.b16.cont [2/8] 0, 128
    %4112 = vxpose.xlu0.c.b16.cont [3/8] 0, 128
    %4113 = vxpose.xlu0.c.b16.cont [4/8] 0, 128
    %4114 = vxpose.xlu0.c.b16.cont [5/8] 0, 128
    %4115 = vxpose.xlu0.c.b16.cont [6/8] 0, 128
    %4116 = vxpose.xlu0.c.b16.cont [7/8] 0, 128
    %4117 = vxpose.xlu0.c.b16.end [8/8] 0, 128
    %v4118 = vpop.trf.xlu0
    %v4119 = vpop.trf.xlu0
    %v4120 = vpop.trf.xlu0
    %v4121 = vpop.trf.xlu0
    %v4122 = vpop.trf.xlu0
    %v4123 = vpop.trf.xlu0
    %v4124 = vpop.trf.xlu0
    %v4125 = vpop.trf.xlu0
    %4126 = vxpose.xlu0.c.b16.start [1/8] %v4036, 128
    %4127 = vxpose.xlu0.c.b16.cont [2/8] 0, 128
    %4128 = vxpose.xlu0.c.b16.cont [3/8] 0, 128
    %4129 = vxpose.xlu0.c.b16.cont [4/8] 0, 128
    %4130 = vxpose.xlu0.c.b16.cont [5/8] 0, 128
    %4131 = vxpose.xlu0.c.b16.cont [6/8] 0, 128
    %4132 = vxpose.xlu0.c.b16.cont [7/8] 0, 128
    %4133 = vxpose.xlu0.c.b16.end [8/8] 0, 128
    %v4134 = vpop.trf.xlu0
    %v4135 = vpop.trf.xlu0
    %v4136 = vpop.trf.xlu0
    %v4137 = vpop.trf.xlu0
    %v4138 = vpop.trf.xlu0
    %v4139 = vpop.trf.xlu0
    %v4140 = vpop.trf.xlu0
    %v4141 = vpop.trf.xlu0
    %4142 = vxpose.xlu0.c.b16.start [1/8] %v4040, 128
    %4143 = vxpose.xlu0.c.b16.cont [2/8] 0, 128
    %4144 = vxpose.xlu0.c.b16.cont [3/8] 0, 128
    %4145 = vxpose.xlu0.c.b16.cont [4/8] 0, 128
    %4146 = vxpose.xlu0.c.b16.cont [5/8] 0, 128
    %4147 = vxpose.xlu0.c.b16.cont [6/8] 0, 128
    %4148 = vxpose.xlu0.c.b16.cont [7/8] 0, 128
    %4149 = vxpose.xlu0.c.b16.end [8/8] 0, 128
    %v4150 = vpop.trf.xlu0
    %v4151 = vpop.trf.xlu0
    %v4152 = vpop.trf.xlu0
    %v4153 = vpop.trf.xlu0
    %v4154 = vpop.trf.xlu0
    %v4155 = vpop.trf.xlu0
    %v4156 = vpop.trf.xlu0
    %v4157 = vpop.trf.xlu0
    %4158 = vxpose.xlu0.c.b16.start [1/8] %v4044, 128
    %4159 = vxpose.xlu0.c.b16.cont [2/8] 0, 128
    %4160 = vxpose.xlu0.c.b16.cont [3/8] 0, 128
    %4161 = vxpose.xlu0.c.b16.cont [4/8] 0, 128
    %4162 = vxpose.xlu0.c.b16.cont [5/8] 0, 128
    %4163 = vxpose.xlu0.c.b16.cont [6/8] 0, 128
    %4164 = vxpose.xlu0.c.b16.cont [7/8] 0, 128
    %4165 = vxpose.xlu0.c.b16.end [8/8] 0, 128
    %v4166 = vpop.trf.xlu0
    %v4167 = vpop.trf.xlu0
    %v4168 = vpop.trf.xlu0
    %v4169 = vpop.trf.xlu0
    %v4170 = vpop.trf.xlu0
    %v4171 = vpop.trf.xlu0
    %v4172 = vpop.trf.xlu0
    %v4173 = vpop.trf.xlu0
    %v4174 = vrot.slane %v4118, 4
    %v4175 = vsel %vm452, %v4174, %v4054
    %v4177 = vunpack.c.l.s4 1983009808
    %v4178 = vunpack.c.0.s8 %v4177
    %v4179 = vperm.slane %v4175, %v4178
    %v4180 = vrot.slane %v4150, 4
    %v4181 = vsel %vm452, %v4180, %v4086
    %v4183 = vunpack.c.l.s4 1983009808
    %v4184 = vunpack.c.0.s8 %v4183
    %v4185 = vperm.slane %v4181, %v4184
    %v4186 = vrot.slane %v4185, 4
    %v4187 = vsel %vm452, %v4186, %v4179
    %v4189 = vunpack.c.l.s4 1934713408
    %v4190 = vunpack.c.0.s8 %v4189
    %v4191 = vperm.slane %v4187, %v4190
    %v4192 = vrot.slane %v4191, 4
    %v4193 = vsel %vm452, 0, %v4192
    %v4194 = vrot.slane %v4134, 4
    %v4195 = vsel %vm452, %v4194, %v4070
    %v4197 = vunpack.c.l.s4 1983009808
    %v4198 = vunpack.c.0.s8 %v4197
    %v4199 = vperm.slane %v4195, %v4198
    %v4200 = vrot.slane %v4166, 4
    %v4201 = vsel %vm452, %v4200, %v4102
    %v4203 = vunpack.c.l.s4 1983009808
    %v4204 = vunpack.c.0.s8 %v4203
    %v4205 = vperm.slane %v4201, %v4204
    %v4206 = vrot.slane %v4205, 4
    %v4207 = vsel %vm452, %v4206, %v4199
    %v4209 = vunpack.c.l.s4 1934713408
    %v4210 = vunpack.c.0.s8 %v4209
    %v4211 = vperm.slane %v4207, %v4210
    %v4212 = vrot.slane %v4211, 4
    %v4213 = vsel %vm452, 0, %v4212
    %v4216 = vpack.i.b16 %v4211, %v4191
    %v4217 = vshrl.u32 %v4191, 16
    %v4218 = vshrl.u32 %v4211, 16
    %v4219 = vpack.i.b16 %v4218, %v4217
    %v4222 = vpack.i.b16 %v4213, %v4193
    %v4223 = vshrl.u32 %v4193, 16
    %v4224 = vshrl.u32 %v4213, 16
    %v4225 = vpack.i.b16 %v4224, %v4223
    %v4227 = vsel %vm900, %v3820, 0
    %v4230 = vsel %vm904, %v4216, 0
    %4232 = vmatpush.bf16.msra.mxu0 0
    %4233 = vmatpush.bf16.msra.mxu0 0
    %4234 = vmatpush.bf16.msra.mxu0 0
    %4235 = vmatpush.bf16.msra.mxu0 0
    %4236 = vmatpush.bf16.msra.mxu0 0
    %4237 = vmatpush.bf16.msra.mxu0 0
    %4238 = vmatpush.bf16.msra.mxu0 0
    %4239 = vmatpush.bf16.msra.mxu0 %v4230
    %4240 = vmatmul.bf16.gmra.mxu0 %v4227
    %v4241 = vpop.f32.mrf.mxu0
    %v4242 = vadd.f32 0.0, %v4241
    %v4243 = vpop.f32.mrf.mxu0
    %4244 = vdwg.mxu0
    %v4246 = vsel %vm900, %v3823, 0
    %v4249 = vsel %vm904, %v4219, 0
    %4251 = vmatpush.bf16.msra.mxu0 0
    %4252 = vmatpush.bf16.msra.mxu0 0
    %4253 = vmatpush.bf16.msra.mxu0 0
    %4254 = vmatpush.bf16.msra.mxu0 0
    %4255 = vmatpush.bf16.msra.mxu0 0
    %4256 = vmatpush.bf16.msra.mxu0 0
    %4257 = vmatpush.bf16.msra.mxu0 0
    %4258 = vmatpush.bf16.msra.mxu0 %v4249
    %4259 = vmatmul.bf16.gmra.mxu0 %v4246
    %v4260 = vpop.f32.mrf.mxu0
    %v4261 = vadd.f32 0.0, %v4260
    %v4262 = vpop.f32.mrf.mxu0
    %4263 = vdwg.mxu0
    %v4265 = vsel %vm900, %v3826, 0
    %v4268 = vsel %vm904, %v4222, 0
    %4270 = vmatpush.bf16.msra.mxu0 0
    %4271 = vmatpush.bf16.msra.mxu0 0
    %4272 = vmatpush.bf16.msra.mxu0 0
    %4273 = vmatpush.bf16.msra.mxu0 0
    %4274 = vmatpush.bf16.msra.mxu0 0
    %4275 = vmatpush.bf16.msra.mxu0 0
    %4276 = vmatpush.bf16.msra.mxu0 0
    %4277 = vmatpush.bf16.msra.mxu0 %v4268
    %4278 = vmatmul.bf16.gmra.mxu0 %v4265
    %v4279 = vpop.f32.mrf.mxu0
    %v4280 = vadd.f32 0.0, %v4279
    %v4281 = vpop.f32.mrf.mxu0
    %4282 = vdwg.mxu0
    %v4284 = vsel %vm900, %v3829, 0
    %v4287 = vsel %vm904, %v4225, 0
    %4289 = vmatpush.bf16.msra.mxu0 0
    %4290 = vmatpush.bf16.msra.mxu0 0
    %4291 = vmatpush.bf16.msra.mxu0 0
    %4292 = vmatpush.bf16.msra.mxu0 0
    %4293 = vmatpush.bf16.msra.mxu0 0
    %4294 = vmatpush.bf16.msra.mxu0 0
    %4295 = vmatpush.bf16.msra.mxu0 0
    %4296 = vmatpush.bf16.msra.mxu0 %v4287
    %4297 = vmatmul.bf16.gmra.mxu0 %v4284
    %v4298 = vpop.f32.mrf.mxu0
    %v4299 = vadd.f32 0.0, %v4298
    %v4300 = vpop.f32.mrf.mxu0
    %4301 = vdwg.mxu0
    %v4302 = vsel %vm900, %v4242, -inf
    %4303 = vmax.xlane.f32.xlu0 %v4302
    %v4304 = vpop.xlane.xlu0 %4303
    %v4305 = vsel %vm900, %v4261, -inf
    %4306 = vmax.xlane.f32.xlu0 %v4305
    %v4307 = vpop.xlane.xlu0 %4306
    %v4308 = vsel %vm900, %v4280, -inf
    %4309 = vmax.xlane.f32.xlu0 %v4308
    %v4310 = vpop.xlane.xlu0 %4309
    %v4311 = vsel %vm900, %v4299, -inf
    %4312 = vmax.xlane.f32.xlu0 %v4311
    %v4313 = vpop.xlane.xlu0 %4312
    %v4314 = vsub.f32 %v4242, %v4304
    %v4315 = vsub.f32 %v4261, %v4307
    %v4316 = vsub.f32 %v4280, %v4310
    %v4317 = vsub.f32 %v4299, %v4313
    %v4318 = vmul.f32 %v4314, 1.442695
    %v4319 = vpow.pop %v4318
    %v4320 = vmul.f32 %v4315, 1.442695
    %v4321 = vpow.pop %v4320
    %v4322 = vmul.f32 %v4316, 1.442695
    %v4323 = vpow.pop %v4322
    %v4324 = vmul.f32 %v4317, 1.442695
    %v4325 = vpow.pop %v4324
    %v4326 = vsel %vm900, %v4319, 0.0
    %4327 = vadd.xlane.f32.xlu0 %v4326
    %v4328 = vpop.xlane.xlu0 %4327
    %v4329 = vsel %vm900, %v4321, 0.0
    %4330 = vadd.xlane.f32.xlu0 %v4329
    %v4331 = vpop.xlane.xlu0 %4330
    %v4332 = vsel %vm900, %v4323, 0.0
    %4333 = vadd.xlane.f32.xlu0 %v4332
    %v4334 = vpop.xlane.xlu0 %4333
    %v4335 = vsel %vm900, %v4325, 0.0
    %4336 = vadd.xlane.f32.xlu0 %v4335
    %v4337 = vpop.xlane.xlu0 %4336
    %v4338 = vrcp.pop %v4328
    %v4339 = vrcp.pop %v4331
    %v4340 = vrcp.pop %v4334
    %v4341 = vrcp.pop %v4337
    %v4342 = vmul.f32 %v4319, %v4338
    %v4343 = vmul.f32 %v4321, %v4339
    %v4344 = vmul.f32 %v4323, %v4340
    %v4345 = vmul.f32 %v4325, %v4341
    %v4346 = vpack.c.bf16 %v4342, %v4342
    %v4347 = vpack.c.bf16 %v4343, %v4343
    %v4348 = vpack.c.bf16 %v4344, %v4344
    %v4349 = vpack.c.bf16 %v4345, %v4345
    %4350 = vxpose.xlu0.c.b16.start [1/8] %v3770, 128
    %4351 = vxpose.xlu0.c.b16.cont [2/8] 0, 128
    %4352 = vxpose.xlu0.c.b16.cont [3/8] 0, 128
    %4353 = vxpose.xlu0.c.b16.cont [4/8] 0, 128
    %4354 = vxpose.xlu0.c.b16.cont [5/8] 0, 128
    %4355 = vxpose.xlu0.c.b16.cont [6/8] 0, 128
    %4356 = vxpose.xlu0.c.b16.cont [7/8] 0, 128
    %4357 = vxpose.xlu0.c.b16.end [8/8] 0, 128
    %v4358 = vpop.trf.xlu0
    %v4359 = vpop.trf.xlu0
    %v4360 = vpop.trf.xlu0
    %v4361 = vpop.trf.xlu0
    %v4362 = vpop.trf.xlu0
    %v4363 = vpop.trf.xlu0
    %v4364 = vpop.trf.xlu0
    %v4365 = vpop.trf.xlu0
    %4366 = vxpose.xlu0.c.b16.start [1/8] %v3771, 128
    %4367 = vxpose.xlu0.c.b16.cont [2/8] 0, 128
    %4368 = vxpose.xlu0.c.b16.cont [3/8] 0, 128
    %4369 = vxpose.xlu0.c.b16.cont [4/8] 0, 128
    %4370 = vxpose.xlu0.c.b16.cont [5/8] 0, 128
    %4371 = vxpose.xlu0.c.b16.cont [6/8] 0, 128
    %4372 = vxpose.xlu0.c.b16.cont [7/8] 0, 128
    %4373 = vxpose.xlu0.c.b16.end [8/8] 0, 128
    %v4374 = vpop.trf.xlu0
    %v4375 = vpop.trf.xlu0
    %v4376 = vpop.trf.xlu0
    %v4377 = vpop.trf.xlu0
    %v4378 = vpop.trf.xlu0
    %v4379 = vpop.trf.xlu0
    %v4380 = vpop.trf.xlu0
    %v4381 = vpop.trf.xlu0
    %4382 = vxpose.xlu0.c.b16.start [1/8] %v3772, 128
    %4383 = vxpose.xlu0.c.b16.cont [2/8] 0, 128
    %4384 = vxpose.xlu0.c.b16.cont [3/8] 0, 128
    %4385 = vxpose.xlu0.c.b16.cont [4/8] 0, 128
    %4386 = vxpose.xlu0.c.b16.cont [5/8] 0, 128
    %4387 = vxpose.xlu0.c.b16.cont [6/8] 0, 128
    %4388 = vxpose.xlu0.c.b16.cont [7/8] 0, 128
    %4389 = vxpose.xlu0.c.b16.end [8/8] 0, 128
    %v4390 = vpop.trf.xlu0
    %v4391 = vpop.trf.xlu0
    %v4392 = vpop.trf.xlu0
    %v4393 = vpop.trf.xlu0
    %v4394 = vpop.trf.xlu0
    %v4395 = vpop.trf.xlu0
    %v4396 = vpop.trf.xlu0
    %v4397 = vpop.trf.xlu0
    %4398 = vxpose.xlu0.c.b16.start [1/8] %v3773, 128
    %4399 = vxpose.xlu0.c.b16.cont [2/8] 0, 128
    %4400 = vxpose.xlu0.c.b16.cont [3/8] 0, 128
    %4401 = vxpose.xlu0.c.b16.cont [4/8] 0, 128
    %4402 = vxpose.xlu0.c.b16.cont [5/8] 0, 128
    %4403 = vxpose.xlu0.c.b16.cont [6/8] 0, 128
    %4404 = vxpose.xlu0.c.b16.cont [7/8] 0, 128
    %4405 = vxpose.xlu0.c.b16.end [8/8] 0, 128
    %v4406 = vpop.trf.xlu0
    %v4407 = vpop.trf.xlu0
    %v4408 = vpop.trf.xlu0
    %v4409 = vpop.trf.xlu0
    %v4410 = vpop.trf.xlu0
    %v4411 = vpop.trf.xlu0
    %v4412 = vpop.trf.xlu0
    %v4413 = vpop.trf.xlu0
    %4414 = vxpose.xlu0.c.b16.start [1/8] %v3774, 128
    %4415 = vxpose.xlu0.c.b16.cont [2/8] 0, 128
    %4416 = vxpose.xlu0.c.b16.cont [3/8] 0, 128
    %4417 = vxpose.xlu0.c.b16.cont [4/8] 0, 128
    %4418 = vxpose.xlu0.c.b16.cont [5/8] 0, 128
    %4419 = vxpose.xlu0.c.b16.cont [6/8] 0, 128
    %4420 = vxpose.xlu0.c.b16.cont [7/8] 0, 128
    %4421 = vxpose.xlu0.c.b16.end [8/8] 0, 128
    %v4422 = vpop.trf.xlu0
    %v4423 = vpop.trf.xlu0
    %v4424 = vpop.trf.xlu0
    %v4425 = vpop.trf.xlu0
    %v4426 = vpop.trf.xlu0
    %v4427 = vpop.trf.xlu0
    %v4428 = vpop.trf.xlu0
    %v4429 = vpop.trf.xlu0
    %4430 = vxpose.xlu0.c.b16.start [1/8] %v3775, 128
    %4431 = vxpose.xlu0.c.b16.cont [2/8] 0, 128
    %4432 = vxpose.xlu0.c.b16.cont [3/8] 0, 128
    %4433 = vxpose.xlu0.c.b16.cont [4/8] 0, 128
    %4434 = vxpose.xlu0.c.b16.cont [5/8] 0, 128
    %4435 = vxpose.xlu0.c.b16.cont [6/8] 0, 128
    %4436 = vxpose.xlu0.c.b16.cont [7/8] 0, 128
    %4437 = vxpose.xlu0.c.b16.end [8/8] 0, 128
    %v4438 = vpop.trf.xlu0
    %v4439 = vpop.trf.xlu0
    %v4440 = vpop.trf.xlu0
    %v4441 = vpop.trf.xlu0
    %v4442 = vpop.trf.xlu0
    %v4443 = vpop.trf.xlu0
    %v4444 = vpop.trf.xlu0
    %v4445 = vpop.trf.xlu0
    %4446 = vxpose.xlu0.c.b16.start [1/8] %v3776, 128
    %4447 = vxpose.xlu0.c.b16.cont [2/8] 0, 128
    %4448 = vxpose.xlu0.c.b16.cont [3/8] 0, 128
    %4449 = vxpose.xlu0.c.b16.cont [4/8] 0, 128
    %4450 = vxpose.xlu0.c.b16.cont [5/8] 0, 128
    %4451 = vxpose.xlu0.c.b16.cont [6/8] 0, 128
    %4452 = vxpose.xlu0.c.b16.cont [7/8] 0, 128
    %4453 = vxpose.xlu0.c.b16.end [8/8] 0, 128
    %v4454 = vpop.trf.xlu0
    %v4455 = vpop.trf.xlu0
    %v4456 = vpop.trf.xlu0
    %v4457 = vpop.trf.xlu0
    %v4458 = vpop.trf.xlu0
    %v4459 = vpop.trf.xlu0
    %v4460 = vpop.trf.xlu0
    %v4461 = vpop.trf.xlu0
    %4462 = vxpose.xlu0.c.b16.start [1/8] %v3777, 128
    %4463 = vxpose.xlu0.c.b16.cont [2/8] 0, 128
    %4464 = vxpose.xlu0.c.b16.cont [3/8] 0, 128
    %4465 = vxpose.xlu0.c.b16.cont [4/8] 0, 128
    %4466 = vxpose.xlu0.c.b16.cont [5/8] 0, 128
    %4467 = vxpose.xlu0.c.b16.cont [6/8] 0, 128
    %4468 = vxpose.xlu0.c.b16.cont [7/8] 0, 128
    %4469 = vxpose.xlu0.c.b16.end [8/8] 0, 128
    %v4470 = vpop.trf.xlu0
    %v4471 = vpop.trf.xlu0
    %v4472 = vpop.trf.xlu0
    %v4473 = vpop.trf.xlu0
    %v4474 = vpop.trf.xlu0
    %v4475 = vpop.trf.xlu0
    %v4476 = vpop.trf.xlu0
    %v4477 = vpop.trf.xlu0
    %v4478 = vrot.slane %v4422, 4
    %v4479 = vsel %vm452, %v4478, %v4358
    %v4481 = vunpack.c.l.s4 1983009808
    %v4482 = vunpack.c.0.s8 %v4481
    %v4483 = vperm.slane %v4479, %v4482
    %v4484 = vrot.slane %v4454, 4
    %v4485 = vsel %vm452, %v4484, %v4390
    %v4487 = vunpack.c.l.s4 1983009808
    %v4488 = vunpack.c.0.s8 %v4487
    %v4489 = vperm.slane %v4485, %v4488
    %v4490 = vrot.slane %v4489, 4
    %v4491 = vsel %vm452, %v4490, %v4483
    %v4492 = vrot.slane %v4483, 4
    %v4493 = vsel %vm452, %v4489, %v4492
    %v4495 = vunpack.c.l.s4 1934713408
    %v4496 = vunpack.c.0.s8 %v4495
    %v4497 = vperm.slane %v4491, %v4496
    %v4499 = vunpack.c.l.s4 1934713408
    %v4500 = vunpack.c.0.s8 %v4499
    %v4501 = vperm.slane %v4493, %v4500
    %v4502 = vrot.slane %v4497, 4
    %v4503 = vsel %vm452, 0, %v4502
    %v4504 = vrot.slane %v4501, 4
    %v4505 = vsel %vm452, 0, %v4504
    %v4506 = vrot.slane %v4438, 4
    %v4507 = vsel %vm452, %v4506, %v4374
    %v4509 = vunpack.c.l.s4 1983009808
    %v4510 = vunpack.c.0.s8 %v4509
    %v4511 = vperm.slane %v4507, %v4510
    %v4512 = vrot.slane %v4470, 4
    %v4513 = vsel %vm452, %v4512, %v4406
    %v4515 = vunpack.c.l.s4 1983009808
    %v4516 = vunpack.c.0.s8 %v4515
    %v4517 = vperm.slane %v4513, %v4516
    %v4518 = vrot.slane %v4517, 4
    %v4519 = vsel %vm452, %v4518, %v4511
    %v4520 = vrot.slane %v4511, 4
    %v4521 = vsel %vm452, %v4517, %v4520
    %v4523 = vunpack.c.l.s4 1934713408
    %v4524 = vunpack.c.0.s8 %v4523
    %v4525 = vperm.slane %v4519, %v4524
    %v4527 = vunpack.c.l.s4 1934713408
    %v4528 = vunpack.c.0.s8 %v4527
    %v4529 = vperm.slane %v4521, %v4528
    %v4530 = vrot.slane %v4525, 4
    %v4531 = vsel %vm452, 0, %v4530
    %v4532 = vrot.slane %v4529, 4
    %v4533 = vsel %vm452, 0, %v4532
    %v4536 = vpack.i.b16 %v4525, %v4497
    %v4538 = vshrl.u32 %v4497, 16
    %v4539 = vshrl.u32 %v4525, 16
    %v4540 = vpack.i.b16 %v4539, %v4538
    %v4544 = vpack.i.b16 %v4531, %v4503
    %v4546 = vshrl.u32 %v4503, 16
    %v4547 = vshrl.u32 %v4531, 16
    %v4548 = vpack.i.b16 %v4547, %v4546
    %v4552 = vpack.i.b16 %v4529, %v4501
    %v4554 = vshrl.u32 %v4501, 16
    %v4555 = vshrl.u32 %v4529, 16
    %v4556 = vpack.i.b16 %v4555, %v4554
    %v4560 = vpack.i.b16 %v4533, %v4505
    %v4562 = vshrl.u32 %v4505, 16
    %v4563 = vshrl.u32 %v4533, 16
    %v4564 = vpack.i.b16 %v4563, %v4562
    %4566 = vxpose.xlu0.c.b16.start [1/8] %v4536, 128
    %4567 = vxpose.xlu0.c.b16.cont [2/8] 0, 128
    %4568 = vxpose.xlu0.c.b16.cont [3/8] 0, 128
    %4569 = vxpose.xlu0.c.b16.cont [4/8] 0, 128
    %4570 = vxpose.xlu0.c.b16.cont [5/8] 0, 128
    %4571 = vxpose.xlu0.c.b16.cont [6/8] 0, 128
    %4572 = vxpose.xlu0.c.b16.cont [7/8] 0, 128
    %4573 = vxpose.xlu0.c.b16.end [8/8] 0, 128
    %v4574 = vpop.trf.xlu0
    %v4575 = vpop.trf.xlu0
    %v4576 = vpop.trf.xlu0
    %v4577 = vpop.trf.xlu0
    %v4578 = vpop.trf.xlu0
    %v4579 = vpop.trf.xlu0
    %v4580 = vpop.trf.xlu0
    %v4581 = vpop.trf.xlu0
    %4582 = vxpose.xlu0.c.b16.start [1/8] %v4540, 128
    %4583 = vxpose.xlu0.c.b16.cont [2/8] 0, 128
    %4584 = vxpose.xlu0.c.b16.cont [3/8] 0, 128
    %4585 = vxpose.xlu0.c.b16.cont [4/8] 0, 128
    %4586 = vxpose.xlu0.c.b16.cont [5/8] 0, 128
    %4587 = vxpose.xlu0.c.b16.cont [6/8] 0, 128
    %4588 = vxpose.xlu0.c.b16.cont [7/8] 0, 128
    %4589 = vxpose.xlu0.c.b16.end [8/8] 0, 128
    %v4590 = vpop.trf.xlu0
    %v4591 = vpop.trf.xlu0
    %v4592 = vpop.trf.xlu0
    %v4593 = vpop.trf.xlu0
    %v4594 = vpop.trf.xlu0
    %v4595 = vpop.trf.xlu0
    %v4596 = vpop.trf.xlu0
    %v4597 = vpop.trf.xlu0
    %4598 = vxpose.xlu0.c.b16.start [1/8] %v4544, 128
    %4599 = vxpose.xlu0.c.b16.cont [2/8] 0, 128
    %4600 = vxpose.xlu0.c.b16.cont [3/8] 0, 128
    %4601 = vxpose.xlu0.c.b16.cont [4/8] 0, 128
    %4602 = vxpose.xlu0.c.b16.cont [5/8] 0, 128
    %4603 = vxpose.xlu0.c.b16.cont [6/8] 0, 128
    %4604 = vxpose.xlu0.c.b16.cont [7/8] 0, 128
    %4605 = vxpose.xlu0.c.b16.end [8/8] 0, 128
    %v4606 = vpop.trf.xlu0
    %v4607 = vpop.trf.xlu0
    %v4608 = vpop.trf.xlu0
    %v4609 = vpop.trf.xlu0
    %v4610 = vpop.trf.xlu0
    %v4611 = vpop.trf.xlu0
    %v4612 = vpop.trf.xlu0
    %v4613 = vpop.trf.xlu0
    %4614 = vxpose.xlu0.c.b16.start [1/8] %v4548, 128
    %4615 = vxpose.xlu0.c.b16.cont [2/8] 0, 128
    %4616 = vxpose.xlu0.c.b16.cont [3/8] 0, 128
    %4617 = vxpose.xlu0.c.b16.cont [4/8] 0, 128
    %4618 = vxpose.xlu0.c.b16.cont [5/8] 0, 128
    %4619 = vxpose.xlu0.c.b16.cont [6/8] 0, 128
    %4620 = vxpose.xlu0.c.b16.cont [7/8] 0, 128
    %4621 = vxpose.xlu0.c.b16.end [8/8] 0, 128
    %v4622 = vpop.trf.xlu0
    %v4623 = vpop.trf.xlu0
    %v4624 = vpop.trf.xlu0
    %v4625 = vpop.trf.xlu0
    %v4626 = vpop.trf.xlu0
    %v4627 = vpop.trf.xlu0
    %v4628 = vpop.trf.xlu0
    %v4629 = vpop.trf.xlu0
    %4630 = vxpose.xlu0.c.b16.start [1/8] %v4552, 128
    %4631 = vxpose.xlu0.c.b16.cont [2/8] 0, 128
    %4632 = vxpose.xlu0.c.b16.cont [3/8] 0, 128
    %4633 = vxpose.xlu0.c.b16.cont [4/8] 0, 128
    %4634 = vxpose.xlu0.c.b16.cont [5/8] 0, 128
    %4635 = vxpose.xlu0.c.b16.cont [6/8] 0, 128
    %4636 = vxpose.xlu0.c.b16.cont [7/8] 0, 128
    %4637 = vxpose.xlu0.c.b16.end [8/8] 0, 128
    %v4638 = vpop.trf.xlu0
    %v4639 = vpop.trf.xlu0
    %v4640 = vpop.trf.xlu0
    %v4641 = vpop.trf.xlu0
    %v4642 = vpop.trf.xlu0
    %v4643 = vpop.trf.xlu0
    %v4644 = vpop.trf.xlu0
    %v4645 = vpop.trf.xlu0
    %4646 = vxpose.xlu0.c.b16.start [1/8] %v4556, 128
    %4647 = vxpose.xlu0.c.b16.cont [2/8] 0, 128
    %4648 = vxpose.xlu0.c.b16.cont [3/8] 0, 128
    %4649 = vxpose.xlu0.c.b16.cont [4/8] 0, 128
    %4650 = vxpose.xlu0.c.b16.cont [5/8] 0, 128
    %4651 = vxpose.xlu0.c.b16.cont [6/8] 0, 128
    %4652 = vxpose.xlu0.c.b16.cont [7/8] 0, 128
    %4653 = vxpose.xlu0.c.b16.end [8/8] 0, 128
    %v4654 = vpop.trf.xlu0
    %v4655 = vpop.trf.xlu0
    %v4656 = vpop.trf.xlu0
    %v4657 = vpop.trf.xlu0
    %v4658 = vpop.trf.xlu0
    %v4659 = vpop.trf.xlu0
    %v4660 = vpop.trf.xlu0
    %v4661 = vpop.trf.xlu0
    %4662 = vxpose.xlu0.c.b16.start [1/8] %v4560, 128
    %4663 = vxpose.xlu0.c.b16.cont [2/8] 0, 128
    %4664 = vxpose.xlu0.c.b16.cont [3/8] 0, 128
    %4665 = vxpose.xlu0.c.b16.cont [4/8] 0, 128
    %4666 = vxpose.xlu0.c.b16.cont [5/8] 0, 128
    %4667 = vxpose.xlu0.c.b16.cont [6/8] 0, 128
    %4668 = vxpose.xlu0.c.b16.cont [7/8] 0, 128
    %4669 = vxpose.xlu0.c.b16.end [8/8] 0, 128
    %v4670 = vpop.trf.xlu0
    %v4671 = vpop.trf.xlu0
    %v4672 = vpop.trf.xlu0
    %v4673 = vpop.trf.xlu0
    %v4674 = vpop.trf.xlu0
    %v4675 = vpop.trf.xlu0
    %v4676 = vpop.trf.xlu0
    %v4677 = vpop.trf.xlu0
    %4678 = vxpose.xlu0.c.b16.start [1/8] %v4564, 128
    %4679 = vxpose.xlu0.c.b16.cont [2/8] 0, 128
    %4680 = vxpose.xlu0.c.b16.cont [3/8] 0, 128
    %4681 = vxpose.xlu0.c.b16.cont [4/8] 0, 128
    %4682 = vxpose.xlu0.c.b16.cont [5/8] 0, 128
    %4683 = vxpose.xlu0.c.b16.cont [6/8] 0, 128
    %4684 = vxpose.xlu0.c.b16.cont [7/8] 0, 128
    %4685 = vxpose.xlu0.c.b16.end [8/8] 0, 128
    %v4686 = vpop.trf.xlu0
    %v4687 = vpop.trf.xlu0
    %v4688 = vpop.trf.xlu0
    %v4689 = vpop.trf.xlu0
    %v4690 = vpop.trf.xlu0
    %v4691 = vpop.trf.xlu0
    %v4692 = vpop.trf.xlu0
    %v4693 = vpop.trf.xlu0
    %v4694 = vrot.slane %v4638, 4
    %v4695 = vsel %vm452, %v4694, %v4574
    %v4697 = vunpack.c.l.s4 1983009808
    %v4698 = vunpack.c.0.s8 %v4697
    %v4699 = vperm.slane %v4695, %v4698
    %v4700 = vrot.slane %v4670, 4
    %v4701 = vsel %vm452, %v4700, %v4606
    %v4703 = vunpack.c.l.s4 1983009808
    %v4704 = vunpack.c.0.s8 %v4703
    %v4705 = vperm.slane %v4701, %v4704
    %v4706 = vrot.slane %v4705, 4
    %v4707 = vsel %vm452, %v4706, %v4699
    %v4709 = vunpack.c.l.s4 1934713408
    %v4710 = vunpack.c.0.s8 %v4709
    %v4711 = vperm.slane %v4707, %v4710
    %v4712 = vrot.slane %v4711, 4
    %v4713 = vsel %vm452, 0, %v4712
    %v4714 = vrot.slane %v4654, 4
    %v4715 = vsel %vm452, %v4714, %v4590
    %v4717 = vunpack.c.l.s4 1983009808
    %v4718 = vunpack.c.0.s8 %v4717
    %v4719 = vperm.slane %v4715, %v4718
    %v4720 = vrot.slane %v4686, 4
    %v4721 = vsel %vm452, %v4720, %v4622
    %v4723 = vunpack.c.l.s4 1983009808
    %v4724 = vunpack.c.0.s8 %v4723
    %v4725 = vperm.slane %v4721, %v4724
    %v4726 = vrot.slane %v4725, 4
    %v4727 = vsel %vm452, %v4726, %v4719
    %v4729 = vunpack.c.l.s4 1934713408
    %v4730 = vunpack.c.0.s8 %v4729
    %v4731 = vperm.slane %v4727, %v4730
    %v4732 = vrot.slane %v4731, 4
    %v4733 = vsel %vm452, 0, %v4732
    %v4736 = vpack.i.b16 %v4731, %v4711
    %v4737 = vshrl.u32 %v4711, 16
    %v4738 = vshrl.u32 %v4731, 16
    %v4739 = vpack.i.b16 %v4738, %v4737
    %v4742 = vpack.i.b16 %v4733, %v4713
    %v4743 = vshrl.u32 %v4713, 16
    %v4744 = vshrl.u32 %v4733, 16
    %v4745 = vpack.i.b16 %v4744, %v4743
    %v4747 = vsel %vm900, %v4736, 0
    %v4750 = vsel %vm900, %v4346, 0
    %4752 = vmatpush.bf16.xpose.msra.mxu0 0
    %4753 = vmatpush.bf16.xpose.msra.mxu0 0
    %4754 = vmatpush.bf16.xpose.msra.mxu0 0
    %4755 = vmatpush.bf16.xpose.msra.mxu0 0
    %4756 = vmatpush.bf16.xpose.msra.mxu0 0
    %4757 = vmatpush.bf16.xpose.msra.mxu0 0
    %4758 = vmatpush.bf16.xpose.msra.mxu0 0
    %4759 = vmatpush.bf16.xpose.msra.mxu0 %v4750
    %4760 = vmatmul.bf16.gmra.mxu0 %v4747
    %v4761 = vpop.f32.mrf.mxu0
    %v4762 = vadd.f32 0.0, %v4761
    %v4763 = vpop.f32.mrf.mxu0
    %4764 = vdwg.mxu0
    %v4766 = vsel %vm900, %v4739, 0
    %v4769 = vsel %vm900, %v4347, 0
    %4771 = vmatpush.bf16.xpose.msra.mxu0 0
    %4772 = vmatpush.bf16.xpose.msra.mxu0 0
    %4773 = vmatpush.bf16.xpose.msra.mxu0 0
    %4774 = vmatpush.bf16.xpose.msra.mxu0 0
    %4775 = vmatpush.bf16.xpose.msra.mxu0 0
    %4776 = vmatpush.bf16.xpose.msra.mxu0 0
    %4777 = vmatpush.bf16.xpose.msra.mxu0 0
    %4778 = vmatpush.bf16.xpose.msra.mxu0 %v4769
    %4779 = vmatmul.bf16.gmra.mxu0 %v4766
    %v4780 = vpop.f32.mrf.mxu0
    %v4781 = vadd.f32 0.0, %v4780
    %v4782 = vpop.f32.mrf.mxu0
    %4783 = vdwg.mxu0
    %v4785 = vsel %vm900, %v4742, 0
    %v4788 = vsel %vm900, %v4348, 0
    %4790 = vmatpush.bf16.xpose.msra.mxu0 0
    %4791 = vmatpush.bf16.xpose.msra.mxu0 0
    %4792 = vmatpush.bf16.xpose.msra.mxu0 0
    %4793 = vmatpush.bf16.xpose.msra.mxu0 0
    %4794 = vmatpush.bf16.xpose.msra.mxu0 0
    %4795 = vmatpush.bf16.xpose.msra.mxu0 0
    %4796 = vmatpush.bf16.xpose.msra.mxu0 0
    %4797 = vmatpush.bf16.xpose.msra.mxu0 %v4788
    %4798 = vmatmul.bf16.gmra.mxu0 %v4785
    %v4799 = vpop.f32.mrf.mxu0
    %v4800 = vadd.f32 0.0, %v4799
    %v4801 = vpop.f32.mrf.mxu0
    %4802 = vdwg.mxu0
    %v4804 = vsel %vm900, %v4745, 0
    %v4807 = vsel %vm900, %v4349, 0
    %4809 = vmatpush.bf16.xpose.msra.mxu0 0
    %4810 = vmatpush.bf16.xpose.msra.mxu0 0
    %4811 = vmatpush.bf16.xpose.msra.mxu0 0
    %4812 = vmatpush.bf16.xpose.msra.mxu0 0
    %4813 = vmatpush.bf16.xpose.msra.mxu0 0
    %4814 = vmatpush.bf16.xpose.msra.mxu0 0
    %4815 = vmatpush.bf16.xpose.msra.mxu0 0
    %4816 = vmatpush.bf16.xpose.msra.mxu0 %v4807
    %4817 = vmatmul.bf16.gmra.mxu0 %v4804
    %v4818 = vpop.f32.mrf.mxu0
    %v4819 = vadd.f32 0.0, %v4818
    %v4820 = vpop.f32.mrf.mxu0
    %4821 = vdwg.mxu0
    %4822 = vxpose.xlu0.b32.start [1/16] %v4762, 128
    %4823 = vxpose.xlu0.b32.cont [2/16] 0.0, 128
    %4824 = vxpose.xlu0.b32.cont [3/16] 0.0, 128
    %4825 = vxpose.xlu0.b32.cont [4/16] 0.0, 128
    %4826 = vxpose.xlu0.b32.cont [5/16] 0.0, 128
    %4827 = vxpose.xlu0.b32.cont [6/16] 0.0, 128
    %4828 = vxpose.xlu0.b32.cont [7/16] 0.0, 128
    %4829 = vxpose.xlu0.b32.cont [8/16] 0.0, 128
    %4830 = vxpose.xlu0.b32.cont [9/16] 0.0, 128
    %4831 = vxpose.xlu0.b32.cont [10/16] 0.0, 128
    %4832 = vxpose.xlu0.b32.cont [11/16] 0.0, 128
    %4833 = vxpose.xlu0.b32.cont [12/16] 0.0, 128
    %4834 = vxpose.xlu0.b32.cont [13/16] 0.0, 128
    %4835 = vxpose.xlu0.b32.cont [14/16] 0.0, 128
    %4836 = vxpose.xlu0.b32.cont [15/16] 0.0, 128
    %4837 = vxpose.xlu0.b32.end [16/16] 0.0, 128
    %v4838 = vpop.trf.xlu0
    %v4839 = vpop.trf.xlu0
    %v4840 = vpop.trf.xlu0
    %v4841 = vpop.trf.xlu0
    %v4842 = vpop.trf.xlu0
    %v4843 = vpop.trf.xlu0
    %v4844 = vpop.trf.xlu0
    %v4845 = vpop.trf.xlu0
    %v4846 = vpop.trf.xlu0
    %v4847 = vpop.trf.xlu0
    %v4848 = vpop.trf.xlu0
    %v4849 = vpop.trf.xlu0
    %v4850 = vpop.trf.xlu0
    %v4851 = vpop.trf.xlu0
    %v4852 = vpop.trf.xlu0
    %v4853 = vpop.trf.xlu0
    %4854 = vxpose.xlu0.b32.start [1/16] %v4781, 128
    %4855 = vxpose.xlu0.b32.cont [2/16] 0.0, 128
    %4856 = vxpose.xlu0.b32.cont [3/16] 0.0, 128
    %4857 = vxpose.xlu0.b32.cont [4/16] 0.0, 128
    %4858 = vxpose.xlu0.b32.cont [5/16] 0.0, 128
    %4859 = vxpose.xlu0.b32.cont [6/16] 0.0, 128
    %4860 = vxpose.xlu0.b32.cont [7/16] 0.0, 128
    %4861 = vxpose.xlu0.b32.cont [8/16] 0.0, 128
    %4862 = vxpose.xlu0.b32.cont [9/16] 0.0, 128
    %4863 = vxpose.xlu0.b32.cont [10/16] 0.0, 128
    %4864 = vxpose.xlu0.b32.cont [11/16] 0.0, 128
    %4865 = vxpose.xlu0.b32.cont [12/16] 0.0, 128
    %4866 = vxpose.xlu0.b32.cont [13/16] 0.0, 128
    %4867 = vxpose.xlu0.b32.cont [14/16] 0.0, 128
    %4868 = vxpose.xlu0.b32.cont [15/16] 0.0, 128
    %4869 = vxpose.xlu0.b32.end [16/16] 0.0, 128
    %v4870 = vpop.trf.xlu0
    %v4871 = vpop.trf.xlu0
    %v4872 = vpop.trf.xlu0
    %v4873 = vpop.trf.xlu0
    %v4874 = vpop.trf.xlu0
    %v4875 = vpop.trf.xlu0
    %v4876 = vpop.trf.xlu0
    %v4877 = vpop.trf.xlu0
    %v4878 = vpop.trf.xlu0
    %v4879 = vpop.trf.xlu0
    %v4880 = vpop.trf.xlu0
    %v4881 = vpop.trf.xlu0
    %v4882 = vpop.trf.xlu0
    %v4883 = vpop.trf.xlu0
    %v4884 = vpop.trf.xlu0
    %v4885 = vpop.trf.xlu0
    %4886 = vxpose.xlu0.b32.start [1/16] %v4800, 128
    %4887 = vxpose.xlu0.b32.cont [2/16] 0.0, 128
    %4888 = vxpose.xlu0.b32.cont [3/16] 0.0, 128
    %4889 = vxpose.xlu0.b32.cont [4/16] 0.0, 128
    %4890 = vxpose.xlu0.b32.cont [5/16] 0.0, 128
    %4891 = vxpose.xlu0.b32.cont [6/16] 0.0, 128
    %4892 = vxpose.xlu0.b32.cont [7/16] 0.0, 128
    %4893 = vxpose.xlu0.b32.cont [8/16] 0.0, 128
    %4894 = vxpose.xlu0.b32.cont [9/16] 0.0, 128
    %4895 = vxpose.xlu0.b32.cont [10/16] 0.0, 128
    %4896 = vxpose.xlu0.b32.cont [11/16] 0.0, 128
    %4897 = vxpose.xlu0.b32.cont [12/16] 0.0, 128
    %4898 = vxpose.xlu0.b32.cont [13/16] 0.0, 128
    %4899 = vxpose.xlu0.b32.cont [14/16] 0.0, 128
    %4900 = vxpose.xlu0.b32.cont [15/16] 0.0, 128
    %4901 = vxpose.xlu0.b32.end [16/16] 0.0, 128
    %v4902 = vpop.trf.xlu0
    %v4903 = vpop.trf.xlu0
    %v4904 = vpop.trf.xlu0
    %v4905 = vpop.trf.xlu0
    %v4906 = vpop.trf.xlu0
    %v4907 = vpop.trf.xlu0
    %v4908 = vpop.trf.xlu0
    %v4909 = vpop.trf.xlu0
    %v4910 = vpop.trf.xlu0
    %v4911 = vpop.trf.xlu0
    %v4912 = vpop.trf.xlu0
    %v4913 = vpop.trf.xlu0
    %v4914 = vpop.trf.xlu0
    %v4915 = vpop.trf.xlu0
    %v4916 = vpop.trf.xlu0
    %v4917 = vpop.trf.xlu0
    %4918 = vxpose.xlu0.b32.start [1/16] %v4819, 128
    %4919 = vxpose.xlu0.b32.cont [2/16] 0.0, 128
    %4920 = vxpose.xlu0.b32.cont [3/16] 0.0, 128
    %4921 = vxpose.xlu0.b32.cont [4/16] 0.0, 128
    %4922 = vxpose.xlu0.b32.cont [5/16] 0.0, 128
    %4923 = vxpose.xlu0.b32.cont [6/16] 0.0, 128
    %4924 = vxpose.xlu0.b32.cont [7/16] 0.0, 128
    %4925 = vxpose.xlu0.b32.cont [8/16] 0.0, 128
    %4926 = vxpose.xlu0.b32.cont [9/16] 0.0, 128
    %4927 = vxpose.xlu0.b32.cont [10/16] 0.0, 128
    %4928 = vxpose.xlu0.b32.cont [11/16] 0.0, 128
    %4929 = vxpose.xlu0.b32.cont [12/16] 0.0, 128
    %4930 = vxpose.xlu0.b32.cont [13/16] 0.0, 128
    %4931 = vxpose.xlu0.b32.cont [14/16] 0.0, 128
    %4932 = vxpose.xlu0.b32.cont [15/16] 0.0, 128
    %4933 = vxpose.xlu0.b32.end [16/16] 0.0, 128
    %v4934 = vpop.trf.xlu0
    %v4935 = vpop.trf.xlu0
    %v4936 = vpop.trf.xlu0
    %v4937 = vpop.trf.xlu0
    %v4938 = vpop.trf.xlu0
    %v4939 = vpop.trf.xlu0
    %v4940 = vpop.trf.xlu0
    %v4941 = vpop.trf.xlu0
    %v4942 = vpop.trf.xlu0
    %v4943 = vpop.trf.xlu0
    %v4944 = vpop.trf.xlu0
    %v4945 = vpop.trf.xlu0
    %v4946 = vpop.trf.xlu0
    %v4947 = vpop.trf.xlu0
    %v4948 = vpop.trf.xlu0
    %v4949 = vpop.trf.xlu0
    %v4950 = vrot.slane %v4902, 4
    %v4951 = vsel %vm221, %v4950, %v4838
    %v4952 = vrot.slane %v4838, 4
    %v4953 = vsel %vm221, %v4902, %v4952
    %v4955 = vunpack.c.l.s4 1983009808
    %v4956 = vunpack.c.0.s8 %v4955
    %v4957 = vperm.slane %v4951, %v4956
    %v4959 = vunpack.c.l.s4 1983009808
    %v4960 = vunpack.c.0.s8 %v4959
    %v4961 = vperm.slane %v4953, %v4960
    %v4962 = vrot.slane %v4934, 4
    %v4963 = vsel %vm221, %v4962, %v4870
    %v4964 = vrot.slane %v4870, 4
    %v4965 = vsel %vm221, %v4934, %v4964
    %v4967 = vunpack.c.l.s4 1983009808
    %v4968 = vunpack.c.0.s8 %v4967
    %v4969 = vperm.slane %v4963, %v4968
    %v4971 = vunpack.c.l.s4 1983009808
    %v4972 = vunpack.c.0.s8 %v4971
    %v4973 = vperm.slane %v4965, %v4972
    %v4974 = vrot.slane %v4969, 4
    %v4975 = vsel %vm221, %v4974, %v4957
    %v4976 = vrot.slane %v4957, 4
    %v4977 = vsel %vm221, %v4969, %v4976
    %v4979 = vunpack.c.l.s4 1934713408
    %v4980 = vunpack.c.0.s8 %v4979
    %v4981 = vperm.slane %v4975, %v4980
    %v4983 = vunpack.c.l.s4 1934713408
    %v4984 = vunpack.c.0.s8 %v4983
    %v4985 = vperm.slane %v4977, %v4984
    %v4986 = vrot.slane %v4973, 4
    %v4987 = vsel %vm221, %v4986, %v4961
    %v4988 = vrot.slane %v4961, 4
    %v4989 = vsel %vm221, %v4973, %v4988
    %v4991 = vunpack.c.l.s4 1934713408
    %v4992 = vunpack.c.0.s8 %v4991
    %v4993 = vperm.slane %v4987, %v4992
    %v4995 = vunpack.c.l.s4 1934713408
    %v4996 = vunpack.c.0.s8 %v4995
    %v4997 = vperm.slane %v4989, %v4996
    %v4998 = vrot.slane %v4981, 4
    %v4999 = vsel %vm221, 0.0, %v4998
    %v5000 = vrot.slane %v4985, 4
    %v5001 = vsel %vm221, 0.0, %v5000
    %v5002 = vrot.slane %v4993, 4
    %v5003 = vsel %vm221, 0.0, %v5002
    %v5004 = vrot.slane %v4997, 4
    %v5005 = vsel %vm221, 0.0, %v5004
    %v5006 = vsel %vm221, %v5000, %v4981
    %v5008 = vunpack.c.l.s4 1983009808
    %v5009 = vunpack.c.0.s8 %v5008
    %v5010 = vperm.slane %v5006, %v5009
    %v5011 = vrot.slane %v5001, 4
    %v5012 = vsel %vm221, %v5011, %v4999
    %v5014 = vunpack.c.l.s4 1983009808
    %v5015 = vunpack.c.0.s8 %v5014
    %v5016 = vperm.slane %v5012, %v5015
    %v5017 = vsel %vm221, %v5004, %v4993
    %v5019 = vunpack.c.l.s4 1983009808
    %v5020 = vunpack.c.0.s8 %v5019
    %v5021 = vperm.slane %v5017, %v5020
    %v5022 = vrot.slane %v5005, 4
    %v5023 = vsel %vm221, %v5022, %v5003
    %v5025 = vunpack.c.l.s4 1983009808
    %v5026 = vunpack.c.0.s8 %v5025
    %v5027 = vperm.slane %v5023, %v5026
    %v5028 = vrot.slane %v5016, 4
    %v5029 = vsel %vm221, %v5028, %v5010
    %v5030 = vrot.slane %v5010, 4
    %v5031 = vsel %vm221, %v5016, %v5030
    %v5033 = vunpack.c.l.s4 1934713408
    %v5034 = vunpack.c.0.s8 %v5033
    %v5035 = vperm.slane %v5029, %v5034
    %v5037 = vunpack.c.l.s4 1934713408
    %v5038 = vunpack.c.0.s8 %v5037
    %v5039 = vperm.slane %v5031, %v5038
    %v5040 = vrot.slane %v5027, 4
    %v5041 = vsel %vm221, %v5040, %v5021
    %v5042 = vrot.slane %v5021, 4
    %v5043 = vsel %vm221, %v5027, %v5042
    %v5045 = vunpack.c.l.s4 1934713408
    %v5046 = vunpack.c.0.s8 %v5045
    %v5047 = vperm.slane %v5041, %v5046
    %v5049 = vunpack.c.l.s4 1934713408
    %v5050 = vunpack.c.0.s8 %v5049
    %v5051 = vperm.slane %v5043, %v5050
    %v5052 = vrot.slane %v5047, 4
    %v5053 = vsel %vm221, %v5052, %v5035
    %v5054 = vrot.slane %v5035, 4
    %v5055 = vsel %vm221, %v5047, %v5054
    %v5056 = vrot.slane %v5051, 4
    %v5057 = vsel %vm221, %v5056, %v5039
    %v5058 = vrot.slane %v5039, 4
    %v5059 = vsel %vm221, %v5051, %v5058
    %5061 = vrot.lane.b32.xlu0 %v5055, 8
    %v5062 = vpop.permute.xlu0 %5061
    %5065 = vrot.lane.b32.xlu0 %v5057, 16
    %v5066 = vpop.permute.xlu0 %5065
    %5069 = vrot.lane.b32.xlu0 %v5059, 24
    %v5070 = vpop.permute.xlu0 %5069
    %v5072 = vsel %vm900, %v5053, %v5062
    %v5073 = vsel %vm1749, %v5072, %v5066
    %v5074 = vsel %vm1751, %v5073, %v5070
    %5076 = vrot.lane.b32.xlu0 %v3533, 120
    %v5077 = vpop.permute.xlu0 %5076
    %5079 = vrot.lane.b32.xlu0 %v3533, 112
    %v5080 = vpop.permute.xlu0 %5079
    %5082 = vrot.lane.b32.xlu0 %v3533, 104
    %v5083 = vpop.permute.xlu0 %5082
    %v5085 = vrot.slane %v5080, 4
    %v5086 = vsel %vm221, %v5085, %v3533
    %v5087 = vrot.slane %v3533, 4
    %v5088 = vsel %vm221, %v5080, %v5087
    %v5090 = vunpack.c.l.s4 1983009808
    %v5091 = vunpack.c.0.s8 %v5090
    %v5092 = vperm.slane %v5086, %v5091
    %v5094 = vunpack.c.l.s4 1983009808
    %v5095 = vunpack.c.0.s8 %v5094
    %v5096 = vperm.slane %v5088, %v5095
    %v5097 = vrot.slane %v5083, 4
    %v5098 = vsel %vm221, %v5097, %v5077
    %v5099 = vrot.slane %v5077, 4
    %v5100 = vsel %vm221, %v5083, %v5099
    %v5102 = vunpack.c.l.s4 1983009808
    %v5103 = vunpack.c.0.s8 %v5102
    %v5104 = vperm.slane %v5098, %v5103
    %v5106 = vunpack.c.l.s4 1983009808
    %v5107 = vunpack.c.0.s8 %v5106
    %v5108 = vperm.slane %v5100, %v5107
    %v5109 = vrot.slane %v5104, 4
    %v5110 = vsel %vm221, %v5109, %v5092
    %v5111 = vrot.slane %v5092, 4
    %v5112 = vsel %vm221, %v5104, %v5111
    %v5114 = vunpack.c.l.s4 1934713408
    %v5115 = vunpack.c.0.s8 %v5114
    %v5116 = vperm.slane %v5110, %v5115
    %v5118 = vunpack.c.l.s4 1934713408
    %v5119 = vunpack.c.0.s8 %v5118
    %v5120 = vperm.slane %v5112, %v5119
    %v5121 = vrot.slane %v5108, 4
    %v5122 = vsel %vm221, %v5121, %v5096
    %v5123 = vrot.slane %v5096, 4
    %v5124 = vsel %vm221, %v5108, %v5123
    %v5126 = vunpack.c.l.s4 1934713408
    %v5127 = vunpack.c.0.s8 %v5126
    %v5128 = vperm.slane %v5122, %v5127
    %v5130 = vunpack.c.l.s4 1934713408
    %v5131 = vunpack.c.0.s8 %v5130
    %v5132 = vperm.slane %v5124, %v5131
    %v5133 = vrot.slane %v5116, 4
    %v5134 = vsel %vm221, 0.0, %v5133
    %v5135 = vrot.slane %v5120, 4
    %v5136 = vsel %vm221, 0.0, %v5135
    %v5137 = vrot.slane %v5128, 4
    %v5138 = vsel %vm221, 0.0, %v5137
    %v5139 = vrot.slane %v5132, 4
    %v5140 = vsel %vm221, 0.0, %v5139
    %v5141 = vpack.c.bf16 %v5116, %v5116
    %v5142 = vpack.c.bf16 %v5134, %v5134
    %v5143 = vpack.c.bf16 %v5120, %v5120
    %v5144 = vpack.c.bf16 %v5136, %v5136
    %v5145 = vpack.c.bf16 %v5128, %v5128
    %v5146 = vpack.c.bf16 %v5138, %v5138
    %v5147 = vpack.c.bf16 %v5132, %v5132
    %v5148 = vpack.c.bf16 %v5140, %v5140
    %5150 = vrot.lane.b32.xlu0 %v3535, 120
    %v5151 = vpop.permute.xlu0 %5150
    %5152 = vrot.lane.b32.xlu0 %v3535, 112
    %v5153 = vpop.permute.xlu0 %5152
    %5154 = vrot.lane.b32.xlu0 %v3535, 104
    %v5155 = vpop.permute.xlu0 %5154
    %5156 = vrot.lane.b32.xlu0 %v3535, 96
    %v5157 = vpop.permute.xlu0 %5156
    %5158 = vrot.lane.b32.xlu0 %v5151, 96
    %v5159 = vpop.permute.xlu0 %5158
    %5160 = vrot.lane.b32.xlu0 %v5153, 96
    %v5161 = vpop.permute.xlu0 %5160
    %5162 = vrot.lane.b32.xlu0 %v5155, 96
    %v5163 = vpop.permute.xlu0 %5162
    %v5168 = vrot.slane %v5161, 4
    %v5169 = vsel %vm221, %v5168, %v5157
    %v5170 = vrot.slane %v5157, 4
    %v5171 = vsel %vm221, %v5161, %v5170
    %v5173 = vunpack.c.l.s4 1983009808
    %v5174 = vunpack.c.0.s8 %v5173
    %v5175 = vperm.slane %v5169, %v5174
    %v5177 = vunpack.c.l.s4 1983009808
    %v5178 = vunpack.c.0.s8 %v5177
    %v5179 = vperm.slane %v5171, %v5178
    %v5180 = vrot.slane %v5163, 4
    %v5181 = vsel %vm221, %v5180, %v5159
    %v5182 = vrot.slane %v5159, 4
    %v5183 = vsel %vm221, %v5163, %v5182
    %v5185 = vunpack.c.l.s4 1983009808
    %v5186 = vunpack.c.0.s8 %v5185
    %v5187 = vperm.slane %v5181, %v5186
    %v5189 = vunpack.c.l.s4 1983009808
    %v5190 = vunpack.c.0.s8 %v5189
    %v5191 = vperm.slane %v5183, %v5190
    %v5192 = vrot.slane %v5187, 4
    %v5193 = vsel %vm221, %v5192, %v5175
    %v5194 = vrot.slane %v5175, 4
    %v5195 = vsel %vm221, %v5187, %v5194
    %v5197 = vunpack.c.l.s4 1934713408
    %v5198 = vunpack.c.0.s8 %v5197
    %v5199 = vperm.slane %v5193, %v5198
    %v5201 = vunpack.c.l.s4 1934713408
    %v5202 = vunpack.c.0.s8 %v5201
    %v5203 = vperm.slane %v5195, %v5202
    %v5204 = vrot.slane %v5191, 4
    %v5205 = vsel %vm221, %v5204, %v5179
    %v5206 = vrot.slane %v5179, 4
    %v5207 = vsel %vm221, %v5191, %v5206
    %v5209 = vunpack.c.l.s4 1934713408
    %v5210 = vunpack.c.0.s8 %v5209
    %v5211 = vperm.slane %v5205, %v5210
    %v5213 = vunpack.c.l.s4 1934713408
    %v5214 = vunpack.c.0.s8 %v5213
    %v5215 = vperm.slane %v5207, %v5214
    %v5216 = vrot.slane %v5199, 4
    %v5217 = vsel %vm221, 0.0, %v5216
    %v5218 = vrot.slane %v5203, 4
    %v5219 = vsel %vm221, 0.0, %v5218
    %v5220 = vrot.slane %v5211, 4
    %v5221 = vsel %vm221, 0.0, %v5220
    %v5222 = vrot.slane %v5215, 4
    %v5223 = vsel %vm221, 0.0, %v5222
    %v5224 = vpack.c.bf16 %v5199, %v5199
    %v5225 = vpack.c.bf16 %v5217, %v5217
    %v5226 = vpack.c.bf16 %v5203, %v5203
    %v5227 = vpack.c.bf16 %v5219, %v5219
    %v5228 = vpack.c.bf16 %v5211, %v5211
    %v5229 = vpack.c.bf16 %v5221, %v5221
    %v5230 = vpack.c.bf16 %v5215, %v5215
    %v5231 = vpack.c.bf16 %v5223, %v5223
    %5233 = vrot.lane.b32.xlu0 %v3537, 120
    %v5234 = vpop.permute.xlu0 %5233
    %5235 = vrot.lane.b32.xlu0 %v3537, 112
    %v5236 = vpop.permute.xlu0 %5235
    %5237 = vrot.lane.b32.xlu0 %v3537, 104
    %v5238 = vpop.permute.xlu0 %5237
    %5239 = vrot.lane.b32.xlu0 %v3537, 64
    %v5240 = vpop.permute.xlu0 %5239
    %5241 = vrot.lane.b32.xlu0 %v5234, 64
    %v5242 = vpop.permute.xlu0 %5241
    %5243 = vrot.lane.b32.xlu0 %v5236, 64
    %v5244 = vpop.permute.xlu0 %5243
    %5245 = vrot.lane.b32.xlu0 %v5238, 64
    %v5246 = vpop.permute.xlu0 %5245
    %v5251 = vrot.slane %v5244, 4
    %v5252 = vsel %vm221, %v5251, %v5240
    %v5253 = vrot.slane %v5240, 4
    %v5254 = vsel %vm221, %v5244, %v5253
    %v5256 = vunpack.c.l.s4 1983009808
    %v5257 = vunpack.c.0.s8 %v5256
    %v5258 = vperm.slane %v5252, %v5257
    %v5260 = vunpack.c.l.s4 1983009808
    %v5261 = vunpack.c.0.s8 %v5260
    %v5262 = vperm.slane %v5254, %v5261
    %v5263 = vrot.slane %v5246, 4
    %v5264 = vsel %vm221, %v5263, %v5242
    %v5265 = vrot.slane %v5242, 4
    %v5266 = vsel %vm221, %v5246, %v5265
    %v5268 = vunpack.c.l.s4 1983009808
    %v5269 = vunpack.c.0.s8 %v5268
    %v5270 = vperm.slane %v5264, %v5269
    %v5272 = vunpack.c.l.s4 1983009808
    %v5273 = vunpack.c.0.s8 %v5272
    %v5274 = vperm.slane %v5266, %v5273
    %v5275 = vrot.slane %v5270, 4
    %v5276 = vsel %vm221, %v5275, %v5258
    %v5277 = vrot.slane %v5258, 4
    %v5278 = vsel %vm221, %v5270, %v5277
    %v5280 = vunpack.c.l.s4 1934713408
    %v5281 = vunpack.c.0.s8 %v5280
    %v5282 = vperm.slane %v5276, %v5281
    %v5284 = vunpack.c.l.s4 1934713408
    %v5285 = vunpack.c.0.s8 %v5284
    %v5286 = vperm.slane %v5278, %v5285
    %v5287 = vrot.slane %v5274, 4
    %v5288 = vsel %vm221, %v5287, %v5262
    %v5289 = vrot.slane %v5262, 4
    %v5290 = vsel %vm221, %v5274, %v5289
    %v5292 = vunpack.c.l.s4 1934713408
    %v5293 = vunpack.c.0.s8 %v5292
    %v5294 = vperm.slane %v5288, %v5293
    %v5296 = vunpack.c.l.s4 1934713408
    %v5297 = vunpack.c.0.s8 %v5296
    %v5298 = vperm.slane %v5290, %v5297
    %v5299 = vrot.slane %v5282, 4
    %v5300 = vsel %vm221, 0.0, %v5299
    %v5301 = vrot.slane %v5286, 4
    %v5302 = vsel %vm221, 0.0, %v5301
    %v5303 = vrot.slane %v5294, 4
    %v5304 = vsel %vm221, 0.0, %v5303
    %v5305 = vrot.slane %v5298, 4
    %v5306 = vsel %vm221, 0.0, %v5305
    %v5307 = vpack.c.bf16 %v5282, %v5282
    %v5308 = vpack.c.bf16 %v5300, %v5300
    %v5309 = vpack.c.bf16 %v5286, %v5286
    %v5310 = vpack.c.bf16 %v5302, %v5302
    %v5311 = vpack.c.bf16 %v5294, %v5294
    %v5312 = vpack.c.bf16 %v5304, %v5304
    %v5313 = vpack.c.bf16 %v5298, %v5298
    %v5314 = vpack.c.bf16 %v5306, %v5306
    %v5315 = vrot.slane %v5145, 4
    %v5316 = vsel %vm452, %v5315, %v5141
    %v5318 = vunpack.c.l.s4 1983009808
    %v5319 = vunpack.c.0.s8 %v5318
    %v5320 = vperm.slane %v5316, %v5319
    %v5321 = vrot.slane %v5147, 4
    %v5322 = vsel %vm452, %v5321, %v5143
    %v5324 = vunpack.c.l.s4 1983009808
    %v5325 = vunpack.c.0.s8 %v5324
    %v5326 = vperm.slane %v5322, %v5325
    %v5327 = vrot.slane %v5326, 4
    %v5328 = vsel %vm452, %v5327, %v5320
    %v5330 = vunpack.c.l.s4 1934713408
    %v5331 = vunpack.c.0.s8 %v5330
    %v5332 = vperm.slane %v5328, %v5331
    %v5333 = vrot.slane %v5332, 4
    %v5334 = vsel %vm452, 0, %v5333
    %v5335 = vrot.slane %v5146, 4
    %v5336 = vsel %vm452, %v5335, %v5142
    %v5338 = vunpack.c.l.s4 1983009808
    %v5339 = vunpack.c.0.s8 %v5338
    %v5340 = vperm.slane %v5336, %v5339
    %v5341 = vrot.slane %v5148, 4
    %v5342 = vsel %vm452, %v5341, %v5144
    %v5344 = vunpack.c.l.s4 1983009808
    %v5345 = vunpack.c.0.s8 %v5344
    %v5346 = vperm.slane %v5342, %v5345
    %v5347 = vrot.slane %v5346, 4
    %v5348 = vsel %vm452, %v5347, %v5340
    %v5350 = vunpack.c.l.s4 1934713408
    %v5351 = vunpack.c.0.s8 %v5350
    %v5352 = vperm.slane %v5348, %v5351
    %v5353 = vrot.slane %v5352, 4
    %v5354 = vsel %vm452, 0, %v5353
    %v5357 = vpack.i.b16 %v5352, %v5332
    %v5358 = vshrl.u32 %v5332, 16
    %v5359 = vshrl.u32 %v5352, 16
    %v5360 = vpack.i.b16 %v5359, %v5358
    %v5363 = vpack.i.b16 %v5354, %v5334
    %v5364 = vshrl.u32 %v5334, 16
    %v5365 = vshrl.u32 %v5354, 16
    %v5366 = vpack.i.b16 %v5365, %v5364
    %5367 = vxpose.xlu0.c.b16.start [1/8] %v5224, 128
    %5368 = vxpose.xlu0.c.b16.cont [2/8] 0, 128
    %5369 = vxpose.xlu0.c.b16.cont [3/8] 0, 128
    %5370 = vxpose.xlu0.c.b16.cont [4/8] 0, 128
    %5371 = vxpose.xlu0.c.b16.cont [5/8] 0, 128
    %5372 = vxpose.xlu0.c.b16.cont [6/8] 0, 128
    %5373 = vxpose.xlu0.c.b16.cont [7/8] 0, 128
    %5374 = vxpose.xlu0.c.b16.end [8/8] 0, 128
    %v5375 = vpop.trf.xlu0
    %v5376 = vpop.trf.xlu0
    %v5377 = vpop.trf.xlu0
    %v5378 = vpop.trf.xlu0
    %v5379 = vpop.trf.xlu0
    %v5380 = vpop.trf.xlu0
    %v5381 = vpop.trf.xlu0
    %v5382 = vpop.trf.xlu0
    %5383 = vxpose.xlu0.c.b16.start [1/8] %v5225, 128
    %5384 = vxpose.xlu0.c.b16.cont [2/8] 0, 128
    %5385 = vxpose.xlu0.c.b16.cont [3/8] 0, 128
    %5386 = vxpose.xlu0.c.b16.cont [4/8] 0, 128
    %5387 = vxpose.xlu0.c.b16.cont [5/8] 0, 128
    %5388 = vxpose.xlu0.c.b16.cont [6/8] 0, 128
    %5389 = vxpose.xlu0.c.b16.cont [7/8] 0, 128
    %5390 = vxpose.xlu0.c.b16.end [8/8] 0, 128
    %v5391 = vpop.trf.xlu0
    %v5392 = vpop.trf.xlu0
    %v5393 = vpop.trf.xlu0
    %v5394 = vpop.trf.xlu0
    %v5395 = vpop.trf.xlu0
    %v5396 = vpop.trf.xlu0
    %v5397 = vpop.trf.xlu0
    %v5398 = vpop.trf.xlu0
    %5399 = vxpose.xlu0.c.b16.start [1/8] %v5226, 128
    %5400 = vxpose.xlu0.c.b16.cont [2/8] 0, 128
    %5401 = vxpose.xlu0.c.b16.cont [3/8] 0, 128
    %5402 = vxpose.xlu0.c.b16.cont [4/8] 0, 128
    %5403 = vxpose.xlu0.c.b16.cont [5/8] 0, 128
    %5404 = vxpose.xlu0.c.b16.cont [6/8] 0, 128
    %5405 = vxpose.xlu0.c.b16.cont [7/8] 0, 128
    %5406 = vxpose.xlu0.c.b16.end [8/8] 0, 128
    %v5407 = vpop.trf.xlu0
    %v5408 = vpop.trf.xlu0
    %v5409 = vpop.trf.xlu0
    %v5410 = vpop.trf.xlu0
    %v5411 = vpop.trf.xlu0
    %v5412 = vpop.trf.xlu0
    %v5413 = vpop.trf.xlu0
    %v5414 = vpop.trf.xlu0
    %5415 = vxpose.xlu0.c.b16.start [1/8] %v5227, 128
    %5416 = vxpose.xlu0.c.b16.cont [2/8] 0, 128
    %5417 = vxpose.xlu0.c.b16.cont [3/8] 0, 128
    %5418 = vxpose.xlu0.c.b16.cont [4/8] 0, 128
    %5419 = vxpose.xlu0.c.b16.cont [5/8] 0, 128
    %5420 = vxpose.xlu0.c.b16.cont [6/8] 0, 128
    %5421 = vxpose.xlu0.c.b16.cont [7/8] 0, 128
    %5422 = vxpose.xlu0.c.b16.end [8/8] 0, 128
    %v5423 = vpop.trf.xlu0
    %v5424 = vpop.trf.xlu0
    %v5425 = vpop.trf.xlu0
    %v5426 = vpop.trf.xlu0
    %v5427 = vpop.trf.xlu0
    %v5428 = vpop.trf.xlu0
    %v5429 = vpop.trf.xlu0
    %v5430 = vpop.trf.xlu0
    %5431 = vxpose.xlu0.c.b16.start [1/8] %v5228, 128
    %5432 = vxpose.xlu0.c.b16.cont [2/8] 0, 128
    %5433 = vxpose.xlu0.c.b16.cont [3/8] 0, 128
    %5434 = vxpose.xlu0.c.b16.cont [4/8] 0, 128
    %5435 = vxpose.xlu0.c.b16.cont [5/8] 0, 128
    %5436 = vxpose.xlu0.c.b16.cont [6/8] 0, 128
    %5437 = vxpose.xlu0.c.b16.cont [7/8] 0, 128
    %5438 = vxpose.xlu0.c.b16.end [8/8] 0, 128
    %v5439 = vpop.trf.xlu0
    %v5440 = vpop.trf.xlu0
    %v5441 = vpop.trf.xlu0
    %v5442 = vpop.trf.xlu0
    %v5443 = vpop.trf.xlu0
    %v5444 = vpop.trf.xlu0
    %v5445 = vpop.trf.xlu0
    %v5446 = vpop.trf.xlu0
    %5447 = vxpose.xlu0.c.b16.start [1/8] %v5229, 128
    %5448 = vxpose.xlu0.c.b16.cont [2/8] 0, 128
    %5449 = vxpose.xlu0.c.b16.cont [3/8] 0, 128
    %5450 = vxpose.xlu0.c.b16.cont [4/8] 0, 128
    %5451 = vxpose.xlu0.c.b16.cont [5/8] 0, 128
    %5452 = vxpose.xlu0.c.b16.cont [6/8] 0, 128
    %5453 = vxpose.xlu0.c.b16.cont [7/8] 0, 128
    %5454 = vxpose.xlu0.c.b16.end [8/8] 0, 128
    %v5455 = vpop.trf.xlu0
    %v5456 = vpop.trf.xlu0
    %v5457 = vpop.trf.xlu0
    %v5458 = vpop.trf.xlu0
    %v5459 = vpop.trf.xlu0
    %v5460 = vpop.trf.xlu0
    %v5461 = vpop.trf.xlu0
    %v5462 = vpop.trf.xlu0
    %5463 = vxpose.xlu0.c.b16.start [1/8] %v5230, 128
    %5464 = vxpose.xlu0.c.b16.cont [2/8] 0, 128
    %5465 = vxpose.xlu0.c.b16.cont [3/8] 0, 128
    %5466 = vxpose.xlu0.c.b16.cont [4/8] 0, 128
    %5467 = vxpose.xlu0.c.b16.cont [5/8] 0, 128
    %5468 = vxpose.xlu0.c.b16.cont [6/8] 0, 128
    %5469 = vxpose.xlu0.c.b16.cont [7/8] 0, 128
    %5470 = vxpose.xlu0.c.b16.end [8/8] 0, 128
    %v5471 = vpop.trf.xlu0
    %v5472 = vpop.trf.xlu0
    %v5473 = vpop.trf.xlu0
    %v5474 = vpop.trf.xlu0
    %v5475 = vpop.trf.xlu0
    %v5476 = vpop.trf.xlu0
    %v5477 = vpop.trf.xlu0
    %v5478 = vpop.trf.xlu0
    %5479 = vxpose.xlu0.c.b16.start [1/8] %v5231, 128
    %5480 = vxpose.xlu0.c.b16.cont [2/8] 0, 128
    %5481 = vxpose.xlu0.c.b16.cont [3/8] 0, 128
    %5482 = vxpose.xlu0.c.b16.cont [4/8] 0, 128
    %5483 = vxpose.xlu0.c.b16.cont [5/8] 0, 128
    %5484 = vxpose.xlu0.c.b16.cont [6/8] 0, 128
    %5485 = vxpose.xlu0.c.b16.cont [7/8] 0, 128
    %5486 = vxpose.xlu0.c.b16.end [8/8] 0, 128
    %v5487 = vpop.trf.xlu0
    %v5488 = vpop.trf.xlu0
    %v5489 = vpop.trf.xlu0
    %v5490 = vpop.trf.xlu0
    %v5491 = vpop.trf.xlu0
    %v5492 = vpop.trf.xlu0
    %v5493 = vpop.trf.xlu0
    %v5494 = vpop.trf.xlu0
    %v5495 = vrot.slane %v5439, 4
    %v5496 = vsel %vm452, %v5495, %v5375
    %v5498 = vunpack.c.l.s4 1983009808
    %v5499 = vunpack.c.0.s8 %v5498
    %v5500 = vperm.slane %v5496, %v5499
    %v5501 = vrot.slane %v5471, 4
    %v5502 = vsel %vm452, %v5501, %v5407
    %v5504 = vunpack.c.l.s4 1983009808
    %v5505 = vunpack.c.0.s8 %v5504
    %v5506 = vperm.slane %v5502, %v5505
    %v5507 = vrot.slane %v5506, 4
    %v5508 = vsel %vm452, %v5507, %v5500
    %v5509 = vrot.slane %v5500, 4
    %v5510 = vsel %vm452, %v5506, %v5509
    %v5512 = vunpack.c.l.s4 1934713408
    %v5513 = vunpack.c.0.s8 %v5512
    %v5514 = vperm.slane %v5508, %v5513
    %v5516 = vunpack.c.l.s4 1934713408
    %v5517 = vunpack.c.0.s8 %v5516
    %v5518 = vperm.slane %v5510, %v5517
    %v5519 = vrot.slane %v5514, 4
    %v5520 = vsel %vm452, 0, %v5519
    %v5521 = vrot.slane %v5518, 4
    %v5522 = vsel %vm452, 0, %v5521
    %v5523 = vrot.slane %v5455, 4
    %v5524 = vsel %vm452, %v5523, %v5391
    %v5526 = vunpack.c.l.s4 1983009808
    %v5527 = vunpack.c.0.s8 %v5526
    %v5528 = vperm.slane %v5524, %v5527
    %v5529 = vrot.slane %v5487, 4
    %v5530 = vsel %vm452, %v5529, %v5423
    %v5532 = vunpack.c.l.s4 1983009808
    %v5533 = vunpack.c.0.s8 %v5532
    %v5534 = vperm.slane %v5530, %v5533
    %v5535 = vrot.slane %v5534, 4
    %v5536 = vsel %vm452, %v5535, %v5528
    %v5537 = vrot.slane %v5528, 4
    %v5538 = vsel %vm452, %v5534, %v5537
    %v5540 = vunpack.c.l.s4 1934713408
    %v5541 = vunpack.c.0.s8 %v5540
    %v5542 = vperm.slane %v5536, %v5541
    %v5544 = vunpack.c.l.s4 1934713408
    %v5545 = vunpack.c.0.s8 %v5544
    %v5546 = vperm.slane %v5538, %v5545
    %v5547 = vrot.slane %v5542, 4
    %v5548 = vsel %vm452, 0, %v5547
    %v5549 = vrot.slane %v5546, 4
    %v5550 = vsel %vm452, 0, %v5549
    %v5553 = vpack.i.b16 %v5542, %v5514
    %v5555 = vshrl.u32 %v5514, 16
    %v5556 = vshrl.u32 %v5542, 16
    %v5557 = vpack.i.b16 %v5556, %v5555
    %v5561 = vpack.i.b16 %v5548, %v5520
    %v5563 = vshrl.u32 %v5520, 16
    %v5564 = vshrl.u32 %v5548, 16
    %v5565 = vpack.i.b16 %v5564, %v5563
    %v5569 = vpack.i.b16 %v5546, %v5518
    %v5571 = vshrl.u32 %v5518, 16
    %v5572 = vshrl.u32 %v5546, 16
    %v5573 = vpack.i.b16 %v5572, %v5571
    %v5577 = vpack.i.b16 %v5550, %v5522
    %v5579 = vshrl.u32 %v5522, 16
    %v5580 = vshrl.u32 %v5550, 16
    %v5581 = vpack.i.b16 %v5580, %v5579
    %5583 = vxpose.xlu0.c.b16.start [1/8] %v5553, 128
    %5584 = vxpose.xlu0.c.b16.cont [2/8] 0, 128
    %5585 = vxpose.xlu0.c.b16.cont [3/8] 0, 128
    %5586 = vxpose.xlu0.c.b16.cont [4/8] 0, 128
    %5587 = vxpose.xlu0.c.b16.cont [5/8] 0, 128
    %5588 = vxpose.xlu0.c.b16.cont [6/8] 0, 128
    %5589 = vxpose.xlu0.c.b16.cont [7/8] 0, 128
    %5590 = vxpose.xlu0.c.b16.end [8/8] 0, 128
    %v5591 = vpop.trf.xlu0
    %v5592 = vpop.trf.xlu0
    %v5593 = vpop.trf.xlu0
    %v5594 = vpop.trf.xlu0
    %v5595 = vpop.trf.xlu0
    %v5596 = vpop.trf.xlu0
    %v5597 = vpop.trf.xlu0
    %v5598 = vpop.trf.xlu0
    %5599 = vxpose.xlu0.c.b16.start [1/8] %v5557, 128
    %5600 = vxpose.xlu0.c.b16.cont [2/8] 0, 128
    %5601 = vxpose.xlu0.c.b16.cont [3/8] 0, 128
    %5602 = vxpose.xlu0.c.b16.cont [4/8] 0, 128
    %5603 = vxpose.xlu0.c.b16.cont [5/8] 0, 128
    %5604 = vxpose.xlu0.c.b16.cont [6/8] 0, 128
    %5605 = vxpose.xlu0.c.b16.cont [7/8] 0, 128
    %5606 = vxpose.xlu0.c.b16.end [8/8] 0, 128
    %v5607 = vpop.trf.xlu0
    %v5608 = vpop.trf.xlu0
    %v5609 = vpop.trf.xlu0
    %v5610 = vpop.trf.xlu0
    %v5611 = vpop.trf.xlu0
    %v5612 = vpop.trf.xlu0
    %v5613 = vpop.trf.xlu0
    %v5614 = vpop.trf.xlu0
    %5615 = vxpose.xlu0.c.b16.start [1/8] %v5561, 128
    %5616 = vxpose.xlu0.c.b16.cont [2/8] 0, 128
    %5617 = vxpose.xlu0.c.b16.cont [3/8] 0, 128
    %5618 = vxpose.xlu0.c.b16.cont [4/8] 0, 128
    %5619 = vxpose.xlu0.c.b16.cont [5/8] 0, 128
    %5620 = vxpose.xlu0.c.b16.cont [6/8] 0, 128
    %5621 = vxpose.xlu0.c.b16.cont [7/8] 0, 128
    %5622 = vxpose.xlu0.c.b16.end [8/8] 0, 128
    %v5623 = vpop.trf.xlu0
    %v5624 = vpop.trf.xlu0
    %v5625 = vpop.trf.xlu0
    %v5626 = vpop.trf.xlu0
    %v5627 = vpop.trf.xlu0
    %v5628 = vpop.trf.xlu0
    %v5629 = vpop.trf.xlu0
    %v5630 = vpop.trf.xlu0
    %5631 = vxpose.xlu0.c.b16.start [1/8] %v5565, 128
    %5632 = vxpose.xlu0.c.b16.cont [2/8] 0, 128
    %5633 = vxpose.xlu0.c.b16.cont [3/8] 0, 128
    %5634 = vxpose.xlu0.c.b16.cont [4/8] 0, 128
    %5635 = vxpose.xlu0.c.b16.cont [5/8] 0, 128
    %5636 = vxpose.xlu0.c.b16.cont [6/8] 0, 128
    %5637 = vxpose.xlu0.c.b16.cont [7/8] 0, 128
    %5638 = vxpose.xlu0.c.b16.end [8/8] 0, 128
    %v5639 = vpop.trf.xlu0
    %v5640 = vpop.trf.xlu0
    %v5641 = vpop.trf.xlu0
    %v5642 = vpop.trf.xlu0
    %v5643 = vpop.trf.xlu0
    %v5644 = vpop.trf.xlu0
    %v5645 = vpop.trf.xlu0
    %v5646 = vpop.trf.xlu0
    %5647 = vxpose.xlu0.c.b16.start [1/8] %v5569, 128
    %5648 = vxpose.xlu0.c.b16.cont [2/8] 0, 128
    %5649 = vxpose.xlu0.c.b16.cont [3/8] 0, 128
    %5650 = vxpose.xlu0.c.b16.cont [4/8] 0, 128
    %5651 = vxpose.xlu0.c.b16.cont [5/8] 0, 128
    %5652 = vxpose.xlu0.c.b16.cont [6/8] 0, 128
    %5653 = vxpose.xlu0.c.b16.cont [7/8] 0, 128
    %5654 = vxpose.xlu0.c.b16.end [8/8] 0, 128
    %v5655 = vpop.trf.xlu0
    %v5656 = vpop.trf.xlu0
    %v5657 = vpop.trf.xlu0
    %v5658 = vpop.trf.xlu0
    %v5659 = vpop.trf.xlu0
    %v5660 = vpop.trf.xlu0
    %v5661 = vpop.trf.xlu0
    %v5662 = vpop.trf.xlu0
    %5663 = vxpose.xlu0.c.b16.start [1/8] %v5573, 128
    %5664 = vxpose.xlu0.c.b16.cont [2/8] 0, 128
    %5665 = vxpose.xlu0.c.b16.cont [3/8] 0, 128
    %5666 = vxpose.xlu0.c.b16.cont [4/8] 0, 128
    %5667 = vxpose.xlu0.c.b16.cont [5/8] 0, 128
    %5668 = vxpose.xlu0.c.b16.cont [6/8] 0, 128
    %5669 = vxpose.xlu0.c.b16.cont [7/8] 0, 128
    %5670 = vxpose.xlu0.c.b16.end [8/8] 0, 128
    %v5671 = vpop.trf.xlu0
    %v5672 = vpop.trf.xlu0
    %v5673 = vpop.trf.xlu0
    %v5674 = vpop.trf.xlu0
    %v5675 = vpop.trf.xlu0
    %v5676 = vpop.trf.xlu0
    %v5677 = vpop.trf.xlu0
    %v5678 = vpop.trf.xlu0
    %5679 = vxpose.xlu0.c.b16.start [1/8] %v5577, 128
    %5680 = vxpose.xlu0.c.b16.cont [2/8] 0, 128
    %5681 = vxpose.xlu0.c.b16.cont [3/8] 0, 128
    %5682 = vxpose.xlu0.c.b16.cont [4/8] 0, 128
    %5683 = vxpose.xlu0.c.b16.cont [5/8] 0, 128
    %5684 = vxpose.xlu0.c.b16.cont [6/8] 0, 128
    %5685 = vxpose.xlu0.c.b16.cont [7/8] 0, 128
    %5686 = vxpose.xlu0.c.b16.end [8/8] 0, 128
    %v5687 = vpop.trf.xlu0
    %v5688 = vpop.trf.xlu0
    %v5689 = vpop.trf.xlu0
    %v5690 = vpop.trf.xlu0
    %v5691 = vpop.trf.xlu0
    %v5692 = vpop.trf.xlu0
    %v5693 = vpop.trf.xlu0
    %v5694 = vpop.trf.xlu0
    %5695 = vxpose.xlu0.c.b16.start [1/8] %v5581, 128
    %5696 = vxpose.xlu0.c.b16.cont [2/8] 0, 128
    %5697 = vxpose.xlu0.c.b16.cont [3/8] 0, 128
    %5698 = vxpose.xlu0.c.b16.cont [4/8] 0, 128
    %5699 = vxpose.xlu0.c.b16.cont [5/8] 0, 128
    %5700 = vxpose.xlu0.c.b16.cont [6/8] 0, 128
    %5701 = vxpose.xlu0.c.b16.cont [7/8] 0, 128
    %5702 = vxpose.xlu0.c.b16.end [8/8] 0, 128
    %v5703 = vpop.trf.xlu0
    %v5704 = vpop.trf.xlu0
    %v5705 = vpop.trf.xlu0
    %v5706 = vpop.trf.xlu0
    %v5707 = vpop.trf.xlu0
    %v5708 = vpop.trf.xlu0
    %v5709 = vpop.trf.xlu0
    %v5710 = vpop.trf.xlu0
    %v5711 = vrot.slane %v5655, 4
    %v5712 = vsel %vm452, %v5711, %v5591
    %v5714 = vunpack.c.l.s4 1983009808
    %v5715 = vunpack.c.0.s8 %v5714
    %v5716 = vperm.slane %v5712, %v5715
    %v5717 = vrot.slane %v5687, 4
    %v5718 = vsel %vm452, %v5717, %v5623
    %v5720 = vunpack.c.l.s4 1983009808
    %v5721 = vunpack.c.0.s8 %v5720
    %v5722 = vperm.slane %v5718, %v5721
    %v5723 = vrot.slane %v5722, 4
    %v5724 = vsel %vm452, %v5723, %v5716
    %v5726 = vunpack.c.l.s4 1934713408
    %v5727 = vunpack.c.0.s8 %v5726
    %v5728 = vperm.slane %v5724, %v5727
    %v5729 = vrot.slane %v5728, 4
    %v5730 = vsel %vm452, 0, %v5729
    %v5731 = vrot.slane %v5671, 4
    %v5732 = vsel %vm452, %v5731, %v5607
    %v5734 = vunpack.c.l.s4 1983009808
    %v5735 = vunpack.c.0.s8 %v5734
    %v5736 = vperm.slane %v5732, %v5735
    %v5737 = vrot.slane %v5703, 4
    %v5738 = vsel %vm452, %v5737, %v5639
    %v5740 = vunpack.c.l.s4 1983009808
    %v5741 = vunpack.c.0.s8 %v5740
    %v5742 = vperm.slane %v5738, %v5741
    %v5743 = vrot.slane %v5742, 4
    %v5744 = vsel %vm452, %v5743, %v5736
    %v5746 = vunpack.c.l.s4 1934713408
    %v5747 = vunpack.c.0.s8 %v5746
    %v5748 = vperm.slane %v5744, %v5747
    %v5749 = vrot.slane %v5748, 4
    %v5750 = vsel %vm452, 0, %v5749
    %v5753 = vpack.i.b16 %v5748, %v5728
    %v5754 = vshrl.u32 %v5728, 16
    %v5755 = vshrl.u32 %v5748, 16
    %v5756 = vpack.i.b16 %v5755, %v5754
    %v5759 = vpack.i.b16 %v5750, %v5730
    %v5760 = vshrl.u32 %v5730, 16
    %v5761 = vshrl.u32 %v5750, 16
    %v5762 = vpack.i.b16 %v5761, %v5760
    %v5764 = vsel %vm900, %v5357, 0
    %v5767 = vsel %vm904, %v5753, 0
    %5769 = vmatpush.bf16.msra.mxu0 0
    %5770 = vmatpush.bf16.msra.mxu0 0
    %5771 = vmatpush.bf16.msra.mxu0 0
    %5772 = vmatpush.bf16.msra.mxu0 0
    %5773 = vmatpush.bf16.msra.mxu0 0
    %5774 = vmatpush.bf16.msra.mxu0 0
    %5775 = vmatpush.bf16.msra.mxu0 0
    %5776 = vmatpush.bf16.msra.mxu0 %v5767
    %5777 = vmatmul.bf16.gmra.mxu0 %v5764
    %v5778 = vpop.f32.mrf.mxu0
    %v5779 = vadd.f32 0.0, %v5778
    %v5780 = vpop.f32.mrf.mxu0
    %5781 = vdwg.mxu0
    %v5783 = vsel %vm900, %v5360, 0
    %v5786 = vsel %vm904, %v5756, 0
    %5788 = vmatpush.bf16.msra.mxu0 0
    %5789 = vmatpush.bf16.msra.mxu0 0
    %5790 = vmatpush.bf16.msra.mxu0 0
    %5791 = vmatpush.bf16.msra.mxu0 0
    %5792 = vmatpush.bf16.msra.mxu0 0
    %5793 = vmatpush.bf16.msra.mxu0 0
    %5794 = vmatpush.bf16.msra.mxu0 0
    %5795 = vmatpush.bf16.msra.mxu0 %v5786
    %5796 = vmatmul.bf16.gmra.mxu0 %v5783
    %v5797 = vpop.f32.mrf.mxu0
    %v5798 = vadd.f32 0.0, %v5797
    %v5799 = vpop.f32.mrf.mxu0
    %5800 = vdwg.mxu0
    %v5802 = vsel %vm900, %v5363, 0
    %v5805 = vsel %vm904, %v5759, 0
    %5807 = vmatpush.bf16.msra.mxu0 0
    %5808 = vmatpush.bf16.msra.mxu0 0
    %5809 = vmatpush.bf16.msra.mxu0 0
    %5810 = vmatpush.bf16.msra.mxu0 0
    %5811 = vmatpush.bf16.msra.mxu0 0
    %5812 = vmatpush.bf16.msra.mxu0 0
    %5813 = vmatpush.bf16.msra.mxu0 0
    %5814 = vmatpush.bf16.msra.mxu0 %v5805
    %5815 = vmatmul.bf16.gmra.mxu0 %v5802
    %v5816 = vpop.f32.mrf.mxu0
    %v5817 = vadd.f32 0.0, %v5816
    %v5818 = vpop.f32.mrf.mxu0
    %5819 = vdwg.mxu0
    %v5821 = vsel %vm900, %v5366, 0
    %v5824 = vsel %vm904, %v5762, 0
    %5826 = vmatpush.bf16.msra.mxu0 0
    %5827 = vmatpush.bf16.msra.mxu0 0
    %5828 = vmatpush.bf16.msra.mxu0 0
    %5829 = vmatpush.bf16.msra.mxu0 0
    %5830 = vmatpush.bf16.msra.mxu0 0
    %5831 = vmatpush.bf16.msra.mxu0 0
    %5832 = vmatpush.bf16.msra.mxu0 0
    %5833 = vmatpush.bf16.msra.mxu0 %v5824
    %5834 = vmatmul.bf16.gmra.mxu0 %v5821
    %v5835 = vpop.f32.mrf.mxu0
    %v5836 = vadd.f32 0.0, %v5835
    %v5837 = vpop.f32.mrf.mxu0
    %5838 = vdwg.mxu0
    %v5839 = vsel %vm900, %v5779, -inf
    %5840 = vmax.xlane.f32.xlu0 %v5839
    %v5841 = vpop.xlane.xlu0 %5840
    %v5842 = vsel %vm900, %v5798, -inf
    %5843 = vmax.xlane.f32.xlu0 %v5842
    %v5844 = vpop.xlane.xlu0 %5843
    %v5845 = vsel %vm900, %v5817, -inf
    %5846 = vmax.xlane.f32.xlu0 %v5845
    %v5847 = vpop.xlane.xlu0 %5846
    %v5848 = vsel %vm900, %v5836, -inf
    %5849 = vmax.xlane.f32.xlu0 %v5848
    %v5850 = vpop.xlane.xlu0 %5849
    %v5851 = vsub.f32 %v5779, %v5841
    %v5852 = vsub.f32 %v5798, %v5844
    %v5853 = vsub.f32 %v5817, %v5847
    %v5854 = vsub.f32 %v5836, %v5850
    %v5855 = vmul.f32 %v5851, 1.442695
    %v5856 = vpow.pop %v5855
    %v5857 = vmul.f32 %v5852, 1.442695
    %v5858 = vpow.pop %v5857
    %v5859 = vmul.f32 %v5853, 1.442695
    %v5860 = vpow.pop %v5859
    %v5861 = vmul.f32 %v5854, 1.442695
    %v5862 = vpow.pop %v5861
    %v5863 = vsel %vm900, %v5856, 0.0
    %5864 = vadd.xlane.f32.xlu0 %v5863
    %v5865 = vpop.xlane.xlu0 %5864
    %v5866 = vsel %vm900, %v5858, 0.0
    %5867 = vadd.xlane.f32.xlu0 %v5866
    %v5868 = vpop.xlane.xlu0 %5867
    %v5869 = vsel %vm900, %v5860, 0.0
    %5870 = vadd.xlane.f32.xlu0 %v5869
    %v5871 = vpop.xlane.xlu0 %5870
    %v5872 = vsel %vm900, %v5862, 0.0
    %5873 = vadd.xlane.f32.xlu0 %v5872
    %v5874 = vpop.xlane.xlu0 %5873
    %v5875 = vrcp.pop %v5865
    %v5876 = vrcp.pop %v5868
    %v5877 = vrcp.pop %v5871
    %v5878 = vrcp.pop %v5874
    %v5879 = vmul.f32 %v5856, %v5875
    %v5880 = vmul.f32 %v5858, %v5876
    %v5881 = vmul.f32 %v5860, %v5877
    %v5882 = vmul.f32 %v5862, %v5878
    %v5883 = vpack.c.bf16 %v5879, %v5879
    %v5884 = vpack.c.bf16 %v5880, %v5880
    %v5885 = vpack.c.bf16 %v5881, %v5881
    %v5886 = vpack.c.bf16 %v5882, %v5882
    %5887 = vxpose.xlu0.c.b16.start [1/8] %v5307, 128
    %5888 = vxpose.xlu0.c.b16.cont [2/8] 0, 128
    %5889 = vxpose.xlu0.c.b16.cont [3/8] 0, 128
    %5890 = vxpose.xlu0.c.b16.cont [4/8] 0, 128
    %5891 = vxpose.xlu0.c.b16.cont [5/8] 0, 128
    %5892 = vxpose.xlu0.c.b16.cont [6/8] 0, 128
    %5893 = vxpose.xlu0.c.b16.cont [7/8] 0, 128
    %5894 = vxpose.xlu0.c.b16.end [8/8] 0, 128
    %v5895 = vpop.trf.xlu0
    %v5896 = vpop.trf.xlu0
    %v5897 = vpop.trf.xlu0
    %v5898 = vpop.trf.xlu0
    %v5899 = vpop.trf.xlu0
    %v5900 = vpop.trf.xlu0
    %v5901 = vpop.trf.xlu0
    %v5902 = vpop.trf.xlu0
    %5903 = vxpose.xlu0.c.b16.start [1/8] %v5308, 128
    %5904 = vxpose.xlu0.c.b16.cont [2/8] 0, 128
    %5905 = vxpose.xlu0.c.b16.cont [3/8] 0, 128
    %5906 = vxpose.xlu0.c.b16.cont [4/8] 0, 128
    %5907 = vxpose.xlu0.c.b16.cont [5/8] 0, 128
    %5908 = vxpose.xlu0.c.b16.cont [6/8] 0, 128
    %5909 = vxpose.xlu0.c.b16.cont [7/8] 0, 128
    %5910 = vxpose.xlu0.c.b16.end [8/8] 0, 128
    %v5911 = vpop.trf.xlu0
    %v5912 = vpop.trf.xlu0
    %v5913 = vpop.trf.xlu0
    %v5914 = vpop.trf.xlu0
    %v5915 = vpop.trf.xlu0
    %v5916 = vpop.trf.xlu0
    %v5917 = vpop.trf.xlu0
    %v5918 = vpop.trf.xlu0
    %5919 = vxpose.xlu0.c.b16.start [1/8] %v5309, 128
    %5920 = vxpose.xlu0.c.b16.cont [2/8] 0, 128
    %5921 = vxpose.xlu0.c.b16.cont [3/8] 0, 128
    %5922 = vxpose.xlu0.c.b16.cont [4/8] 0, 128
    %5923 = vxpose.xlu0.c.b16.cont [5/8] 0, 128
    %5924 = vxpose.xlu0.c.b16.cont [6/8] 0, 128
    %5925 = vxpose.xlu0.c.b16.cont [7/8] 0, 128
    %5926 = vxpose.xlu0.c.b16.end [8/8] 0, 128
    %v5927 = vpop.trf.xlu0
    %v5928 = vpop.trf.xlu0
    %v5929 = vpop.trf.xlu0
    %v5930 = vpop.trf.xlu0
    %v5931 = vpop.trf.xlu0
    %v5932 = vpop.trf.xlu0
    %v5933 = vpop.trf.xlu0
    %v5934 = vpop.trf.xlu0
    %5935 = vxpose.xlu0.c.b16.start [1/8] %v5310, 128
    %5936 = vxpose.xlu0.c.b16.cont [2/8] 0, 128
    %5937 = vxpose.xlu0.c.b16.cont [3/8] 0, 128
    %5938 = vxpose.xlu0.c.b16.cont [4/8] 0, 128
    %5939 = vxpose.xlu0.c.b16.cont [5/8] 0, 128
    %5940 = vxpose.xlu0.c.b16.cont [6/8] 0, 128
    %5941 = vxpose.xlu0.c.b16.cont [7/8] 0, 128
    %5942 = vxpose.xlu0.c.b16.end [8/8] 0, 128
    %v5943 = vpop.trf.xlu0
    %v5944 = vpop.trf.xlu0
    %v5945 = vpop.trf.xlu0
    %v5946 = vpop.trf.xlu0
    %v5947 = vpop.trf.xlu0
    %v5948 = vpop.trf.xlu0
    %v5949 = vpop.trf.xlu0
    %v5950 = vpop.trf.xlu0
    %5951 = vxpose.xlu0.c.b16.start [1/8] %v5311, 128
    %5952 = vxpose.xlu0.c.b16.cont [2/8] 0, 128
    %5953 = vxpose.xlu0.c.b16.cont [3/8] 0, 128
    %5954 = vxpose.xlu0.c.b16.cont [4/8] 0, 128
    %5955 = vxpose.xlu0.c.b16.cont [5/8] 0, 128
    %5956 = vxpose.xlu0.c.b16.cont [6/8] 0, 128
    %5957 = vxpose.xlu0.c.b16.cont [7/8] 0, 128
    %5958 = vxpose.xlu0.c.b16.end [8/8] 0, 128
    %v5959 = vpop.trf.xlu0
    %v5960 = vpop.trf.xlu0
    %v5961 = vpop.trf.xlu0
    %v5962 = vpop.trf.xlu0
    %v5963 = vpop.trf.xlu0
    %v5964 = vpop.trf.xlu0
    %v5965 = vpop.trf.xlu0
    %v5966 = vpop.trf.xlu0
    %5967 = vxpose.xlu0.c.b16.start [1/8] %v5312, 128
    %5968 = vxpose.xlu0.c.b16.cont [2/8] 0, 128
    %5969 = vxpose.xlu0.c.b16.cont [3/8] 0, 128
    %5970 = vxpose.xlu0.c.b16.cont [4/8] 0, 128
    %5971 = vxpose.xlu0.c.b16.cont [5/8] 0, 128
    %5972 = vxpose.xlu0.c.b16.cont [6/8] 0, 128
    %5973 = vxpose.xlu0.c.b16.cont [7/8] 0, 128
    %5974 = vxpose.xlu0.c.b16.end [8/8] 0, 128
    %v5975 = vpop.trf.xlu0
    %v5976 = vpop.trf.xlu0
    %v5977 = vpop.trf.xlu0
    %v5978 = vpop.trf.xlu0
    %v5979 = vpop.trf.xlu0
    %v5980 = vpop.trf.xlu0
    %v5981 = vpop.trf.xlu0
    %v5982 = vpop.trf.xlu0
    %5983 = vxpose.xlu0.c.b16.start [1/8] %v5313, 128
    %5984 = vxpose.xlu0.c.b16.cont [2/8] 0, 128
    %5985 = vxpose.xlu0.c.b16.cont [3/8] 0, 128
    %5986 = vxpose.xlu0.c.b16.cont [4/8] 0, 128
    %5987 = vxpose.xlu0.c.b16.cont [5/8] 0, 128
    %5988 = vxpose.xlu0.c.b16.cont [6/8] 0, 128
    %5989 = vxpose.xlu0.c.b16.cont [7/8] 0, 128
    %5990 = vxpose.xlu0.c.b16.end [8/8] 0, 128
    %v5991 = vpop.trf.xlu0
    %v5992 = vpop.trf.xlu0
    %v5993 = vpop.trf.xlu0
    %v5994 = vpop.trf.xlu0
    %v5995 = vpop.trf.xlu0
    %v5996 = vpop.trf.xlu0
    %v5997 = vpop.trf.xlu0
    %v5998 = vpop.trf.xlu0
    %5999 = vxpose.xlu0.c.b16.start [1/8] %v5314, 128
    %6000 = vxpose.xlu0.c.b16.cont [2/8] 0, 128
    %6001 = vxpose.xlu0.c.b16.cont [3/8] 0, 128
    %6002 = vxpose.xlu0.c.b16.cont [4/8] 0, 128
    %6003 = vxpose.xlu0.c.b16.cont [5/8] 0, 128
    %6004 = vxpose.xlu0.c.b16.cont [6/8] 0, 128
    %6005 = vxpose.xlu0.c.b16.cont [7/8] 0, 128
    %6006 = vxpose.xlu0.c.b16.end [8/8] 0, 128
    %v6007 = vpop.trf.xlu0
    %v6008 = vpop.trf.xlu0
    %v6009 = vpop.trf.xlu0
    %v6010 = vpop.trf.xlu0
    %v6011 = vpop.trf.xlu0
    %v6012 = vpop.trf.xlu0
    %v6013 = vpop.trf.xlu0
    %v6014 = vpop.trf.xlu0
    %v6015 = vrot.slane %v5959, 4
    %v6016 = vsel %vm452, %v6015, %v5895
    %v6018 = vunpack.c.l.s4 1983009808
    %v6019 = vunpack.c.0.s8 %v6018
    %v6020 = vperm.slane %v6016, %v6019
    %v6021 = vrot.slane %v5991, 4
    %v6022 = vsel %vm452, %v6021, %v5927
    %v6024 = vunpack.c.l.s4 1983009808
    %v6025 = vunpack.c.0.s8 %v6024
    %v6026 = vperm.slane %v6022, %v6025
    %v6027 = vrot.slane %v6026, 4
    %v6028 = vsel %vm452, %v6027, %v6020
    %v6029 = vrot.slane %v6020, 4
    %v6030 = vsel %vm452, %v6026, %v6029
    %v6032 = vunpack.c.l.s4 1934713408
    %v6033 = vunpack.c.0.s8 %v6032
    %v6034 = vperm.slane %v6028, %v6033
    %v6036 = vunpack.c.l.s4 1934713408
    %v6037 = vunpack.c.0.s8 %v6036
    %v6038 = vperm.slane %v6030, %v6037
    %v6039 = vrot.slane %v6034, 4
    %v6040 = vsel %vm452, 0, %v6039
    %v6041 = vrot.slane %v6038, 4
    %v6042 = vsel %vm452, 0, %v6041
    %v6043 = vrot.slane %v5975, 4
    %v6044 = vsel %vm452, %v6043, %v5911
    %v6046 = vunpack.c.l.s4 1983009808
    %v6047 = vunpack.c.0.s8 %v6046
    %v6048 = vperm.slane %v6044, %v6047
    %v6049 = vrot.slane %v6007, 4
    %v6050 = vsel %vm452, %v6049, %v5943
    %v6052 = vunpack.c.l.s4 1983009808
    %v6053 = vunpack.c.0.s8 %v6052
    %v6054 = vperm.slane %v6050, %v6053
    %v6055 = vrot.slane %v6054, 4
    %v6056 = vsel %vm452, %v6055, %v6048
    %v6057 = vrot.slane %v6048, 4
    %v6058 = vsel %vm452, %v6054, %v6057
    %v6060 = vunpack.c.l.s4 1934713408
    %v6061 = vunpack.c.0.s8 %v6060
    %v6062 = vperm.slane %v6056, %v6061
    %v6064 = vunpack.c.l.s4 1934713408
    %v6065 = vunpack.c.0.s8 %v6064
    %v6066 = vperm.slane %v6058, %v6065
    %v6067 = vrot.slane %v6062, 4
    %v6068 = vsel %vm452, 0, %v6067
    %v6069 = vrot.slane %v6066, 4
    %v6070 = vsel %vm452, 0, %v6069
    %v6073 = vpack.i.b16 %v6062, %v6034
    %v6075 = vshrl.u32 %v6034, 16
    %v6076 = vshrl.u32 %v6062, 16
    %v6077 = vpack.i.b16 %v6076, %v6075
    %v6081 = vpack.i.b16 %v6068, %v6040
    %v6083 = vshrl.u32 %v6040, 16
    %v6084 = vshrl.u32 %v6068, 16
    %v6085 = vpack.i.b16 %v6084, %v6083
    %v6089 = vpack.i.b16 %v6066, %v6038
    %v6091 = vshrl.u32 %v6038, 16
    %v6092 = vshrl.u32 %v6066, 16
    %v6093 = vpack.i.b16 %v6092, %v6091
    %v6097 = vpack.i.b16 %v6070, %v6042
    %v6099 = vshrl.u32 %v6042, 16
    %v6100 = vshrl.u32 %v6070, 16
    %v6101 = vpack.i.b16 %v6100, %v6099
    %6103 = vxpose.xlu0.c.b16.start [1/8] %v6073, 128
    %6104 = vxpose.xlu0.c.b16.cont [2/8] 0, 128
    %6105 = vxpose.xlu0.c.b16.cont [3/8] 0, 128
    %6106 = vxpose.xlu0.c.b16.cont [4/8] 0, 128
    %6107 = vxpose.xlu0.c.b16.cont [5/8] 0, 128
    %6108 = vxpose.xlu0.c.b16.cont [6/8] 0, 128
    %6109 = vxpose.xlu0.c.b16.cont [7/8] 0, 128
    %6110 = vxpose.xlu0.c.b16.end [8/8] 0, 128
    %v6111 = vpop.trf.xlu0
    %v6112 = vpop.trf.xlu0
    %v6113 = vpop.trf.xlu0
    %v6114 = vpop.trf.xlu0
    %v6115 = vpop.trf.xlu0
    %v6116 = vpop.trf.xlu0
    %v6117 = vpop.trf.xlu0
    %v6118 = vpop.trf.xlu0
    %6119 = vxpose.xlu0.c.b16.start [1/8] %v6077, 128
    %6120 = vxpose.xlu0.c.b16.cont [2/8] 0, 128
    %6121 = vxpose.xlu0.c.b16.cont [3/8] 0, 128
    %6122 = vxpose.xlu0.c.b16.cont [4/8] 0, 128
    %6123 = vxpose.xlu0.c.b16.cont [5/8] 0, 128
    %6124 = vxpose.xlu0.c.b16.cont [6/8] 0, 128
    %6125 = vxpose.xlu0.c.b16.cont [7/8] 0, 128
    %6126 = vxpose.xlu0.c.b16.end [8/8] 0, 128
    %v6127 = vpop.trf.xlu0
    %v6128 = vpop.trf.xlu0
    %v6129 = vpop.trf.xlu0
    %v6130 = vpop.trf.xlu0
    %v6131 = vpop.trf.xlu0
    %v6132 = vpop.trf.xlu0
    %v6133 = vpop.trf.xlu0
    %v6134 = vpop.trf.xlu0
    %6135 = vxpose.xlu0.c.b16.start [1/8] %v6081, 128
    %6136 = vxpose.xlu0.c.b16.cont [2/8] 0, 128
    %6137 = vxpose.xlu0.c.b16.cont [3/8] 0, 128
    %6138 = vxpose.xlu0.c.b16.cont [4/8] 0, 128
    %6139 = vxpose.xlu0.c.b16.cont [5/8] 0, 128
    %6140 = vxpose.xlu0.c.b16.cont [6/8] 0, 128
    %6141 = vxpose.xlu0.c.b16.cont [7/8] 0, 128
    %6142 = vxpose.xlu0.c.b16.end [8/8] 0, 128
    %v6143 = vpop.trf.xlu0
    %v6144 = vpop.trf.xlu0
    %v6145 = vpop.trf.xlu0
    %v6146 = vpop.trf.xlu0
    %v6147 = vpop.trf.xlu0
    %v6148 = vpop.trf.xlu0
    %v6149 = vpop.trf.xlu0
    %v6150 = vpop.trf.xlu0
    %6151 = vxpose.xlu0.c.b16.start [1/8] %v6085, 128
    %6152 = vxpose.xlu0.c.b16.cont [2/8] 0, 128
    %6153 = vxpose.xlu0.c.b16.cont [3/8] 0, 128
    %6154 = vxpose.xlu0.c.b16.cont [4/8] 0, 128
    %6155 = vxpose.xlu0.c.b16.cont [5/8] 0, 128
    %6156 = vxpose.xlu0.c.b16.cont [6/8] 0, 128
    %6157 = vxpose.xlu0.c.b16.cont [7/8] 0, 128
    %6158 = vxpose.xlu0.c.b16.end [8/8] 0, 128
    %v6159 = vpop.trf.xlu0
    %v6160 = vpop.trf.xlu0
    %v6161 = vpop.trf.xlu0
    %v6162 = vpop.trf.xlu0
    %v6163 = vpop.trf.xlu0
    %v6164 = vpop.trf.xlu0
    %v6165 = vpop.trf.xlu0
    %v6166 = vpop.trf.xlu0
    %6167 = vxpose.xlu0.c.b16.start [1/8] %v6089, 128
    %6168 = vxpose.xlu0.c.b16.cont [2/8] 0, 128
    %6169 = vxpose.xlu0.c.b16.cont [3/8] 0, 128
    %6170 = vxpose.xlu0.c.b16.cont [4/8] 0, 128
    %6171 = vxpose.xlu0.c.b16.cont [5/8] 0, 128
    %6172 = vxpose.xlu0.c.b16.cont [6/8] 0, 128
    %6173 = vxpose.xlu0.c.b16.cont [7/8] 0, 128
    %6174 = vxpose.xlu0.c.b16.end [8/8] 0, 128
    %v6175 = vpop.trf.xlu0
    %v6176 = vpop.trf.xlu0
    %v6177 = vpop.trf.xlu0
    %v6178 = vpop.trf.xlu0
    %v6179 = vpop.trf.xlu0
    %v6180 = vpop.trf.xlu0
    %v6181 = vpop.trf.xlu0
    %v6182 = vpop.trf.xlu0
    %6183 = vxpose.xlu0.c.b16.start [1/8] %v6093, 128
    %6184 = vxpose.xlu0.c.b16.cont [2/8] 0, 128
    %6185 = vxpose.xlu0.c.b16.cont [3/8] 0, 128
    %6186 = vxpose.xlu0.c.b16.cont [4/8] 0, 128
    %6187 = vxpose.xlu0.c.b16.cont [5/8] 0, 128
    %6188 = vxpose.xlu0.c.b16.cont [6/8] 0, 128
    %6189 = vxpose.xlu0.c.b16.cont [7/8] 0, 128
    %6190 = vxpose.xlu0.c.b16.end [8/8] 0, 128
    %v6191 = vpop.trf.xlu0
    %v6192 = vpop.trf.xlu0
    %v6193 = vpop.trf.xlu0
    %v6194 = vpop.trf.xlu0
    %v6195 = vpop.trf.xlu0
    %v6196 = vpop.trf.xlu0
    %v6197 = vpop.trf.xlu0
    %v6198 = vpop.trf.xlu0
    %6199 = vxpose.xlu0.c.b16.start [1/8] %v6097, 128
    %6200 = vxpose.xlu0.c.b16.cont [2/8] 0, 128
    %6201 = vxpose.xlu0.c.b16.cont [3/8] 0, 128
    %6202 = vxpose.xlu0.c.b16.cont [4/8] 0, 128
    %6203 = vxpose.xlu0.c.b16.cont [5/8] 0, 128
    %6204 = vxpose.xlu0.c.b16.cont [6/8] 0, 128
    %6205 = vxpose.xlu0.c.b16.cont [7/8] 0, 128
    %6206 = vxpose.xlu0.c.b16.end [8/8] 0, 128
    %v6207 = vpop.trf.xlu0
    %v6208 = vpop.trf.xlu0
    %v6209 = vpop.trf.xlu0
    %v6210 = vpop.trf.xlu0
    %v6211 = vpop.trf.xlu0
    %v6212 = vpop.trf.xlu0
    %v6213 = vpop.trf.xlu0
    %v6214 = vpop.trf.xlu0
    %6215 = vxpose.xlu0.c.b16.start [1/8] %v6101, 128
    %6216 = vxpose.xlu0.c.b16.cont [2/8] 0, 128
    %6217 = vxpose.xlu0.c.b16.cont [3/8] 0, 128
    %6218 = vxpose.xlu0.c.b16.cont [4/8] 0, 128
    %6219 = vxpose.xlu0.c.b16.cont [5/8] 0, 128
    %6220 = vxpose.xlu0.c.b16.cont [6/8] 0, 128
    %6221 = vxpose.xlu0.c.b16.cont [7/8] 0, 128
    %6222 = vxpose.xlu0.c.b16.end [8/8] 0, 128
    %v6223 = vpop.trf.xlu0
    %v6224 = vpop.trf.xlu0
    %v6225 = vpop.trf.xlu0
    %v6226 = vpop.trf.xlu0
    %v6227 = vpop.trf.xlu0
    %v6228 = vpop.trf.xlu0
    %v6229 = vpop.trf.xlu0
    %v6230 = vpop.trf.xlu0
    %v6231 = vrot.slane %v6175, 4
    %v6232 = vsel %vm452, %v6231, %v6111
    %v6234 = vunpack.c.l.s4 1983009808
    %v6235 = vunpack.c.0.s8 %v6234
    %v6236 = vperm.slane %v6232, %v6235
    %v6237 = vrot.slane %v6207, 4
    %v6238 = vsel %vm452, %v6237, %v6143
    %v6240 = vunpack.c.l.s4 1983009808
    %v6241 = vunpack.c.0.s8 %v6240
    %v6242 = vperm.slane %v6238, %v6241
    %v6243 = vrot.slane %v6242, 4
    %v6244 = vsel %vm452, %v6243, %v6236
    %v6246 = vunpack.c.l.s4 1934713408
    %v6247 = vunpack.c.0.s8 %v6246
    %v6248 = vperm.slane %v6244, %v6247
    %v6249 = vrot.slane %v6248, 4
    %v6250 = vsel %vm452, 0, %v6249
    %v6251 = vrot.slane %v6191, 4
    %v6252 = vsel %vm452, %v6251, %v6127
    %v6254 = vunpack.c.l.s4 1983009808
    %v6255 = vunpack.c.0.s8 %v6254
    %v6256 = vperm.slane %v6252, %v6255
    %v6257 = vrot.slane %v6223, 4
    %v6258 = vsel %vm452, %v6257, %v6159
    %v6260 = vunpack.c.l.s4 1983009808
    %v6261 = vunpack.c.0.s8 %v6260
    %v6262 = vperm.slane %v6258, %v6261
    %v6263 = vrot.slane %v6262, 4
    %v6264 = vsel %vm452, %v6263, %v6256
    %v6266 = vunpack.c.l.s4 1934713408
    %v6267 = vunpack.c.0.s8 %v6266
    %v6268 = vperm.slane %v6264, %v6267
    %v6269 = vrot.slane %v6268, 4
    %v6270 = vsel %vm452, 0, %v6269
    %v6273 = vpack.i.b16 %v6268, %v6248
    %v6274 = vshrl.u32 %v6248, 16
    %v6275 = vshrl.u32 %v6268, 16
    %v6276 = vpack.i.b16 %v6275, %v6274
    %v6279 = vpack.i.b16 %v6270, %v6250
    %v6280 = vshrl.u32 %v6250, 16
    %v6281 = vshrl.u32 %v6270, 16
    %v6282 = vpack.i.b16 %v6281, %v6280
    %v6284 = vsel %vm900, %v6273, 0
    %v6287 = vsel %vm900, %v5883, 0
    %6289 = vmatpush.bf16.xpose.msra.mxu0 0
    %6290 = vmatpush.bf16.xpose.msra.mxu0 0
    %6291 = vmatpush.bf16.xpose.msra.mxu0 0
    %6292 = vmatpush.bf16.xpose.msra.mxu0 0
    %6293 = vmatpush.bf16.xpose.msra.mxu0 0
    %6294 = vmatpush.bf16.xpose.msra.mxu0 0
    %6295 = vmatpush.bf16.xpose.msra.mxu0 0
    %6296 = vmatpush.bf16.xpose.msra.mxu0 %v6287
    %6297 = vmatmul.bf16.gmra.mxu0 %v6284
    %v6298 = vpop.f32.mrf.mxu0
    %v6299 = vadd.f32 0.0, %v6298
    %v6300 = vpop.f32.mrf.mxu0
    %6301 = vdwg.mxu0
    %v6303 = vsel %vm900, %v6276, 0
    %v6306 = vsel %vm900, %v5884, 0
    %6308 = vmatpush.bf16.xpose.msra.mxu0 0
    %6309 = vmatpush.bf16.xpose.msra.mxu0 0
    %6310 = vmatpush.bf16.xpose.msra.mxu0 0
    %6311 = vmatpush.bf16.xpose.msra.mxu0 0
    %6312 = vmatpush.bf16.xpose.msra.mxu0 0
    %6313 = vmatpush.bf16.xpose.msra.mxu0 0
    %6314 = vmatpush.bf16.xpose.msra.mxu0 0
    %6315 = vmatpush.bf16.xpose.msra.mxu0 %v6306
    %6316 = vmatmul.bf16.gmra.mxu0 %v6303
    %v6317 = vpop.f32.mrf.mxu0
    %v6318 = vadd.f32 0.0, %v6317
    %v6319 = vpop.f32.mrf.mxu0
    %6320 = vdwg.mxu0
    %v6322 = vsel %vm900, %v6279, 0
    %v6325 = vsel %vm900, %v5885, 0
    %6327 = vmatpush.bf16.xpose.msra.mxu0 0
    %6328 = vmatpush.bf16.xpose.msra.mxu0 0
    %6329 = vmatpush.bf16.xpose.msra.mxu0 0
    %6330 = vmatpush.bf16.xpose.msra.mxu0 0
    %6331 = vmatpush.bf16.xpose.msra.mxu0 0
    %6332 = vmatpush.bf16.xpose.msra.mxu0 0
    %6333 = vmatpush.bf16.xpose.msra.mxu0 0
    %6334 = vmatpush.bf16.xpose.msra.mxu0 %v6325
    %6335 = vmatmul.bf16.gmra.mxu0 %v6322
    %v6336 = vpop.f32.mrf.mxu0
    %v6337 = vadd.f32 0.0, %v6336
    %v6338 = vpop.f32.mrf.mxu0
    %6339 = vdwg.mxu0
    %v6341 = vsel %vm900, %v6282, 0
    %v6344 = vsel %vm900, %v5886, 0
    %6346 = vmatpush.bf16.xpose.msra.mxu0 0
    %6347 = vmatpush.bf16.xpose.msra.mxu0 0
    %6348 = vmatpush.bf16.xpose.msra.mxu0 0
    %6349 = vmatpush.bf16.xpose.msra.mxu0 0
    %6350 = vmatpush.bf16.xpose.msra.mxu0 0
    %6351 = vmatpush.bf16.xpose.msra.mxu0 0
    %6352 = vmatpush.bf16.xpose.msra.mxu0 0
    %6353 = vmatpush.bf16.xpose.msra.mxu0 %v6344
    %6354 = vmatmul.bf16.gmra.mxu0 %v6341
    %v6355 = vpop.f32.mrf.mxu0
    %v6356 = vadd.f32 0.0, %v6355
    %v6357 = vpop.f32.mrf.mxu0
    %6358 = vdwg.mxu0
    %6359 = vxpose.xlu0.b32.start [1/16] %v6299, 128
    %6360 = vxpose.xlu0.b32.cont [2/16] 0.0, 128
    %6361 = vxpose.xlu0.b32.cont [3/16] 0.0, 128
    %6362 = vxpose.xlu0.b32.cont [4/16] 0.0, 128
    %6363 = vxpose.xlu0.b32.cont [5/16] 0.0, 128
    %6364 = vxpose.xlu0.b32.cont [6/16] 0.0, 128
    %6365 = vxpose.xlu0.b32.cont [7/16] 0.0, 128
    %6366 = vxpose.xlu0.b32.cont [8/16] 0.0, 128
    %6367 = vxpose.xlu0.b32.cont [9/16] 0.0, 128
    %6368 = vxpose.xlu0.b32.cont [10/16] 0.0, 128
    %6369 = vxpose.xlu0.b32.cont [11/16] 0.0, 128
    %6370 = vxpose.xlu0.b32.cont [12/16] 0.0, 128
    %6371 = vxpose.xlu0.b32.cont [13/16] 0.0, 128
    %6372 = vxpose.xlu0.b32.cont [14/16] 0.0, 128
    %6373 = vxpose.xlu0.b32.cont [15/16] 0.0, 128
    %6374 = vxpose.xlu0.b32.end [16/16] 0.0, 128
    %v6375 = vpop.trf.xlu0
    %v6376 = vpop.trf.xlu0
    %v6377 = vpop.trf.xlu0
    %v6378 = vpop.trf.xlu0
    %v6379 = vpop.trf.xlu0
    %v6380 = vpop.trf.xlu0
    %v6381 = vpop.trf.xlu0
    %v6382 = vpop.trf.xlu0
    %v6383 = vpop.trf.xlu0
    %v6384 = vpop.trf.xlu0
    %v6385 = vpop.trf.xlu0
    %v6386 = vpop.trf.xlu0
    %v6387 = vpop.trf.xlu0
    %v6388 = vpop.trf.xlu0
    %v6389 = vpop.trf.xlu0
    %v6390 = vpop.trf.xlu0
    %6391 = vxpose.xlu0.b32.start [1/16] %v6318, 128
    %6392 = vxpose.xlu0.b32.cont [2/16] 0.0, 128
    %6393 = vxpose.xlu0.b32.cont [3/16] 0.0, 128
    %6394 = vxpose.xlu0.b32.cont [4/16] 0.0, 128
    %6395 = vxpose.xlu0.b32.cont [5/16] 0.0, 128
    %6396 = vxpose.xlu0.b32.cont [6/16] 0.0, 128
    %6397 = vxpose.xlu0.b32.cont [7/16] 0.0, 128
    %6398 = vxpose.xlu0.b32.cont [8/16] 0.0, 128
    %6399 = vxpose.xlu0.b32.cont [9/16] 0.0, 128
    %6400 = vxpose.xlu0.b32.cont [10/16] 0.0, 128
    %6401 = vxpose.xlu0.b32.cont [11/16] 0.0, 128
    %6402 = vxpose.xlu0.b32.cont [12/16] 0.0, 128
    %6403 = vxpose.xlu0.b32.cont [13/16] 0.0, 128
    %6404 = vxpose.xlu0.b32.cont [14/16] 0.0, 128
    %6405 = vxpose.xlu0.b32.cont [15/16] 0.0, 128
    %6406 = vxpose.xlu0.b32.end [16/16] 0.0, 128
    %v6407 = vpop.trf.xlu0
    %v6408 = vpop.trf.xlu0
    %v6409 = vpop.trf.xlu0
    %v6410 = vpop.trf.xlu0
    %v6411 = vpop.trf.xlu0
    %v6412 = vpop.trf.xlu0
    %v6413 = vpop.trf.xlu0
    %v6414 = vpop.trf.xlu0
    %v6415 = vpop.trf.xlu0
    %v6416 = vpop.trf.xlu0
    %v6417 = vpop.trf.xlu0
    %v6418 = vpop.trf.xlu0
    %v6419 = vpop.trf.xlu0
    %v6420 = vpop.trf.xlu0
    %v6421 = vpop.trf.xlu0
    %v6422 = vpop.trf.xlu0
    %6423 = vxpose.xlu0.b32.start [1/16] %v6337, 128
    %6424 = vxpose.xlu0.b32.cont [2/16] 0.0, 128
    %6425 = vxpose.xlu0.b32.cont [3/16] 0.0, 128
    %6426 = vxpose.xlu0.b32.cont [4/16] 0.0, 128
    %6427 = vxpose.xlu0.b32.cont [5/16] 0.0, 128
    %6428 = vxpose.xlu0.b32.cont [6/16] 0.0, 128
    %6429 = vxpose.xlu0.b32.cont [7/16] 0.0, 128
    %6430 = vxpose.xlu0.b32.cont [8/16] 0.0, 128
    %6431 = vxpose.xlu0.b32.cont [9/16] 0.0, 128
    %6432 = vxpose.xlu0.b32.cont [10/16] 0.0, 128
    %6433 = vxpose.xlu0.b32.cont [11/16] 0.0, 128
    %6434 = vxpose.xlu0.b32.cont [12/16] 0.0, 128
    %6435 = vxpose.xlu0.b32.cont [13/16] 0.0, 128
    %6436 = vxpose.xlu0.b32.cont [14/16] 0.0, 128
    %6437 = vxpose.xlu0.b32.cont [15/16] 0.0, 128
    %6438 = vxpose.xlu0.b32.end [16/16] 0.0, 128
    %v6439 = vpop.trf.xlu0
    %v6440 = vpop.trf.xlu0
    %v6441 = vpop.trf.xlu0
    %v6442 = vpop.trf.xlu0
    %v6443 = vpop.trf.xlu0
    %v6444 = vpop.trf.xlu0
    %v6445 = vpop.trf.xlu0
    %v6446 = vpop.trf.xlu0
    %v6447 = vpop.trf.xlu0
    %v6448 = vpop.trf.xlu0
    %v6449 = vpop.trf.xlu0
    %v6450 = vpop.trf.xlu0
    %v6451 = vpop.trf.xlu0
    %v6452 = vpop.trf.xlu0
    %v6453 = vpop.trf.xlu0
    %v6454 = vpop.trf.xlu0
    %6455 = vxpose.xlu0.b32.start [1/16] %v6356, 128
    %6456 = vxpose.xlu0.b32.cont [2/16] 0.0, 128
    %6457 = vxpose.xlu0.b32.cont [3/16] 0.0, 128
    %6458 = vxpose.xlu0.b32.cont [4/16] 0.0, 128
    %6459 = vxpose.xlu0.b32.cont [5/16] 0.0, 128
    %6460 = vxpose.xlu0.b32.cont [6/16] 0.0, 128
    %6461 = vxpose.xlu0.b32.cont [7/16] 0.0, 128
    %6462 = vxpose.xlu0.b32.cont [8/16] 0.0, 128
    %6463 = vxpose.xlu0.b32.cont [9/16] 0.0, 128
    %6464 = vxpose.xlu0.b32.cont [10/16] 0.0, 128
    %6465 = vxpose.xlu0.b32.cont [11/16] 0.0, 128
    %6466 = vxpose.xlu0.b32.cont [12/16] 0.0, 128
    %6467 = vxpose.xlu0.b32.cont [13/16] 0.0, 128
    %6468 = vxpose.xlu0.b32.cont [14/16] 0.0, 128
    %6469 = vxpose.xlu0.b32.cont [15/16] 0.0, 128
    %6470 = vxpose.xlu0.b32.end [16/16] 0.0, 128
    %v6471 = vpop.trf.xlu0
    %v6472 = vpop.trf.xlu0
    %v6473 = vpop.trf.xlu0
    %v6474 = vpop.trf.xlu0
    %v6475 = vpop.trf.xlu0
    %v6476 = vpop.trf.xlu0
    %v6477 = vpop.trf.xlu0
    %v6478 = vpop.trf.xlu0
    %v6479 = vpop.trf.xlu0
    %v6480 = vpop.trf.xlu0
    %v6481 = vpop.trf.xlu0
    %v6482 = vpop.trf.xlu0
    %v6483 = vpop.trf.xlu0
    %v6484 = vpop.trf.xlu0
    %v6485 = vpop.trf.xlu0
    %v6486 = vpop.trf.xlu0
    %v6487 = vrot.slane %v6439, 4
    %v6488 = vsel %vm221, %v6487, %v6375
    %v6489 = vrot.slane %v6375, 4
    %v6490 = vsel %vm221, %v6439, %v6489
    %v6492 = vunpack.c.l.s4 1983009808
    %v6493 = vunpack.c.0.s8 %v6492
    %v6494 = vperm.slane %v6488, %v6493
    %v6496 = vunpack.c.l.s4 1983009808
    %v6497 = vunpack.c.0.s8 %v6496
    %v6498 = vperm.slane %v6490, %v6497
    %v6499 = vrot.slane %v6471, 4
    %v6500 = vsel %vm221, %v6499, %v6407
    %v6501 = vrot.slane %v6407, 4
    %v6502 = vsel %vm221, %v6471, %v6501
    %v6504 = vunpack.c.l.s4 1983009808
    %v6505 = vunpack.c.0.s8 %v6504
    %v6506 = vperm.slane %v6500, %v6505
    %v6508 = vunpack.c.l.s4 1983009808
    %v6509 = vunpack.c.0.s8 %v6508
    %v6510 = vperm.slane %v6502, %v6509
    %v6511 = vrot.slane %v6506, 4
    %v6512 = vsel %vm221, %v6511, %v6494
    %v6513 = vrot.slane %v6494, 4
    %v6514 = vsel %vm221, %v6506, %v6513
    %v6516 = vunpack.c.l.s4 1934713408
    %v6517 = vunpack.c.0.s8 %v6516
    %v6518 = vperm.slane %v6512, %v6517
    %v6520 = vunpack.c.l.s4 1934713408
    %v6521 = vunpack.c.0.s8 %v6520
    %v6522 = vperm.slane %v6514, %v6521
    %v6523 = vrot.slane %v6510, 4
    %v6524 = vsel %vm221, %v6523, %v6498
    %v6525 = vrot.slane %v6498, 4
    %v6526 = vsel %vm221, %v6510, %v6525
    %v6528 = vunpack.c.l.s4 1934713408
    %v6529 = vunpack.c.0.s8 %v6528
    %v6530 = vperm.slane %v6524, %v6529
    %v6532 = vunpack.c.l.s4 1934713408
    %v6533 = vunpack.c.0.s8 %v6532
    %v6534 = vperm.slane %v6526, %v6533
    %v6535 = vrot.slane %v6518, 4
    %v6536 = vsel %vm221, 0.0, %v6535
    %v6537 = vrot.slane %v6522, 4
    %v6538 = vsel %vm221, 0.0, %v6537
    %v6539 = vrot.slane %v6530, 4
    %v6540 = vsel %vm221, 0.0, %v6539
    %v6541 = vrot.slane %v6534, 4
    %v6542 = vsel %vm221, 0.0, %v6541
    %v6543 = vsel %vm221, %v6537, %v6518
    %v6545 = vunpack.c.l.s4 1983009808
    %v6546 = vunpack.c.0.s8 %v6545
    %v6547 = vperm.slane %v6543, %v6546
    %v6548 = vrot.slane %v6538, 4
    %v6549 = vsel %vm221, %v6548, %v6536
    %v6551 = vunpack.c.l.s4 1983009808
    %v6552 = vunpack.c.0.s8 %v6551
    %v6553 = vperm.slane %v6549, %v6552
    %v6554 = vsel %vm221, %v6541, %v6530
    %v6556 = vunpack.c.l.s4 1983009808
    %v6557 = vunpack.c.0.s8 %v6556
    %v6558 = vperm.slane %v6554, %v6557
    %v6559 = vrot.slane %v6542, 4
    %v6560 = vsel %vm221, %v6559, %v6540
    %v6562 = vunpack.c.l.s4 1983009808
    %v6563 = vunpack.c.0.s8 %v6562
    %v6564 = vperm.slane %v6560, %v6563
    %v6565 = vrot.slane %v6553, 4
    %v6566 = vsel %vm221, %v6565, %v6547
    %v6567 = vrot.slane %v6547, 4
    %v6568 = vsel %vm221, %v6553, %v6567
    %v6570 = vunpack.c.l.s4 1934713408
    %v6571 = vunpack.c.0.s8 %v6570
    %v6572 = vperm.slane %v6566, %v6571
    %v6574 = vunpack.c.l.s4 1934713408
    %v6575 = vunpack.c.0.s8 %v6574
    %v6576 = vperm.slane %v6568, %v6575
    %v6577 = vrot.slane %v6564, 4
    %v6578 = vsel %vm221, %v6577, %v6558
    %v6579 = vrot.slane %v6558, 4
    %v6580 = vsel %vm221, %v6564, %v6579
    %v6582 = vunpack.c.l.s4 1934713408
    %v6583 = vunpack.c.0.s8 %v6582
    %v6584 = vperm.slane %v6578, %v6583
    %v6586 = vunpack.c.l.s4 1934713408
    %v6587 = vunpack.c.0.s8 %v6586
    %v6588 = vperm.slane %v6580, %v6587
    %v6589 = vrot.slane %v6584, 4
    %v6590 = vsel %vm221, %v6589, %v6572
    %v6591 = vrot.slane %v6572, 4
    %v6592 = vsel %vm221, %v6584, %v6591
    %v6593 = vrot.slane %v6588, 4
    %v6594 = vsel %vm221, %v6593, %v6576
    %v6595 = vrot.slane %v6576, 4
    %v6596 = vsel %vm221, %v6588, %v6595
    %6598 = vrot.lane.b32.xlu0 %v6592, 8
    %v6599 = vpop.permute.xlu0 %6598
    %6602 = vrot.lane.b32.xlu0 %v6594, 16
    %v6603 = vpop.permute.xlu0 %6602
    %6606 = vrot.lane.b32.xlu0 %v6596, 24
    %v6607 = vpop.permute.xlu0 %6606
    %v6609 = vsel %vm900, %v6590, %v6599
    %v6610 = vsel %vm1749, %v6609, %v6603
    %v6611 = vsel %vm1751, %v6610, %v6607
    %v6612 = vpack.c.bf16 %v6611, %v5074
    %v6614 = vsel %vm175, %v6612, 0
    %6616 = vmatpush.bf16.msra.mxu0 0
    %6617 = vmatpush.bf16.msra.mxu0 0
    %6618 = vmatpush.bf16.msra.mxu0 0
    %6619 = vmatpush.bf16.msra.mxu0 0
    %6620 = vmatpush.bf16.msra.mxu0 0
    %6621 = vmatpush.bf16.msra.mxu0 0
    %6622 = vmatpush.bf16.msra.mxu0 %v3300
    %6623 = vmatpush.bf16.msra.mxu0 %v3299
    %6624 = vmatmul.bf16.gmra.mxu0 %v6614
    %v6625 = vpop.f32.mrf.mxu0
    %v6626 = vadd.f32 %v134, %v6625
    %v6627 = vpop.f32.mrf.mxu0
    %v6628 = vadd.f32 %v134, %v6627
    %6629 = vdwg.mxu0
    %v6630 = vadd.f32 %v3512, %v6626
    %v6631 = vadd.f32 %v3513, %v6628
    %v6632 = vsel %vm175, %v6630, 0.0
    %6633 = vadd.xlane.f32.xlu0 %v6632
    %v6634 = vpop.xlane.xlu0 %6633
    %v6635 = vsel %vm175, %v6631, 0.0
    %6636 = vadd.xlane.f32.xlu0 %v6635
    %v6637 = vpop.xlane.xlu0 %6636
    %v6638 = vmul.f32 %v6634, %v3334
    %v6639 = vmul.f32 %v6637, %v3334
    %v6640 = vmul.f32 %v6630, %v6630
    %v6641 = vmul.f32 %v6631, %v6631
    %v6642 = vsel %vm175, %v6640, 0.0
    %6643 = vadd.xlane.f32.xlu0 %v6642
    %v6644 = vpop.xlane.xlu0 %6643
    %v6645 = vsel %vm175, %v6641, 0.0
    %6646 = vadd.xlane.f32.xlu0 %v6645
    %v6647 = vpop.xlane.xlu0 %6646
    %v6648 = vmul.f32 %v6644, %v3334
    %v6649 = vmul.f32 %v6647, %v3334
    %v6650 = vmul.f32 %v6638, %v6638
    %v6651 = vmul.f32 %v6639, %v6639
    %v6652 = vsub.f32 %v6648, %v6650
    %v6653 = vsub.f32 %v6649, %v6651
    %v6654 = vmax.f32 %v6652, 0.0
    %v6655 = vmax.f32 %v6653, 0.0
    %v6656 = vsub.f32 %v6630, %v6638
    %v6657 = vsub.f32 %v6631, %v6639
    %v6658 = vadd.f32 %v6654, 1e-05
    %v6659 = vadd.f32 %v6655, 1e-05
    %v6660 = vrsqrt.pop %v6658
    %v6661 = vmul.f32 %v6660, %v6658
    %v6662 = vmul.f32 %v6661, %v6660
    %v6663 = vmul.f32 0.5, %v6662
    %v6664 = vsub.f32 1.5, %v6663
    %v6665 = vmul.f32 %v6660, %v6664
    %vm6666 = vweird.f32 %v6658
    %vm6667 = vweird.f32 %v6660
    %vm6668 = vmor %vm6666, %vm6667
    %v6669 = vsel %vm6668, %v6660, %v6665
    %v6670 = vrsqrt.pop %v6659
    %v6671 = vmul.f32 %v6670, %v6659
    %v6672 = vmul.f32 %v6671, %v6670
    %v6673 = vmul.f32 0.5, %v6672
    %v6674 = vsub.f32 1.5, %v6673
    %v6675 = vmul.f32 %v6670, %v6674
    %vm6676 = vweird.f32 %v6659
    %vm6677 = vweird.f32 %v6670
    %vm6678 = vmor %vm6676, %vm6677
    %v6679 = vsel %vm6678, %v6670, %v6675
    %v6680 = vmul.f32 %v6656, %v6669
    %v6681 = vmul.f32 %v6657, %v6679
    %v6682 = vmul.f32 %v6680, %v146
    %v6683 = vmul.f32 %v6681, %v146
    %v6684 = vadd.f32 %v6682, %v150
    %v6685 = vadd.f32 %v6683, %v150
    %v6686 = vpack.c.bf16 %v6685, %v6684
    %v6688 = vsel %vm175, %v6686, 0
    %6690 = vmatpush.bf16.msra.mxu0 0
    %6691 = vmatpush.bf16.msra.mxu0 0
    %6692 = vmatpush.bf16.msra.mxu0 0
    %6693 = vmatpush.bf16.msra.mxu0 0
    %6694 = vmatpush.bf16.msra.mxu0 0
    %6695 = vmatpush.bf16.msra.mxu0 0
    %6696 = vmatpush.bf16.msra.mxu0 %v3393
    %6697 = vmatpush.bf16.msra.mxu0 %v3392
    %6698 = vmatmul.bf16.gmra.mxu0 %v6688
    %v6699 = vpop.f32.mrf.mxu0
    %v6700 = vadd.f32 %v138, %v6699
    %v6701 = vpop.f32.mrf.mxu0
    %v6702 = vadd.f32 %v138, %v6701
    %6703 = vdwg.mxu0
    %v6704 = vmax.f32 %v6700, 0.0
    %v6705 = vmax.f32 %v6702, 0.0
    %v6706 = vpack.c.bf16 %v6705, %v6704
    %v6708 = vsel %vm3440, %v6706, 0
    %6710 = vmatpush.bf16.msra.mxu0 0
    %6711 = vmatpush.bf16.msra.mxu0 0
    %6712 = vmatpush.bf16.msra.mxu0 0
    %6713 = vmatpush.bf16.msra.mxu0 0
    %6714 = vmatpush.bf16.msra.mxu0 %v3435
    %6715 = vmatpush.bf16.msra.mxu0 %v3434
    %6716 = vmatpush.bf16.msra.mxu0 %v3433
    %6717 = vmatpush.bf16.msra.mxu0 %v3432
    %6718 = vmatmul.bf16.gmra.mxu0 %v6708
    %v6719 = vpop.f32.mrf.mxu0
    %v6720 = vadd.f32 %v142, %v6719
    %v6721 = vpop.f32.mrf.mxu0
    %v6722 = vadd.f32 %v142, %v6721
    %6723 = vdwg.mxu0
    %v6724 = vadd.f32 %v6684, %v6720
    %v6725 = vadd.f32 %v6685, %v6722
    %v6726 = vsel %vm175, %v6724, 0.0
    %6727 = vadd.xlane.f32.xlu0 %v6726
    %v6728 = vpop.xlane.xlu0 %6727
    %v6729 = vsel %vm175, %v6725, 0.0
    %6730 = vadd.xlane.f32.xlu0 %v6729
    %v6731 = vpop.xlane.xlu0 %6730
    %v6732 = vmul.f32 %v6728, %v3334
    %v6733 = vmul.f32 %v6731, %v3334
    %v6734 = vmul.f32 %v6724, %v6724
    %v6735 = vmul.f32 %v6725, %v6725
    %v6736 = vsel %vm175, %v6734, 0.0
    %6737 = vadd.xlane.f32.xlu0 %v6736
    %v6738 = vpop.xlane.xlu0 %6737
    %v6739 = vsel %vm175, %v6735, 0.0
    %6740 = vadd.xlane.f32.xlu0 %v6739
    %v6741 = vpop.xlane.xlu0 %6740
    %v6742 = vmul.f32 %v6738, %v3334
    %v6743 = vmul.f32 %v6741, %v3334
    %v6744 = vmul.f32 %v6732, %v6732
    %v6745 = vmul.f32 %v6733, %v6733
    %v6746 = vsub.f32 %v6742, %v6744
    %v6747 = vsub.f32 %v6743, %v6745
    %v6748 = vmax.f32 %v6746, 0.0
    %v6749 = vmax.f32 %v6747, 0.0
    %v6750 = vsub.f32 %v6724, %v6732
    %v6751 = vsub.f32 %v6725, %v6733
    %v6752 = vadd.f32 %v6748, 1e-05
    %v6753 = vadd.f32 %v6749, 1e-05
    %v6754 = vrsqrt.pop %v6752
    %v6755 = vmul.f32 %v6754, %v6752
    %v6756 = vmul.f32 %v6755, %v6754
    %v6757 = vmul.f32 0.5, %v6756
    %v6758 = vsub.f32 1.5, %v6757
    %v6759 = vmul.f32 %v6754, %v6758
    %vm6760 = vweird.f32 %v6752
    %vm6761 = vweird.f32 %v6754
    %vm6762 = vmor %vm6760, %vm6761
    %v6763 = vsel %vm6762, %v6754, %v6759
    %v6764 = vrsqrt.pop %v6753
    %v6765 = vmul.f32 %v6764, %v6753
    %v6766 = vmul.f32 %v6765, %v6764
    %v6767 = vmul.f32 0.5, %v6766
    %v6768 = vsub.f32 1.5, %v6767
    %v6769 = vmul.f32 %v6764, %v6768
    %vm6770 = vweird.f32 %v6753
    %vm6771 = vweird.f32 %v6764
    %vm6772 = vmor %vm6770, %vm6771
    %v6773 = vsel %vm6772, %v6764, %v6769
    %v6774 = vmul.f32 %v6750, %v6763
    %v6775 = vmul.f32 %v6751, %v6773
    %v6776 = vmul.f32 %v6774, %v154
    %v6777 = vmul.f32 %v6775, %v154
    %v6778 = vadd.f32 %v6776, %v158
    %v6779 = vadd.f32 %v6777, %v158
    %v6780 = vld [vmem:[%s15] sm:$0x1]
    %v6782 = vperm.slane %v6780, 0
    %v6784 = vld [vmem:[%s16] sm:$0x1]
    %v6786 = vperm.slane %v6784, 0
    %v6788 = vsel %vm175, %v6778, 0.0
    %6789 = vadd.xlane.f32.xlu0 %v6788
    %v6790 = vpop.xlane.xlu0 %6789
    %v6791 = vsel %vm175, %v6779, 0.0
    %6792 = vadd.xlane.f32.xlu0 %v6791
    %v6793 = vpop.xlane.xlu0 %6792
    %v6794 = vmul.f32 %v6790, %v3334
    %v6795 = vmul.f32 %v6793, %v3334
    %v6796 = vmul.f32 %v6778, %v6778
    %v6797 = vmul.f32 %v6779, %v6779
    %v6798 = vsel %vm175, %v6796, 0.0
    %6799 = vadd.xlane.f32.xlu0 %v6798
    %v6800 = vpop.xlane.xlu0 %6799
    %v6801 = vsel %vm175, %v6797, 0.0
    %6802 = vadd.xlane.f32.xlu0 %v6801
    %v6803 = vpop.xlane.xlu0 %6802
    %v6804 = vmul.f32 %v6800, %v3334
    %v6805 = vmul.f32 %v6803, %v3334
    %v6806 = vmul.f32 %v6794, %v6794
    %v6807 = vmul.f32 %v6795, %v6795
    %v6808 = vsub.f32 %v6804, %v6806
    %v6809 = vsub.f32 %v6805, %v6807
    %v6810 = vmax.f32 %v6808, 0.0
    %v6811 = vmax.f32 %v6809, 0.0
    %v6812 = vsub.f32 %v6778, %v6794
    %v6813 = vsub.f32 %v6779, %v6795
    %v6814 = vadd.f32 %v6810, 1e-05
    %v6815 = vadd.f32 %v6811, 1e-05
    %v6816 = vrsqrt.pop %v6814
    %v6817 = vmul.f32 %v6816, %v6814
    %v6818 = vmul.f32 %v6817, %v6816
    %v6819 = vmul.f32 0.5, %v6818
    %v6820 = vsub.f32 1.5, %v6819
    %v6821 = vmul.f32 %v6816, %v6820
    %vm6822 = vweird.f32 %v6814
    %vm6823 = vweird.f32 %v6816
    %vm6824 = vmor %vm6822, %vm6823
    %v6825 = vsel %vm6824, %v6816, %v6821
    %v6826 = vrsqrt.pop %v6815
    %v6827 = vmul.f32 %v6826, %v6815
    %v6828 = vmul.f32 %v6827, %v6826
    %v6829 = vmul.f32 0.5, %v6828
    %v6830 = vsub.f32 1.5, %v6829
    %v6831 = vmul.f32 %v6826, %v6830
    %vm6832 = vweird.f32 %v6815
    %vm6833 = vweird.f32 %v6826
    %vm6834 = vmor %vm6832, %vm6833
    %v6835 = vsel %vm6834, %v6826, %v6831
    %v6836 = vmul.f32 %v6812, %v6825
    %v6837 = vmul.f32 %v6813, %v6835
    %v6838 = vmul.f32 %v6836, %v6782
    %v6839 = vmul.f32 %v6837, %v6782
    %v6840 = vadd.f32 %v6838, %v6786
    %v6841 = vadd.f32 %v6839, %v6786
    %6842 = vst.msk [vmem:[#allocation8] sm:$0xff] %vm175, %v6840
    %6843 = vst.msk [vmem:[#allocation8 + $0x8] sm:$0xff] %vm175, %v6841
    // Predicated region
    $region82: #{tpu_custom_call.1} parent=1 // pred_check
      _
    $region83: #{tpu_custom_call.1} parent=1 // pred_check_branch
      %6845 = sbr.rel (0) target = $region85
    $region84: #{tpu_custom_call.1} parent=1 // pred_region
      %6847 = vsyncadd [#allocation4], 0
      %s6848 = sshll.u32 [#allocation8], 4
      %s6849 = int_to_ptr.vmem [resolvable:$true] %s6848
      %s6850 = sshll.u32 %s17, 4
      %s6851 = int_to_ptr.hbm [resolvable:$true] %s6850
      %6856 = dma.vmem_to_hbm [thread:$0]  %s6849, 256, %s6851, [#allocation4], 128, 128, 8
    $region85: #{tpu_custom_call.1} parent=1 // pred_fallthru
      _
    // Predicated region
    $region86: #{tpu_custom_call.1} parent=1 // pred_check
      _
    $region87: #{tpu_custom_call.1} parent=1 // pred_check_branch
      %6858 = sbr.rel (0) target = $region89
    $region88: #{tpu_custom_call.1} parent=1 // pred_region
      %6860 = dma.done [#allocation4], 256
    $region89: #{tpu_custom_call.1} parent=1 // pred_fallthru
      _
    %6861 = vsyncpa [#allocation3], 1
    %6862 = vsyncpa [#allocation6], 1
    %6863 = vsyncpa [#allocation4], 1

</llo_original>
